<compile_context>
chip_gen: v7x
topology: tpu7x:2x2x1
jax: 0.10.0
libtpu: 0.0.40
codegen_flags: <defaults>
</compile_context>

<pallas_src>
import functools

import numpy as np
import jax
import jax.numpy as jnp
from jax.experimental import pallas as pl
from jax.experimental.pallas import tpu as pltpu

LN_EPS = 1e-5      # PyTorch nn.LayerNorm default
NEG_INF = -1e30    # additive key-padding mask value


def _round_up(x, m):
    return ((x + m - 1) // m) * m


# ---------------------------------------------------------------------------
# Packed small-parameter layouts (shared by the wrapper and the kernel).
# Every segment starts at a multiple of 128 lanes so in-kernel slices are free.
# ---------------------------------------------------------------------------
_LAYER_SMALL_KEYS = ('bqkv', 'bo', 'b1', 'b2', 'ln1_w', 'ln1_b', 'ln2_w', 'ln2_b')


def _layer_small_layout(H, F):
    widths = dict(bqkv=3 * H, bo=H, b1=F, b2=H, ln1_w=H, ln1_b=H, ln2_w=H, ln2_b=H)
    offs, cur = {}, 0
    for k in _LAYER_SMALL_KEYS:
        offs[k] = cur
        cur += _round_up(widths[k], 128)
    return offs, widths, cur


_HEAD_KEYS = ('wa_s', 'wa_c', 'wc', 'ba', 'bc')


def _head_layout(H):
    widths = dict(wa_s=H, wa_c=H, wc=H, ba=1, bc=1)
    offs, cur = {}, 0
    for k in _HEAD_KEYS:
        offs[k] = cur
        cur += _round_up(widths[k], 128)
    return offs, widths, cur


def _pack_1d(segments, keys, offs, widths, total):
    """Host-side: pack 1-D f32 segments into a single (1, total) array."""
    buf = jnp.zeros((1, total), jnp.float32)
    for k in keys:
        seg = jnp.asarray(segments[k], jnp.float32).reshape(1, -1)
        buf = buf.at[:, offs[k]:offs[k] + widths[k]].set(seg)
    return buf


# ---------------------------------------------------------------------------
# In-kernel helpers
# ---------------------------------------------------------------------------
def _layernorm(x, w, b):
    mu = jnp.mean(x, axis=-1, keepdims=True)
    var = jnp.mean((x - mu) ** 2, axis=-1, keepdims=True)
    return (x - mu) * jax.lax.rsqrt(var + LN_EPS) * w + b


def _last_token_rows(x_flat, n, t, last):
    """Rows (i*t + last), i in [0, n), of x_flat:(n*t, H) -> (n, H).

    Exact f32 one-hot selection matmul built from 2-D iotas (verified lowering;
    avoids any middle-dim squeeze / sublane relayout inside the kernel).
    """
    rows = jax.lax.broadcasted_iota(jnp.int32, (n, n * t), 0)
    cols = jax.lax.broadcasted_iota(jnp.int32, (n, n * t), 1)
    sel = (cols == rows * t + last).astype(jnp.float32)
    return jnp.dot(sel, x_flat, preferred_element_type=jnp.float32)


# ---------------------------------------------------------------------------
# One nn.TransformerEncoderLayer (norm_first=False, activation=relu), eval mode.
# Matmul weights bf16 / f32 accumulation; LayerNorm, residuals, softmax in f32.
# attn_bias: optional (n, t, t) additive key-padding mask (0 / -1e30).
# ---------------------------------------------------------------------------
def _encoder_layer(x2, n, t, nhead,
                   wqkv_ref, wo_ref, w1_ref, w2_ref, small_ref,
                   attn_bias=None):
    H = x2.shape[-1]
    F = w1_ref.shape[-1]
    dh = H // nhead
    offs, widths, _ = _layer_small_layout(H, F)

    def g(name):                                    # 128-lane-aligned static slice
        o, w = offs[name], widths[name]
        return small_ref[:, o:o + w]

    # --- self attention ---
    qkv = jnp.dot(x2.astype(jnp.bfloat16), wqkv_ref[...],
                  preferred_element_type=jnp.float32) + g('bqkv')
    qkv3 = qkv.reshape(n, t, 3 * H)                 # t is a multiple of 8 -> free reshape
    scale = 1.0 / float(np.sqrt(dh))
    heads = []
    for h in range(nhead):
        qh = qkv3[:, :, h * dh:(h + 1) * dh]                      # (n, t, dh)
        kh = qkv3[:, :, H + h * dh:H + (h + 1) * dh]
        vh = qkv3[:, :, 2 * H + h * dh:2 * H + (h + 1) * dh]
        s = jnp.einsum('btd,bsd->bts', qh, kh,
                       preferred_element_type=jnp.float32) * scale
        if attn_bias is not None:
            s = s + attn_bias                                      # mask padded keys
        s = s - jnp.max(s, axis=-1, keepdims=True)
        p = jnp.exp(s)
        p = p * pl.reciprocal(jnp.sum(p, axis=-1, keepdims=True), approx=True)
        heads.append(jnp.einsum('bts,bsd->btd', p, vh,
                                preferred_element_type=jnp.float32))
    ctx = jnp.concatenate(heads, axis=-1).reshape(n * t, H)
    attn = jnp.dot(ctx.astype(jnp.bfloat16), wo_ref[...],
                   preferred_element_type=jnp.float32) + g('bo')

    # --- residual + layernorm 1 (f32) ---
    h1 = _layernorm(x2 + attn, g('ln1_w'), g('ln1_b'))

    # --- feed forward (relu); ReLU output carried as bf16 to halve VMEM traffic ---
    ff = jnp.maximum(
        jnp.dot(h1.astype(jnp.bfloat16), w1_ref[...],
                preferred_element_type=jnp.float32) + g('b1'),
        0.0).astype(jnp.bfloat16)
    ff = jnp.dot(ff, w2_ref[...], preferred_element_type=jnp.float32) + g('b2')

    # --- residual + layernorm 2 (f32) ---
    return _layernorm(h1 + ff, g('ln2_w'), g('ln2_b'))              # (n*t, H)


# ---------------------------------------------------------------------------
# Fused forward kernel: ONE shared-'enc' pass over obs+cmd tokens, state layer,
# critic, att_cmd scores — single pallas_call, each weight DMA'd once.
# ---------------------------------------------------------------------------
def _scorer_kernel(nhead, B, T_obs, T_cmd, x_ref, bias_ref, *refs):
    enc_w = refs[0:5]
    st_w = refs[5:10]
    head_ref = refs[10]
    scores_ref, value_ref = refs[11], refs[12]

    N, T, H = x_ref.shape          # N = B + C, T = padded sequence length
    C = N - B

    x = x_ref[...].reshape(N * T, H)

    need_enc_bias = (T_obs < T) or (T_cmd < T)
    need_st_bias = T_obs < T
    bias_all = bias_ref[...] if (need_enc_bias or need_st_bias) else None
    enc_bias = bias_all if need_enc_bias else None
    st_bias = bias_all[0:B] if need_st_bias else None

    # Shared 'enc' layer over observation AND command tokens in one pass.
    enc_out = _encoder_layer(x, N, T, nhead, *enc_w, attn_bias=enc_bias)   # (N*T, H)

    # state_transformer on the encoded observation rows only.
    obs_enc = enc_out[:B * T, :]                                           # aligned slice
    state_out = _encoder_layer(obs_enc, B, T, nhead, *st_w, attn_bias=st_bias)

    state_last = _last_token_rows(state_out, B, T, T_obs - 1)     # (B, H) == state_hidden.squeeze(0)
    cmds_last = _last_token_rows(enc_out[B * T:, :], C, T, T_cmd - 1)  # (C, H) == cmds_encoding[-1]

    ho, hw, _ = _head_layout(H)

    def hg(name):
        o, w = ho[name], hw[name]
        return head_ref[:, o:o + w]

    # critic: value = Linear(H, 1)(state_output[-1])
    value_ref[...] = (jnp.sum(state_last * hg('wc'), axis=1, keepdims=True)
                      + hg('bc'))                                          # (B, 1)

    # att_cmd: scores[b, c] = relu(wa_s . state[b] + wa_c . cmd[c] + ba)
    s_part = jnp.sum(state_last * hg('wa_s'), axis=1, keepdims=True)       # (B, 1)
    c_part = jnp.dot(hg('wa_c'), cmds_last.T,
                     preferred_element_type=jnp.float32)                   # (1, C)
    scores_ref[...] = jnp.maximum(s_part + c_part + hg('ba'), 0.0)         # (B, C)


def transformer_scorer_fused(params, x_merged, attn_bias, nhead, B, T_obs, T_cmd):
    """x_merged: (B+C, T_pad, H) f32; attn_bias: (B+C, T_pad, T_pad) f32."""
    N = x_merged.shape[0]
    C = N - B
    enc, st = params['enc'], params['state']
    args = (x_merged, attn_bias,
            enc['wqkv_t'], enc['wo_t'], enc['w1_t'], enc['w2_t'], enc['small'],
            st['wqkv_t'], st['wo_t'], st['w1_t'], st['w2_t'], st['small'],
            params['head'])
    vmem = pl.BlockSpec(memory_space=pltpu.MemorySpace.VMEM)
    # Single-shot, everything resident in VMEM (<2 MB) — no grid / pipelining.
    return pl.pallas_call(
        functools.partial(_scorer_kernel, nhead, B, T_obs, T_cmd),
        out_shape=(jax.ShapeDtypeStruct((B, C), jnp.float32),   # scores
                   jax.ShapeDtypeStruct((B, 1), jnp.float32)),  # value
        in_specs=[vmem] * len(args),
        out_specs=(vmem, vmem),
    )(*args)


# ---------------------------------------------------------------------------
# Deterministic synthetic parameters (shapes follow the module's __init__;
# linear weights pre-transposed; matmul weights bf16; small params packed).
# ---------------------------------------------------------------------------
def init_params(seed, input_size, hidden_size, nhead, dim_feedforward=2048):
    key = jax.random.PRNGKey(seed)
    ks = iter(jax.random.split(key, 64))
    H, F = hidden_size, dim_feedforward

    def uniform(k, shape, fan_in, dtype=jnp.float32):
        bound = 1.0 / np.sqrt(fan_in)
        return jax.random.uniform(k, shape, jnp.float32, -bound, bound).astype(dtype)

    offs, widths, total = _layer_small_layout(H, F)

    def make_layer():
        small = dict(
            bqkv=jnp.zeros((3 * H,), jnp.float32),     # MHA in_proj bias (zero init)
            bo=jnp.zeros((H,), jnp.float32),           # out_proj bias
            b1=uniform(next(ks), (F,), H),
            b2=uniform(next(ks), (H,), F),
            ln1_w=jnp.ones((H,), jnp.float32), ln1_b=jnp.zeros((H,), jnp.float32),
            ln2_w=jnp.ones((H,), jnp.float32), ln2_b=jnp.zeros((H,), jnp.float32),
        )
        return dict(
            wqkv_t=uniform(next(ks), (H, 3 * H), H, jnp.bfloat16),  # MHA in_proj^T
            wo_t=uniform(next(ks), (H, H), H, jnp.bfloat16),        # out_proj^T
            w1_t=uniform(next(ks), (H, F), H, jnp.bfloat16),        # linear1^T
            w2_t=uniform(next(ks), (F, H), F, jnp.bfloat16),        # linear2^T
            small=_pack_1d(small, _LAYER_SMALL_KEYS, offs, widths, total),
        )

    # att_cmd: Linear(2H, 1) split into state / cmd halves; critic: Linear(H, 1).
    wa = uniform(next(ks), (2 * H,), 2 * H)
    hoffs, hwidths, htotal = _head_layout(H)
    head_small = dict(
        wa_s=wa[:H],
        wa_c=wa[H:],
        wc=uniform(next(ks), (H,), H),
        ba=uniform(next(ks), (1,), 2 * H),
        bc=uniform(next(ks), (1,), H),
    )

    return dict(
        embedding=jax.random.normal(next(ks), (input_size, H), jnp.float32),
        enc=make_layer(),      # encoder_transformer (1 layer)
        state=make_layer(),    # state_transformer   (1 layer)
        head=_pack_1d(head_small, _HEAD_KEYS, hoffs, hwidths, htotal),
    )


# ---------------------------------------------------------------------------
# Full forward pass (matches TransformerScorer.forward)
# ---------------------------------------------------------------------------
def transformer_scorer_forward(params, obs, commands, nhead, sample_key):
    # obs: (T_obs, batch) int32 token ids; commands: (T_cmd, nb_cmds) int32 ids
    T_obs, B = obs.shape
    T_cmd, C = commands.shape
    T_pad = _round_up(max(T_obs, T_cmd), 8)          # sublane-aligned sequence length

    emb = params['embedding']
    x_obs = jnp.take(emb, obs.T, axis=0)             # (B, T_obs, H)
    x_cmd = jnp.take(emb, commands.T, axis=0)        # (C, T_cmd, H)

    def pad_t(x, t_from):
        if t_from == T_pad:
            return x
        return jnp.pad(x, ((0, 0), (0, T_pad - t_from), (0, 0)))

    # Merged token block for the single shared-'enc' pass.
    x_merged = jnp.concatenate([pad_t(x_obs, T_obs), pad_t(x_cmd, T_cmd)], axis=0)

    # Additive key-padding bias: 0 for valid keys, -1e30 for padded keys.
    valid = jnp.concatenate([jnp.full((B,), T_obs, jnp.int32),
                             jnp.full((C,), T_cmd, jnp.int32)])
    key_pos = jnp.arange(T_pad, dtype=jnp.int32)
    bias2d = jnp.where(key_pos[None, :] < valid[:, None], 0.0, NEG_INF).astype(jnp.float32)
    attn_bias = jnp.broadcast_to(bias2d[:, None, :], (B + C, T_pad, T_pad))

    scores, value = transformer_scorer_fused(params, x_merged, attn_bias,
                                             nhead, B, T_obs, T_cmd)

    # TODO(synk): probs.multinomial(1) is inherently stochastic; sampled with
    # jax.random.categorical on the score logits (softmax(scores) == probs).
    index = jax.random.categorical(sample_key, scores, axis=1)[:, None].astype(jnp.int32)
    return scores, index, value


if __name__ == "__main__":
    input_size, hidden_size, nhead = 50, 32, 4
    T_obs, T_cmd, batch, nb_cmds = 8, 6, 2, 5

    params = init_params(0, input_size, hidden_size, nhead)

    key = jax.random.PRNGKey(0)
    k_obs, k_cmd, k_sample = jax.random.split(key, 3)
    obs = jax.random.randint(k_obs, (T_obs, batch), 0, input_size, jnp.int32)
    commands = jax.random.randint(k_cmd, (T_cmd, nb_cmds), 0, input_size, jnp.int32)

    fwd = jax.jit(transformer_scorer_forward, static_argnums=(3,))
    scores, index, value = fwd(params, obs, commands, nhead, k_sample)
    jax.block_until_ready((scores, index, value))

    assert scores.shape == (batch, nb_cmds) and scores.dtype == jnp.float32
    assert index.shape == (batch, 1)
    assert value.shape == (batch, 1) and value.dtype == jnp.float32
    assert bool(jnp.all(jnp.isfinite(scores))) and bool(jnp.all(jnp.isfinite(value)))
    assert bool(jnp.all((index >= 0) & (index < nb_cmds)))
    print("KERNEL_OK")
</pallas_src>

<mosaic_0001>
module attributes {stable_mosaic.version = 11 : i64} {
  func.func @_scorer_kernel(%arg0: memref<7x8x32xf32, #tpu.memory_space<vmem>>, %arg1: memref<7x8x8xf32, #tpu.memory_space<vmem>>, %arg2: memref<32x96xbf16, #tpu.memory_space<vmem>>, %arg3: memref<32x32xbf16, #tpu.memory_space<vmem>>, %arg4: memref<32x2048xbf16, #tpu.memory_space<vmem>>, %arg5: memref<2048x32xbf16, #tpu.memory_space<vmem>>, %arg6: memref<1x2944xf32, #tpu.memory_space<vmem>>, %arg7: memref<32x96xbf16, #tpu.memory_space<vmem>>, %arg8: memref<32x32xbf16, #tpu.memory_space<vmem>>, %arg9: memref<32x2048xbf16, #tpu.memory_space<vmem>>, %arg10: memref<2048x32xbf16, #tpu.memory_space<vmem>>, %arg11: memref<1x2944xf32, #tpu.memory_space<vmem>>, %arg12: memref<1x640xf32, #tpu.memory_space<vmem>>, %arg13: memref<2x5xf32, #tpu.memory_space<vmem>>, %arg14: memref<2x1xf32, #tpu.memory_space<vmem>>) attributes {dimension_semantics = [], scalar_prefetch = 0 : i64, scratch_operands = 0 : i64, tpu.core_type = #tpu.core_type<tc>} {
    %c0 = arith.constant 0 : index
    %c0_0 = arith.constant 0 : index
    %c0_1 = arith.constant 0 : index
    %0 = vector.load %arg0[%c0, %c0_0, %c0_1] : memref<7x8x32xf32, #tpu.memory_space<vmem>>, vector<7x8x32xf32>
    %1 = vector.shape_cast %0 : vector<7x8x32xf32> to vector<56x32xf32>
    %c0_2 = arith.constant 0 : index
    %c0_3 = arith.constant 0 : index
    %c0_4 = arith.constant 0 : index
    %2 = vector.load %arg1[%c0_2, %c0_3, %c0_4] : memref<7x8x8xf32, #tpu.memory_space<vmem>>, vector<7x8x8xf32>
    %3 = arith.truncf %1 : vector<56x32xf32> to vector<56x32xbf16>
    %c0_5 = arith.constant 0 : index
    %c0_6 = arith.constant 0 : index
    %4 = vector.load %arg2[%c0_5, %c0_6] : memref<32x96xbf16, #tpu.memory_space<vmem>>, vector<32x96xbf16>
    %cst = arith.constant dense<0.000000e+00> : vector<56x96xf32>
    %5 = tpu.matmul %3, %4, %cst {dimension_numbers = #tpu.dot_dimension_numbers<[1], [0], [0], [1], [0, 0, 1, 1], [], []>} : vector<56x32xbf16>, vector<32x96xbf16>, vector<56x96xf32> -> vector<56x96xf32>
    %c0_7 = arith.constant 0 : index
    %c0_8 = arith.constant 0 : index
    %6 = vector.load %arg6[%c0_7, %c0_8] : memref<1x2944xf32, #tpu.memory_space<vmem>>, vector<1x96xf32>
    %7 = vector.broadcast %6 : vector<1x96xf32> to vector<56x96xf32>
    %8 = arith.addf %5, %7 : vector<56x96xf32>
    %9 = vector.shape_cast %8 : vector<56x96xf32> to vector<7x8x96xf32>
    %10 = vector.extract_strided_slice %9 {offsets = [0, 0, 0], sizes = [7, 8, 8], strides = [1, 1, 1]} : vector<7x8x96xf32> to vector<7x8x8xf32>
    %11 = vector.extract_strided_slice %9 {offsets = [0, 0, 32], sizes = [7, 8, 8], strides = [1, 1, 1]} : vector<7x8x96xf32> to vector<7x8x8xf32>
    %12 = vector.extract_strided_slice %9 {offsets = [0, 0, 64], sizes = [7, 8, 8], strides = [1, 1, 1]} : vector<7x8x96xf32> to vector<7x8x8xf32>
    "tpu.trace_start"() <{level = 10 : i32, message = "btd,bsd->bts"}> : () -> ()
    %cst_9 = arith.constant dense<0.000000e+00> : vector<7x8x8xf32>
    %13 = tpu.matmul %10, %11, %cst_9 {dimension_numbers = #tpu.dot_dimension_numbers<[2], [2], [1], [1], [0, 0, 0, 1, 1, 1], [0], [0]>} : vector<7x8x8xf32>, vector<7x8x8xf32>, vector<7x8x8xf32> -> vector<7x8x8xf32>
    "tpu.trace_stop"() : () -> ()
    %cst_10 = arith.constant 0.353553385 : f32
    %14 = vector.broadcast %cst_10 : f32 to vector<7x8x8xf32>
    %15 = arith.mulf %13, %14 : vector<7x8x8xf32>
    %16 = arith.addf %15, %2 : vector<7x8x8xf32>
    %cst_11 = arith.constant dense<0xFF800000> : vector<7x8xf32>
    %17 = vector.multi_reduction <maximumf>, %16, %cst_11 [2] : vector<7x8x8xf32> to vector<7x8xf32>
    %18 = vector.shape_cast %17 : vector<7x8xf32> to vector<7x8x1xf32>
    %19 = vector.broadcast %18 : vector<7x8x1xf32> to vector<7x8x8xf32>
    %20 = arith.subf %16, %19 : vector<7x8x8xf32>
    %21 = math.exp %20 : vector<7x8x8xf32>
    %cst_12 = arith.constant dense<0.000000e+00> : vector<7x8xf32>
    %22 = vector.multi_reduction <add>, %21, %cst_12 [2] : vector<7x8x8xf32> to vector<7x8xf32>
    %23 = vector.shape_cast %22 : vector<7x8xf32> to vector<7x8x1xf32>
    %24 = tpu.reciprocal %23 {approx = true} : vector<7x8x1xf32> -> vector<7x8x1xf32>
    %25 = vector.broadcast %24 : vector<7x8x1xf32> to vector<7x8x8xf32>
    %26 = arith.mulf %21, %25 : vector<7x8x8xf32>
    "tpu.trace_start"() <{level = 10 : i32, message = "bts,bsd->btd"}> : () -> ()
    %cst_13 = arith.constant dense<0.000000e+00> : vector<7x8x8xf32>
    %27 = tpu.matmul %26, %12, %cst_13 {dimension_numbers = #tpu.dot_dimension_numbers<[2], [1], [1], [2], [0, 0, 0, 1, 1, 2], [0], [0]>} : vector<7x8x8xf32>, vector<7x8x8xf32>, vector<7x8x8xf32> -> vector<7x8x8xf32>
    "tpu.trace_stop"() : () -> ()
    %28 = vector.extract_strided_slice %9 {offsets = [0, 0, 8], sizes = [7, 8, 8], strides = [1, 1, 1]} : vector<7x8x96xf32> to vector<7x8x8xf32>
    %29 = vector.extract_strided_slice %9 {offsets = [0, 0, 40], sizes = [7, 8, 8], strides = [1, 1, 1]} : vector<7x8x96xf32> to vector<7x8x8xf32>
    %30 = vector.extract_strided_slice %9 {offsets = [0, 0, 72], sizes = [7, 8, 8], strides = [1, 1, 1]} : vector<7x8x96xf32> to vector<7x8x8xf32>
    "tpu.trace_start"() <{level = 10 : i32, message = "btd,bsd->bts"}> : () -> ()
    %cst_14 = arith.constant dense<0.000000e+00> : vector<7x8x8xf32>
    %31 = tpu.matmul %28, %29, %cst_14 {dimension_numbers = #tpu.dot_dimension_numbers<[2], [2], [1], [1], [0, 0, 0, 1, 1, 1], [0], [0]>} : vector<7x8x8xf32>, vector<7x8x8xf32>, vector<7x8x8xf32> -> vector<7x8x8xf32>
    "tpu.trace_stop"() : () -> ()
    %cst_15 = arith.constant 0.353553385 : f32
    %32 = vector.broadcast %cst_15 : f32 to vector<7x8x8xf32>
    %33 = arith.mulf %31, %32 : vector<7x8x8xf32>
    %34 = arith.addf %33, %2 : vector<7x8x8xf32>
    %cst_16 = arith.constant dense<0xFF800000> : vector<7x8xf32>
    %35 = vector.multi_reduction <maximumf>, %34, %cst_16 [2] : vector<7x8x8xf32> to vector<7x8xf32>
    %36 = vector.shape_cast %35 : vector<7x8xf32> to vector<7x8x1xf32>
    %37 = vector.broadcast %36 : vector<7x8x1xf32> to vector<7x8x8xf32>
    %38 = arith.subf %34, %37 : vector<7x8x8xf32>
    %39 = math.exp %38 : vector<7x8x8xf32>
    %cst_17 = arith.constant dense<0.000000e+00> : vector<7x8xf32>
    %40 = vector.multi_reduction <add>, %39, %cst_17 [2] : vector<7x8x8xf32> to vector<7x8xf32>
    %41 = vector.shape_cast %40 : vector<7x8xf32> to vector<7x8x1xf32>
    %42 = tpu.reciprocal %41 {approx = true} : vector<7x8x1xf32> -> vector<7x8x1xf32>
    %43 = vector.broadcast %42 : vector<7x8x1xf32> to vector<7x8x8xf32>
    %44 = arith.mulf %39, %43 : vector<7x8x8xf32>
    "tpu.trace_start"() <{level = 10 : i32, message = "bts,bsd->btd"}> : () -> ()
    %cst_18 = arith.constant dense<0.000000e+00> : vector<7x8x8xf32>
    %45 = tpu.matmul %44, %30, %cst_18 {dimension_numbers = #tpu.dot_dimension_numbers<[2], [1], [1], [2], [0, 0, 0, 1, 1, 2], [0], [0]>} : vector<7x8x8xf32>, vector<7x8x8xf32>, vector<7x8x8xf32> -> vector<7x8x8xf32>
    "tpu.trace_stop"() : () -> ()
    %46 = vector.extract_strided_slice %9 {offsets = [0, 0, 16], sizes = [7, 8, 8], strides = [1, 1, 1]} : vector<7x8x96xf32> to vector<7x8x8xf32>
    %47 = vector.extract_strided_slice %9 {offsets = [0, 0, 48], sizes = [7, 8, 8], strides = [1, 1, 1]} : vector<7x8x96xf32> to vector<7x8x8xf32>
    %48 = vector.extract_strided_slice %9 {offsets = [0, 0, 80], sizes = [7, 8, 8], strides = [1, 1, 1]} : vector<7x8x96xf32> to vector<7x8x8xf32>
    "tpu.trace_start"() <{level = 10 : i32, message = "btd,bsd->bts"}> : () -> ()
    %cst_19 = arith.constant dense<0.000000e+00> : vector<7x8x8xf32>
    %49 = tpu.matmul %46, %47, %cst_19 {dimension_numbers = #tpu.dot_dimension_numbers<[2], [2], [1], [1], [0, 0, 0, 1, 1, 1], [0], [0]>} : vector<7x8x8xf32>, vector<7x8x8xf32>, vector<7x8x8xf32> -> vector<7x8x8xf32>
    "tpu.trace_stop"() : () -> ()
    %cst_20 = arith.constant 0.353553385 : f32
    %50 = vector.broadcast %cst_20 : f32 to vector<7x8x8xf32>
    %51 = arith.mulf %49, %50 : vector<7x8x8xf32>
    %52 = arith.addf %51, %2 : vector<7x8x8xf32>
    %cst_21 = arith.constant dense<0xFF800000> : vector<7x8xf32>
    %53 = vector.multi_reduction <maximumf>, %52, %cst_21 [2] : vector<7x8x8xf32> to vector<7x8xf32>
    %54 = vector.shape_cast %53 : vector<7x8xf32> to vector<7x8x1xf32>
    %55 = vector.broadcast %54 : vector<7x8x1xf32> to vector<7x8x8xf32>
    %56 = arith.subf %52, %55 : vector<7x8x8xf32>
    %57 = math.exp %56 : vector<7x8x8xf32>
    %cst_22 = arith.constant dense<0.000000e+00> : vector<7x8xf32>
    %58 = vector.multi_reduction <add>, %57, %cst_22 [2] : vector<7x8x8xf32> to vector<7x8xf32>
    %59 = vector.shape_cast %58 : vector<7x8xf32> to vector<7x8x1xf32>
    %60 = tpu.reciprocal %59 {approx = true} : vector<7x8x1xf32> -> vector<7x8x1xf32>
    %61 = vector.broadcast %60 : vector<7x8x1xf32> to vector<7x8x8xf32>
    %62 = arith.mulf %57, %61 : vector<7x8x8xf32>
    "tpu.trace_start"() <{level = 10 : i32, message = "bts,bsd->btd"}> : () -> ()
    %cst_23 = arith.constant dense<0.000000e+00> : vector<7x8x8xf32>
    %63 = tpu.matmul %62, %48, %cst_23 {dimension_numbers = #tpu.dot_dimension_numbers<[2], [1], [1], [2], [0, 0, 0, 1, 1, 2], [0], [0]>} : vector<7x8x8xf32>, vector<7x8x8xf32>, vector<7x8x8xf32> -> vector<7x8x8xf32>
    "tpu.trace_stop"() : () -> ()
    %64 = vector.extract_strided_slice %9 {offsets = [0, 0, 24], sizes = [7, 8, 8], strides = [1, 1, 1]} : vector<7x8x96xf32> to vector<7x8x8xf32>
    %65 = vector.extract_strided_slice %9 {offsets = [0, 0, 56], sizes = [7, 8, 8], strides = [1, 1, 1]} : vector<7x8x96xf32> to vector<7x8x8xf32>
    %66 = vector.extract_strided_slice %9 {offsets = [0, 0, 88], sizes = [7, 8, 8], strides = [1, 1, 1]} : vector<7x8x96xf32> to vector<7x8x8xf32>
    "tpu.trace_start"() <{level = 10 : i32, message = "btd,bsd->bts"}> : () -> ()
    %cst_24 = arith.constant dense<0.000000e+00> : vector<7x8x8xf32>
    %67 = tpu.matmul %64, %65, %cst_24 {dimension_numbers = #tpu.dot_dimension_numbers<[2], [2], [1], [1], [0, 0, 0, 1, 1, 1], [0], [0]>} : vector<7x8x8xf32>, vector<7x8x8xf32>, vector<7x8x8xf32> -> vector<7x8x8xf32>
    "tpu.trace_stop"() : () -> ()
    %cst_25 = arith.constant 0.353553385 : f32
    %68 = vector.broadcast %cst_25 : f32 to vector<7x8x8xf32>
    %69 = arith.mulf %67, %68 : vector<7x8x8xf32>
    %70 = arith.addf %69, %2 : vector<7x8x8xf32>
    %cst_26 = arith.constant dense<0xFF800000> : vector<7x8xf32>
    %71 = vector.multi_reduction <maximumf>, %70, %cst_26 [2] : vector<7x8x8xf32> to vector<7x8xf32>
    %72 = vector.shape_cast %71 : vector<7x8xf32> to vector<7x8x1xf32>
    %73 = vector.broadcast %72 : vector<7x8x1xf32> to vector<7x8x8xf32>
    %74 = arith.subf %70, %73 : vector<7x8x8xf32>
    %75 = math.exp %74 : vector<7x8x8xf32>
    %cst_27 = arith.constant dense<0.000000e+00> : vector<7x8xf32>
    %76 = vector.multi_reduction <add>, %75, %cst_27 [2] : vector<7x8x8xf32> to vector<7x8xf32>
    %77 = vector.shape_cast %76 : vector<7x8xf32> to vector<7x8x1xf32>
    %78 = tpu.reciprocal %77 {approx = true} : vector<7x8x1xf32> -> vector<7x8x1xf32>
    %79 = vector.broadcast %78 : vector<7x8x1xf32> to vector<7x8x8xf32>
    %80 = arith.mulf %75, %79 : vector<7x8x8xf32>
    "tpu.trace_start"() <{level = 10 : i32, message = "bts,bsd->btd"}> : () -> ()
    %cst_28 = arith.constant dense<0.000000e+00> : vector<7x8x8xf32>
    %81 = tpu.matmul %80, %66, %cst_28 {dimension_numbers = #tpu.dot_dimension_numbers<[2], [1], [1], [2], [0, 0, 0, 1, 1, 2], [0], [0]>} : vector<7x8x8xf32>, vector<7x8x8xf32>, vector<7x8x8xf32> -> vector<7x8x8xf32>
    "tpu.trace_stop"() : () -> ()
    %82 = tpu.concatenate %27, %45, %63, %81 in 2 : vector<7x8x8xf32>, vector<7x8x8xf32>, vector<7x8x8xf32>, vector<7x8x8xf32> -> vector<7x8x32xf32>
    %83 = vector.shape_cast %82 : vector<7x8x32xf32> to vector<56x32xf32>
    %84 = arith.truncf %83 : vector<56x32xf32> to vector<56x32xbf16>
    %c0_29 = arith.constant 0 : index
    %c0_30 = arith.constant 0 : index
    %85 = vector.load %arg3[%c0_29, %c0_30] : memref<32x32xbf16, #tpu.memory_space<vmem>>, vector<32x32xbf16>
    %cst_31 = arith.constant dense<0.000000e+00> : vector<56x32xf32>
    %86 = tpu.matmul %84, %85, %cst_31 {dimension_numbers = #tpu.dot_dimension_numbers<[1], [0], [0], [1], [0, 0, 1, 1], [], []>} : vector<56x32xbf16>, vector<32x32xbf16>, vector<56x32xf32> -> vector<56x32xf32>
    %c0_32 = arith.constant 0 : index
    %c128 = arith.constant 128 : index
    %87 = vector.load %arg6[%c0_32, %c128] : memref<1x2944xf32, #tpu.memory_space<vmem>>, vector<1x32xf32>
    %88 = vector.broadcast %87 : vector<1x32xf32> to vector<56x32xf32>
    %89 = arith.addf %86, %88 : vector<56x32xf32>
    %90 = arith.addf %1, %89 : vector<56x32xf32>
    %c0_33 = arith.constant 0 : index
    %c2432 = arith.constant 2432 : index
    %91 = vector.load %arg6[%c0_33, %c2432] : memref<1x2944xf32, #tpu.memory_space<vmem>>, vector<1x32xf32>
    %c0_34 = arith.constant 0 : index
    %c2560 = arith.constant 2560 : index
    %92 = vector.load %arg6[%c0_34, %c2560] : memref<1x2944xf32, #tpu.memory_space<vmem>>, vector<1x32xf32>
    %cst_35 = arith.constant dense<0.000000e+00> : vector<56xf32>
    %93 = vector.multi_reduction <add>, %90, %cst_35 [1] : vector<56x32xf32> to vector<56xf32>
    %94 = vector.shape_cast %93 : vector<56xf32> to vector<56x1xf32>
    %cst_36 = arith.constant 3.200000e+01 : f32
    %95 = vector.broadcast %cst_36 : f32 to vector<56x1xf32>
    %96 = arith.divf %94, %95 : vector<56x1xf32>
    %97 = vector.broadcast %96 : vector<56x1xf32> to vector<56x32xf32>
    %98 = arith.subf %90, %97 : vector<56x32xf32>
    %99 = arith.mulf %98, %98 : vector<56x32xf32>
    %cst_37 = arith.constant dense<0.000000e+00> : vector<56xf32>
    %100 = vector.multi_reduction <add>, %99, %cst_37 [1] : vector<56x32xf32> to vector<56xf32>
    %101 = vector.shape_cast %100 : vector<56xf32> to vector<56x1xf32>
    %cst_38 = arith.constant 3.200000e+01 : f32
    %102 = vector.broadcast %cst_38 : f32 to vector<56x1xf32>
    %103 = arith.divf %101, %102 : vector<56x1xf32>
    %104 = vector.broadcast %96 : vector<56x1xf32> to vector<56x32xf32>
    %105 = arith.subf %90, %104 : vector<56x32xf32>
    %cst_39 = arith.constant 9.99999974E-6 : f32
    %106 = vector.broadcast %cst_39 : f32 to vector<56x1xf32>
    %107 = arith.addf %103, %106 : vector<56x1xf32>
    %108 = math.rsqrt %107 : vector<56x1xf32>
    %109 = vector.broadcast %108 : vector<56x1xf32> to vector<56x32xf32>
    %110 = arith.mulf %105, %109 : vector<56x32xf32>
    %111 = vector.broadcast %91 : vector<1x32xf32> to vector<56x32xf32>
    %112 = arith.mulf %110, %111 : vector<56x32xf32>
    %113 = vector.broadcast %92 : vector<1x32xf32> to vector<56x32xf32>
    %114 = arith.addf %112, %113 : vector<56x32xf32>
    %115 = arith.truncf %114 : vector<56x32xf32> to vector<56x32xbf16>
    %c0_40 = arith.constant 0 : index
    %c0_41 = arith.constant 0 : index
    %116 = vector.load %arg4[%c0_40, %c0_41] : memref<32x2048xbf16, #tpu.memory_space<vmem>>, vector<32x2048xbf16>
    %cst_42 = arith.constant dense<0.000000e+00> : vector<56x2048xf32>
    %117 = tpu.matmul %115, %116, %cst_42 {dimension_numbers = #tpu.dot_dimension_numbers<[1], [0], [0], [1], [0, 0, 1, 1], [], []>} : vector<56x32xbf16>, vector<32x2048xbf16>, vector<56x2048xf32> -> vector<56x2048xf32>
    %c0_43 = arith.constant 0 : index
    %c256 = arith.constant 256 : index
    %118 = vector.load %arg6[%c0_43, %c256] : memref<1x2944xf32, #tpu.memory_space<vmem>>, vector<1x2048xf32>
    %119 = vector.broadcast %118 : vector<1x2048xf32> to vector<56x2048xf32>
    %120 = arith.addf %117, %119 : vector<56x2048xf32>
    %cst_44 = arith.constant 0.000000e+00 : f32
    %121 = vector.broadcast %cst_44 : f32 to vector<56x2048xf32>
    %122 = arith.maximumf %120, %121 : vector<56x2048xf32>
    %123 = arith.truncf %122 : vector<56x2048xf32> to vector<56x2048xbf16>
    %c0_45 = arith.constant 0 : index
    %c0_46 = arith.constant 0 : index
    %124 = vector.load %arg5[%c0_45, %c0_46] : memref<2048x32xbf16, #tpu.memory_space<vmem>>, vector<2048x32xbf16>
    %cst_47 = arith.constant dense<0.000000e+00> : vector<56x32xf32>
    %125 = tpu.matmul %123, %124, %cst_47 {dimension_numbers = #tpu.dot_dimension_numbers<[1], [0], [0], [1], [0, 0, 1, 1], [], []>} : vector<56x2048xbf16>, vector<2048x32xbf16>, vector<56x32xf32> -> vector<56x32xf32>
    %c0_48 = arith.constant 0 : index
    %c2304 = arith.constant 2304 : index
    %126 = vector.load %arg6[%c0_48, %c2304] : memref<1x2944xf32, #tpu.memory_space<vmem>>, vector<1x32xf32>
    %127 = vector.broadcast %126 : vector<1x32xf32> to vector<56x32xf32>
    %128 = arith.addf %125, %127 : vector<56x32xf32>
    %129 = arith.addf %114, %128 : vector<56x32xf32>
    %c0_49 = arith.constant 0 : index
    %c2688 = arith.constant 2688 : index
    %130 = vector.load %arg6[%c0_49, %c2688] : memref<1x2944xf32, #tpu.memory_space<vmem>>, vector<1x32xf32>
    %c0_50 = arith.constant 0 : index
    %c2816 = arith.constant 2816 : index
    %131 = vector.load %arg6[%c0_50, %c2816] : memref<1x2944xf32, #tpu.memory_space<vmem>>, vector<1x32xf32>
    %cst_51 = arith.constant dense<0.000000e+00> : vector<56xf32>
    %132 = vector.multi_reduction <add>, %129, %cst_51 [1] : vector<56x32xf32> to vector<56xf32>
    %133 = vector.shape_cast %132 : vector<56xf32> to vector<56x1xf32>
    %cst_52 = arith.constant 3.200000e+01 : f32
    %134 = vector.broadcast %cst_52 : f32 to vector<56x1xf32>
    %135 = arith.divf %133, %134 : vector<56x1xf32>
    %136 = vector.broadcast %135 : vector<56x1xf32> to vector<56x32xf32>
    %137 = arith.subf %129, %136 : vector<56x32xf32>
    %138 = arith.mulf %137, %137 : vector<56x32xf32>
    %cst_53 = arith.constant dense<0.000000e+00> : vector<56xf32>
    %139 = vector.multi_reduction <add>, %138, %cst_53 [1] : vector<56x32xf32> to vector<56xf32>
    %140 = vector.shape_cast %139 : vector<56xf32> to vector<56x1xf32>
    %cst_54 = arith.constant 3.200000e+01 : f32
    %141 = vector.broadcast %cst_54 : f32 to vector<56x1xf32>
    %142 = arith.divf %140, %141 : vector<56x1xf32>
    %143 = vector.broadcast %135 : vector<56x1xf32> to vector<56x32xf32>
    %144 = arith.subf %129, %143 : vector<56x32xf32>
    %cst_55 = arith.constant 9.99999974E-6 : f32
    %145 = vector.broadcast %cst_55 : f32 to vector<56x1xf32>
    %146 = arith.addf %142, %145 : vector<56x1xf32>
    %147 = math.rsqrt %146 : vector<56x1xf32>
    %148 = vector.broadcast %147 : vector<56x1xf32> to vector<56x32xf32>
    %149 = arith.mulf %144, %148 : vector<56x32xf32>
    %150 = vector.broadcast %130 : vector<1x32xf32> to vector<56x32xf32>
    %151 = arith.mulf %149, %150 : vector<56x32xf32>
    %152 = vector.broadcast %131 : vector<1x32xf32> to vector<56x32xf32>
    %153 = arith.addf %151, %152 : vector<56x32xf32>
    %154 = vector.extract_strided_slice %153 {offsets = [0, 0], sizes = [16, 32], strides = [1, 1]} : vector<56x32xf32> to vector<16x32xf32>
    %155 = arith.truncf %154 : vector<16x32xf32> to vector<16x32xbf16>
    %c0_56 = arith.constant 0 : index
    %c0_57 = arith.constant 0 : index
    %156 = vector.load %arg7[%c0_56, %c0_57] : memref<32x96xbf16, #tpu.memory_space<vmem>>, vector<32x96xbf16>
    %cst_58 = arith.constant dense<0.000000e+00> : vector<16x96xf32>
    %157 = tpu.matmul %155, %156, %cst_58 {dimension_numbers = #tpu.dot_dimension_numbers<[1], [0], [0], [1], [0, 0, 1, 1], [], []>} : vector<16x32xbf16>, vector<32x96xbf16>, vector<16x96xf32> -> vector<16x96xf32>
    %c0_59 = arith.constant 0 : index
    %c0_60 = arith.constant 0 : index
    %158 = vector.load %arg11[%c0_59, %c0_60] : memref<1x2944xf32, #tpu.memory_space<vmem>>, vector<1x96xf32>
    %159 = vector.broadcast %158 : vector<1x96xf32> to vector<16x96xf32>
    %160 = arith.addf %157, %159 : vector<16x96xf32>
    %161 = vector.shape_cast %160 : vector<16x96xf32> to vector<2x8x96xf32>
    %162 = vector.extract_strided_slice %161 {offsets = [0, 0, 0], sizes = [2, 8, 8], strides = [1, 1, 1]} : vector<2x8x96xf32> to vector<2x8x8xf32>
    %163 = vector.extract_strided_slice %161 {offsets = [0, 0, 32], sizes = [2, 8, 8], strides = [1, 1, 1]} : vector<2x8x96xf32> to vector<2x8x8xf32>
    %164 = vector.extract_strided_slice %161 {offsets = [0, 0, 64], sizes = [2, 8, 8], strides = [1, 1, 1]} : vector<2x8x96xf32> to vector<2x8x8xf32>
    "tpu.trace_start"() <{level = 10 : i32, message = "btd,bsd->bts"}> : () -> ()
    %cst_61 = arith.constant dense<0.000000e+00> : vector<2x8x8xf32>
    %165 = tpu.matmul %162, %163, %cst_61 {dimension_numbers = #tpu.dot_dimension_numbers<[2], [2], [1], [1], [0, 0, 0, 1, 1, 1], [0], [0]>} : vector<2x8x8xf32>, vector<2x8x8xf32>, vector<2x8x8xf32> -> vector<2x8x8xf32>
    "tpu.trace_stop"() : () -> ()
    %cst_62 = arith.constant 0.353553385 : f32
    %166 = vector.broadcast %cst_62 : f32 to vector<2x8x8xf32>
    %167 = arith.mulf %165, %166 : vector<2x8x8xf32>
    %cst_63 = arith.constant dense<0xFF800000> : vector<2x8xf32>
    %168 = vector.multi_reduction <maximumf>, %167, %cst_63 [2] : vector<2x8x8xf32> to vector<2x8xf32>
    %169 = vector.shape_cast %168 : vector<2x8xf32> to vector<2x8x1xf32>
    %170 = vector.broadcast %169 : vector<2x8x1xf32> to vector<2x8x8xf32>
    %171 = arith.subf %167, %170 : vector<2x8x8xf32>
    %172 = math.exp %171 : vector<2x8x8xf32>
    %cst_64 = arith.constant dense<0.000000e+00> : vector<2x8xf32>
    %173 = vector.multi_reduction <add>, %172, %cst_64 [2] : vector<2x8x8xf32> to vector<2x8xf32>
    %174 = vector.shape_cast %173 : vector<2x8xf32> to vector<2x8x1xf32>
    %175 = tpu.reciprocal %174 {approx = true} : vector<2x8x1xf32> -> vector<2x8x1xf32>
    %176 = vector.broadcast %175 : vector<2x8x1xf32> to vector<2x8x8xf32>
    %177 = arith.mulf %172, %176 : vector<2x8x8xf32>
    "tpu.trace_start"() <{level = 10 : i32, message = "bts,bsd->btd"}> : () -> ()
    %cst_65 = arith.constant dense<0.000000e+00> : vector<2x8x8xf32>
    %178 = tpu.matmul %177, %164, %cst_65 {dimension_numbers = #tpu.dot_dimension_numbers<[2], [1], [1], [2], [0, 0, 0, 1, 1, 2], [0], [0]>} : vector<2x8x8xf32>, vector<2x8x8xf32>, vector<2x8x8xf32> -> vector<2x8x8xf32>
    "tpu.trace_stop"() : () -> ()
    %179 = vector.extract_strided_slice %161 {offsets = [0, 0, 8], sizes = [2, 8, 8], strides = [1, 1, 1]} : vector<2x8x96xf32> to vector<2x8x8xf32>
    %180 = vector.extract_strided_slice %161 {offsets = [0, 0, 40], sizes = [2, 8, 8], strides = [1, 1, 1]} : vector<2x8x96xf32> to vector<2x8x8xf32>
    %181 = vector.extract_strided_slice %161 {offsets = [0, 0, 72], sizes = [2, 8, 8], strides = [1, 1, 1]} : vector<2x8x96xf32> to vector<2x8x8xf32>
    "tpu.trace_start"() <{level = 10 : i32, message = "btd,bsd->bts"}> : () -> ()
    %cst_66 = arith.constant dense<0.000000e+00> : vector<2x8x8xf32>
    %182 = tpu.matmul %179, %180, %cst_66 {dimension_numbers = #tpu.dot_dimension_numbers<[2], [2], [1], [1], [0, 0, 0, 1, 1, 1], [0], [0]>} : vector<2x8x8xf32>, vector<2x8x8xf32>, vector<2x8x8xf32> -> vector<2x8x8xf32>
    "tpu.trace_stop"() : () -> ()
    %cst_67 = arith.constant 0.353553385 : f32
    %183 = vector.broadcast %cst_67 : f32 to vector<2x8x8xf32>
    %184 = arith.mulf %182, %183 : vector<2x8x8xf32>
    %cst_68 = arith.constant dense<0xFF800000> : vector<2x8xf32>
    %185 = vector.multi_reduction <maximumf>, %184, %cst_68 [2] : vector<2x8x8xf32> to vector<2x8xf32>
    %186 = vector.shape_cast %185 : vector<2x8xf32> to vector<2x8x1xf32>
    %187 = vector.broadcast %186 : vector<2x8x1xf32> to vector<2x8x8xf32>
    %188 = arith.subf %184, %187 : vector<2x8x8xf32>
    %189 = math.exp %188 : vector<2x8x8xf32>
    %cst_69 = arith.constant dense<0.000000e+00> : vector<2x8xf32>
    %190 = vector.multi_reduction <add>, %189, %cst_69 [2] : vector<2x8x8xf32> to vector<2x8xf32>
    %191 = vector.shape_cast %190 : vector<2x8xf32> to vector<2x8x1xf32>
    %192 = tpu.reciprocal %191 {approx = true} : vector<2x8x1xf32> -> vector<2x8x1xf32>
    %193 = vector.broadcast %192 : vector<2x8x1xf32> to vector<2x8x8xf32>
    %194 = arith.mulf %189, %193 : vector<2x8x8xf32>
    "tpu.trace_start"() <{level = 10 : i32, message = "bts,bsd->btd"}> : () -> ()
    %cst_70 = arith.constant dense<0.000000e+00> : vector<2x8x8xf32>
    %195 = tpu.matmul %194, %181, %cst_70 {dimension_numbers = #tpu.dot_dimension_numbers<[2], [1], [1], [2], [0, 0, 0, 1, 1, 2], [0], [0]>} : vector<2x8x8xf32>, vector<2x8x8xf32>, vector<2x8x8xf32> -> vector<2x8x8xf32>
    "tpu.trace_stop"() : () -> ()
    %196 = vector.extract_strided_slice %161 {offsets = [0, 0, 16], sizes = [2, 8, 8], strides = [1, 1, 1]} : vector<2x8x96xf32> to vector<2x8x8xf32>
    %197 = vector.extract_strided_slice %161 {offsets = [0, 0, 48], sizes = [2, 8, 8], strides = [1, 1, 1]} : vector<2x8x96xf32> to vector<2x8x8xf32>
    %198 = vector.extract_strided_slice %161 {offsets = [0, 0, 80], sizes = [2, 8, 8], strides = [1, 1, 1]} : vector<2x8x96xf32> to vector<2x8x8xf32>
    "tpu.trace_start"() <{level = 10 : i32, message = "btd,bsd->bts"}> : () -> ()
    %cst_71 = arith.constant dense<0.000000e+00> : vector<2x8x8xf32>
    %199 = tpu.matmul %196, %197, %cst_71 {dimension_numbers = #tpu.dot_dimension_numbers<[2], [2], [1], [1], [0, 0, 0, 1, 1, 1], [0], [0]>} : vector<2x8x8xf32>, vector<2x8x8xf32>, vector<2x8x8xf32> -> vector<2x8x8xf32>
    "tpu.trace_stop"() : () -> ()
    %cst_72 = arith.constant 0.353553385 : f32
    %200 = vector.broadcast %cst_72 : f32 to vector<2x8x8xf32>
    %201 = arith.mulf %199, %200 : vector<2x8x8xf32>
    %cst_73 = arith.constant dense<0xFF800000> : vector<2x8xf32>
    %202 = vector.multi_reduction <maximumf>, %201, %cst_73 [2] : vector<2x8x8xf32> to vector<2x8xf32>
    %203 = vector.shape_cast %202 : vector<2x8xf32> to vector<2x8x1xf32>
    %204 = vector.broadcast %203 : vector<2x8x1xf32> to vector<2x8x8xf32>
    %205 = arith.subf %201, %204 : vector<2x8x8xf32>
    %206 = math.exp %205 : vector<2x8x8xf32>
    %cst_74 = arith.constant dense<0.000000e+00> : vector<2x8xf32>
    %207 = vector.multi_reduction <add>, %206, %cst_74 [2] : vector<2x8x8xf32> to vector<2x8xf32>
    %208 = vector.shape_cast %207 : vector<2x8xf32> to vector<2x8x1xf32>
    %209 = tpu.reciprocal %208 {approx = true} : vector<2x8x1xf32> -> vector<2x8x1xf32>
    %210 = vector.broadcast %209 : vector<2x8x1xf32> to vector<2x8x8xf32>
    %211 = arith.mulf %206, %210 : vector<2x8x8xf32>
    "tpu.trace_start"() <{level = 10 : i32, message = "bts,bsd->btd"}> : () -> ()
    %cst_75 = arith.constant dense<0.000000e+00> : vector<2x8x8xf32>
    %212 = tpu.matmul %211, %198, %cst_75 {dimension_numbers = #tpu.dot_dimension_numbers<[2], [1], [1], [2], [0, 0, 0, 1, 1, 2], [0], [0]>} : vector<2x8x8xf32>, vector<2x8x8xf32>, vector<2x8x8xf32> -> vector<2x8x8xf32>
    "tpu.trace_stop"() : () -> ()
    %213 = vector.extract_strided_slice %161 {offsets = [0, 0, 24], sizes = [2, 8, 8], strides = [1, 1, 1]} : vector<2x8x96xf32> to vector<2x8x8xf32>
    %214 = vector.extract_strided_slice %161 {offsets = [0, 0, 56], sizes = [2, 8, 8], strides = [1, 1, 1]} : vector<2x8x96xf32> to vector<2x8x8xf32>
    %215 = vector.extract_strided_slice %161 {offsets = [0, 0, 88], sizes = [2, 8, 8], strides = [1, 1, 1]} : vector<2x8x96xf32> to vector<2x8x8xf32>
    "tpu.trace_start"() <{level = 10 : i32, message = "btd,bsd->bts"}> : () -> ()
    %cst_76 = arith.constant dense<0.000000e+00> : vector<2x8x8xf32>
    %216 = tpu.matmul %213, %214, %cst_76 {dimension_numbers = #tpu.dot_dimension_numbers<[2], [2], [1], [1], [0, 0, 0, 1, 1, 1], [0], [0]>} : vector<2x8x8xf32>, vector<2x8x8xf32>, vector<2x8x8xf32> -> vector<2x8x8xf32>
    "tpu.trace_stop"() : () -> ()
    %cst_77 = arith.constant 0.353553385 : f32
    %217 = vector.broadcast %cst_77 : f32 to vector<2x8x8xf32>
    %218 = arith.mulf %216, %217 : vector<2x8x8xf32>
    %cst_78 = arith.constant dense<0xFF800000> : vector<2x8xf32>
    %219 = vector.multi_reduction <maximumf>, %218, %cst_78 [2] : vector<2x8x8xf32> to vector<2x8xf32>
    %220 = vector.shape_cast %219 : vector<2x8xf32> to vector<2x8x1xf32>
    %221 = vector.broadcast %220 : vector<2x8x1xf32> to vector<2x8x8xf32>
    %222 = arith.subf %218, %221 : vector<2x8x8xf32>
    %223 = math.exp %222 : vector<2x8x8xf32>
    %cst_79 = arith.constant dense<0.000000e+00> : vector<2x8xf32>
    %224 = vector.multi_reduction <add>, %223, %cst_79 [2] : vector<2x8x8xf32> to vector<2x8xf32>
    %225 = vector.shape_cast %224 : vector<2x8xf32> to vector<2x8x1xf32>
    %226 = tpu.reciprocal %225 {approx = true} : vector<2x8x1xf32> -> vector<2x8x1xf32>
    %227 = vector.broadcast %226 : vector<2x8x1xf32> to vector<2x8x8xf32>
    %228 = arith.mulf %223, %227 : vector<2x8x8xf32>
    "tpu.trace_start"() <{level = 10 : i32, message = "bts,bsd->btd"}> : () -> ()
    %cst_80 = arith.constant dense<0.000000e+00> : vector<2x8x8xf32>
    %229 = tpu.matmul %228, %215, %cst_80 {dimension_numbers = #tpu.dot_dimension_numbers<[2], [1], [1], [2], [0, 0, 0, 1, 1, 2], [0], [0]>} : vector<2x8x8xf32>, vector<2x8x8xf32>, vector<2x8x8xf32> -> vector<2x8x8xf32>
    "tpu.trace_stop"() : () -> ()
    %230 = tpu.concatenate %178, %195, %212, %229 in 2 : vector<2x8x8xf32>, vector<2x8x8xf32>, vector<2x8x8xf32>, vector<2x8x8xf32> -> vector<2x8x32xf32>
    %231 = vector.shape_cast %230 : vector<2x8x32xf32> to vector<16x32xf32>
    %232 = arith.truncf %231 : vector<16x32xf32> to vector<16x32xbf16>
    %c0_81 = arith.constant 0 : index
    %c0_82 = arith.constant 0 : index
    %233 = vector.load %arg8[%c0_81, %c0_82] : memref<32x32xbf16, #tpu.memory_space<vmem>>, vector<32x32xbf16>
    %cst_83 = arith.constant dense<0.000000e+00> : vector<16x32xf32>
    %234 = tpu.matmul %232, %233, %cst_83 {dimension_numbers = #tpu.dot_dimension_numbers<[1], [0], [0], [1], [0, 0, 1, 1], [], []>} : vector<16x32xbf16>, vector<32x32xbf16>, vector<16x32xf32> -> vector<16x32xf32>
    %c0_84 = arith.constant 0 : index
    %c128_85 = arith.constant 128 : index
    %235 = vector.load %arg11[%c0_84, %c128_85] : memref<1x2944xf32, #tpu.memory_space<vmem>>, vector<1x32xf32>
    %236 = vector.broadcast %235 : vector<1x32xf32> to vector<16x32xf32>
    %237 = arith.addf %234, %236 : vector<16x32xf32>
    %238 = arith.addf %154, %237 : vector<16x32xf32>
    %c0_86 = arith.constant 0 : index
    %c2432_87 = arith.constant 2432 : index
    %239 = vector.load %arg11[%c0_86, %c2432_87] : memref<1x2944xf32, #tpu.memory_space<vmem>>, vector<1x32xf32>
    %c0_88 = arith.constant 0 : index
    %c2560_89 = arith.constant 2560 : index
    %240 = vector.load %arg11[%c0_88, %c2560_89] : memref<1x2944xf32, #tpu.memory_space<vmem>>, vector<1x32xf32>
    %cst_90 = arith.constant dense<0.000000e+00> : vector<16xf32>
    %241 = vector.multi_reduction <add>, %238, %cst_90 [1] : vector<16x32xf32> to vector<16xf32>
    %242 = vector.shape_cast %241 : vector<16xf32> to vector<16x1xf32>
    %cst_91 = arith.constant 3.200000e+01 : f32
    %243 = vector.broadcast %cst_91 : f32 to vector<16x1xf32>
    %244 = arith.divf %242, %243 : vector<16x1xf32>
    %245 = vector.broadcast %244 : vector<16x1xf32> to vector<16x32xf32>
    %246 = arith.subf %238, %245 : vector<16x32xf32>
    %247 = arith.mulf %246, %246 : vector<16x32xf32>
    %cst_92 = arith.constant dense<0.000000e+00> : vector<16xf32>
    %248 = vector.multi_reduction <add>, %247, %cst_92 [1] : vector<16x32xf32> to vector<16xf32>
    %249 = vector.shape_cast %248 : vector<16xf32> to vector<16x1xf32>
    %cst_93 = arith.constant 3.200000e+01 : f32
    %250 = vector.broadcast %cst_93 : f32 to vector<16x1xf32>
    %251 = arith.divf %249, %250 : vector<16x1xf32>
    %252 = vector.broadcast %244 : vector<16x1xf32> to vector<16x32xf32>
    %253 = arith.subf %238, %252 : vector<16x32xf32>
    %cst_94 = arith.constant 9.99999974E-6 : f32
    %254 = vector.broadcast %cst_94 : f32 to vector<16x1xf32>
    %255 = arith.addf %251, %254 : vector<16x1xf32>
    %256 = math.rsqrt %255 : vector<16x1xf32>
    %257 = vector.broadcast %256 : vector<16x1xf32> to vector<16x32xf32>
    %258 = arith.mulf %253, %257 : vector<16x32xf32>
    %259 = vector.broadcast %239 : vector<1x32xf32> to vector<16x32xf32>
    %260 = arith.mulf %258, %259 : vector<16x32xf32>
    %261 = vector.broadcast %240 : vector<1x32xf32> to vector<16x32xf32>
    %262 = arith.addf %260, %261 : vector<16x32xf32>
    %263 = arith.truncf %262 : vector<16x32xf32> to vector<16x32xbf16>
    %c0_95 = arith.constant 0 : index
    %c0_96 = arith.constant 0 : index
    %264 = vector.load %arg9[%c0_95, %c0_96] : memref<32x2048xbf16, #tpu.memory_space<vmem>>, vector<32x2048xbf16>
    %cst_97 = arith.constant dense<0.000000e+00> : vector<16x2048xf32>
    %265 = tpu.matmul %263, %264, %cst_97 {dimension_numbers = #tpu.dot_dimension_numbers<[1], [0], [0], [1], [0, 0, 1, 1], [], []>} : vector<16x32xbf16>, vector<32x2048xbf16>, vector<16x2048xf32> -> vector<16x2048xf32>
    %c0_98 = arith.constant 0 : index
    %c256_99 = arith.constant 256 : index
    %266 = vector.load %arg11[%c0_98, %c256_99] : memref<1x2944xf32, #tpu.memory_space<vmem>>, vector<1x2048xf32>
    %267 = vector.broadcast %266 : vector<1x2048xf32> to vector<16x2048xf32>
    %268 = arith.addf %265, %267 : vector<16x2048xf32>
    %cst_100 = arith.constant 0.000000e+00 : f32
    %269 = vector.broadcast %cst_100 : f32 to vector<16x2048xf32>
    %270 = arith.maximumf %268, %269 : vector<16x2048xf32>
    %271 = arith.truncf %270 : vector<16x2048xf32> to vector<16x2048xbf16>
    %c0_101 = arith.constant 0 : index
    %c0_102 = arith.constant 0 : index
    %272 = vector.load %arg10[%c0_101, %c0_102] : memref<2048x32xbf16, #tpu.memory_space<vmem>>, vector<2048x32xbf16>
    %cst_103 = arith.constant dense<0.000000e+00> : vector<16x32xf32>
    %273 = tpu.matmul %271, %272, %cst_103 {dimension_numbers = #tpu.dot_dimension_numbers<[1], [0], [0], [1], [0, 0, 1, 1], [], []>} : vector<16x2048xbf16>, vector<2048x32xbf16>, vector<16x32xf32> -> vector<16x32xf32>
    %c0_104 = arith.constant 0 : index
    %c2304_105 = arith.constant 2304 : index
    %274 = vector.load %arg11[%c0_104, %c2304_105] : memref<1x2944xf32, #tpu.memory_space<vmem>>, vector<1x32xf32>
    %275 = vector.broadcast %274 : vector<1x32xf32> to vector<16x32xf32>
    %276 = arith.addf %273, %275 : vector<16x32xf32>
    %277 = arith.addf %262, %276 : vector<16x32xf32>
    %c0_106 = arith.constant 0 : index
    %c2688_107 = arith.constant 2688 : index
    %278 = vector.load %arg11[%c0_106, %c2688_107] : memref<1x2944xf32, #tpu.memory_space<vmem>>, vector<1x32xf32>
    %c0_108 = arith.constant 0 : index
    %c2816_109 = arith.constant 2816 : index
    %279 = vector.load %arg11[%c0_108, %c2816_109] : memref<1x2944xf32, #tpu.memory_space<vmem>>, vector<1x32xf32>
    %cst_110 = arith.constant dense<0.000000e+00> : vector<16xf32>
    %280 = vector.multi_reduction <add>, %277, %cst_110 [1] : vector<16x32xf32> to vector<16xf32>
    %281 = vector.shape_cast %280 : vector<16xf32> to vector<16x1xf32>
    %cst_111 = arith.constant 3.200000e+01 : f32
    %282 = vector.broadcast %cst_111 : f32 to vector<16x1xf32>
    %283 = arith.divf %281, %282 : vector<16x1xf32>
    %284 = vector.broadcast %283 : vector<16x1xf32> to vector<16x32xf32>
    %285 = arith.subf %277, %284 : vector<16x32xf32>
    %286 = arith.mulf %285, %285 : vector<16x32xf32>
    %cst_112 = arith.constant dense<0.000000e+00> : vector<16xf32>
    %287 = vector.multi_reduction <add>, %286, %cst_112 [1] : vector<16x32xf32> to vector<16xf32>
    %288 = vector.shape_cast %287 : vector<16xf32> to vector<16x1xf32>
    %cst_113 = arith.constant 3.200000e+01 : f32
    %289 = vector.broadcast %cst_113 : f32 to vector<16x1xf32>
    %290 = arith.divf %288, %289 : vector<16x1xf32>
    %291 = vector.broadcast %283 : vector<16x1xf32> to vector<16x32xf32>
    %292 = arith.subf %277, %291 : vector<16x32xf32>
    %cst_114 = arith.constant 9.99999974E-6 : f32
    %293 = vector.broadcast %cst_114 : f32 to vector<16x1xf32>
    %294 = arith.addf %290, %293 : vector<16x1xf32>
    %295 = math.rsqrt %294 : vector<16x1xf32>
    %296 = vector.broadcast %295 : vector<16x1xf32> to vector<16x32xf32>
    %297 = arith.mulf %292, %296 : vector<16x32xf32>
    %298 = vector.broadcast %278 : vector<1x32xf32> to vector<16x32xf32>
    %299 = arith.mulf %297, %298 : vector<16x32xf32>
    %300 = vector.broadcast %279 : vector<1x32xf32> to vector<16x32xf32>
    %301 = arith.addf %299, %300 : vector<16x32xf32>
    %302 = tpu.iota {dimensions = array<i32: 0>} : vector<2x16xi32>
    %303 = tpu.iota {dimensions = array<i32: 1>} : vector<2x16xi32>
    %c8_i32 = arith.constant 8 : i32
    %304 = vector.broadcast %c8_i32 : i32 to vector<2x16xi32>
    %305 = arith.muli %302, %304 : vector<2x16xi32>
    %c7_i32 = arith.constant 7 : i32
    %306 = vector.broadcast %c7_i32 : i32 to vector<2x16xi32>
    %307 = arith.addi %305, %306 : vector<2x16xi32>
    %308 = arith.cmpi eq, %303, %307 : vector<2x16xi32>
    %309 = arith.extui %308 : vector<2x16xi1> to vector<2x16xi32>
    %310 = arith.sitofp %309 : vector<2x16xi32> to vector<2x16xf32>
    %cst_115 = arith.constant dense<0.000000e+00> : vector<2x32xf32>
    %311 = tpu.matmul %310, %301, %cst_115 {dimension_numbers = #tpu.dot_dimension_numbers<[1], [0], [0], [1], [0, 0, 1, 1], [], []>} : vector<2x16xf32>, vector<16x32xf32>, vector<2x32xf32> -> vector<2x32xf32>
    %312 = vector.extract_strided_slice %153 {offsets = [16, 0], sizes = [40, 32], strides = [1, 1]} : vector<56x32xf32> to vector<40x32xf32>
    %313 = tpu.iota {dimensions = array<i32: 0>} : vector<5x40xi32>
    %314 = tpu.iota {dimensions = array<i32: 1>} : vector<5x40xi32>
    %c8_i32_116 = arith.constant 8 : i32
    %315 = vector.broadcast %c8_i32_116 : i32 to vector<5x40xi32>
    %316 = arith.muli %313, %315 : vector<5x40xi32>
    %c5_i32 = arith.constant 5 : i32
    %317 = vector.broadcast %c5_i32 : i32 to vector<5x40xi32>
    %318 = arith.addi %316, %317 : vector<5x40xi32>
    %319 = arith.cmpi eq, %314, %318 : vector<5x40xi32>
    %320 = arith.extui %319 : vector<5x40xi1> to vector<5x40xi32>
    %321 = arith.sitofp %320 : vector<5x40xi32> to vector<5x40xf32>
    %cst_117 = arith.constant dense<0.000000e+00> : vector<5x32xf32>
    %322 = tpu.matmul %321, %312, %cst_117 {dimension_numbers = #tpu.dot_dimension_numbers<[1], [0], [0], [1], [0, 0, 1, 1], [], []>} : vector<5x40xf32>, vector<40x32xf32>, vector<5x32xf32> -> vector<5x32xf32>
    %c0_118 = arith.constant 0 : index
    %c256_119 = arith.constant 256 : index
    %323 = vector.load %arg12[%c0_118, %c256_119] : memref<1x640xf32, #tpu.memory_space<vmem>>, vector<1x32xf32>
    %324 = vector.broadcast %323 : vector<1x32xf32> to vector<2x32xf32>
    %325 = arith.mulf %311, %324 : vector<2x32xf32>
    %cst_120 = arith.constant dense<0.000000e+00> : vector<2xf32>
    %326 = vector.multi_reduction <add>, %325, %cst_120 [1] : vector<2x32xf32> to vector<2xf32>
    %327 = vector.shape_cast %326 : vector<2xf32> to vector<2x1xf32>
    %c0_121 = arith.constant 0 : index
    %c512 = arith.constant 512 : index
    %328 = vector.load %arg12[%c0_121, %c512] : memref<1x640xf32, #tpu.memory_space<vmem>>, vector<1x1xf32>
    %329 = vector.broadcast %328 : vector<1x1xf32> to vector<2x1xf32>
    %330 = arith.addf %327, %329 : vector<2x1xf32>
    %c0_122 = arith.constant 0 : index
    %c0_123 = arith.constant 0 : index
    %331 = vector.load %arg14[%c0_122, %c0_123] : memref<2x1xf32, #tpu.memory_space<vmem>>, vector<2x1xf32>
    tpu.vector_store %arg14[%c0_122, %c0_123], %330 {strides = array<i32>} : memref<2x1xf32, #tpu.memory_space<vmem>>, vector<2x1xf32>,
    %c0_124 = arith.constant 0 : index
    %c0_125 = arith.constant 0 : index
    %332 = vector.load %arg12[%c0_124, %c0_125] : memref<1x640xf32, #tpu.memory_space<vmem>>, vector<1x32xf32>
    %333 = vector.broadcast %332 : vector<1x32xf32> to vector<2x32xf32>
    %334 = arith.mulf %311, %333 : vector<2x32xf32>
    %cst_126 = arith.constant dense<0.000000e+00> : vector<2xf32>
    %335 = vector.multi_reduction <add>, %334, %cst_126 [1] : vector<2x32xf32> to vector<2xf32>
    %336 = vector.shape_cast %335 : vector<2xf32> to vector<2x1xf32>
    %c0_127 = arith.constant 0 : index
    %c128_128 = arith.constant 128 : index
    %337 = vector.load %arg12[%c0_127, %c128_128] : memref<1x640xf32, #tpu.memory_space<vmem>>, vector<1x32xf32>
    %338 = tpu.transpose %322, [1, 0] : vector<5x32xf32> -> vector<32x5xf32>
    %cst_129 = arith.constant dense<0.000000e+00> : vector<1x5xf32>
    %339 = tpu.matmul %337, %338, %cst_129 {dimension_numbers = #tpu.dot_dimension_numbers<[1], [0], [0], [1], [0, 0, 1, 1], [], []>} : vector<1x32xf32>, vector<32x5xf32>, vector<1x5xf32> -> vector<1x5xf32>
    %340 = vector.broadcast %336 : vector<2x1xf32> to vector<2x5xf32>
    %341 = vector.broadcast %339 : vector<1x5xf32> to vector<2x5xf32>
    %342 = arith.addf %340, %341 : vector<2x5xf32>
    %c0_130 = arith.constant 0 : index
    %c384 = arith.constant 384 : index
    %343 = vector.load %arg12[%c0_130, %c384] : memref<1x640xf32, #tpu.memory_space<vmem>>, vector<1x1xf32>
    %344 = vector.broadcast %343 : vector<1x1xf32> to vector<2x5xf32>
    %345 = arith.addf %342, %344 : vector<2x5xf32>
    %cst_131 = arith.constant 0.000000e+00 : f32
    %346 = vector.broadcast %cst_131 : f32 to vector<2x5xf32>
    %347 = arith.maximumf %345, %346 : vector<2x5xf32>
    %c0_132 = arith.constant 0 : index
    %c0_133 = arith.constant 0 : index
    %348 = vector.load %arg13[%c0_132, %c0_133] : memref<2x5xf32, #tpu.memory_space<vmem>>, vector<2x5xf32>
    tpu.vector_store %arg13[%c0_132, %c0_133], %347 {strides = array<i32>} : memref<2x5xf32, #tpu.memory_space<vmem>>, vector<2x5xf32>,
    return
  }
}

</mosaic_0001>

<llo_original>
// kernel: transformer_scorer_forward.1
$region0: #{transformer_scorer_forward.1}
  #allocation0 [shape = 'u32[]', space=smem, size = 0x4, offset = 0x4, fixed_abs, tag = 'smem constant byte address 0x4 - core index']
  #allocation1 [shape = 'u32[144,128]{1,0:T(1,128)}', space=vmem, size = 0x12000, scoped, tag = 'internal scratch']
  %s0 = inlined_call_operand.vmem [shape: f32[7,8,32], index: 0, kind: input, shape index: {}]
  %s1 = inlined_call_operand.vmem [shape: f32[7,8,8], index: 1, kind: input, shape index: {}]
  %s2 = inlined_call_operand.vmem [shape: bf16[32,96], index: 2, kind: input, shape index: {}]
  %s3 = inlined_call_operand.vmem [shape: bf16[32,32], index: 3, kind: input, shape index: {}]
  %s4 = inlined_call_operand.vmem [shape: bf16[32,2048], index: 4, kind: input, shape index: {}]
  %s5 = inlined_call_operand.vmem [shape: bf16[2048,32], index: 5, kind: input, shape index: {}]
  %s6 = inlined_call_operand.vmem [shape: f32[1,2944], index: 6, kind: input, shape index: {}]
  %s7 = inlined_call_operand.vmem [shape: bf16[32,96], index: 7, kind: input, shape index: {}]
  %s8 = inlined_call_operand.vmem [shape: bf16[32,32], index: 8, kind: input, shape index: {}]
  %s9 = inlined_call_operand.vmem [shape: bf16[32,2048], index: 9, kind: input, shape index: {}]
  %s10 = inlined_call_operand.vmem [shape: bf16[2048,32], index: 10, kind: input, shape index: {}]
  %s11 = inlined_call_operand.vmem [shape: f32[1,2944], index: 11, kind: input, shape index: {}]
  %s12 = inlined_call_operand.vmem [shape: f32[1,640], index: 12, kind: input, shape index: {}]
  %s13 = inlined_call_operand.vmem [shape: f32[2,5], index: 13, kind: output, shape index: {0}]
  %s14 = inlined_call_operand.vmem [shape: f32[2,1], index: 14, kind: output, shape index: {1}]
  %15 = xla_tuple %s13, %s14
  %s16 = sld [smem:[#allocation0]]
  $region70: #{transformer_scorer_forward.1} parent=0
    _
  %s18 = ssub.s32 1, %s16
  %s19 = scalar_select 0, %s18, %s16
  // Predicated region
  $region2: #{transformer_scorer_forward.1} parent=0 // pred_check
    _
  $region3: #{transformer_scorer_forward.1} parent=0 // pred_check_branch
    %21 = sbr.rel (0) target = $region5
  $region4: #{transformer_scorer_forward.1} parent=0 // pred_region
    _
  $region5: #{transformer_scorer_forward.1} parent=0 // pred_fallthru
    _
  // Predicated region
  $region6: #{transformer_scorer_forward.1} parent=0 // pred_check
    _
  $region7: #{transformer_scorer_forward.1} parent=0 // pred_check_branch
    %23 = sbr.rel (0) target = $region9
  $region8: #{transformer_scorer_forward.1} parent=0 // pred_region
    _
  $region9: #{transformer_scorer_forward.1} parent=0 // pred_fallthru
    _
  // Predicated region
  $region10: #{transformer_scorer_forward.1} parent=0 // pred_check
    _
  $region11: #{transformer_scorer_forward.1} parent=0 // pred_check_branch
    %25 = sbr.rel (0) target = $region13
  $region12: #{transformer_scorer_forward.1} parent=0 // pred_region
    _
  $region13: #{transformer_scorer_forward.1} parent=0 // pred_fallthru
    _
  // Predicated region
  $region14: #{transformer_scorer_forward.1} parent=0 // pred_check
    _
  $region15: #{transformer_scorer_forward.1} parent=0 // pred_check_branch
    %27 = sbr.rel (0) target = $region17
  $region16: #{transformer_scorer_forward.1} parent=0 // pred_region
    _
  $region17: #{transformer_scorer_forward.1} parent=0 // pred_fallthru
    _
  // Predicated region
  $region18: #{transformer_scorer_forward.1} parent=0 // pred_check
    _
  $region19: #{transformer_scorer_forward.1} parent=0 // pred_check_branch
    %29 = sbr.rel (0) target = $region21
  $region20: #{transformer_scorer_forward.1} parent=0 // pred_region
    _
  $region21: #{transformer_scorer_forward.1} parent=0 // pred_fallthru
    _
  // Predicated region
  $region22: #{transformer_scorer_forward.1} parent=0 // pred_check
    _
  $region23: #{transformer_scorer_forward.1} parent=0 // pred_check_branch
    %31 = sbr.rel (0) target = $region25
  $region24: #{transformer_scorer_forward.1} parent=0 // pred_region
    _
  $region25: #{transformer_scorer_forward.1} parent=0 // pred_fallthru
    _
  // Predicated region
  $region26: #{transformer_scorer_forward.1} parent=0 // pred_check
    _
  $region27: #{transformer_scorer_forward.1} parent=0 // pred_check_branch
    %33 = sbr.rel (0) target = $region29
  $region28: #{transformer_scorer_forward.1} parent=0 // pred_region
    _
  $region29: #{transformer_scorer_forward.1} parent=0 // pred_fallthru
    _
  // Predicated region
  $region30: #{transformer_scorer_forward.1} parent=0 // pred_check
    _
  $region31: #{transformer_scorer_forward.1} parent=0 // pred_check_branch
    %35 = sbr.rel (0) target = $region33
  $region32: #{transformer_scorer_forward.1} parent=0 // pred_region
    _
  $region33: #{transformer_scorer_forward.1} parent=0 // pred_fallthru
    _
  // Predicated region
  $region34: #{transformer_scorer_forward.1} parent=0 // pred_check
    _
  $region35: #{transformer_scorer_forward.1} parent=0 // pred_check_branch
    %37 = sbr.rel (0) target = $region37
  $region36: #{transformer_scorer_forward.1} parent=0 // pred_region
    _
  $region37: #{transformer_scorer_forward.1} parent=0 // pred_fallthru
    _
  // Predicated region
  $region38: #{transformer_scorer_forward.1} parent=0 // pred_check
    _
  $region39: #{transformer_scorer_forward.1} parent=0 // pred_check_branch
    %39 = sbr.rel (0) target = $region41
  $region40: #{transformer_scorer_forward.1} parent=0 // pred_region
    _
  $region41: #{transformer_scorer_forward.1} parent=0 // pred_fallthru
    _
  // Predicated region
  $region42: #{transformer_scorer_forward.1} parent=0 // pred_check
    _
  $region43: #{transformer_scorer_forward.1} parent=0 // pred_check_branch
    %41 = sbr.rel (0) target = $region45
  $region44: #{transformer_scorer_forward.1} parent=0 // pred_region
    _
  $region45: #{transformer_scorer_forward.1} parent=0 // pred_fallthru
    _
  // Predicated region
  $region46: #{transformer_scorer_forward.1} parent=0 // pred_check
    _
  $region47: #{transformer_scorer_forward.1} parent=0 // pred_check_branch
    %43 = sbr.rel (0) target = $region49
  $region48: #{transformer_scorer_forward.1} parent=0 // pred_region
    _
  $region49: #{transformer_scorer_forward.1} parent=0 // pred_fallthru
    _
  // Predicated region
  $region50: #{transformer_scorer_forward.1} parent=0 // pred_check
    _
  $region51: #{transformer_scorer_forward.1} parent=0 // pred_check_branch
    %45 = sbr.rel (0) target = $region53
  $region52: #{transformer_scorer_forward.1} parent=0 // pred_region
    _
  $region53: #{transformer_scorer_forward.1} parent=0 // pred_fallthru
    _
  %v47 = vld [vmem:[%s0] sm:$0xff]
  %v48 = vld [vmem:[%s0 + $0x8] sm:$0xff]
  %v49 = vld [vmem:[%s0 + $0x10] sm:$0xff]
  %v50 = vld [vmem:[%s0 + $0x18] sm:$0xff]
  %v51 = vld [vmem:[%s0 + $0x20] sm:$0xff]
  %v52 = vld [vmem:[%s0 + $0x28] sm:$0xff]
  %v53 = vld [vmem:[%s0 + $0x30] sm:$0xff]
  %v54 = vld [vmem:[%s1] sm:$0xff]
  %v55 = vld [vmem:[%s1 + $0x8] sm:$0xff]
  %v56 = vld [vmem:[%s1 + $0x10] sm:$0xff]
  %v57 = vld [vmem:[%s1 + $0x18] sm:$0xff]
  %v58 = vld [vmem:[%s1 + $0x20] sm:$0xff]
  %v59 = vld [vmem:[%s1 + $0x28] sm:$0xff]
  %v60 = vld [vmem:[%s1 + $0x30] sm:$0xff]
  %v61 = vpack.c.bf16 %v48, %v47
  %v62 = vpack.c.bf16 %v50, %v49
  %v63 = vpack.c.bf16 %v52, %v51
  %v64 = vpack.c.bf16 %v53, %v53
  %v65 = vld [vmem:[%s2] sm:$0xf]
  %v66 = vld [vmem:[%s2 + $0x4] sm:$0xf]
  %v67 = vld [vmem:[%s2 + $0x8] sm:$0xf]
  %v68 = vld [vmem:[%s2 + $0xc] sm:$0xf]
  %v69 = vld [vmem:[%s6] sm:$0x1]
  %v71 = vlaneseq
  %v72 = vshrl.u32 %v71, 7
  %v73 = vsub.s32 0, %v72
  %v74 = vrot.slane %v69, %v73
  %v80 = vunpack.c.l.b16 %v65
  %v81 = vunpack.c.l.b16 %v66
  %v82 = vunpack.c.l.b16 %v67
  %v83 = vunpack.c.l.b16 %v68
  %v84 = vpack.c.b16 %v81, %v80
  %v85 = vpack.c.b16 %v83, %v82
  %vm88 = vcmask 261120
  %v90 = vsel %vm88, %v61, 0
  %v93 = vsel %vm88, %v62, 0
  %v96 = vsel %vm88, %v63, 0
  %v99 = vsel %vm88, %v64, 0
  %101 = vmatprep.subr.bf16.mxu0 0
  %102 = vmatpush1.bf16.msra.mxu0 %v84
  %103 = vmatprep.subr.bf16.mxu0 0
  %104 = vmatpush1.bf16.msra.mxu0 %v85
  %105 = vmatprep.subr.bf16.mxu0 0
  %106 = vmatpush1.bf16.msra.mxu0 0
  %107 = vmatprep.subr.bf16.mxu0 0
  %108 = vmatpush1.bf16.msra.mxu0 0
  %109 = vmatprep.subr.bf16.mxu0 0
  %110 = vmatpush1.bf16.msra.mxu0 0
  %111 = vmatprep.subr.bf16.mxu0 0
  %112 = vmatpush1.bf16.msra.mxu0 0
  %113 = vmatprep.subr.bf16.mxu0 0
  %114 = vmatpush1.bf16.msra.mxu0 0
  %115 = vmatprep.subr.bf16.mxu0 0
  %116 = vmatpush1.bf16.msra.mxu0 0
  %117 = vmatprep.subr.bf16.mxu0 0
  %118 = vmatpush1.bf16.msra.mxu0 0
  %119 = vmatprep.subr.bf16.mxu0 0
  %120 = vmatpush1.bf16.msra.mxu0 0
  %121 = vmatprep.subr.bf16.mxu0 0
  %122 = vmatpush1.bf16.msra.mxu0 0
  %123 = vmatprep.subr.bf16.mxu0 0
  %124 = vmatpush1.bf16.msra.mxu0 0
  %125 = vmatprep.subr.bf16.mxu0 0
  %126 = vmatpush1.bf16.msra.mxu0 0
  %127 = vmatprep.subr.bf16.mxu0 0
  %128 = vmatpush1.bf16.msra.mxu0 0
  %129 = vmatprep.subr.bf16.mxu0 0
  %130 = vmatpush1.bf16.msra.mxu0 0
  %131 = vmatprep.subr.bf16.mxu0 0
  %132 = vmatpush1.bf16.msra.mxu0 0
  %133 = vmatprep.mubr.bf16.mxu0 0
  %134 = vmatmul.mubr.bf16.gmra.mrb[0].mxu0 %v90
  %v135 = vpop.f32.mrb[0].mxu0
  %v136 = vadd.f32 %v74, %v135
  %v137 = vpop.f32.mrb[0].mxu0
  %v138 = vpop.f32.mrb[0].mxu0
  %v139 = vadd.f32 %v74, %v138
  %v140 = vpop.f32.mrb[0].mxu0
  %141 = vmatprep.mubr.bf16.mxu0 0
  %142 = vmatmul.mubr.bf16.gmra.mrb[0].mxu0 %v93
  %v143 = vpop.f32.mrb[0].mxu0
  %v144 = vadd.f32 %v74, %v143
  %v145 = vpop.f32.mrb[0].mxu0
  %v146 = vpop.f32.mrb[0].mxu0
  %v147 = vadd.f32 %v74, %v146
  %v148 = vpop.f32.mrb[0].mxu0
  %149 = vmatprep.mubr.bf16.mxu0 0
  %150 = vmatmul.mubr.bf16.gmra.mrb[0].mxu0 %v96
  %v151 = vpop.f32.mrb[0].mxu0
  %v152 = vadd.f32 %v74, %v151
  %v153 = vpop.f32.mrb[0].mxu0
  %v154 = vpop.f32.mrb[0].mxu0
  %v155 = vadd.f32 %v74, %v154
  %v156 = vpop.f32.mrb[0].mxu0
  %157 = vmatprep.mubr.bf16.mxu0 0
  %158 = vmatmul.mubr.bf16.gmra.mrb[0].mxu0 %v99
  %v159 = vpop.f32.mrb[0].mxu0
  %v160 = vadd.f32 %v74, %v159
  %v161 = vpop.f32.mrb[0].mxu0
  %v162 = vpop.f32.mrb[0].mxu0
  %v163 = vpop.f32.mrb[0].mxu0
  %164 = vdwg.mxu0
  %166 = vrot.lane.b32.xlu0 %v136, 96
  %v167 = vpop.permute.xlu0 %166
  %vm168 = vcmask 64512
  %v169 = vsel %vm168, %v136, 0
  %v171 = vsel %vm168, %v167, 0
  %173 = vmatprep.subr.mxu0 0.0
  %174 = vmatpush1.xpose.msra.mxu0 %v171
  %175 = vmatprep.subr.mxu0 0.0
  %176 = vmatpush1.xpose.msra.mxu0 0.0
  %177 = vmatprep.subr.mxu0 0.0
  %178 = vmatpush1.xpose.msra.mxu0 0.0
  %179 = vmatprep.subr.mxu0 0.0
  %180 = vmatpush1.xpose.msra.mxu0 0.0
  %181 = vmatprep.subr.mxu0 0.0
  %182 = vmatpush1.xpose.msra.mxu0 0.0
  %183 = vmatprep.subr.mxu0 0.0
  %184 = vmatpush1.xpose.msra.mxu0 0.0
  %185 = vmatprep.subr.mxu0 0.0
  %186 = vmatpush1.xpose.msra.mxu0 0.0
  %187 = vmatprep.subr.mxu0 0.0
  %188 = vmatpush1.xpose.msra.mxu0 0.0
  %189 = vmatprep.subr.mxu0 0.0
  %190 = vmatpush1.xpose.msra.mxu0 0.0
  %191 = vmatprep.subr.mxu0 0.0
  %192 = vmatpush1.xpose.msra.mxu0 0.0
  %193 = vmatprep.subr.mxu0 0.0
  %194 = vmatpush1.xpose.msra.mxu0 0.0
  %195 = vmatprep.subr.mxu0 0.0
  %196 = vmatpush1.xpose.msra.mxu0 0.0
  %197 = vmatprep.subr.mxu0 0.0
  %198 = vmatpush1.xpose.msra.mxu0 0.0
  %199 = vmatprep.subr.mxu0 0.0
  %200 = vmatpush1.xpose.msra.mxu0 0.0
  %201 = vmatprep.subr.mxu0 0.0
  %202 = vmatpush1.xpose.msra.mxu0 0.0
  %203 = vmatprep.subr.mxu0 0.0
  %204 = vmatpush1.xpose.msra.mxu0 0.0
  %205 = vmatprep.subr.mxu0 0.0
  %206 = vmatpush1.xpose.msra.mxu0 0.0
  %207 = vmatprep.subr.mxu0 0.0
  %208 = vmatpush1.xpose.msra.mxu0 0.0
  %209 = vmatprep.subr.mxu0 0.0
  %210 = vmatpush1.xpose.msra.mxu0 0.0
  %211 = vmatprep.subr.mxu0 0.0
  %212 = vmatpush1.xpose.msra.mxu0 0.0
  %213 = vmatprep.subr.mxu0 0.0
  %214 = vmatpush1.xpose.msra.mxu0 0.0
  %215 = vmatprep.subr.mxu0 0.0
  %216 = vmatpush1.xpose.msra.mxu0 0.0
  %217 = vmatprep.subr.mxu0 0.0
  %218 = vmatpush1.xpose.msra.mxu0 0.0
  %219 = vmatprep.subr.mxu0 0.0
  %220 = vmatpush1.xpose.msra.mxu0 0.0
  %221 = vmatprep.subr.mxu0 0.0
  %222 = vmatpush1.xpose.msra.mxu0 0.0
  %223 = vmatprep.subr.mxu0 0.0
  %224 = vmatpush1.xpose.msra.mxu0 0.0
  %225 = vmatprep.subr.mxu0 0.0
  %226 = vmatpush1.xpose.msra.mxu0 0.0
  %227 = vmatprep.subr.mxu0 0.0
  %228 = vmatpush1.xpose.msra.mxu0 0.0
  %229 = vmatprep.subr.mxu0 0.0
  %230 = vmatpush1.xpose.msra.mxu0 0.0
  %231 = vmatprep.subr.mxu0 0.0
  %232 = vmatpush1.xpose.msra.mxu0 0.0
  %233 = vmatprep.subr.mxu0 0.0
  %234 = vmatpush1.xpose.msra.mxu0 0.0
  %235 = vmatprep.subr.mxu0 0.0
  %236 = vmatpush1.xpose.msra.mxu0 0.0
  %237 = vmatprep.mubr.f32.mxu0 0.0
  %238 = vmatmul.mubr.f32.gmra.mrb[0].mxu0 %v169
  %v239 = vpop.f32.mrb[0].mxu0
  %v240 = vadd.f32 0.0, %v239
  %v241 = vpop.f32.mrb[0].mxu0
  %242 = vdwg.mxu0
  %244 = vrot.lane.b32.xlu0 %v139, 96
  %v245 = vpop.permute.xlu0 %244
  %v246 = vsel %vm168, %v139, 0
  %v248 = vsel %vm168, %v245, 0
  %250 = vmatprep.subr.mxu0 0.0
  %251 = vmatpush1.xpose.msra.mxu0 %v248
  %252 = vmatprep.subr.mxu0 0.0
  %253 = vmatpush1.xpose.msra.mxu0 0.0
  %254 = vmatprep.subr.mxu0 0.0
  %255 = vmatpush1.xpose.msra.mxu0 0.0
  %256 = vmatprep.subr.mxu0 0.0
  %257 = vmatpush1.xpose.msra.mxu0 0.0
  %258 = vmatprep.subr.mxu0 0.0
  %259 = vmatpush1.xpose.msra.mxu0 0.0
  %260 = vmatprep.subr.mxu0 0.0
  %261 = vmatpush1.xpose.msra.mxu0 0.0
  %262 = vmatprep.subr.mxu0 0.0
  %263 = vmatpush1.xpose.msra.mxu0 0.0
  %264 = vmatprep.subr.mxu0 0.0
  %265 = vmatpush1.xpose.msra.mxu0 0.0
  %266 = vmatprep.subr.mxu0 0.0
  %267 = vmatpush1.xpose.msra.mxu0 0.0
  %268 = vmatprep.subr.mxu0 0.0
  %269 = vmatpush1.xpose.msra.mxu0 0.0
  %270 = vmatprep.subr.mxu0 0.0
  %271 = vmatpush1.xpose.msra.mxu0 0.0
  %272 = vmatprep.subr.mxu0 0.0
  %273 = vmatpush1.xpose.msra.mxu0 0.0
  %274 = vmatprep.subr.mxu0 0.0
  %275 = vmatpush1.xpose.msra.mxu0 0.0
  %276 = vmatprep.subr.mxu0 0.0
  %277 = vmatpush1.xpose.msra.mxu0 0.0
  %278 = vmatprep.subr.mxu0 0.0
  %279 = vmatpush1.xpose.msra.mxu0 0.0
  %280 = vmatprep.subr.mxu0 0.0
  %281 = vmatpush1.xpose.msra.mxu0 0.0
  %282 = vmatprep.subr.mxu0 0.0
  %283 = vmatpush1.xpose.msra.mxu0 0.0
  %284 = vmatprep.subr.mxu0 0.0
  %285 = vmatpush1.xpose.msra.mxu0 0.0
  %286 = vmatprep.subr.mxu0 0.0
  %287 = vmatpush1.xpose.msra.mxu0 0.0
  %288 = vmatprep.subr.mxu0 0.0
  %289 = vmatpush1.xpose.msra.mxu0 0.0
  %290 = vmatprep.subr.mxu0 0.0
  %291 = vmatpush1.xpose.msra.mxu0 0.0
  %292 = vmatprep.subr.mxu0 0.0
  %293 = vmatpush1.xpose.msra.mxu0 0.0
  %294 = vmatprep.subr.mxu0 0.0
  %295 = vmatpush1.xpose.msra.mxu0 0.0
  %296 = vmatprep.subr.mxu0 0.0
  %297 = vmatpush1.xpose.msra.mxu0 0.0
  %298 = vmatprep.subr.mxu0 0.0
  %299 = vmatpush1.xpose.msra.mxu0 0.0
  %300 = vmatprep.subr.mxu0 0.0
  %301 = vmatpush1.xpose.msra.mxu0 0.0
  %302 = vmatprep.subr.mxu0 0.0
  %303 = vmatpush1.xpose.msra.mxu0 0.0
  %304 = vmatprep.subr.mxu0 0.0
  %305 = vmatpush1.xpose.msra.mxu0 0.0
  %306 = vmatprep.subr.mxu0 0.0
  %307 = vmatpush1.xpose.msra.mxu0 0.0
  %308 = vmatprep.subr.mxu0 0.0
  %309 = vmatpush1.xpose.msra.mxu0 0.0
  %310 = vmatprep.subr.mxu0 0.0
  %311 = vmatpush1.xpose.msra.mxu0 0.0
  %312 = vmatprep.subr.mxu0 0.0
  %313 = vmatpush1.xpose.msra.mxu0 0.0
  %314 = vmatprep.mubr.f32.mxu0 0.0
  %315 = vmatmul.mubr.f32.gmra.mrb[0].mxu0 %v246
  %v316 = vpop.f32.mrb[0].mxu0
  %v317 = vadd.f32 0.0, %v316
  %v318 = vpop.f32.mrb[0].mxu0
  %319 = vdwg.mxu0
  %321 = vrot.lane.b32.xlu0 %v144, 96
  %v322 = vpop.permute.xlu0 %321
  %v323 = vsel %vm168, %v144, 0
  %v325 = vsel %vm168, %v322, 0
  %327 = vmatprep.subr.mxu0 0.0
  %328 = vmatpush1.xpose.msra.mxu0 %v325
  %329 = vmatprep.subr.mxu0 0.0
  %330 = vmatpush1.xpose.msra.mxu0 0.0
  %331 = vmatprep.subr.mxu0 0.0
  %332 = vmatpush1.xpose.msra.mxu0 0.0
  %333 = vmatprep.subr.mxu0 0.0
  %334 = vmatpush1.xpose.msra.mxu0 0.0
  %335 = vmatprep.subr.mxu0 0.0
  %336 = vmatpush1.xpose.msra.mxu0 0.0
  %337 = vmatprep.subr.mxu0 0.0
  %338 = vmatpush1.xpose.msra.mxu0 0.0
  %339 = vmatprep.subr.mxu0 0.0
  %340 = vmatpush1.xpose.msra.mxu0 0.0
  %341 = vmatprep.subr.mxu0 0.0
  %342 = vmatpush1.xpose.msra.mxu0 0.0
  %343 = vmatprep.subr.mxu0 0.0
  %344 = vmatpush1.xpose.msra.mxu0 0.0
  %345 = vmatprep.subr.mxu0 0.0
  %346 = vmatpush1.xpose.msra.mxu0 0.0
  %347 = vmatprep.subr.mxu0 0.0
  %348 = vmatpush1.xpose.msra.mxu0 0.0
  %349 = vmatprep.subr.mxu0 0.0
  %350 = vmatpush1.xpose.msra.mxu0 0.0
  %351 = vmatprep.subr.mxu0 0.0
  %352 = vmatpush1.xpose.msra.mxu0 0.0
  %353 = vmatprep.subr.mxu0 0.0
  %354 = vmatpush1.xpose.msra.mxu0 0.0
  %355 = vmatprep.subr.mxu0 0.0
  %356 = vmatpush1.xpose.msra.mxu0 0.0
  %357 = vmatprep.subr.mxu0 0.0
  %358 = vmatpush1.xpose.msra.mxu0 0.0
  %359 = vmatprep.subr.mxu0 0.0
  %360 = vmatpush1.xpose.msra.mxu0 0.0
  %361 = vmatprep.subr.mxu0 0.0
  %362 = vmatpush1.xpose.msra.mxu0 0.0
  %363 = vmatprep.subr.mxu0 0.0
  %364 = vmatpush1.xpose.msra.mxu0 0.0
  %365 = vmatprep.subr.mxu0 0.0
  %366 = vmatpush1.xpose.msra.mxu0 0.0
  %367 = vmatprep.subr.mxu0 0.0
  %368 = vmatpush1.xpose.msra.mxu0 0.0
  %369 = vmatprep.subr.mxu0 0.0
  %370 = vmatpush1.xpose.msra.mxu0 0.0
  %371 = vmatprep.subr.mxu0 0.0
  %372 = vmatpush1.xpose.msra.mxu0 0.0
  %373 = vmatprep.subr.mxu0 0.0
  %374 = vmatpush1.xpose.msra.mxu0 0.0
  %375 = vmatprep.subr.mxu0 0.0
  %376 = vmatpush1.xpose.msra.mxu0 0.0
  %377 = vmatprep.subr.mxu0 0.0
  %378 = vmatpush1.xpose.msra.mxu0 0.0
  %379 = vmatprep.subr.mxu0 0.0
  %380 = vmatpush1.xpose.msra.mxu0 0.0
  %381 = vmatprep.subr.mxu0 0.0
  %382 = vmatpush1.xpose.msra.mxu0 0.0
  %383 = vmatprep.subr.mxu0 0.0
  %384 = vmatpush1.xpose.msra.mxu0 0.0
  %385 = vmatprep.subr.mxu0 0.0
  %386 = vmatpush1.xpose.msra.mxu0 0.0
  %387 = vmatprep.subr.mxu0 0.0
  %388 = vmatpush1.xpose.msra.mxu0 0.0
  %389 = vmatprep.subr.mxu0 0.0
  %390 = vmatpush1.xpose.msra.mxu0 0.0
  %391 = vmatprep.mubr.f32.mxu0 0.0
  %392 = vmatmul.mubr.f32.gmra.mrb[0].mxu0 %v323
  %v393 = vpop.f32.mrb[0].mxu0
  %v394 = vadd.f32 0.0, %v393
  %v395 = vpop.f32.mrb[0].mxu0
  %396 = vdwg.mxu0
  %398 = vrot.lane.b32.xlu0 %v147, 96
  %v399 = vpop.permute.xlu0 %398
  %v400 = vsel %vm168, %v147, 0
  %v402 = vsel %vm168, %v399, 0
  %404 = vmatprep.subr.mxu0 0.0
  %405 = vmatpush1.xpose.msra.mxu0 %v402
  %406 = vmatprep.subr.mxu0 0.0
  %407 = vmatpush1.xpose.msra.mxu0 0.0
  %408 = vmatprep.subr.mxu0 0.0
  %409 = vmatpush1.xpose.msra.mxu0 0.0
  %410 = vmatprep.subr.mxu0 0.0
  %411 = vmatpush1.xpose.msra.mxu0 0.0
  %412 = vmatprep.subr.mxu0 0.0
  %413 = vmatpush1.xpose.msra.mxu0 0.0
  %414 = vmatprep.subr.mxu0 0.0
  %415 = vmatpush1.xpose.msra.mxu0 0.0
  %416 = vmatprep.subr.mxu0 0.0
  %417 = vmatpush1.xpose.msra.mxu0 0.0
  %418 = vmatprep.subr.mxu0 0.0
  %419 = vmatpush1.xpose.msra.mxu0 0.0
  %420 = vmatprep.subr.mxu0 0.0
  %421 = vmatpush1.xpose.msra.mxu0 0.0
  %422 = vmatprep.subr.mxu0 0.0
  %423 = vmatpush1.xpose.msra.mxu0 0.0
  %424 = vmatprep.subr.mxu0 0.0
  %425 = vmatpush1.xpose.msra.mxu0 0.0
  %426 = vmatprep.subr.mxu0 0.0
  %427 = vmatpush1.xpose.msra.mxu0 0.0
  %428 = vmatprep.subr.mxu0 0.0
  %429 = vmatpush1.xpose.msra.mxu0 0.0
  %430 = vmatprep.subr.mxu0 0.0
  %431 = vmatpush1.xpose.msra.mxu0 0.0
  %432 = vmatprep.subr.mxu0 0.0
  %433 = vmatpush1.xpose.msra.mxu0 0.0
  %434 = vmatprep.subr.mxu0 0.0
  %435 = vmatpush1.xpose.msra.mxu0 0.0
  %436 = vmatprep.subr.mxu0 0.0
  %437 = vmatpush1.xpose.msra.mxu0 0.0
  %438 = vmatprep.subr.mxu0 0.0
  %439 = vmatpush1.xpose.msra.mxu0 0.0
  %440 = vmatprep.subr.mxu0 0.0
  %441 = vmatpush1.xpose.msra.mxu0 0.0
  %442 = vmatprep.subr.mxu0 0.0
  %443 = vmatpush1.xpose.msra.mxu0 0.0
  %444 = vmatprep.subr.mxu0 0.0
  %445 = vmatpush1.xpose.msra.mxu0 0.0
  %446 = vmatprep.subr.mxu0 0.0
  %447 = vmatpush1.xpose.msra.mxu0 0.0
  %448 = vmatprep.subr.mxu0 0.0
  %449 = vmatpush1.xpose.msra.mxu0 0.0
  %450 = vmatprep.subr.mxu0 0.0
  %451 = vmatpush1.xpose.msra.mxu0 0.0
  %452 = vmatprep.subr.mxu0 0.0
  %453 = vmatpush1.xpose.msra.mxu0 0.0
  %454 = vmatprep.subr.mxu0 0.0
  %455 = vmatpush1.xpose.msra.mxu0 0.0
  %456 = vmatprep.subr.mxu0 0.0
  %457 = vmatpush1.xpose.msra.mxu0 0.0
  %458 = vmatprep.subr.mxu0 0.0
  %459 = vmatpush1.xpose.msra.mxu0 0.0
  %460 = vmatprep.subr.mxu0 0.0
  %461 = vmatpush1.xpose.msra.mxu0 0.0
  %462 = vmatprep.subr.mxu0 0.0
  %463 = vmatpush1.xpose.msra.mxu0 0.0
  %464 = vmatprep.subr.mxu0 0.0
  %465 = vmatpush1.xpose.msra.mxu0 0.0
  %466 = vmatprep.subr.mxu0 0.0
  %467 = vmatpush1.xpose.msra.mxu0 0.0
  %468 = vmatprep.mubr.f32.mxu0 0.0
  %469 = vmatmul.mubr.f32.gmra.mrb[0].mxu0 %v400
  %v470 = vpop.f32.mrb[0].mxu0
  %v471 = vadd.f32 0.0, %v470
  %v472 = vpop.f32.mrb[0].mxu0
  %473 = vdwg.mxu0
  %475 = vrot.lane.b32.xlu0 %v152, 96
  %v476 = vpop.permute.xlu0 %475
  %v477 = vsel %vm168, %v152, 0
  %v479 = vsel %vm168, %v476, 0
  %481 = vmatprep.subr.mxu0 0.0
  %482 = vmatpush1.xpose.msra.mxu0 %v479
  %483 = vmatprep.subr.mxu0 0.0
  %484 = vmatpush1.xpose.msra.mxu0 0.0
  %485 = vmatprep.subr.mxu0 0.0
  %486 = vmatpush1.xpose.msra.mxu0 0.0
  %487 = vmatprep.subr.mxu0 0.0
  %488 = vmatpush1.xpose.msra.mxu0 0.0
  %489 = vmatprep.subr.mxu0 0.0
  %490 = vmatpush1.xpose.msra.mxu0 0.0
  %491 = vmatprep.subr.mxu0 0.0
  %492 = vmatpush1.xpose.msra.mxu0 0.0
  %493 = vmatprep.subr.mxu0 0.0
  %494 = vmatpush1.xpose.msra.mxu0 0.0
  %495 = vmatprep.subr.mxu0 0.0
  %496 = vmatpush1.xpose.msra.mxu0 0.0
  %497 = vmatprep.subr.mxu0 0.0
  %498 = vmatpush1.xpose.msra.mxu0 0.0
  %499 = vmatprep.subr.mxu0 0.0
  %500 = vmatpush1.xpose.msra.mxu0 0.0
  %501 = vmatprep.subr.mxu0 0.0
  %502 = vmatpush1.xpose.msra.mxu0 0.0
  %503 = vmatprep.subr.mxu0 0.0
  %504 = vmatpush1.xpose.msra.mxu0 0.0
  %505 = vmatprep.subr.mxu0 0.0
  %506 = vmatpush1.xpose.msra.mxu0 0.0
  %507 = vmatprep.subr.mxu0 0.0
  %508 = vmatpush1.xpose.msra.mxu0 0.0
  %509 = vmatprep.subr.mxu0 0.0
  %510 = vmatpush1.xpose.msra.mxu0 0.0
  %511 = vmatprep.subr.mxu0 0.0
  %512 = vmatpush1.xpose.msra.mxu0 0.0
  %513 = vmatprep.subr.mxu0 0.0
  %514 = vmatpush1.xpose.msra.mxu0 0.0
  %515 = vmatprep.subr.mxu0 0.0
  %516 = vmatpush1.xpose.msra.mxu0 0.0
  %517 = vmatprep.subr.mxu0 0.0
  %518 = vmatpush1.xpose.msra.mxu0 0.0
  %519 = vmatprep.subr.mxu0 0.0
  %520 = vmatpush1.xpose.msra.mxu0 0.0
  %521 = vmatprep.subr.mxu0 0.0
  %522 = vmatpush1.xpose.msra.mxu0 0.0
  %523 = vmatprep.subr.mxu0 0.0
  %524 = vmatpush1.xpose.msra.mxu0 0.0
  %525 = vmatprep.subr.mxu0 0.0
  %526 = vmatpush1.xpose.msra.mxu0 0.0
  %527 = vmatprep.subr.mxu0 0.0
  %528 = vmatpush1.xpose.msra.mxu0 0.0
  %529 = vmatprep.subr.mxu0 0.0
  %530 = vmatpush1.xpose.msra.mxu0 0.0
  %531 = vmatprep.subr.mxu0 0.0
  %532 = vmatpush1.xpose.msra.mxu0 0.0
  %533 = vmatprep.subr.mxu0 0.0
  %534 = vmatpush1.xpose.msra.mxu0 0.0
  %535 = vmatprep.subr.mxu0 0.0
  %536 = vmatpush1.xpose.msra.mxu0 0.0
  %537 = vmatprep.subr.mxu0 0.0
  %538 = vmatpush1.xpose.msra.mxu0 0.0
  %539 = vmatprep.subr.mxu0 0.0
  %540 = vmatpush1.xpose.msra.mxu0 0.0
  %541 = vmatprep.subr.mxu0 0.0
  %542 = vmatpush1.xpose.msra.mxu0 0.0
  %543 = vmatprep.subr.mxu0 0.0
  %544 = vmatpush1.xpose.msra.mxu0 0.0
  %545 = vmatprep.mubr.f32.mxu0 0.0
  %546 = vmatmul.mubr.f32.gmra.mrb[0].mxu0 %v477
  %v547 = vpop.f32.mrb[0].mxu0
  %v548 = vadd.f32 0.0, %v547
  %v549 = vpop.f32.mrb[0].mxu0
  %550 = vdwg.mxu0
  %552 = vrot.lane.b32.xlu0 %v155, 96
  %v553 = vpop.permute.xlu0 %552
  %v554 = vsel %vm168, %v155, 0
  %v556 = vsel %vm168, %v553, 0
  %558 = vmatprep.subr.mxu0 0.0
  %559 = vmatpush1.xpose.msra.mxu0 %v556
  %560 = vmatprep.subr.mxu0 0.0
  %561 = vmatpush1.xpose.msra.mxu0 0.0
  %562 = vmatprep.subr.mxu0 0.0
  %563 = vmatpush1.xpose.msra.mxu0 0.0
  %564 = vmatprep.subr.mxu0 0.0
  %565 = vmatpush1.xpose.msra.mxu0 0.0
  %566 = vmatprep.subr.mxu0 0.0
  %567 = vmatpush1.xpose.msra.mxu0 0.0
  %568 = vmatprep.subr.mxu0 0.0
  %569 = vmatpush1.xpose.msra.mxu0 0.0
  %570 = vmatprep.subr.mxu0 0.0
  %571 = vmatpush1.xpose.msra.mxu0 0.0
  %572 = vmatprep.subr.mxu0 0.0
  %573 = vmatpush1.xpose.msra.mxu0 0.0
  %574 = vmatprep.subr.mxu0 0.0
  %575 = vmatpush1.xpose.msra.mxu0 0.0
  %576 = vmatprep.subr.mxu0 0.0
  %577 = vmatpush1.xpose.msra.mxu0 0.0
  %578 = vmatprep.subr.mxu0 0.0
  %579 = vmatpush1.xpose.msra.mxu0 0.0
  %580 = vmatprep.subr.mxu0 0.0
  %581 = vmatpush1.xpose.msra.mxu0 0.0
  %582 = vmatprep.subr.mxu0 0.0
  %583 = vmatpush1.xpose.msra.mxu0 0.0
  %584 = vmatprep.subr.mxu0 0.0
  %585 = vmatpush1.xpose.msra.mxu0 0.0
  %586 = vmatprep.subr.mxu0 0.0
  %587 = vmatpush1.xpose.msra.mxu0 0.0
  %588 = vmatprep.subr.mxu0 0.0
  %589 = vmatpush1.xpose.msra.mxu0 0.0
  %590 = vmatprep.subr.mxu0 0.0
  %591 = vmatpush1.xpose.msra.mxu0 0.0
  %592 = vmatprep.subr.mxu0 0.0
  %593 = vmatpush1.xpose.msra.mxu0 0.0
  %594 = vmatprep.subr.mxu0 0.0
  %595 = vmatpush1.xpose.msra.mxu0 0.0
  %596 = vmatprep.subr.mxu0 0.0
  %597 = vmatpush1.xpose.msra.mxu0 0.0
  %598 = vmatprep.subr.mxu0 0.0
  %599 = vmatpush1.xpose.msra.mxu0 0.0
  %600 = vmatprep.subr.mxu0 0.0
  %601 = vmatpush1.xpose.msra.mxu0 0.0
  %602 = vmatprep.subr.mxu0 0.0
  %603 = vmatpush1.xpose.msra.mxu0 0.0
  %604 = vmatprep.subr.mxu0 0.0
  %605 = vmatpush1.xpose.msra.mxu0 0.0
  %606 = vmatprep.subr.mxu0 0.0
  %607 = vmatpush1.xpose.msra.mxu0 0.0
  %608 = vmatprep.subr.mxu0 0.0
  %609 = vmatpush1.xpose.msra.mxu0 0.0
  %610 = vmatprep.subr.mxu0 0.0
  %611 = vmatpush1.xpose.msra.mxu0 0.0
  %612 = vmatprep.subr.mxu0 0.0
  %613 = vmatpush1.xpose.msra.mxu0 0.0
  %614 = vmatprep.subr.mxu0 0.0
  %615 = vmatpush1.xpose.msra.mxu0 0.0
  %616 = vmatprep.subr.mxu0 0.0
  %617 = vmatpush1.xpose.msra.mxu0 0.0
  %618 = vmatprep.subr.mxu0 0.0
  %619 = vmatpush1.xpose.msra.mxu0 0.0
  %620 = vmatprep.subr.mxu0 0.0
  %621 = vmatpush1.xpose.msra.mxu0 0.0
  %622 = vmatprep.mubr.f32.mxu0 0.0
  %623 = vmatmul.mubr.f32.gmra.mrb[0].mxu0 %v554
  %v624 = vpop.f32.mrb[0].mxu0
  %v625 = vadd.f32 0.0, %v624
  %v626 = vpop.f32.mrb[0].mxu0
  %627 = vdwg.mxu0
  %629 = vrot.lane.b32.xlu0 %v160, 96
  %v630 = vpop.permute.xlu0 %629
  %v631 = vsel %vm168, %v160, 0
  %v633 = vsel %vm168, %v630, 0
  %635 = vmatprep.subr.mxu0 0.0
  %636 = vmatpush1.xpose.msra.mxu0 %v633
  %637 = vmatprep.subr.mxu0 0.0
  %638 = vmatpush1.xpose.msra.mxu0 0.0
  %639 = vmatprep.subr.mxu0 0.0
  %640 = vmatpush1.xpose.msra.mxu0 0.0
  %641 = vmatprep.subr.mxu0 0.0
  %642 = vmatpush1.xpose.msra.mxu0 0.0
  %643 = vmatprep.subr.mxu0 0.0
  %644 = vmatpush1.xpose.msra.mxu0 0.0
  %645 = vmatprep.subr.mxu0 0.0
  %646 = vmatpush1.xpose.msra.mxu0 0.0
  %647 = vmatprep.subr.mxu0 0.0
  %648 = vmatpush1.xpose.msra.mxu0 0.0
  %649 = vmatprep.subr.mxu0 0.0
  %650 = vmatpush1.xpose.msra.mxu0 0.0
  %651 = vmatprep.subr.mxu0 0.0
  %652 = vmatpush1.xpose.msra.mxu0 0.0
  %653 = vmatprep.subr.mxu0 0.0
  %654 = vmatpush1.xpose.msra.mxu0 0.0
  %655 = vmatprep.subr.mxu0 0.0
  %656 = vmatpush1.xpose.msra.mxu0 0.0
  %657 = vmatprep.subr.mxu0 0.0
  %658 = vmatpush1.xpose.msra.mxu0 0.0
  %659 = vmatprep.subr.mxu0 0.0
  %660 = vmatpush1.xpose.msra.mxu0 0.0
  %661 = vmatprep.subr.mxu0 0.0
  %662 = vmatpush1.xpose.msra.mxu0 0.0
  %663 = vmatprep.subr.mxu0 0.0
  %664 = vmatpush1.xpose.msra.mxu0 0.0
  %665 = vmatprep.subr.mxu0 0.0
  %666 = vmatpush1.xpose.msra.mxu0 0.0
  %667 = vmatprep.subr.mxu0 0.0
  %668 = vmatpush1.xpose.msra.mxu0 0.0
  %669 = vmatprep.subr.mxu0 0.0
  %670 = vmatpush1.xpose.msra.mxu0 0.0
  %671 = vmatprep.subr.mxu0 0.0
  %672 = vmatpush1.xpose.msra.mxu0 0.0
  %673 = vmatprep.subr.mxu0 0.0
  %674 = vmatpush1.xpose.msra.mxu0 0.0
  %675 = vmatprep.subr.mxu0 0.0
  %676 = vmatpush1.xpose.msra.mxu0 0.0
  %677 = vmatprep.subr.mxu0 0.0
  %678 = vmatpush1.xpose.msra.mxu0 0.0
  %679 = vmatprep.subr.mxu0 0.0
  %680 = vmatpush1.xpose.msra.mxu0 0.0
  %681 = vmatprep.subr.mxu0 0.0
  %682 = vmatpush1.xpose.msra.mxu0 0.0
  %683 = vmatprep.subr.mxu0 0.0
  %684 = vmatpush1.xpose.msra.mxu0 0.0
  %685 = vmatprep.subr.mxu0 0.0
  %686 = vmatpush1.xpose.msra.mxu0 0.0
  %687 = vmatprep.subr.mxu0 0.0
  %688 = vmatpush1.xpose.msra.mxu0 0.0
  %689 = vmatprep.subr.mxu0 0.0
  %690 = vmatpush1.xpose.msra.mxu0 0.0
  %691 = vmatprep.subr.mxu0 0.0
  %692 = vmatpush1.xpose.msra.mxu0 0.0
  %693 = vmatprep.subr.mxu0 0.0
  %694 = vmatpush1.xpose.msra.mxu0 0.0
  %695 = vmatprep.subr.mxu0 0.0
  %696 = vmatpush1.xpose.msra.mxu0 0.0
  %697 = vmatprep.subr.mxu0 0.0
  %698 = vmatpush1.xpose.msra.mxu0 0.0
  %699 = vmatprep.mubr.f32.mxu0 0.0
  %700 = vmatmul.mubr.f32.gmra.mrb[0].mxu0 %v631
  %v701 = vpop.f32.mrb[0].mxu0
  %v702 = vadd.f32 0.0, %v701
  %v703 = vpop.f32.mrb[0].mxu0
  %704 = vdwg.mxu0
  %v705 = vmul.f32 %v240, 0.35355338
  %v706 = vmul.f32 %v317, 0.35355338
  %v707 = vmul.f32 %v394, 0.35355338
  %v708 = vmul.f32 %v471, 0.35355338
  %v709 = vmul.f32 %v548, 0.35355338
  %v710 = vmul.f32 %v625, 0.35355338
  %v711 = vmul.f32 %v702, 0.35355338
  %v712 = vadd.f32 %v705, %v54
  %v713 = vadd.f32 %v706, %v55
  %v714 = vadd.f32 %v707, %v56
  %v715 = vadd.f32 %v708, %v57
  %v716 = vadd.f32 %v709, %v58
  %v717 = vadd.f32 %v710, %v59
  %v718 = vadd.f32 %v711, %v60
  %v719 = vsel %vm168, %v712, -inf
  %720 = vmax.xlane.f32.xlu0 %v719
  %v721 = vpop.xlane.xlu0 %720
  %v722 = vsel %vm168, %v713, -inf
  %723 = vmax.xlane.f32.xlu0 %v722
  %v724 = vpop.xlane.xlu0 %723
  %v725 = vsel %vm168, %v714, -inf
  %726 = vmax.xlane.f32.xlu0 %v725
  %v727 = vpop.xlane.xlu0 %726
  %v728 = vsel %vm168, %v715, -inf
  %729 = vmax.xlane.f32.xlu0 %v728
  %v730 = vpop.xlane.xlu0 %729
  %v731 = vsel %vm168, %v716, -inf
  %732 = vmax.xlane.f32.xlu0 %v731
  %v733 = vpop.xlane.xlu0 %732
  %v734 = vsel %vm168, %v717, -inf
  %735 = vmax.xlane.f32.xlu0 %v734
  %v736 = vpop.xlane.xlu0 %735
  %v737 = vsel %vm168, %v718, -inf
  %738 = vmax.xlane.f32.xlu0 %v737
  %v739 = vpop.xlane.xlu0 %738
  %v740 = vsub.f32 %v712, %v721
  %v741 = vsub.f32 %v713, %v724
  %v742 = vsub.f32 %v714, %v727
  %v743 = vsub.f32 %v715, %v730
  %v744 = vsub.f32 %v716, %v733
  %v745 = vsub.f32 %v717, %v736
  %v746 = vsub.f32 %v718, %v739
  %v747 = vmul.f32 %v740, 1.442695
  %v748 = vpow.pop %v747
  %v749 = vmul.f32 %v741, 1.442695
  %v750 = vpow.pop %v749
  %v751 = vmul.f32 %v742, 1.442695
  %v752 = vpow.pop %v751
  %v753 = vmul.f32 %v743, 1.442695
  %v754 = vpow.pop %v753
  %v755 = vmul.f32 %v744, 1.442695
  %v756 = vpow.pop %v755
  %v757 = vmul.f32 %v745, 1.442695
  %v758 = vpow.pop %v757
  %v759 = vmul.f32 %v746, 1.442695
  %v760 = vpow.pop %v759
  %v761 = vsel %vm168, %v748, 0.0
  %762 = vadd.xlane.f32.xlu0 %v761
  %v763 = vpop.xlane.xlu0 %762
  %v764 = vsel %vm168, %v750, 0.0
  %765 = vadd.xlane.f32.xlu0 %v764
  %v766 = vpop.xlane.xlu0 %765
  %v767 = vsel %vm168, %v752, 0.0
  %768 = vadd.xlane.f32.xlu0 %v767
  %v769 = vpop.xlane.xlu0 %768
  %v770 = vsel %vm168, %v754, 0.0
  %771 = vadd.xlane.f32.xlu0 %v770
  %v772 = vpop.xlane.xlu0 %771
  %v773 = vsel %vm168, %v756, 0.0
  %774 = vadd.xlane.f32.xlu0 %v773
  %v775 = vpop.xlane.xlu0 %774
  %v776 = vsel %vm168, %v758, 0.0
  %777 = vadd.xlane.f32.xlu0 %v776
  %v778 = vpop.xlane.xlu0 %777
  %v779 = vsel %vm168, %v760, 0.0
  %780 = vadd.xlane.f32.xlu0 %v779
  %v781 = vpop.xlane.xlu0 %780
  %v782 = vrcp.pop %v763
  %v783 = vrcp.pop %v766
  %v784 = vrcp.pop %v769
  %v785 = vrcp.pop %v772
  %v786 = vrcp.pop %v775
  %v787 = vrcp.pop %v778
  %v788 = vrcp.pop %v781
  %v789 = vmul.f32 %v748, %v782
  %v790 = vmul.f32 %v750, %v783
  %v791 = vmul.f32 %v752, %v784
  %v792 = vmul.f32 %v754, %v785
  %v793 = vmul.f32 %v756, %v786
  %v794 = vmul.f32 %v758, %v787
  %v795 = vmul.f32 %v760, %v788
  %796 = vrot.lane.b32.xlu0 %v136, 64
  %v797 = vpop.permute.xlu0 %796
  %v800 = vsel %vm168, %v789, 0
  %802 = vmatprep.subr.mxu0 0.0
  %803 = vmatpush1.msra.mxu0 %v797
  %804 = vmatprep.subr.mxu0 0.0
  %805 = vmatpush1.msra.mxu0 0.0
  %806 = vmatprep.subr.mxu0 0.0
  %807 = vmatpush1.msra.mxu0 0.0
  %808 = vmatprep.subr.mxu0 0.0
  %809 = vmatpush1.msra.mxu0 0.0
  %810 = vmatprep.subr.mxu0 0.0
  %811 = vmatpush1.msra.mxu0 0.0
  %812 = vmatprep.subr.mxu0 0.0
  %813 = vmatpush1.msra.mxu0 0.0
  %814 = vmatprep.subr.mxu0 0.0
  %815 = vmatpush1.msra.mxu0 0.0
  %816 = vmatprep.subr.mxu0 0.0
  %817 = vmatpush1.msra.mxu0 0.0
  %818 = vmatprep.subr.mxu0 0.0
  %819 = vmatpush1.msra.mxu0 0.0
  %820 = vmatprep.subr.mxu0 0.0
  %821 = vmatpush1.msra.mxu0 0.0
  %822 = vmatprep.subr.mxu0 0.0
  %823 = vmatpush1.msra.mxu0 0.0
  %824 = vmatprep.subr.mxu0 0.0
  %825 = vmatpush1.msra.mxu0 0.0
  %826 = vmatprep.subr.mxu0 0.0
  %827 = vmatpush1.msra.mxu0 0.0
  %828 = vmatprep.subr.mxu0 0.0
  %829 = vmatpush1.msra.mxu0 0.0
  %830 = vmatprep.subr.mxu0 0.0
  %831 = vmatpush1.msra.mxu0 0.0
  %832 = vmatprep.subr.mxu0 0.0
  %833 = vmatpush1.msra.mxu0 0.0
  %834 = vmatprep.subr.mxu0 0.0
  %835 = vmatpush1.msra.mxu0 0.0
  %836 = vmatprep.subr.mxu0 0.0
  %837 = vmatpush1.msra.mxu0 0.0
  %838 = vmatprep.subr.mxu0 0.0
  %839 = vmatpush1.msra.mxu0 0.0
  %840 = vmatprep.subr.mxu0 0.0
  %841 = vmatpush1.msra.mxu0 0.0
  %842 = vmatprep.subr.mxu0 0.0
  %843 = vmatpush1.msra.mxu0 0.0
  %844 = vmatprep.subr.mxu0 0.0
  %845 = vmatpush1.msra.mxu0 0.0
  %846 = vmatprep.subr.mxu0 0.0
  %847 = vmatpush1.msra.mxu0 0.0
  %848 = vmatprep.subr.mxu0 0.0
  %849 = vmatpush1.msra.mxu0 0.0
  %850 = vmatprep.subr.mxu0 0.0
  %851 = vmatpush1.msra.mxu0 0.0
  %852 = vmatprep.subr.mxu0 0.0
  %853 = vmatpush1.msra.mxu0 0.0
  %854 = vmatprep.subr.mxu0 0.0
  %855 = vmatpush1.msra.mxu0 0.0
  %856 = vmatprep.subr.mxu0 0.0
  %857 = vmatpush1.msra.mxu0 0.0
  %858 = vmatprep.subr.mxu0 0.0
  %859 = vmatpush1.msra.mxu0 0.0
  %860 = vmatprep.subr.mxu0 0.0
  %861 = vmatpush1.msra.mxu0 0.0
  %862 = vmatprep.subr.mxu0 0.0
  %863 = vmatpush1.msra.mxu0 0.0
  %864 = vmatprep.subr.mxu0 0.0
  %865 = vmatpush1.msra.mxu0 0.0
  %866 = vmatprep.mubr.f32.mxu0 0.0
  %867 = vmatmul.mubr.f32.gmra.mrb[0].mxu0 %v800
  %v868 = vpop.f32.mrb[0].mxu0
  %v869 = vadd.f32 0.0, %v868
  %v870 = vpop.f32.mrb[0].mxu0
  %871 = vdwg.mxu0
  %872 = vrot.lane.b32.xlu0 %v139, 64
  %v873 = vpop.permute.xlu0 %872
  %v876 = vsel %vm168, %v790, 0
  %878 = vmatprep.subr.mxu0 0.0
  %879 = vmatpush1.msra.mxu0 %v873
  %880 = vmatprep.subr.mxu0 0.0
  %881 = vmatpush1.msra.mxu0 0.0
  %882 = vmatprep.subr.mxu0 0.0
  %883 = vmatpush1.msra.mxu0 0.0
  %884 = vmatprep.subr.mxu0 0.0
  %885 = vmatpush1.msra.mxu0 0.0
  %886 = vmatprep.subr.mxu0 0.0
  %887 = vmatpush1.msra.mxu0 0.0
  %888 = vmatprep.subr.mxu0 0.0
  %889 = vmatpush1.msra.mxu0 0.0
  %890 = vmatprep.subr.mxu0 0.0
  %891 = vmatpush1.msra.mxu0 0.0
  %892 = vmatprep.subr.mxu0 0.0
  %893 = vmatpush1.msra.mxu0 0.0
  %894 = vmatprep.subr.mxu0 0.0
  %895 = vmatpush1.msra.mxu0 0.0
  %896 = vmatprep.subr.mxu0 0.0
  %897 = vmatpush1.msra.mxu0 0.0
  %898 = vmatprep.subr.mxu0 0.0
  %899 = vmatpush1.msra.mxu0 0.0
  %900 = vmatprep.subr.mxu0 0.0
  %901 = vmatpush1.msra.mxu0 0.0
  %902 = vmatprep.subr.mxu0 0.0
  %903 = vmatpush1.msra.mxu0 0.0
  %904 = vmatprep.subr.mxu0 0.0
  %905 = vmatpush1.msra.mxu0 0.0
  %906 = vmatprep.subr.mxu0 0.0
  %907 = vmatpush1.msra.mxu0 0.0
  %908 = vmatprep.subr.mxu0 0.0
  %909 = vmatpush1.msra.mxu0 0.0
  %910 = vmatprep.subr.mxu0 0.0
  %911 = vmatpush1.msra.mxu0 0.0
  %912 = vmatprep.subr.mxu0 0.0
  %913 = vmatpush1.msra.mxu0 0.0
  %914 = vmatprep.subr.mxu0 0.0
  %915 = vmatpush1.msra.mxu0 0.0
  %916 = vmatprep.subr.mxu0 0.0
  %917 = vmatpush1.msra.mxu0 0.0
  %918 = vmatprep.subr.mxu0 0.0
  %919 = vmatpush1.msra.mxu0 0.0
  %920 = vmatprep.subr.mxu0 0.0
  %921 = vmatpush1.msra.mxu0 0.0
  %922 = vmatprep.subr.mxu0 0.0
  %923 = vmatpush1.msra.mxu0 0.0
  %924 = vmatprep.subr.mxu0 0.0
  %925 = vmatpush1.msra.mxu0 0.0
  %926 = vmatprep.subr.mxu0 0.0
  %927 = vmatpush1.msra.mxu0 0.0
  %928 = vmatprep.subr.mxu0 0.0
  %929 = vmatpush1.msra.mxu0 0.0
  %930 = vmatprep.subr.mxu0 0.0
  %931 = vmatpush1.msra.mxu0 0.0
  %932 = vmatprep.subr.mxu0 0.0
  %933 = vmatpush1.msra.mxu0 0.0
  %934 = vmatprep.subr.mxu0 0.0
  %935 = vmatpush1.msra.mxu0 0.0
  %936 = vmatprep.subr.mxu0 0.0
  %937 = vmatpush1.msra.mxu0 0.0
  %938 = vmatprep.subr.mxu0 0.0
  %939 = vmatpush1.msra.mxu0 0.0
  %940 = vmatprep.subr.mxu0 0.0
  %941 = vmatpush1.msra.mxu0 0.0
  %942 = vmatprep.mubr.f32.mxu0 0.0
  %943 = vmatmul.mubr.f32.gmra.mrb[0].mxu0 %v876
  %v944 = vpop.f32.mrb[0].mxu0
  %v945 = vadd.f32 0.0, %v944
  %v946 = vpop.f32.mrb[0].mxu0
  %947 = vdwg.mxu0
  %948 = vrot.lane.b32.xlu0 %v144, 64
  %v949 = vpop.permute.xlu0 %948
  %v952 = vsel %vm168, %v791, 0
  %954 = vmatprep.subr.mxu0 0.0
  %955 = vmatpush1.msra.mxu0 %v949
  %956 = vmatprep.subr.mxu0 0.0
  %957 = vmatpush1.msra.mxu0 0.0
  %958 = vmatprep.subr.mxu0 0.0
  %959 = vmatpush1.msra.mxu0 0.0
  %960 = vmatprep.subr.mxu0 0.0
  %961 = vmatpush1.msra.mxu0 0.0
  %962 = vmatprep.subr.mxu0 0.0
  %963 = vmatpush1.msra.mxu0 0.0
  %964 = vmatprep.subr.mxu0 0.0
  %965 = vmatpush1.msra.mxu0 0.0
  %966 = vmatprep.subr.mxu0 0.0
  %967 = vmatpush1.msra.mxu0 0.0
  %968 = vmatprep.subr.mxu0 0.0
  %969 = vmatpush1.msra.mxu0 0.0
  %970 = vmatprep.subr.mxu0 0.0
  %971 = vmatpush1.msra.mxu0 0.0
  %972 = vmatprep.subr.mxu0 0.0
  %973 = vmatpush1.msra.mxu0 0.0
  %974 = vmatprep.subr.mxu0 0.0
  %975 = vmatpush1.msra.mxu0 0.0
  %976 = vmatprep.subr.mxu0 0.0
  %977 = vmatpush1.msra.mxu0 0.0
  %978 = vmatprep.subr.mxu0 0.0
  %979 = vmatpush1.msra.mxu0 0.0
  %980 = vmatprep.subr.mxu0 0.0
  %981 = vmatpush1.msra.mxu0 0.0
  %982 = vmatprep.subr.mxu0 0.0
  %983 = vmatpush1.msra.mxu0 0.0
  %984 = vmatprep.subr.mxu0 0.0
  %985 = vmatpush1.msra.mxu0 0.0
  %986 = vmatprep.subr.mxu0 0.0
  %987 = vmatpush1.msra.mxu0 0.0
  %988 = vmatprep.subr.mxu0 0.0
  %989 = vmatpush1.msra.mxu0 0.0
  %990 = vmatprep.subr.mxu0 0.0
  %991 = vmatpush1.msra.mxu0 0.0
  %992 = vmatprep.subr.mxu0 0.0
  %993 = vmatpush1.msra.mxu0 0.0
  %994 = vmatprep.subr.mxu0 0.0
  %995 = vmatpush1.msra.mxu0 0.0
  %996 = vmatprep.subr.mxu0 0.0
  %997 = vmatpush1.msra.mxu0 0.0
  %998 = vmatprep.subr.mxu0 0.0
  %999 = vmatpush1.msra.mxu0 0.0
  %1000 = vmatprep.subr.mxu0 0.0
  %1001 = vmatpush1.msra.mxu0 0.0
  %1002 = vmatprep.subr.mxu0 0.0
  %1003 = vmatpush1.msra.mxu0 0.0
  %1004 = vmatprep.subr.mxu0 0.0
  %1005 = vmatpush1.msra.mxu0 0.0
  %1006 = vmatprep.subr.mxu0 0.0
  %1007 = vmatpush1.msra.mxu0 0.0
  %1008 = vmatprep.subr.mxu0 0.0
  %1009 = vmatpush1.msra.mxu0 0.0
  %1010 = vmatprep.subr.mxu0 0.0
  %1011 = vmatpush1.msra.mxu0 0.0
  %1012 = vmatprep.subr.mxu0 0.0
  %1013 = vmatpush1.msra.mxu0 0.0
  %1014 = vmatprep.subr.mxu0 0.0
  %1015 = vmatpush1.msra.mxu0 0.0
  %1016 = vmatprep.subr.mxu0 0.0
  %1017 = vmatpush1.msra.mxu0 0.0
  %1018 = vmatprep.mubr.f32.mxu0 0.0
  %1019 = vmatmul.mubr.f32.gmra.mrb[0].mxu0 %v952
  %v1020 = vpop.f32.mrb[0].mxu0
  %v1021 = vadd.f32 0.0, %v1020
  %v1022 = vpop.f32.mrb[0].mxu0
  %1023 = vdwg.mxu0
  %1024 = vrot.lane.b32.xlu0 %v147, 64
  %v1025 = vpop.permute.xlu0 %1024
  %v1028 = vsel %vm168, %v792, 0
  %1030 = vmatprep.subr.mxu0 0.0
  %1031 = vmatpush1.msra.mxu0 %v1025
  %1032 = vmatprep.subr.mxu0 0.0
  %1033 = vmatpush1.msra.mxu0 0.0
  %1034 = vmatprep.subr.mxu0 0.0
  %1035 = vmatpush1.msra.mxu0 0.0
  %1036 = vmatprep.subr.mxu0 0.0
  %1037 = vmatpush1.msra.mxu0 0.0
  %1038 = vmatprep.subr.mxu0 0.0
  %1039 = vmatpush1.msra.mxu0 0.0
  %1040 = vmatprep.subr.mxu0 0.0
  %1041 = vmatpush1.msra.mxu0 0.0
  %1042 = vmatprep.subr.mxu0 0.0
  %1043 = vmatpush1.msra.mxu0 0.0
  %1044 = vmatprep.subr.mxu0 0.0
  %1045 = vmatpush1.msra.mxu0 0.0
  %1046 = vmatprep.subr.mxu0 0.0
  %1047 = vmatpush1.msra.mxu0 0.0
  %1048 = vmatprep.subr.mxu0 0.0
  %1049 = vmatpush1.msra.mxu0 0.0
  %1050 = vmatprep.subr.mxu0 0.0
  %1051 = vmatpush1.msra.mxu0 0.0
  %1052 = vmatprep.subr.mxu0 0.0
  %1053 = vmatpush1.msra.mxu0 0.0
  %1054 = vmatprep.subr.mxu0 0.0
  %1055 = vmatpush1.msra.mxu0 0.0
  %1056 = vmatprep.subr.mxu0 0.0
  %1057 = vmatpush1.msra.mxu0 0.0
  %1058 = vmatprep.subr.mxu0 0.0
  %1059 = vmatpush1.msra.mxu0 0.0
  %1060 = vmatprep.subr.mxu0 0.0
  %1061 = vmatpush1.msra.mxu0 0.0
  %1062 = vmatprep.subr.mxu0 0.0
  %1063 = vmatpush1.msra.mxu0 0.0
  %1064 = vmatprep.subr.mxu0 0.0
  %1065 = vmatpush1.msra.mxu0 0.0
  %1066 = vmatprep.subr.mxu0 0.0
  %1067 = vmatpush1.msra.mxu0 0.0
  %1068 = vmatprep.subr.mxu0 0.0
  %1069 = vmatpush1.msra.mxu0 0.0
  %1070 = vmatprep.subr.mxu0 0.0
  %1071 = vmatpush1.msra.mxu0 0.0
  %1072 = vmatprep.subr.mxu0 0.0
  %1073 = vmatpush1.msra.mxu0 0.0
  %1074 = vmatprep.subr.mxu0 0.0
  %1075 = vmatpush1.msra.mxu0 0.0
  %1076 = vmatprep.subr.mxu0 0.0
  %1077 = vmatpush1.msra.mxu0 0.0
  %1078 = vmatprep.subr.mxu0 0.0
  %1079 = vmatpush1.msra.mxu0 0.0
  %1080 = vmatprep.subr.mxu0 0.0
  %1081 = vmatpush1.msra.mxu0 0.0
  %1082 = vmatprep.subr.mxu0 0.0
  %1083 = vmatpush1.msra.mxu0 0.0
  %1084 = vmatprep.subr.mxu0 0.0
  %1085 = vmatpush1.msra.mxu0 0.0
  %1086 = vmatprep.subr.mxu0 0.0
  %1087 = vmatpush1.msra.mxu0 0.0
  %1088 = vmatprep.subr.mxu0 0.0
  %1089 = vmatpush1.msra.mxu0 0.0
  %1090 = vmatprep.subr.mxu0 0.0
  %1091 = vmatpush1.msra.mxu0 0.0
  %1092 = vmatprep.subr.mxu0 0.0
  %1093 = vmatpush1.msra.mxu0 0.0
  %1094 = vmatprep.mubr.f32.mxu0 0.0
  %1095 = vmatmul.mubr.f32.gmra.mrb[0].mxu0 %v1028
  %v1096 = vpop.f32.mrb[0].mxu0
  %v1097 = vadd.f32 0.0, %v1096
  %v1098 = vpop.f32.mrb[0].mxu0
  %1099 = vdwg.mxu0
  %1100 = vrot.lane.b32.xlu0 %v152, 64
  %v1101 = vpop.permute.xlu0 %1100
  %v1104 = vsel %vm168, %v793, 0
  %1106 = vmatprep.subr.mxu0 0.0
  %1107 = vmatpush1.msra.mxu0 %v1101
  %1108 = vmatprep.subr.mxu0 0.0
  %1109 = vmatpush1.msra.mxu0 0.0
  %1110 = vmatprep.subr.mxu0 0.0
  %1111 = vmatpush1.msra.mxu0 0.0
  %1112 = vmatprep.subr.mxu0 0.0
  %1113 = vmatpush1.msra.mxu0 0.0
  %1114 = vmatprep.subr.mxu0 0.0
  %1115 = vmatpush1.msra.mxu0 0.0
  %1116 = vmatprep.subr.mxu0 0.0
  %1117 = vmatpush1.msra.mxu0 0.0
  %1118 = vmatprep.subr.mxu0 0.0
  %1119 = vmatpush1.msra.mxu0 0.0
  %1120 = vmatprep.subr.mxu0 0.0
  %1121 = vmatpush1.msra.mxu0 0.0
  %1122 = vmatprep.subr.mxu0 0.0
  %1123 = vmatpush1.msra.mxu0 0.0
  %1124 = vmatprep.subr.mxu0 0.0
  %1125 = vmatpush1.msra.mxu0 0.0
  %1126 = vmatprep.subr.mxu0 0.0
  %1127 = vmatpush1.msra.mxu0 0.0
  %1128 = vmatprep.subr.mxu0 0.0
  %1129 = vmatpush1.msra.mxu0 0.0
  %1130 = vmatprep.subr.mxu0 0.0
  %1131 = vmatpush1.msra.mxu0 0.0
  %1132 = vmatprep.subr.mxu0 0.0
  %1133 = vmatpush1.msra.mxu0 0.0
  %1134 = vmatprep.subr.mxu0 0.0
  %1135 = vmatpush1.msra.mxu0 0.0
  %1136 = vmatprep.subr.mxu0 0.0
  %1137 = vmatpush1.msra.mxu0 0.0
  %1138 = vmatprep.subr.mxu0 0.0
  %1139 = vmatpush1.msra.mxu0 0.0
  %1140 = vmatprep.subr.mxu0 0.0
  %1141 = vmatpush1.msra.mxu0 0.0
  %1142 = vmatprep.subr.mxu0 0.0
  %1143 = vmatpush1.msra.mxu0 0.0
  %1144 = vmatprep.subr.mxu0 0.0
  %1145 = vmatpush1.msra.mxu0 0.0
  %1146 = vmatprep.subr.mxu0 0.0
  %1147 = vmatpush1.msra.mxu0 0.0
  %1148 = vmatprep.subr.mxu0 0.0
  %1149 = vmatpush1.msra.mxu0 0.0
  %1150 = vmatprep.subr.mxu0 0.0
  %1151 = vmatpush1.msra.mxu0 0.0
  %1152 = vmatprep.subr.mxu0 0.0
  %1153 = vmatpush1.msra.mxu0 0.0
  %1154 = vmatprep.subr.mxu0 0.0
  %1155 = vmatpush1.msra.mxu0 0.0
  %1156 = vmatprep.subr.mxu0 0.0
  %1157 = vmatpush1.msra.mxu0 0.0
  %1158 = vmatprep.subr.mxu0 0.0
  %1159 = vmatpush1.msra.mxu0 0.0
  %1160 = vmatprep.subr.mxu0 0.0
  %1161 = vmatpush1.msra.mxu0 0.0
  %1162 = vmatprep.subr.mxu0 0.0
  %1163 = vmatpush1.msra.mxu0 0.0
  %1164 = vmatprep.subr.mxu0 0.0
  %1165 = vmatpush1.msra.mxu0 0.0
  %1166 = vmatprep.subr.mxu0 0.0
  %1167 = vmatpush1.msra.mxu0 0.0
  %1168 = vmatprep.subr.mxu0 0.0
  %1169 = vmatpush1.msra.mxu0 0.0
  %1170 = vmatprep.mubr.f32.mxu0 0.0
  %1171 = vmatmul.mubr.f32.gmra.mrb[0].mxu0 %v1104
  %v1172 = vpop.f32.mrb[0].mxu0
  %v1173 = vadd.f32 0.0, %v1172
  %v1174 = vpop.f32.mrb[0].mxu0
  %1175 = vdwg.mxu0
  %1176 = vrot.lane.b32.xlu0 %v155, 64
  %v1177 = vpop.permute.xlu0 %1176
  %v1180 = vsel %vm168, %v794, 0
  %1182 = vmatprep.subr.mxu0 0.0
  %1183 = vmatpush1.msra.mxu0 %v1177
  %1184 = vmatprep.subr.mxu0 0.0
  %1185 = vmatpush1.msra.mxu0 0.0
  %1186 = vmatprep.subr.mxu0 0.0
  %1187 = vmatpush1.msra.mxu0 0.0
  %1188 = vmatprep.subr.mxu0 0.0
  %1189 = vmatpush1.msra.mxu0 0.0
  %1190 = vmatprep.subr.mxu0 0.0
  %1191 = vmatpush1.msra.mxu0 0.0
  %1192 = vmatprep.subr.mxu0 0.0
  %1193 = vmatpush1.msra.mxu0 0.0
  %1194 = vmatprep.subr.mxu0 0.0
  %1195 = vmatpush1.msra.mxu0 0.0
  %1196 = vmatprep.subr.mxu0 0.0
  %1197 = vmatpush1.msra.mxu0 0.0
  %1198 = vmatprep.subr.mxu0 0.0
  %1199 = vmatpush1.msra.mxu0 0.0
  %1200 = vmatprep.subr.mxu0 0.0
  %1201 = vmatpush1.msra.mxu0 0.0
  %1202 = vmatprep.subr.mxu0 0.0
  %1203 = vmatpush1.msra.mxu0 0.0
  %1204 = vmatprep.subr.mxu0 0.0
  %1205 = vmatpush1.msra.mxu0 0.0
  %1206 = vmatprep.subr.mxu0 0.0
  %1207 = vmatpush1.msra.mxu0 0.0
  %1208 = vmatprep.subr.mxu0 0.0
  %1209 = vmatpush1.msra.mxu0 0.0
  %1210 = vmatprep.subr.mxu0 0.0
  %1211 = vmatpush1.msra.mxu0 0.0
  %1212 = vmatprep.subr.mxu0 0.0
  %1213 = vmatpush1.msra.mxu0 0.0
  %1214 = vmatprep.subr.mxu0 0.0
  %1215 = vmatpush1.msra.mxu0 0.0
  %1216 = vmatprep.subr.mxu0 0.0
  %1217 = vmatpush1.msra.mxu0 0.0
  %1218 = vmatprep.subr.mxu0 0.0
  %1219 = vmatpush1.msra.mxu0 0.0
  %1220 = vmatprep.subr.mxu0 0.0
  %1221 = vmatpush1.msra.mxu0 0.0
  %1222 = vmatprep.subr.mxu0 0.0
  %1223 = vmatpush1.msra.mxu0 0.0
  %1224 = vmatprep.subr.mxu0 0.0
  %1225 = vmatpush1.msra.mxu0 0.0
  %1226 = vmatprep.subr.mxu0 0.0
  %1227 = vmatpush1.msra.mxu0 0.0
  %1228 = vmatprep.subr.mxu0 0.0
  %1229 = vmatpush1.msra.mxu0 0.0
  %1230 = vmatprep.subr.mxu0 0.0
  %1231 = vmatpush1.msra.mxu0 0.0
  %1232 = vmatprep.subr.mxu0 0.0
  %1233 = vmatpush1.msra.mxu0 0.0
  %1234 = vmatprep.subr.mxu0 0.0
  %1235 = vmatpush1.msra.mxu0 0.0
  %1236 = vmatprep.subr.mxu0 0.0
  %1237 = vmatpush1.msra.mxu0 0.0
  %1238 = vmatprep.subr.mxu0 0.0
  %1239 = vmatpush1.msra.mxu0 0.0
  %1240 = vmatprep.subr.mxu0 0.0
  %1241 = vmatpush1.msra.mxu0 0.0
  %1242 = vmatprep.subr.mxu0 0.0
  %1243 = vmatpush1.msra.mxu0 0.0
  %1244 = vmatprep.subr.mxu0 0.0
  %1245 = vmatpush1.msra.mxu0 0.0
  %1246 = vmatprep.mubr.f32.mxu0 0.0
  %1247 = vmatmul.mubr.f32.gmra.mrb[0].mxu0 %v1180
  %v1248 = vpop.f32.mrb[0].mxu0
  %v1249 = vadd.f32 0.0, %v1248
  %v1250 = vpop.f32.mrb[0].mxu0
  %1251 = vdwg.mxu0
  %1252 = vrot.lane.b32.xlu0 %v160, 64
  %v1253 = vpop.permute.xlu0 %1252
  %v1256 = vsel %vm168, %v795, 0
  %1258 = vmatprep.subr.mxu0 0.0
  %1259 = vmatpush1.msra.mxu0 %v1253
  %1260 = vmatprep.subr.mxu0 0.0
  %1261 = vmatpush1.msra.mxu0 0.0
  %1262 = vmatprep.subr.mxu0 0.0
  %1263 = vmatpush1.msra.mxu0 0.0
  %1264 = vmatprep.subr.mxu0 0.0
  %1265 = vmatpush1.msra.mxu0 0.0
  %1266 = vmatprep.subr.mxu0 0.0
  %1267 = vmatpush1.msra.mxu0 0.0
  %1268 = vmatprep.subr.mxu0 0.0
  %1269 = vmatpush1.msra.mxu0 0.0
  %1270 = vmatprep.subr.mxu0 0.0
  %1271 = vmatpush1.msra.mxu0 0.0
  %1272 = vmatprep.subr.mxu0 0.0
  %1273 = vmatpush1.msra.mxu0 0.0
  %1274 = vmatprep.subr.mxu0 0.0
  %1275 = vmatpush1.msra.mxu0 0.0
  %1276 = vmatprep.subr.mxu0 0.0
  %1277 = vmatpush1.msra.mxu0 0.0
  %1278 = vmatprep.subr.mxu0 0.0
  %1279 = vmatpush1.msra.mxu0 0.0
  %1280 = vmatprep.subr.mxu0 0.0
  %1281 = vmatpush1.msra.mxu0 0.0
  %1282 = vmatprep.subr.mxu0 0.0
  %1283 = vmatpush1.msra.mxu0 0.0
  %1284 = vmatprep.subr.mxu0 0.0
  %1285 = vmatpush1.msra.mxu0 0.0
  %1286 = vmatprep.subr.mxu0 0.0
  %1287 = vmatpush1.msra.mxu0 0.0
  %1288 = vmatprep.subr.mxu0 0.0
  %1289 = vmatpush1.msra.mxu0 0.0
  %1290 = vmatprep.subr.mxu0 0.0
  %1291 = vmatpush1.msra.mxu0 0.0
  %1292 = vmatprep.subr.mxu0 0.0
  %1293 = vmatpush1.msra.mxu0 0.0
  %1294 = vmatprep.subr.mxu0 0.0
  %1295 = vmatpush1.msra.mxu0 0.0
  %1296 = vmatprep.subr.mxu0 0.0
  %1297 = vmatpush1.msra.mxu0 0.0
  %1298 = vmatprep.subr.mxu0 0.0
  %1299 = vmatpush1.msra.mxu0 0.0
  %1300 = vmatprep.subr.mxu0 0.0
  %1301 = vmatpush1.msra.mxu0 0.0
  %1302 = vmatprep.subr.mxu0 0.0
  %1303 = vmatpush1.msra.mxu0 0.0
  %1304 = vmatprep.subr.mxu0 0.0
  %1305 = vmatpush1.msra.mxu0 0.0
  %1306 = vmatprep.subr.mxu0 0.0
  %1307 = vmatpush1.msra.mxu0 0.0
  %1308 = vmatprep.subr.mxu0 0.0
  %1309 = vmatpush1.msra.mxu0 0.0
  %1310 = vmatprep.subr.mxu0 0.0
  %1311 = vmatpush1.msra.mxu0 0.0
  %1312 = vmatprep.subr.mxu0 0.0
  %1313 = vmatpush1.msra.mxu0 0.0
  %1314 = vmatprep.subr.mxu0 0.0
  %1315 = vmatpush1.msra.mxu0 0.0
  %1316 = vmatprep.subr.mxu0 0.0
  %1317 = vmatpush1.msra.mxu0 0.0
  %1318 = vmatprep.subr.mxu0 0.0
  %1319 = vmatpush1.msra.mxu0 0.0
  %1320 = vmatprep.subr.mxu0 0.0
  %1321 = vmatpush1.msra.mxu0 0.0
  %1322 = vmatprep.mubr.f32.mxu0 0.0
  %1323 = vmatmul.mubr.f32.gmra.mrb[0].mxu0 %v1256
  %v1324 = vpop.f32.mrb[0].mxu0
  %v1325 = vadd.f32 0.0, %v1324
  %v1326 = vpop.f32.mrb[0].mxu0
  %1327 = vdwg.mxu0
  %1328 = vrot.lane.b32.xlu0 %v136, 120
  %v1329 = vpop.permute.xlu0 %1328
  %1330 = vrot.lane.b32.xlu0 %v136, 88
  %v1331 = vpop.permute.xlu0 %1330
  %v1332 = vsel %vm168, %v1329, 0
  %v1334 = vsel %vm168, %v1331, 0
  %1336 = vmatprep.subr.mxu0 0.0
  %1337 = vmatpush1.xpose.msra.mxu0 %v1334
  %1338 = vmatprep.subr.mxu0 0.0
  %1339 = vmatpush1.xpose.msra.mxu0 0.0
  %1340 = vmatprep.subr.mxu0 0.0
  %1341 = vmatpush1.xpose.msra.mxu0 0.0
  %1342 = vmatprep.subr.mxu0 0.0
  %1343 = vmatpush1.xpose.msra.mxu0 0.0
  %1344 = vmatprep.subr.mxu0 0.0
  %1345 = vmatpush1.xpose.msra.mxu0 0.0
  %1346 = vmatprep.subr.mxu0 0.0
  %1347 = vmatpush1.xpose.msra.mxu0 0.0
  %1348 = vmatprep.subr.mxu0 0.0
  %1349 = vmatpush1.xpose.msra.mxu0 0.0
  %1350 = vmatprep.subr.mxu0 0.0
  %1351 = vmatpush1.xpose.msra.mxu0 0.0
  %1352 = vmatprep.subr.mxu0 0.0
  %1353 = vmatpush1.xpose.msra.mxu0 0.0
  %1354 = vmatprep.subr.mxu0 0.0
  %1355 = vmatpush1.xpose.msra.mxu0 0.0
  %1356 = vmatprep.subr.mxu0 0.0
  %1357 = vmatpush1.xpose.msra.mxu0 0.0
  %1358 = vmatprep.subr.mxu0 0.0
  %1359 = vmatpush1.xpose.msra.mxu0 0.0
  %1360 = vmatprep.subr.mxu0 0.0
  %1361 = vmatpush1.xpose.msra.mxu0 0.0
  %1362 = vmatprep.subr.mxu0 0.0
  %1363 = vmatpush1.xpose.msra.mxu0 0.0
  %1364 = vmatprep.subr.mxu0 0.0
  %1365 = vmatpush1.xpose.msra.mxu0 0.0
  %1366 = vmatprep.subr.mxu0 0.0
  %1367 = vmatpush1.xpose.msra.mxu0 0.0
  %1368 = vmatprep.subr.mxu0 0.0
  %1369 = vmatpush1.xpose.msra.mxu0 0.0
  %1370 = vmatprep.subr.mxu0 0.0
  %1371 = vmatpush1.xpose.msra.mxu0 0.0
  %1372 = vmatprep.subr.mxu0 0.0
  %1373 = vmatpush1.xpose.msra.mxu0 0.0
  %1374 = vmatprep.subr.mxu0 0.0
  %1375 = vmatpush1.xpose.msra.mxu0 0.0
  %1376 = vmatprep.subr.mxu0 0.0
  %1377 = vmatpush1.xpose.msra.mxu0 0.0
  %1378 = vmatprep.subr.mxu0 0.0
  %1379 = vmatpush1.xpose.msra.mxu0 0.0
  %1380 = vmatprep.subr.mxu0 0.0
  %1381 = vmatpush1.xpose.msra.mxu0 0.0
  %1382 = vmatprep.subr.mxu0 0.0
  %1383 = vmatpush1.xpose.msra.mxu0 0.0
  %1384 = vmatprep.subr.mxu0 0.0
  %1385 = vmatpush1.xpose.msra.mxu0 0.0
  %1386 = vmatprep.subr.mxu0 0.0
  %1387 = vmatpush1.xpose.msra.mxu0 0.0
  %1388 = vmatprep.subr.mxu0 0.0
  %1389 = vmatpush1.xpose.msra.mxu0 0.0
  %1390 = vmatprep.subr.mxu0 0.0
  %1391 = vmatpush1.xpose.msra.mxu0 0.0
  %1392 = vmatprep.subr.mxu0 0.0
  %1393 = vmatpush1.xpose.msra.mxu0 0.0
  %1394 = vmatprep.subr.mxu0 0.0
  %1395 = vmatpush1.xpose.msra.mxu0 0.0
  %1396 = vmatprep.subr.mxu0 0.0
  %1397 = vmatpush1.xpose.msra.mxu0 0.0
  %1398 = vmatprep.subr.mxu0 0.0
  %1399 = vmatpush1.xpose.msra.mxu0 0.0
  %1400 = vmatprep.mubr.f32.mxu0 0.0
  %1401 = vmatmul.mubr.f32.gmra.mrb[0].mxu0 %v1332
  %v1402 = vpop.f32.mrb[0].mxu0
  %v1403 = vadd.f32 0.0, %v1402
  %v1404 = vpop.f32.mrb[0].mxu0
  %1405 = vdwg.mxu0
  %1406 = vrot.lane.b32.xlu0 %v139, 120
  %v1407 = vpop.permute.xlu0 %1406
  %1408 = vrot.lane.b32.xlu0 %v139, 88
  %v1409 = vpop.permute.xlu0 %1408
  %v1410 = vsel %vm168, %v1407, 0
  %v1412 = vsel %vm168, %v1409, 0
  %1414 = vmatprep.subr.mxu0 0.0
  %1415 = vmatpush1.xpose.msra.mxu0 %v1412
  %1416 = vmatprep.subr.mxu0 0.0
  %1417 = vmatpush1.xpose.msra.mxu0 0.0
  %1418 = vmatprep.subr.mxu0 0.0
  %1419 = vmatpush1.xpose.msra.mxu0 0.0
  %1420 = vmatprep.subr.mxu0 0.0
  %1421 = vmatpush1.xpose.msra.mxu0 0.0
  %1422 = vmatprep.subr.mxu0 0.0
  %1423 = vmatpush1.xpose.msra.mxu0 0.0
  %1424 = vmatprep.subr.mxu0 0.0
  %1425 = vmatpush1.xpose.msra.mxu0 0.0
  %1426 = vmatprep.subr.mxu0 0.0
  %1427 = vmatpush1.xpose.msra.mxu0 0.0
  %1428 = vmatprep.subr.mxu0 0.0
  %1429 = vmatpush1.xpose.msra.mxu0 0.0
  %1430 = vmatprep.subr.mxu0 0.0
  %1431 = vmatpush1.xpose.msra.mxu0 0.0
  %1432 = vmatprep.subr.mxu0 0.0
  %1433 = vmatpush1.xpose.msra.mxu0 0.0
  %1434 = vmatprep.subr.mxu0 0.0
  %1435 = vmatpush1.xpose.msra.mxu0 0.0
  %1436 = vmatprep.subr.mxu0 0.0
  %1437 = vmatpush1.xpose.msra.mxu0 0.0
  %1438 = vmatprep.subr.mxu0 0.0
  %1439 = vmatpush1.xpose.msra.mxu0 0.0
  %1440 = vmatprep.subr.mxu0 0.0
  %1441 = vmatpush1.xpose.msra.mxu0 0.0
  %1442 = vmatprep.subr.mxu0 0.0
  %1443 = vmatpush1.xpose.msra.mxu0 0.0
  %1444 = vmatprep.subr.mxu0 0.0
  %1445 = vmatpush1.xpose.msra.mxu0 0.0
  %1446 = vmatprep.subr.mxu0 0.0
  %1447 = vmatpush1.xpose.msra.mxu0 0.0
  %1448 = vmatprep.subr.mxu0 0.0
  %1449 = vmatpush1.xpose.msra.mxu0 0.0
  %1450 = vmatprep.subr.mxu0 0.0
  %1451 = vmatpush1.xpose.msra.mxu0 0.0
  %1452 = vmatprep.subr.mxu0 0.0
  %1453 = vmatpush1.xpose.msra.mxu0 0.0
  %1454 = vmatprep.subr.mxu0 0.0
  %1455 = vmatpush1.xpose.msra.mxu0 0.0
  %1456 = vmatprep.subr.mxu0 0.0
  %1457 = vmatpush1.xpose.msra.mxu0 0.0
  %1458 = vmatprep.subr.mxu0 0.0
  %1459 = vmatpush1.xpose.msra.mxu0 0.0
  %1460 = vmatprep.subr.mxu0 0.0
  %1461 = vmatpush1.xpose.msra.mxu0 0.0
  %1462 = vmatprep.subr.mxu0 0.0
  %1463 = vmatpush1.xpose.msra.mxu0 0.0
  %1464 = vmatprep.subr.mxu0 0.0
  %1465 = vmatpush1.xpose.msra.mxu0 0.0
  %1466 = vmatprep.subr.mxu0 0.0
  %1467 = vmatpush1.xpose.msra.mxu0 0.0
  %1468 = vmatprep.subr.mxu0 0.0
  %1469 = vmatpush1.xpose.msra.mxu0 0.0
  %1470 = vmatprep.subr.mxu0 0.0
  %1471 = vmatpush1.xpose.msra.mxu0 0.0
  %1472 = vmatprep.subr.mxu0 0.0
  %1473 = vmatpush1.xpose.msra.mxu0 0.0
  %1474 = vmatprep.subr.mxu0 0.0
  %1475 = vmatpush1.xpose.msra.mxu0 0.0
  %1476 = vmatprep.subr.mxu0 0.0
  %1477 = vmatpush1.xpose.msra.mxu0 0.0
  %1478 = vmatprep.mubr.f32.mxu0 0.0
  %1479 = vmatmul.mubr.f32.gmra.mrb[0].mxu0 %v1410
  %v1480 = vpop.f32.mrb[0].mxu0
  %v1481 = vadd.f32 0.0, %v1480
  %v1482 = vpop.f32.mrb[0].mxu0
  %1483 = vdwg.mxu0
  %1484 = vrot.lane.b32.xlu0 %v144, 120
  %v1485 = vpop.permute.xlu0 %1484
  %1486 = vrot.lane.b32.xlu0 %v144, 88
  %v1487 = vpop.permute.xlu0 %1486
  %v1488 = vsel %vm168, %v1485, 0
  %v1490 = vsel %vm168, %v1487, 0
  %1492 = vmatprep.subr.mxu0 0.0
  %1493 = vmatpush1.xpose.msra.mxu0 %v1490
  %1494 = vmatprep.subr.mxu0 0.0
  %1495 = vmatpush1.xpose.msra.mxu0 0.0
  %1496 = vmatprep.subr.mxu0 0.0
  %1497 = vmatpush1.xpose.msra.mxu0 0.0
  %1498 = vmatprep.subr.mxu0 0.0
  %1499 = vmatpush1.xpose.msra.mxu0 0.0
  %1500 = vmatprep.subr.mxu0 0.0
  %1501 = vmatpush1.xpose.msra.mxu0 0.0
  %1502 = vmatprep.subr.mxu0 0.0
  %1503 = vmatpush1.xpose.msra.mxu0 0.0
  %1504 = vmatprep.subr.mxu0 0.0
  %1505 = vmatpush1.xpose.msra.mxu0 0.0
  %1506 = vmatprep.subr.mxu0 0.0
  %1507 = vmatpush1.xpose.msra.mxu0 0.0
  %1508 = vmatprep.subr.mxu0 0.0
  %1509 = vmatpush1.xpose.msra.mxu0 0.0
  %1510 = vmatprep.subr.mxu0 0.0
  %1511 = vmatpush1.xpose.msra.mxu0 0.0
  %1512 = vmatprep.subr.mxu0 0.0
  %1513 = vmatpush1.xpose.msra.mxu0 0.0
  %1514 = vmatprep.subr.mxu0 0.0
  %1515 = vmatpush1.xpose.msra.mxu0 0.0
  %1516 = vmatprep.subr.mxu0 0.0
  %1517 = vmatpush1.xpose.msra.mxu0 0.0
  %1518 = vmatprep.subr.mxu0 0.0
  %1519 = vmatpush1.xpose.msra.mxu0 0.0
  %1520 = vmatprep.subr.mxu0 0.0
  %1521 = vmatpush1.xpose.msra.mxu0 0.0
  %1522 = vmatprep.subr.mxu0 0.0
  %1523 = vmatpush1.xpose.msra.mxu0 0.0
  %1524 = vmatprep.subr.mxu0 0.0
  %1525 = vmatpush1.xpose.msra.mxu0 0.0
  %1526 = vmatprep.subr.mxu0 0.0
  %1527 = vmatpush1.xpose.msra.mxu0 0.0
  %1528 = vmatprep.subr.mxu0 0.0
  %1529 = vmatpush1.xpose.msra.mxu0 0.0
  %1530 = vmatprep.subr.mxu0 0.0
  %1531 = vmatpush1.xpose.msra.mxu0 0.0
  %1532 = vmatprep.subr.mxu0 0.0
  %1533 = vmatpush1.xpose.msra.mxu0 0.0
  %1534 = vmatprep.subr.mxu0 0.0
  %1535 = vmatpush1.xpose.msra.mxu0 0.0
  %1536 = vmatprep.subr.mxu0 0.0
  %1537 = vmatpush1.xpose.msra.mxu0 0.0
  %1538 = vmatprep.subr.mxu0 0.0
  %1539 = vmatpush1.xpose.msra.mxu0 0.0
  %1540 = vmatprep.subr.mxu0 0.0
  %1541 = vmatpush1.xpose.msra.mxu0 0.0
  %1542 = vmatprep.subr.mxu0 0.0
  %1543 = vmatpush1.xpose.msra.mxu0 0.0
  %1544 = vmatprep.subr.mxu0 0.0
  %1545 = vmatpush1.xpose.msra.mxu0 0.0
  %1546 = vmatprep.subr.mxu0 0.0
  %1547 = vmatpush1.xpose.msra.mxu0 0.0
  %1548 = vmatprep.subr.mxu0 0.0
  %1549 = vmatpush1.xpose.msra.mxu0 0.0
  %1550 = vmatprep.subr.mxu0 0.0
  %1551 = vmatpush1.xpose.msra.mxu0 0.0
  %1552 = vmatprep.subr.mxu0 0.0
  %1553 = vmatpush1.xpose.msra.mxu0 0.0
  %1554 = vmatprep.subr.mxu0 0.0
  %1555 = vmatpush1.xpose.msra.mxu0 0.0
  %1556 = vmatprep.mubr.f32.mxu0 0.0
  %1557 = vmatmul.mubr.f32.gmra.mrb[0].mxu0 %v1488
  %v1558 = vpop.f32.mrb[0].mxu0
  %v1559 = vadd.f32 0.0, %v1558
  %v1560 = vpop.f32.mrb[0].mxu0
  %1561 = vdwg.mxu0
  %1562 = vrot.lane.b32.xlu0 %v147, 120
  %v1563 = vpop.permute.xlu0 %1562
  %1564 = vrot.lane.b32.xlu0 %v147, 88
  %v1565 = vpop.permute.xlu0 %1564
  %v1566 = vsel %vm168, %v1563, 0
  %v1568 = vsel %vm168, %v1565, 0
  %1570 = vmatprep.subr.mxu0 0.0
  %1571 = vmatpush1.xpose.msra.mxu0 %v1568
  %1572 = vmatprep.subr.mxu0 0.0
  %1573 = vmatpush1.xpose.msra.mxu0 0.0
  %1574 = vmatprep.subr.mxu0 0.0
  %1575 = vmatpush1.xpose.msra.mxu0 0.0
  %1576 = vmatprep.subr.mxu0 0.0
  %1577 = vmatpush1.xpose.msra.mxu0 0.0
  %1578 = vmatprep.subr.mxu0 0.0
  %1579 = vmatpush1.xpose.msra.mxu0 0.0
  %1580 = vmatprep.subr.mxu0 0.0
  %1581 = vmatpush1.xpose.msra.mxu0 0.0
  %1582 = vmatprep.subr.mxu0 0.0
  %1583 = vmatpush1.xpose.msra.mxu0 0.0
  %1584 = vmatprep.subr.mxu0 0.0
  %1585 = vmatpush1.xpose.msra.mxu0 0.0
  %1586 = vmatprep.subr.mxu0 0.0
  %1587 = vmatpush1.xpose.msra.mxu0 0.0
  %1588 = vmatprep.subr.mxu0 0.0
  %1589 = vmatpush1.xpose.msra.mxu0 0.0
  %1590 = vmatprep.subr.mxu0 0.0
  %1591 = vmatpush1.xpose.msra.mxu0 0.0
  %1592 = vmatprep.subr.mxu0 0.0
  %1593 = vmatpush1.xpose.msra.mxu0 0.0
  %1594 = vmatprep.subr.mxu0 0.0
  %1595 = vmatpush1.xpose.msra.mxu0 0.0
  %1596 = vmatprep.subr.mxu0 0.0
  %1597 = vmatpush1.xpose.msra.mxu0 0.0
  %1598 = vmatprep.subr.mxu0 0.0
  %1599 = vmatpush1.xpose.msra.mxu0 0.0
  %1600 = vmatprep.subr.mxu0 0.0
  %1601 = vmatpush1.xpose.msra.mxu0 0.0
  %1602 = vmatprep.subr.mxu0 0.0
  %1603 = vmatpush1.xpose.msra.mxu0 0.0
  %1604 = vmatprep.subr.mxu0 0.0
  %1605 = vmatpush1.xpose.msra.mxu0 0.0
  %1606 = vmatprep.subr.mxu0 0.0
  %1607 = vmatpush1.xpose.msra.mxu0 0.0
  %1608 = vmatprep.subr.mxu0 0.0
  %1609 = vmatpush1.xpose.msra.mxu0 0.0
  %1610 = vmatprep.subr.mxu0 0.0
  %1611 = vmatpush1.xpose.msra.mxu0 0.0
  %1612 = vmatprep.subr.mxu0 0.0
  %1613 = vmatpush1.xpose.msra.mxu0 0.0
  %1614 = vmatprep.subr.mxu0 0.0
  %1615 = vmatpush1.xpose.msra.mxu0 0.0
  %1616 = vmatprep.subr.mxu0 0.0
  %1617 = vmatpush1.xpose.msra.mxu0 0.0
  %1618 = vmatprep.subr.mxu0 0.0
  %1619 = vmatpush1.xpose.msra.mxu0 0.0
  %1620 = vmatprep.subr.mxu0 0.0
  %1621 = vmatpush1.xpose.msra.mxu0 0.0
  %1622 = vmatprep.subr.mxu0 0.0
  %1623 = vmatpush1.xpose.msra.mxu0 0.0
  %1624 = vmatprep.subr.mxu0 0.0
  %1625 = vmatpush1.xpose.msra.mxu0 0.0
  %1626 = vmatprep.subr.mxu0 0.0
  %1627 = vmatpush1.xpose.msra.mxu0 0.0
  %1628 = vmatprep.subr.mxu0 0.0
  %1629 = vmatpush1.xpose.msra.mxu0 0.0
  %1630 = vmatprep.subr.mxu0 0.0
  %1631 = vmatpush1.xpose.msra.mxu0 0.0
  %1632 = vmatprep.subr.mxu0 0.0
  %1633 = vmatpush1.xpose.msra.mxu0 0.0
  %1634 = vmatprep.mubr.f32.mxu0 0.0
  %1635 = vmatmul.mubr.f32.gmra.mrb[0].mxu0 %v1566
  %v1636 = vpop.f32.mrb[0].mxu0
  %v1637 = vadd.f32 0.0, %v1636
  %v1638 = vpop.f32.mrb[0].mxu0
  %1639 = vdwg.mxu0
  %1640 = vrot.lane.b32.xlu0 %v152, 120
  %v1641 = vpop.permute.xlu0 %1640
  %1642 = vrot.lane.b32.xlu0 %v152, 88
  %v1643 = vpop.permute.xlu0 %1642
  %v1644 = vsel %vm168, %v1641, 0
  %v1646 = vsel %vm168, %v1643, 0
  %1648 = vmatprep.subr.mxu0 0.0
  %1649 = vmatpush1.xpose.msra.mxu0 %v1646
  %1650 = vmatprep.subr.mxu0 0.0
  %1651 = vmatpush1.xpose.msra.mxu0 0.0
  %1652 = vmatprep.subr.mxu0 0.0
  %1653 = vmatpush1.xpose.msra.mxu0 0.0
  %1654 = vmatprep.subr.mxu0 0.0
  %1655 = vmatpush1.xpose.msra.mxu0 0.0
  %1656 = vmatprep.subr.mxu0 0.0
  %1657 = vmatpush1.xpose.msra.mxu0 0.0
  %1658 = vmatprep.subr.mxu0 0.0
  %1659 = vmatpush1.xpose.msra.mxu0 0.0
  %1660 = vmatprep.subr.mxu0 0.0
  %1661 = vmatpush1.xpose.msra.mxu0 0.0
  %1662 = vmatprep.subr.mxu0 0.0
  %1663 = vmatpush1.xpose.msra.mxu0 0.0
  %1664 = vmatprep.subr.mxu0 0.0
  %1665 = vmatpush1.xpose.msra.mxu0 0.0
  %1666 = vmatprep.subr.mxu0 0.0
  %1667 = vmatpush1.xpose.msra.mxu0 0.0
  %1668 = vmatprep.subr.mxu0 0.0
  %1669 = vmatpush1.xpose.msra.mxu0 0.0
  %1670 = vmatprep.subr.mxu0 0.0
  %1671 = vmatpush1.xpose.msra.mxu0 0.0
  %1672 = vmatprep.subr.mxu0 0.0
  %1673 = vmatpush1.xpose.msra.mxu0 0.0
  %1674 = vmatprep.subr.mxu0 0.0
  %1675 = vmatpush1.xpose.msra.mxu0 0.0
  %1676 = vmatprep.subr.mxu0 0.0
  %1677 = vmatpush1.xpose.msra.mxu0 0.0
  %1678 = vmatprep.subr.mxu0 0.0
  %1679 = vmatpush1.xpose.msra.mxu0 0.0
  %1680 = vmatprep.subr.mxu0 0.0
  %1681 = vmatpush1.xpose.msra.mxu0 0.0
  %1682 = vmatprep.subr.mxu0 0.0
  %1683 = vmatpush1.xpose.msra.mxu0 0.0
  %1684 = vmatprep.subr.mxu0 0.0
  %1685 = vmatpush1.xpose.msra.mxu0 0.0
  %1686 = vmatprep.subr.mxu0 0.0
  %1687 = vmatpush1.xpose.msra.mxu0 0.0
  %1688 = vmatprep.subr.mxu0 0.0
  %1689 = vmatpush1.xpose.msra.mxu0 0.0
  %1690 = vmatprep.subr.mxu0 0.0
  %1691 = vmatpush1.xpose.msra.mxu0 0.0
  %1692 = vmatprep.subr.mxu0 0.0
  %1693 = vmatpush1.xpose.msra.mxu0 0.0
  %1694 = vmatprep.subr.mxu0 0.0
  %1695 = vmatpush1.xpose.msra.mxu0 0.0
  %1696 = vmatprep.subr.mxu0 0.0
  %1697 = vmatpush1.xpose.msra.mxu0 0.0
  %1698 = vmatprep.subr.mxu0 0.0
  %1699 = vmatpush1.xpose.msra.mxu0 0.0
  %1700 = vmatprep.subr.mxu0 0.0
  %1701 = vmatpush1.xpose.msra.mxu0 0.0
  %1702 = vmatprep.subr.mxu0 0.0
  %1703 = vmatpush1.xpose.msra.mxu0 0.0
  %1704 = vmatprep.subr.mxu0 0.0
  %1705 = vmatpush1.xpose.msra.mxu0 0.0
  %1706 = vmatprep.subr.mxu0 0.0
  %1707 = vmatpush1.xpose.msra.mxu0 0.0
  %1708 = vmatprep.subr.mxu0 0.0
  %1709 = vmatpush1.xpose.msra.mxu0 0.0
  %1710 = vmatprep.subr.mxu0 0.0
  %1711 = vmatpush1.xpose.msra.mxu0 0.0
  %1712 = vmatprep.mubr.f32.mxu0 0.0
  %1713 = vmatmul.mubr.f32.gmra.mrb[0].mxu0 %v1644
  %v1714 = vpop.f32.mrb[0].mxu0
  %v1715 = vadd.f32 0.0, %v1714
  %v1716 = vpop.f32.mrb[0].mxu0
  %1717 = vdwg.mxu0
  %1718 = vrot.lane.b32.xlu0 %v155, 120
  %v1719 = vpop.permute.xlu0 %1718
  %1720 = vrot.lane.b32.xlu0 %v155, 88
  %v1721 = vpop.permute.xlu0 %1720
  %v1722 = vsel %vm168, %v1719, 0
  %v1724 = vsel %vm168, %v1721, 0
  %1726 = vmatprep.subr.mxu0 0.0
  %1727 = vmatpush1.xpose.msra.mxu0 %v1724
  %1728 = vmatprep.subr.mxu0 0.0
  %1729 = vmatpush1.xpose.msra.mxu0 0.0
  %1730 = vmatprep.subr.mxu0 0.0
  %1731 = vmatpush1.xpose.msra.mxu0 0.0
  %1732 = vmatprep.subr.mxu0 0.0
  %1733 = vmatpush1.xpose.msra.mxu0 0.0
  %1734 = vmatprep.subr.mxu0 0.0
  %1735 = vmatpush1.xpose.msra.mxu0 0.0
  %1736 = vmatprep.subr.mxu0 0.0
  %1737 = vmatpush1.xpose.msra.mxu0 0.0
  %1738 = vmatprep.subr.mxu0 0.0
  %1739 = vmatpush1.xpose.msra.mxu0 0.0
  %1740 = vmatprep.subr.mxu0 0.0
  %1741 = vmatpush1.xpose.msra.mxu0 0.0
  %1742 = vmatprep.subr.mxu0 0.0
  %1743 = vmatpush1.xpose.msra.mxu0 0.0
  %1744 = vmatprep.subr.mxu0 0.0
  %1745 = vmatpush1.xpose.msra.mxu0 0.0
  %1746 = vmatprep.subr.mxu0 0.0
  %1747 = vmatpush1.xpose.msra.mxu0 0.0
  %1748 = vmatprep.subr.mxu0 0.0
  %1749 = vmatpush1.xpose.msra.mxu0 0.0
  %1750 = vmatprep.subr.mxu0 0.0
  %1751 = vmatpush1.xpose.msra.mxu0 0.0
  %1752 = vmatprep.subr.mxu0 0.0
  %1753 = vmatpush1.xpose.msra.mxu0 0.0
  %1754 = vmatprep.subr.mxu0 0.0
  %1755 = vmatpush1.xpose.msra.mxu0 0.0
  %1756 = vmatprep.subr.mxu0 0.0
  %1757 = vmatpush1.xpose.msra.mxu0 0.0
  %1758 = vmatprep.subr.mxu0 0.0
  %1759 = vmatpush1.xpose.msra.mxu0 0.0
  %1760 = vmatprep.subr.mxu0 0.0
  %1761 = vmatpush1.xpose.msra.mxu0 0.0
  %1762 = vmatprep.subr.mxu0 0.0
  %1763 = vmatpush1.xpose.msra.mxu0 0.0
  %1764 = vmatprep.subr.mxu0 0.0
  %1765 = vmatpush1.xpose.msra.mxu0 0.0
  %1766 = vmatprep.subr.mxu0 0.0
  %1767 = vmatpush1.xpose.msra.mxu0 0.0
  %1768 = vmatprep.subr.mxu0 0.0
  %1769 = vmatpush1.xpose.msra.mxu0 0.0
  %1770 = vmatprep.subr.mxu0 0.0
  %1771 = vmatpush1.xpose.msra.mxu0 0.0
  %1772 = vmatprep.subr.mxu0 0.0
  %1773 = vmatpush1.xpose.msra.mxu0 0.0
  %1774 = vmatprep.subr.mxu0 0.0
  %1775 = vmatpush1.xpose.msra.mxu0 0.0
  %1776 = vmatprep.subr.mxu0 0.0
  %1777 = vmatpush1.xpose.msra.mxu0 0.0
  %1778 = vmatprep.subr.mxu0 0.0
  %1779 = vmatpush1.xpose.msra.mxu0 0.0
  %1780 = vmatprep.subr.mxu0 0.0
  %1781 = vmatpush1.xpose.msra.mxu0 0.0
  %1782 = vmatprep.subr.mxu0 0.0
  %1783 = vmatpush1.xpose.msra.mxu0 0.0
  %1784 = vmatprep.subr.mxu0 0.0
  %1785 = vmatpush1.xpose.msra.mxu0 0.0
  %1786 = vmatprep.subr.mxu0 0.0
  %1787 = vmatpush1.xpose.msra.mxu0 0.0
  %1788 = vmatprep.subr.mxu0 0.0
  %1789 = vmatpush1.xpose.msra.mxu0 0.0
  %1790 = vmatprep.mubr.f32.mxu0 0.0
  %1791 = vmatmul.mubr.f32.gmra.mrb[0].mxu0 %v1722
  %v1792 = vpop.f32.mrb[0].mxu0
  %v1793 = vadd.f32 0.0, %v1792
  %v1794 = vpop.f32.mrb[0].mxu0
  %1795 = vdwg.mxu0
  %1796 = vrot.lane.b32.xlu0 %v160, 120
  %v1797 = vpop.permute.xlu0 %1796
  %1798 = vrot.lane.b32.xlu0 %v160, 88
  %v1799 = vpop.permute.xlu0 %1798
  %v1800 = vsel %vm168, %v1797, 0
  %v1802 = vsel %vm168, %v1799, 0
  %1804 = vmatprep.subr.mxu0 0.0
  %1805 = vmatpush1.xpose.msra.mxu0 %v1802
  %1806 = vmatprep.subr.mxu0 0.0
  %1807 = vmatpush1.xpose.msra.mxu0 0.0
  %1808 = vmatprep.subr.mxu0 0.0
  %1809 = vmatpush1.xpose.msra.mxu0 0.0
  %1810 = vmatprep.subr.mxu0 0.0
  %1811 = vmatpush1.xpose.msra.mxu0 0.0
  %1812 = vmatprep.subr.mxu0 0.0
  %1813 = vmatpush1.xpose.msra.mxu0 0.0
  %1814 = vmatprep.subr.mxu0 0.0
  %1815 = vmatpush1.xpose.msra.mxu0 0.0
  %1816 = vmatprep.subr.mxu0 0.0
  %1817 = vmatpush1.xpose.msra.mxu0 0.0
  %1818 = vmatprep.subr.mxu0 0.0
  %1819 = vmatpush1.xpose.msra.mxu0 0.0
  %1820 = vmatprep.subr.mxu0 0.0
  %1821 = vmatpush1.xpose.msra.mxu0 0.0
  %1822 = vmatprep.subr.mxu0 0.0
  %1823 = vmatpush1.xpose.msra.mxu0 0.0
  %1824 = vmatprep.subr.mxu0 0.0
  %1825 = vmatpush1.xpose.msra.mxu0 0.0
  %1826 = vmatprep.subr.mxu0 0.0
  %1827 = vmatpush1.xpose.msra.mxu0 0.0
  %1828 = vmatprep.subr.mxu0 0.0
  %1829 = vmatpush1.xpose.msra.mxu0 0.0
  %1830 = vmatprep.subr.mxu0 0.0
  %1831 = vmatpush1.xpose.msra.mxu0 0.0
  %1832 = vmatprep.subr.mxu0 0.0
  %1833 = vmatpush1.xpose.msra.mxu0 0.0
  %1834 = vmatprep.subr.mxu0 0.0
  %1835 = vmatpush1.xpose.msra.mxu0 0.0
  %1836 = vmatprep.subr.mxu0 0.0
  %1837 = vmatpush1.xpose.msra.mxu0 0.0
  %1838 = vmatprep.subr.mxu0 0.0
  %1839 = vmatpush1.xpose.msra.mxu0 0.0
  %1840 = vmatprep.subr.mxu0 0.0
  %1841 = vmatpush1.xpose.msra.mxu0 0.0
  %1842 = vmatprep.subr.mxu0 0.0
  %1843 = vmatpush1.xpose.msra.mxu0 0.0
  %1844 = vmatprep.subr.mxu0 0.0
  %1845 = vmatpush1.xpose.msra.mxu0 0.0
  %1846 = vmatprep.subr.mxu0 0.0
  %1847 = vmatpush1.xpose.msra.mxu0 0.0
  %1848 = vmatprep.subr.mxu0 0.0
  %1849 = vmatpush1.xpose.msra.mxu0 0.0
  %1850 = vmatprep.subr.mxu0 0.0
  %1851 = vmatpush1.xpose.msra.mxu0 0.0
  %1852 = vmatprep.subr.mxu0 0.0
  %1853 = vmatpush1.xpose.msra.mxu0 0.0
  %1854 = vmatprep.subr.mxu0 0.0
  %1855 = vmatpush1.xpose.msra.mxu0 0.0
  %1856 = vmatprep.subr.mxu0 0.0
  %1857 = vmatpush1.xpose.msra.mxu0 0.0
  %1858 = vmatprep.subr.mxu0 0.0
  %1859 = vmatpush1.xpose.msra.mxu0 0.0
  %1860 = vmatprep.subr.mxu0 0.0
  %1861 = vmatpush1.xpose.msra.mxu0 0.0
  %1862 = vmatprep.subr.mxu0 0.0
  %1863 = vmatpush1.xpose.msra.mxu0 0.0
  %1864 = vmatprep.subr.mxu0 0.0
  %1865 = vmatpush1.xpose.msra.mxu0 0.0
  %1866 = vmatprep.subr.mxu0 0.0
  %1867 = vmatpush1.xpose.msra.mxu0 0.0
  %1868 = vmatprep.mubr.f32.mxu0 0.0
  %1869 = vmatmul.mubr.f32.gmra.mrb[0].mxu0 %v1800
  %v1870 = vpop.f32.mrb[0].mxu0
  %v1871 = vadd.f32 0.0, %v1870
  %v1872 = vpop.f32.mrb[0].mxu0
  %1873 = vdwg.mxu0
  %v1874 = vmul.f32 %v1403, 0.35355338
  %v1875 = vmul.f32 %v1481, 0.35355338
  %v1876 = vmul.f32 %v1559, 0.35355338
  %v1877 = vmul.f32 %v1637, 0.35355338
  %v1878 = vmul.f32 %v1715, 0.35355338
  %v1879 = vmul.f32 %v1793, 0.35355338
  %v1880 = vmul.f32 %v1871, 0.35355338
  %v1881 = vadd.f32 %v1874, %v54
  %v1882 = vadd.f32 %v1875, %v55
  %v1883 = vadd.f32 %v1876, %v56
  %v1884 = vadd.f32 %v1877, %v57
  %v1885 = vadd.f32 %v1878, %v58
  %v1886 = vadd.f32 %v1879, %v59
  %v1887 = vadd.f32 %v1880, %v60
  %v1888 = vsel %vm168, %v1881, -inf
  %1889 = vmax.xlane.f32.xlu0 %v1888
  %v1890 = vpop.xlane.xlu0 %1889
  %v1891 = vsel %vm168, %v1882, -inf
  %1892 = vmax.xlane.f32.xlu0 %v1891
  %v1893 = vpop.xlane.xlu0 %1892
  %v1894 = vsel %vm168, %v1883, -inf
  %1895 = vmax.xlane.f32.xlu0 %v1894
  %v1896 = vpop.xlane.xlu0 %1895
  %v1897 = vsel %vm168, %v1884, -inf
  %1898 = vmax.xlane.f32.xlu0 %v1897
  %v1899 = vpop.xlane.xlu0 %1898
  %v1900 = vsel %vm168, %v1885, -inf
  %1901 = vmax.xlane.f32.xlu0 %v1900
  %v1902 = vpop.xlane.xlu0 %1901
  %v1903 = vsel %vm168, %v1886, -inf
  %1904 = vmax.xlane.f32.xlu0 %v1903
  %v1905 = vpop.xlane.xlu0 %1904
  %v1906 = vsel %vm168, %v1887, -inf
  %1907 = vmax.xlane.f32.xlu0 %v1906
  %v1908 = vpop.xlane.xlu0 %1907
  %v1909 = vsub.f32 %v1881, %v1890
  %v1910 = vsub.f32 %v1882, %v1893
  %v1911 = vsub.f32 %v1883, %v1896
  %v1912 = vsub.f32 %v1884, %v1899
  %v1913 = vsub.f32 %v1885, %v1902
  %v1914 = vsub.f32 %v1886, %v1905
  %v1915 = vsub.f32 %v1887, %v1908
  %v1916 = vmul.f32 %v1909, 1.442695
  %v1917 = vpow.pop %v1916
  %v1918 = vmul.f32 %v1910, 1.442695
  %v1919 = vpow.pop %v1918
  %v1920 = vmul.f32 %v1911, 1.442695
  %v1921 = vpow.pop %v1920
  %v1922 = vmul.f32 %v1912, 1.442695
  %v1923 = vpow.pop %v1922
  %v1924 = vmul.f32 %v1913, 1.442695
  %v1925 = vpow.pop %v1924
  %v1926 = vmul.f32 %v1914, 1.442695
  %v1927 = vpow.pop %v1926
  %v1928 = vmul.f32 %v1915, 1.442695
  %v1929 = vpow.pop %v1928
  %v1930 = vsel %vm168, %v1917, 0.0
  %1931 = vadd.xlane.f32.xlu0 %v1930
  %v1932 = vpop.xlane.xlu0 %1931
  %v1933 = vsel %vm168, %v1919, 0.0
  %1934 = vadd.xlane.f32.xlu0 %v1933
  %v1935 = vpop.xlane.xlu0 %1934
  %v1936 = vsel %vm168, %v1921, 0.0
  %1937 = vadd.xlane.f32.xlu0 %v1936
  %v1938 = vpop.xlane.xlu0 %1937
  %v1939 = vsel %vm168, %v1923, 0.0
  %1940 = vadd.xlane.f32.xlu0 %v1939
  %v1941 = vpop.xlane.xlu0 %1940
  %v1942 = vsel %vm168, %v1925, 0.0
  %1943 = vadd.xlane.f32.xlu0 %v1942
  %v1944 = vpop.xlane.xlu0 %1943
  %v1945 = vsel %vm168, %v1927, 0.0
  %1946 = vadd.xlane.f32.xlu0 %v1945
  %v1947 = vpop.xlane.xlu0 %1946
  %v1948 = vsel %vm168, %v1929, 0.0
  %1949 = vadd.xlane.f32.xlu0 %v1948
  %v1950 = vpop.xlane.xlu0 %1949
  %v1951 = vrcp.pop %v1932
  %v1952 = vrcp.pop %v1935
  %v1953 = vrcp.pop %v1938
  %v1954 = vrcp.pop %v1941
  %v1955 = vrcp.pop %v1944
  %v1956 = vrcp.pop %v1947
  %v1957 = vrcp.pop %v1950
  %v1958 = vmul.f32 %v1917, %v1951
  %v1959 = vmul.f32 %v1919, %v1952
  %v1960 = vmul.f32 %v1921, %v1953
  %v1961 = vmul.f32 %v1923, %v1954
  %v1962 = vmul.f32 %v1925, %v1955
  %v1963 = vmul.f32 %v1927, %v1956
  %v1964 = vmul.f32 %v1929, %v1957
  %1965 = vrot.lane.b32.xlu0 %v136, 56
  %v1966 = vpop.permute.xlu0 %1965
  %v1969 = vsel %vm168, %v1958, 0
  %1971 = vmatprep.subr.mxu0 0.0
  %1972 = vmatpush1.msra.mxu0 %v1966
  %1973 = vmatprep.subr.mxu0 0.0
  %1974 = vmatpush1.msra.mxu0 0.0
  %1975 = vmatprep.subr.mxu0 0.0
  %1976 = vmatpush1.msra.mxu0 0.0
  %1977 = vmatprep.subr.mxu0 0.0
  %1978 = vmatpush1.msra.mxu0 0.0
  %1979 = vmatprep.subr.mxu0 0.0
  %1980 = vmatpush1.msra.mxu0 0.0
  %1981 = vmatprep.subr.mxu0 0.0
  %1982 = vmatpush1.msra.mxu0 0.0
  %1983 = vmatprep.subr.mxu0 0.0
  %1984 = vmatpush1.msra.mxu0 0.0
  %1985 = vmatprep.subr.mxu0 0.0
  %1986 = vmatpush1.msra.mxu0 0.0
  %1987 = vmatprep.subr.mxu0 0.0
  %1988 = vmatpush1.msra.mxu0 0.0
  %1989 = vmatprep.subr.mxu0 0.0
  %1990 = vmatpush1.msra.mxu0 0.0
  %1991 = vmatprep.subr.mxu0 0.0
  %1992 = vmatpush1.msra.mxu0 0.0
  %1993 = vmatprep.subr.mxu0 0.0
  %1994 = vmatpush1.msra.mxu0 0.0
  %1995 = vmatprep.subr.mxu0 0.0
  %1996 = vmatpush1.msra.mxu0 0.0
  %1997 = vmatprep.subr.mxu0 0.0
  %1998 = vmatpush1.msra.mxu0 0.0
  %1999 = vmatprep.subr.mxu0 0.0
  %2000 = vmatpush1.msra.mxu0 0.0
  %2001 = vmatprep.subr.mxu0 0.0
  %2002 = vmatpush1.msra.mxu0 0.0
  %2003 = vmatprep.subr.mxu0 0.0
  %2004 = vmatpush1.msra.mxu0 0.0
  %2005 = vmatprep.subr.mxu0 0.0
  %2006 = vmatpush1.msra.mxu0 0.0
  %2007 = vmatprep.subr.mxu0 0.0
  %2008 = vmatpush1.msra.mxu0 0.0
  %2009 = vmatprep.subr.mxu0 0.0
  %2010 = vmatpush1.msra.mxu0 0.0
  %2011 = vmatprep.subr.mxu0 0.0
  %2012 = vmatpush1.msra.mxu0 0.0
  %2013 = vmatprep.subr.mxu0 0.0
  %2014 = vmatpush1.msra.mxu0 0.0
  %2015 = vmatprep.subr.mxu0 0.0
  %2016 = vmatpush1.msra.mxu0 0.0
  %2017 = vmatprep.subr.mxu0 0.0
  %2018 = vmatpush1.msra.mxu0 0.0
  %2019 = vmatprep.subr.mxu0 0.0
  %2020 = vmatpush1.msra.mxu0 0.0
  %2021 = vmatprep.subr.mxu0 0.0
  %2022 = vmatpush1.msra.mxu0 0.0
  %2023 = vmatprep.subr.mxu0 0.0
  %2024 = vmatpush1.msra.mxu0 0.0
  %2025 = vmatprep.subr.mxu0 0.0
  %2026 = vmatpush1.msra.mxu0 0.0
  %2027 = vmatprep.subr.mxu0 0.0
  %2028 = vmatpush1.msra.mxu0 0.0
  %2029 = vmatprep.subr.mxu0 0.0
  %2030 = vmatpush1.msra.mxu0 0.0
  %2031 = vmatprep.subr.mxu0 0.0
  %2032 = vmatpush1.msra.mxu0 0.0
  %2033 = vmatprep.subr.mxu0 0.0
  %2034 = vmatpush1.msra.mxu0 0.0
  %2035 = vmatprep.mubr.f32.mxu0 0.0
  %2036 = vmatmul.mubr.f32.gmra.mrb[0].mxu0 %v1969
  %v2037 = vpop.f32.mrb[0].mxu0
  %v2038 = vadd.f32 0.0, %v2037
  %v2039 = vpop.f32.mrb[0].mxu0
  %2040 = vdwg.mxu0
  %2041 = vrot.lane.b32.xlu0 %v139, 56
  %v2042 = vpop.permute.xlu0 %2041
  %v2045 = vsel %vm168, %v1959, 0
  %2047 = vmatprep.subr.mxu0 0.0
  %2048 = vmatpush1.msra.mxu0 %v2042
  %2049 = vmatprep.subr.mxu0 0.0
  %2050 = vmatpush1.msra.mxu0 0.0
  %2051 = vmatprep.subr.mxu0 0.0
  %2052 = vmatpush1.msra.mxu0 0.0
  %2053 = vmatprep.subr.mxu0 0.0
  %2054 = vmatpush1.msra.mxu0 0.0
  %2055 = vmatprep.subr.mxu0 0.0
  %2056 = vmatpush1.msra.mxu0 0.0
  %2057 = vmatprep.subr.mxu0 0.0
  %2058 = vmatpush1.msra.mxu0 0.0
  %2059 = vmatprep.subr.mxu0 0.0
  %2060 = vmatpush1.msra.mxu0 0.0
  %2061 = vmatprep.subr.mxu0 0.0
  %2062 = vmatpush1.msra.mxu0 0.0
  %2063 = vmatprep.subr.mxu0 0.0
  %2064 = vmatpush1.msra.mxu0 0.0
  %2065 = vmatprep.subr.mxu0 0.0
  %2066 = vmatpush1.msra.mxu0 0.0
  %2067 = vmatprep.subr.mxu0 0.0
  %2068 = vmatpush1.msra.mxu0 0.0
  %2069 = vmatprep.subr.mxu0 0.0
  %2070 = vmatpush1.msra.mxu0 0.0
  %2071 = vmatprep.subr.mxu0 0.0
  %2072 = vmatpush1.msra.mxu0 0.0
  %2073 = vmatprep.subr.mxu0 0.0
  %2074 = vmatpush1.msra.mxu0 0.0
  %2075 = vmatprep.subr.mxu0 0.0
  %2076 = vmatpush1.msra.mxu0 0.0
  %2077 = vmatprep.subr.mxu0 0.0
  %2078 = vmatpush1.msra.mxu0 0.0
  %2079 = vmatprep.subr.mxu0 0.0
  %2080 = vmatpush1.msra.mxu0 0.0
  %2081 = vmatprep.subr.mxu0 0.0
  %2082 = vmatpush1.msra.mxu0 0.0
  %2083 = vmatprep.subr.mxu0 0.0
  %2084 = vmatpush1.msra.mxu0 0.0
  %2085 = vmatprep.subr.mxu0 0.0
  %2086 = vmatpush1.msra.mxu0 0.0
  %2087 = vmatprep.subr.mxu0 0.0
  %2088 = vmatpush1.msra.mxu0 0.0
  %2089 = vmatprep.subr.mxu0 0.0
  %2090 = vmatpush1.msra.mxu0 0.0
  %2091 = vmatprep.subr.mxu0 0.0
  %2092 = vmatpush1.msra.mxu0 0.0
  %2093 = vmatprep.subr.mxu0 0.0
  %2094 = vmatpush1.msra.mxu0 0.0
  %2095 = vmatprep.subr.mxu0 0.0
  %2096 = vmatpush1.msra.mxu0 0.0
  %2097 = vmatprep.subr.mxu0 0.0
  %2098 = vmatpush1.msra.mxu0 0.0
  %2099 = vmatprep.subr.mxu0 0.0
  %2100 = vmatpush1.msra.mxu0 0.0
  %2101 = vmatprep.subr.mxu0 0.0
  %2102 = vmatpush1.msra.mxu0 0.0
  %2103 = vmatprep.subr.mxu0 0.0
  %2104 = vmatpush1.msra.mxu0 0.0
  %2105 = vmatprep.subr.mxu0 0.0
  %2106 = vmatpush1.msra.mxu0 0.0
  %2107 = vmatprep.subr.mxu0 0.0
  %2108 = vmatpush1.msra.mxu0 0.0
  %2109 = vmatprep.subr.mxu0 0.0
  %2110 = vmatpush1.msra.mxu0 0.0
  %2111 = vmatprep.mubr.f32.mxu0 0.0
  %2112 = vmatmul.mubr.f32.gmra.mrb[0].mxu0 %v2045
  %v2113 = vpop.f32.mrb[0].mxu0
  %v2114 = vadd.f32 0.0, %v2113
  %v2115 = vpop.f32.mrb[0].mxu0
  %2116 = vdwg.mxu0
  %2117 = vrot.lane.b32.xlu0 %v144, 56
  %v2118 = vpop.permute.xlu0 %2117
  %v2121 = vsel %vm168, %v1960, 0
  %2123 = vmatprep.subr.mxu0 0.0
  %2124 = vmatpush1.msra.mxu0 %v2118
  %2125 = vmatprep.subr.mxu0 0.0
  %2126 = vmatpush1.msra.mxu0 0.0
  %2127 = vmatprep.subr.mxu0 0.0
  %2128 = vmatpush1.msra.mxu0 0.0
  %2129 = vmatprep.subr.mxu0 0.0
  %2130 = vmatpush1.msra.mxu0 0.0
  %2131 = vmatprep.subr.mxu0 0.0
  %2132 = vmatpush1.msra.mxu0 0.0
  %2133 = vmatprep.subr.mxu0 0.0
  %2134 = vmatpush1.msra.mxu0 0.0
  %2135 = vmatprep.subr.mxu0 0.0
  %2136 = vmatpush1.msra.mxu0 0.0
  %2137 = vmatprep.subr.mxu0 0.0
  %2138 = vmatpush1.msra.mxu0 0.0
  %2139 = vmatprep.subr.mxu0 0.0
  %2140 = vmatpush1.msra.mxu0 0.0
  %2141 = vmatprep.subr.mxu0 0.0
  %2142 = vmatpush1.msra.mxu0 0.0
  %2143 = vmatprep.subr.mxu0 0.0
  %2144 = vmatpush1.msra.mxu0 0.0
  %2145 = vmatprep.subr.mxu0 0.0
  %2146 = vmatpush1.msra.mxu0 0.0
  %2147 = vmatprep.subr.mxu0 0.0
  %2148 = vmatpush1.msra.mxu0 0.0
  %2149 = vmatprep.subr.mxu0 0.0
  %2150 = vmatpush1.msra.mxu0 0.0
  %2151 = vmatprep.subr.mxu0 0.0
  %2152 = vmatpush1.msra.mxu0 0.0
  %2153 = vmatprep.subr.mxu0 0.0
  %2154 = vmatpush1.msra.mxu0 0.0
  %2155 = vmatprep.subr.mxu0 0.0
  %2156 = vmatpush1.msra.mxu0 0.0
  %2157 = vmatprep.subr.mxu0 0.0
  %2158 = vmatpush1.msra.mxu0 0.0
  %2159 = vmatprep.subr.mxu0 0.0
  %2160 = vmatpush1.msra.mxu0 0.0
  %2161 = vmatprep.subr.mxu0 0.0
  %2162 = vmatpush1.msra.mxu0 0.0
  %2163 = vmatprep.subr.mxu0 0.0
  %2164 = vmatpush1.msra.mxu0 0.0
  %2165 = vmatprep.subr.mxu0 0.0
  %2166 = vmatpush1.msra.mxu0 0.0
  %2167 = vmatprep.subr.mxu0 0.0
  %2168 = vmatpush1.msra.mxu0 0.0
  %2169 = vmatprep.subr.mxu0 0.0
  %2170 = vmatpush1.msra.mxu0 0.0
  %2171 = vmatprep.subr.mxu0 0.0
  %2172 = vmatpush1.msra.mxu0 0.0
  %2173 = vmatprep.subr.mxu0 0.0
  %2174 = vmatpush1.msra.mxu0 0.0
  %2175 = vmatprep.subr.mxu0 0.0
  %2176 = vmatpush1.msra.mxu0 0.0
  %2177 = vmatprep.subr.mxu0 0.0
  %2178 = vmatpush1.msra.mxu0 0.0
  %2179 = vmatprep.subr.mxu0 0.0
  %2180 = vmatpush1.msra.mxu0 0.0
  %2181 = vmatprep.subr.mxu0 0.0
  %2182 = vmatpush1.msra.mxu0 0.0
  %2183 = vmatprep.subr.mxu0 0.0
  %2184 = vmatpush1.msra.mxu0 0.0
  %2185 = vmatprep.subr.mxu0 0.0
  %2186 = vmatpush1.msra.mxu0 0.0
  %2187 = vmatprep.mubr.f32.mxu0 0.0
  %2188 = vmatmul.mubr.f32.gmra.mrb[0].mxu0 %v2121
  %v2189 = vpop.f32.mrb[0].mxu0
  %v2190 = vadd.f32 0.0, %v2189
  %v2191 = vpop.f32.mrb[0].mxu0
  %2192 = vdwg.mxu0
  %2193 = vrot.lane.b32.xlu0 %v147, 56
  %v2194 = vpop.permute.xlu0 %2193
  %v2197 = vsel %vm168, %v1961, 0
  %2199 = vmatprep.subr.mxu0 0.0
  %2200 = vmatpush1.msra.mxu0 %v2194
  %2201 = vmatprep.subr.mxu0 0.0
  %2202 = vmatpush1.msra.mxu0 0.0
  %2203 = vmatprep.subr.mxu0 0.0
  %2204 = vmatpush1.msra.mxu0 0.0
  %2205 = vmatprep.subr.mxu0 0.0
  %2206 = vmatpush1.msra.mxu0 0.0
  %2207 = vmatprep.subr.mxu0 0.0
  %2208 = vmatpush1.msra.mxu0 0.0
  %2209 = vmatprep.subr.mxu0 0.0
  %2210 = vmatpush1.msra.mxu0 0.0
  %2211 = vmatprep.subr.mxu0 0.0
  %2212 = vmatpush1.msra.mxu0 0.0
  %2213 = vmatprep.subr.mxu0 0.0
  %2214 = vmatpush1.msra.mxu0 0.0
  %2215 = vmatprep.subr.mxu0 0.0
  %2216 = vmatpush1.msra.mxu0 0.0
  %2217 = vmatprep.subr.mxu0 0.0
  %2218 = vmatpush1.msra.mxu0 0.0
  %2219 = vmatprep.subr.mxu0 0.0
  %2220 = vmatpush1.msra.mxu0 0.0
  %2221 = vmatprep.subr.mxu0 0.0
  %2222 = vmatpush1.msra.mxu0 0.0
  %2223 = vmatprep.subr.mxu0 0.0
  %2224 = vmatpush1.msra.mxu0 0.0
  %2225 = vmatprep.subr.mxu0 0.0
  %2226 = vmatpush1.msra.mxu0 0.0
  %2227 = vmatprep.subr.mxu0 0.0
  %2228 = vmatpush1.msra.mxu0 0.0
  %2229 = vmatprep.subr.mxu0 0.0
  %2230 = vmatpush1.msra.mxu0 0.0
  %2231 = vmatprep.subr.mxu0 0.0
  %2232 = vmatpush1.msra.mxu0 0.0
  %2233 = vmatprep.subr.mxu0 0.0
  %2234 = vmatpush1.msra.mxu0 0.0
  %2235 = vmatprep.subr.mxu0 0.0
  %2236 = vmatpush1.msra.mxu0 0.0
  %2237 = vmatprep.subr.mxu0 0.0
  %2238 = vmatpush1.msra.mxu0 0.0
  %2239 = vmatprep.subr.mxu0 0.0
  %2240 = vmatpush1.msra.mxu0 0.0
  %2241 = vmatprep.subr.mxu0 0.0
  %2242 = vmatpush1.msra.mxu0 0.0
  %2243 = vmatprep.subr.mxu0 0.0
  %2244 = vmatpush1.msra.mxu0 0.0
  %2245 = vmatprep.subr.mxu0 0.0
  %2246 = vmatpush1.msra.mxu0 0.0
  %2247 = vmatprep.subr.mxu0 0.0
  %2248 = vmatpush1.msra.mxu0 0.0
  %2249 = vmatprep.subr.mxu0 0.0
  %2250 = vmatpush1.msra.mxu0 0.0
  %2251 = vmatprep.subr.mxu0 0.0
  %2252 = vmatpush1.msra.mxu0 0.0
  %2253 = vmatprep.subr.mxu0 0.0
  %2254 = vmatpush1.msra.mxu0 0.0
  %2255 = vmatprep.subr.mxu0 0.0
  %2256 = vmatpush1.msra.mxu0 0.0
  %2257 = vmatprep.subr.mxu0 0.0
  %2258 = vmatpush1.msra.mxu0 0.0
  %2259 = vmatprep.subr.mxu0 0.0
  %2260 = vmatpush1.msra.mxu0 0.0
  %2261 = vmatprep.subr.mxu0 0.0
  %2262 = vmatpush1.msra.mxu0 0.0
  %2263 = vmatprep.mubr.f32.mxu0 0.0
  %2264 = vmatmul.mubr.f32.gmra.mrb[0].mxu0 %v2197
  %v2265 = vpop.f32.mrb[0].mxu0
  %v2266 = vadd.f32 0.0, %v2265
  %v2267 = vpop.f32.mrb[0].mxu0
  %2268 = vdwg.mxu0
  %2269 = vrot.lane.b32.xlu0 %v152, 56
  %v2270 = vpop.permute.xlu0 %2269
  %v2273 = vsel %vm168, %v1962, 0
  %2275 = vmatprep.subr.mxu0 0.0
  %2276 = vmatpush1.msra.mxu0 %v2270
  %2277 = vmatprep.subr.mxu0 0.0
  %2278 = vmatpush1.msra.mxu0 0.0
  %2279 = vmatprep.subr.mxu0 0.0
  %2280 = vmatpush1.msra.mxu0 0.0
  %2281 = vmatprep.subr.mxu0 0.0
  %2282 = vmatpush1.msra.mxu0 0.0
  %2283 = vmatprep.subr.mxu0 0.0
  %2284 = vmatpush1.msra.mxu0 0.0
  %2285 = vmatprep.subr.mxu0 0.0
  %2286 = vmatpush1.msra.mxu0 0.0
  %2287 = vmatprep.subr.mxu0 0.0
  %2288 = vmatpush1.msra.mxu0 0.0
  %2289 = vmatprep.subr.mxu0 0.0
  %2290 = vmatpush1.msra.mxu0 0.0
  %2291 = vmatprep.subr.mxu0 0.0
  %2292 = vmatpush1.msra.mxu0 0.0
  %2293 = vmatprep.subr.mxu0 0.0
  %2294 = vmatpush1.msra.mxu0 0.0
  %2295 = vmatprep.subr.mxu0 0.0
  %2296 = vmatpush1.msra.mxu0 0.0
  %2297 = vmatprep.subr.mxu0 0.0
  %2298 = vmatpush1.msra.mxu0 0.0
  %2299 = vmatprep.subr.mxu0 0.0
  %2300 = vmatpush1.msra.mxu0 0.0
  %2301 = vmatprep.subr.mxu0 0.0
  %2302 = vmatpush1.msra.mxu0 0.0
  %2303 = vmatprep.subr.mxu0 0.0
  %2304 = vmatpush1.msra.mxu0 0.0
  %2305 = vmatprep.subr.mxu0 0.0
  %2306 = vmatpush1.msra.mxu0 0.0
  %2307 = vmatprep.subr.mxu0 0.0
  %2308 = vmatpush1.msra.mxu0 0.0
  %2309 = vmatprep.subr.mxu0 0.0
  %2310 = vmatpush1.msra.mxu0 0.0
  %2311 = vmatprep.subr.mxu0 0.0
  %2312 = vmatpush1.msra.mxu0 0.0
  %2313 = vmatprep.subr.mxu0 0.0
  %2314 = vmatpush1.msra.mxu0 0.0
  %2315 = vmatprep.subr.mxu0 0.0
  %2316 = vmatpush1.msra.mxu0 0.0
  %2317 = vmatprep.subr.mxu0 0.0
  %2318 = vmatpush1.msra.mxu0 0.0
  %2319 = vmatprep.subr.mxu0 0.0
  %2320 = vmatpush1.msra.mxu0 0.0
  %2321 = vmatprep.subr.mxu0 0.0
  %2322 = vmatpush1.msra.mxu0 0.0
  %2323 = vmatprep.subr.mxu0 0.0
  %2324 = vmatpush1.msra.mxu0 0.0
  %2325 = vmatprep.subr.mxu0 0.0
  %2326 = vmatpush1.msra.mxu0 0.0
  %2327 = vmatprep.subr.mxu0 0.0
  %2328 = vmatpush1.msra.mxu0 0.0
  %2329 = vmatprep.subr.mxu0 0.0
  %2330 = vmatpush1.msra.mxu0 0.0
  %2331 = vmatprep.subr.mxu0 0.0
  %2332 = vmatpush1.msra.mxu0 0.0
  %2333 = vmatprep.subr.mxu0 0.0
  %2334 = vmatpush1.msra.mxu0 0.0
  %2335 = vmatprep.subr.mxu0 0.0
  %2336 = vmatpush1.msra.mxu0 0.0
  %2337 = vmatprep.subr.mxu0 0.0
  %2338 = vmatpush1.msra.mxu0 0.0
  %2339 = vmatprep.mubr.f32.mxu0 0.0
  %2340 = vmatmul.mubr.f32.gmra.mrb[0].mxu0 %v2273
  %v2341 = vpop.f32.mrb[0].mxu0
  %v2342 = vadd.f32 0.0, %v2341
  %v2343 = vpop.f32.mrb[0].mxu0
  %2344 = vdwg.mxu0
  %2345 = vrot.lane.b32.xlu0 %v155, 56
  %v2346 = vpop.permute.xlu0 %2345
  %v2349 = vsel %vm168, %v1963, 0
  %2351 = vmatprep.subr.mxu0 0.0
  %2352 = vmatpush1.msra.mxu0 %v2346
  %2353 = vmatprep.subr.mxu0 0.0
  %2354 = vmatpush1.msra.mxu0 0.0
  %2355 = vmatprep.subr.mxu0 0.0
  %2356 = vmatpush1.msra.mxu0 0.0
  %2357 = vmatprep.subr.mxu0 0.0
  %2358 = vmatpush1.msra.mxu0 0.0
  %2359 = vmatprep.subr.mxu0 0.0
  %2360 = vmatpush1.msra.mxu0 0.0
  %2361 = vmatprep.subr.mxu0 0.0
  %2362 = vmatpush1.msra.mxu0 0.0
  %2363 = vmatprep.subr.mxu0 0.0
  %2364 = vmatpush1.msra.mxu0 0.0
  %2365 = vmatprep.subr.mxu0 0.0
  %2366 = vmatpush1.msra.mxu0 0.0
  %2367 = vmatprep.subr.mxu0 0.0
  %2368 = vmatpush1.msra.mxu0 0.0
  %2369 = vmatprep.subr.mxu0 0.0
  %2370 = vmatpush1.msra.mxu0 0.0
  %2371 = vmatprep.subr.mxu0 0.0
  %2372 = vmatpush1.msra.mxu0 0.0
  %2373 = vmatprep.subr.mxu0 0.0
  %2374 = vmatpush1.msra.mxu0 0.0
  %2375 = vmatprep.subr.mxu0 0.0
  %2376 = vmatpush1.msra.mxu0 0.0
  %2377 = vmatprep.subr.mxu0 0.0
  %2378 = vmatpush1.msra.mxu0 0.0
  %2379 = vmatprep.subr.mxu0 0.0
  %2380 = vmatpush1.msra.mxu0 0.0
  %2381 = vmatprep.subr.mxu0 0.0
  %2382 = vmatpush1.msra.mxu0 0.0
  %2383 = vmatprep.subr.mxu0 0.0
  %2384 = vmatpush1.msra.mxu0 0.0
  %2385 = vmatprep.subr.mxu0 0.0
  %2386 = vmatpush1.msra.mxu0 0.0
  %2387 = vmatprep.subr.mxu0 0.0
  %2388 = vmatpush1.msra.mxu0 0.0
  %2389 = vmatprep.subr.mxu0 0.0
  %2390 = vmatpush1.msra.mxu0 0.0
  %2391 = vmatprep.subr.mxu0 0.0
  %2392 = vmatpush1.msra.mxu0 0.0
  %2393 = vmatprep.subr.mxu0 0.0
  %2394 = vmatpush1.msra.mxu0 0.0
  %2395 = vmatprep.subr.mxu0 0.0
  %2396 = vmatpush1.msra.mxu0 0.0
  %2397 = vmatprep.subr.mxu0 0.0
  %2398 = vmatpush1.msra.mxu0 0.0
  %2399 = vmatprep.subr.mxu0 0.0
  %2400 = vmatpush1.msra.mxu0 0.0
  %2401 = vmatprep.subr.mxu0 0.0
  %2402 = vmatpush1.msra.mxu0 0.0
  %2403 = vmatprep.subr.mxu0 0.0
  %2404 = vmatpush1.msra.mxu0 0.0
  %2405 = vmatprep.subr.mxu0 0.0
  %2406 = vmatpush1.msra.mxu0 0.0
  %2407 = vmatprep.subr.mxu0 0.0
  %2408 = vmatpush1.msra.mxu0 0.0
  %2409 = vmatprep.subr.mxu0 0.0
  %2410 = vmatpush1.msra.mxu0 0.0
  %2411 = vmatprep.subr.mxu0 0.0
  %2412 = vmatpush1.msra.mxu0 0.0
  %2413 = vmatprep.subr.mxu0 0.0
  %2414 = vmatpush1.msra.mxu0 0.0
  %2415 = vmatprep.mubr.f32.mxu0 0.0
  %2416 = vmatmul.mubr.f32.gmra.mrb[0].mxu0 %v2349
  %v2417 = vpop.f32.mrb[0].mxu0
  %v2418 = vadd.f32 0.0, %v2417
  %v2419 = vpop.f32.mrb[0].mxu0
  %2420 = vdwg.mxu0
  %2421 = vrot.lane.b32.xlu0 %v160, 56
  %v2422 = vpop.permute.xlu0 %2421
  %v2425 = vsel %vm168, %v1964, 0
  %2427 = vmatprep.subr.mxu0 0.0
  %2428 = vmatpush1.msra.mxu0 %v2422
  %2429 = vmatprep.subr.mxu0 0.0
  %2430 = vmatpush1.msra.mxu0 0.0
  %2431 = vmatprep.subr.mxu0 0.0
  %2432 = vmatpush1.msra.mxu0 0.0
  %2433 = vmatprep.subr.mxu0 0.0
  %2434 = vmatpush1.msra.mxu0 0.0
  %2435 = vmatprep.subr.mxu0 0.0
  %2436 = vmatpush1.msra.mxu0 0.0
  %2437 = vmatprep.subr.mxu0 0.0
  %2438 = vmatpush1.msra.mxu0 0.0
  %2439 = vmatprep.subr.mxu0 0.0
  %2440 = vmatpush1.msra.mxu0 0.0
  %2441 = vmatprep.subr.mxu0 0.0
  %2442 = vmatpush1.msra.mxu0 0.0
  %2443 = vmatprep.subr.mxu0 0.0
  %2444 = vmatpush1.msra.mxu0 0.0
  %2445 = vmatprep.subr.mxu0 0.0
  %2446 = vmatpush1.msra.mxu0 0.0
  %2447 = vmatprep.subr.mxu0 0.0
  %2448 = vmatpush1.msra.mxu0 0.0
  %2449 = vmatprep.subr.mxu0 0.0
  %2450 = vmatpush1.msra.mxu0 0.0
  %2451 = vmatprep.subr.mxu0 0.0
  %2452 = vmatpush1.msra.mxu0 0.0
  %2453 = vmatprep.subr.mxu0 0.0
  %2454 = vmatpush1.msra.mxu0 0.0
  %2455 = vmatprep.subr.mxu0 0.0
  %2456 = vmatpush1.msra.mxu0 0.0
  %2457 = vmatprep.subr.mxu0 0.0
  %2458 = vmatpush1.msra.mxu0 0.0
  %2459 = vmatprep.subr.mxu0 0.0
  %2460 = vmatpush1.msra.mxu0 0.0
  %2461 = vmatprep.subr.mxu0 0.0
  %2462 = vmatpush1.msra.mxu0 0.0
  %2463 = vmatprep.subr.mxu0 0.0
  %2464 = vmatpush1.msra.mxu0 0.0
  %2465 = vmatprep.subr.mxu0 0.0
  %2466 = vmatpush1.msra.mxu0 0.0
  %2467 = vmatprep.subr.mxu0 0.0
  %2468 = vmatpush1.msra.mxu0 0.0
  %2469 = vmatprep.subr.mxu0 0.0
  %2470 = vmatpush1.msra.mxu0 0.0
  %2471 = vmatprep.subr.mxu0 0.0
  %2472 = vmatpush1.msra.mxu0 0.0
  %2473 = vmatprep.subr.mxu0 0.0
  %2474 = vmatpush1.msra.mxu0 0.0
  %2475 = vmatprep.subr.mxu0 0.0
  %2476 = vmatpush1.msra.mxu0 0.0
  %2477 = vmatprep.subr.mxu0 0.0
  %2478 = vmatpush1.msra.mxu0 0.0
  %2479 = vmatprep.subr.mxu0 0.0
  %2480 = vmatpush1.msra.mxu0 0.0
  %2481 = vmatprep.subr.mxu0 0.0
  %2482 = vmatpush1.msra.mxu0 0.0
  %2483 = vmatprep.subr.mxu0 0.0
  %2484 = vmatpush1.msra.mxu0 0.0
  %2485 = vmatprep.subr.mxu0 0.0
  %2486 = vmatpush1.msra.mxu0 0.0
  %2487 = vmatprep.subr.mxu0 0.0
  %2488 = vmatpush1.msra.mxu0 0.0
  %2489 = vmatprep.subr.mxu0 0.0
  %2490 = vmatpush1.msra.mxu0 0.0
  %2491 = vmatprep.mubr.f32.mxu0 0.0
  %2492 = vmatmul.mubr.f32.gmra.mrb[0].mxu0 %v2425
  %v2493 = vpop.f32.mrb[0].mxu0
  %v2494 = vadd.f32 0.0, %v2493
  %v2495 = vpop.f32.mrb[0].mxu0
  %2496 = vdwg.mxu0
  %2497 = vrot.lane.b32.xlu0 %v136, 112
  %v2498 = vpop.permute.xlu0 %2497
  %2499 = vrot.lane.b32.xlu0 %v136, 80
  %v2500 = vpop.permute.xlu0 %2499
  %v2501 = vsel %vm168, %v2498, 0
  %v2503 = vsel %vm168, %v2500, 0
  %2505 = vmatprep.subr.mxu0 0.0
  %2506 = vmatpush1.xpose.msra.mxu0 %v2503
  %2507 = vmatprep.subr.mxu0 0.0
  %2508 = vmatpush1.xpose.msra.mxu0 0.0
  %2509 = vmatprep.subr.mxu0 0.0
  %2510 = vmatpush1.xpose.msra.mxu0 0.0
  %2511 = vmatprep.subr.mxu0 0.0
  %2512 = vmatpush1.xpose.msra.mxu0 0.0
  %2513 = vmatprep.subr.mxu0 0.0
  %2514 = vmatpush1.xpose.msra.mxu0 0.0
  %2515 = vmatprep.subr.mxu0 0.0
  %2516 = vmatpush1.xpose.msra.mxu0 0.0
  %2517 = vmatprep.subr.mxu0 0.0
  %2518 = vmatpush1.xpose.msra.mxu0 0.0
  %2519 = vmatprep.subr.mxu0 0.0
  %2520 = vmatpush1.xpose.msra.mxu0 0.0
  %2521 = vmatprep.subr.mxu0 0.0
  %2522 = vmatpush1.xpose.msra.mxu0 0.0
  %2523 = vmatprep.subr.mxu0 0.0
  %2524 = vmatpush1.xpose.msra.mxu0 0.0
  %2525 = vmatprep.subr.mxu0 0.0
  %2526 = vmatpush1.xpose.msra.mxu0 0.0
  %2527 = vmatprep.subr.mxu0 0.0
  %2528 = vmatpush1.xpose.msra.mxu0 0.0
  %2529 = vmatprep.subr.mxu0 0.0
  %2530 = vmatpush1.xpose.msra.mxu0 0.0
  %2531 = vmatprep.subr.mxu0 0.0
  %2532 = vmatpush1.xpose.msra.mxu0 0.0
  %2533 = vmatprep.subr.mxu0 0.0
  %2534 = vmatpush1.xpose.msra.mxu0 0.0
  %2535 = vmatprep.subr.mxu0 0.0
  %2536 = vmatpush1.xpose.msra.mxu0 0.0
  %2537 = vmatprep.subr.mxu0 0.0
  %2538 = vmatpush1.xpose.msra.mxu0 0.0
  %2539 = vmatprep.subr.mxu0 0.0
  %2540 = vmatpush1.xpose.msra.mxu0 0.0
  %2541 = vmatprep.subr.mxu0 0.0
  %2542 = vmatpush1.xpose.msra.mxu0 0.0
  %2543 = vmatprep.subr.mxu0 0.0
  %2544 = vmatpush1.xpose.msra.mxu0 0.0
  %2545 = vmatprep.subr.mxu0 0.0
  %2546 = vmatpush1.xpose.msra.mxu0 0.0
  %2547 = vmatprep.subr.mxu0 0.0
  %2548 = vmatpush1.xpose.msra.mxu0 0.0
  %2549 = vmatprep.subr.mxu0 0.0
  %2550 = vmatpush1.xpose.msra.mxu0 0.0
  %2551 = vmatprep.subr.mxu0 0.0
  %2552 = vmatpush1.xpose.msra.mxu0 0.0
  %2553 = vmatprep.subr.mxu0 0.0
  %2554 = vmatpush1.xpose.msra.mxu0 0.0
  %2555 = vmatprep.subr.mxu0 0.0
  %2556 = vmatpush1.xpose.msra.mxu0 0.0
  %2557 = vmatprep.subr.mxu0 0.0
  %2558 = vmatpush1.xpose.msra.mxu0 0.0
  %2559 = vmatprep.subr.mxu0 0.0
  %2560 = vmatpush1.xpose.msra.mxu0 0.0
  %2561 = vmatprep.subr.mxu0 0.0
  %2562 = vmatpush1.xpose.msra.mxu0 0.0
  %2563 = vmatprep.subr.mxu0 0.0
  %2564 = vmatpush1.xpose.msra.mxu0 0.0
  %2565 = vmatprep.subr.mxu0 0.0
  %2566 = vmatpush1.xpose.msra.mxu0 0.0
  %2567 = vmatprep.subr.mxu0 0.0
  %2568 = vmatpush1.xpose.msra.mxu0 0.0
  %2569 = vmatprep.mubr.f32.mxu0 0.0
  %2570 = vmatmul.mubr.f32.gmra.mrb[0].mxu0 %v2501
  %v2571 = vpop.f32.mrb[0].mxu0
  %v2572 = vadd.f32 0.0, %v2571
  %v2573 = vpop.f32.mrb[0].mxu0
  %2574 = vdwg.mxu0
  %2575 = vrot.lane.b32.xlu0 %v139, 112
  %v2576 = vpop.permute.xlu0 %2575
  %2577 = vrot.lane.b32.xlu0 %v139, 80
  %v2578 = vpop.permute.xlu0 %2577
  %v2579 = vsel %vm168, %v2576, 0
  %v2581 = vsel %vm168, %v2578, 0
  %2583 = vmatprep.subr.mxu0 0.0
  %2584 = vmatpush1.xpose.msra.mxu0 %v2581
  %2585 = vmatprep.subr.mxu0 0.0
  %2586 = vmatpush1.xpose.msra.mxu0 0.0
  %2587 = vmatprep.subr.mxu0 0.0
  %2588 = vmatpush1.xpose.msra.mxu0 0.0
  %2589 = vmatprep.subr.mxu0 0.0
  %2590 = vmatpush1.xpose.msra.mxu0 0.0
  %2591 = vmatprep.subr.mxu0 0.0
  %2592 = vmatpush1.xpose.msra.mxu0 0.0
  %2593 = vmatprep.subr.mxu0 0.0
  %2594 = vmatpush1.xpose.msra.mxu0 0.0
  %2595 = vmatprep.subr.mxu0 0.0
  %2596 = vmatpush1.xpose.msra.mxu0 0.0
  %2597 = vmatprep.subr.mxu0 0.0
  %2598 = vmatpush1.xpose.msra.mxu0 0.0
  %2599 = vmatprep.subr.mxu0 0.0
  %2600 = vmatpush1.xpose.msra.mxu0 0.0
  %2601 = vmatprep.subr.mxu0 0.0
  %2602 = vmatpush1.xpose.msra.mxu0 0.0
  %2603 = vmatprep.subr.mxu0 0.0
  %2604 = vmatpush1.xpose.msra.mxu0 0.0
  %2605 = vmatprep.subr.mxu0 0.0
  %2606 = vmatpush1.xpose.msra.mxu0 0.0
  %2607 = vmatprep.subr.mxu0 0.0
  %2608 = vmatpush1.xpose.msra.mxu0 0.0
  %2609 = vmatprep.subr.mxu0 0.0
  %2610 = vmatpush1.xpose.msra.mxu0 0.0
  %2611 = vmatprep.subr.mxu0 0.0
  %2612 = vmatpush1.xpose.msra.mxu0 0.0
  %2613 = vmatprep.subr.mxu0 0.0
  %2614 = vmatpush1.xpose.msra.mxu0 0.0
  %2615 = vmatprep.subr.mxu0 0.0
  %2616 = vmatpush1.xpose.msra.mxu0 0.0
  %2617 = vmatprep.subr.mxu0 0.0
  %2618 = vmatpush1.xpose.msra.mxu0 0.0
  %2619 = vmatprep.subr.mxu0 0.0
  %2620 = vmatpush1.xpose.msra.mxu0 0.0
  %2621 = vmatprep.subr.mxu0 0.0
  %2622 = vmatpush1.xpose.msra.mxu0 0.0
  %2623 = vmatprep.subr.mxu0 0.0
  %2624 = vmatpush1.xpose.msra.mxu0 0.0
  %2625 = vmatprep.subr.mxu0 0.0
  %2626 = vmatpush1.xpose.msra.mxu0 0.0
  %2627 = vmatprep.subr.mxu0 0.0
  %2628 = vmatpush1.xpose.msra.mxu0 0.0
  %2629 = vmatprep.subr.mxu0 0.0
  %2630 = vmatpush1.xpose.msra.mxu0 0.0
  %2631 = vmatprep.subr.mxu0 0.0
  %2632 = vmatpush1.xpose.msra.mxu0 0.0
  %2633 = vmatprep.subr.mxu0 0.0
  %2634 = vmatpush1.xpose.msra.mxu0 0.0
  %2635 = vmatprep.subr.mxu0 0.0
  %2636 = vmatpush1.xpose.msra.mxu0 0.0
  %2637 = vmatprep.subr.mxu0 0.0
  %2638 = vmatpush1.xpose.msra.mxu0 0.0
  %2639 = vmatprep.subr.mxu0 0.0
  %2640 = vmatpush1.xpose.msra.mxu0 0.0
  %2641 = vmatprep.subr.mxu0 0.0
  %2642 = vmatpush1.xpose.msra.mxu0 0.0
  %2643 = vmatprep.subr.mxu0 0.0
  %2644 = vmatpush1.xpose.msra.mxu0 0.0
  %2645 = vmatprep.subr.mxu0 0.0
  %2646 = vmatpush1.xpose.msra.mxu0 0.0
  %2647 = vmatprep.mubr.f32.mxu0 0.0
  %2648 = vmatmul.mubr.f32.gmra.mrb[0].mxu0 %v2579
  %v2649 = vpop.f32.mrb[0].mxu0
  %v2650 = vadd.f32 0.0, %v2649
  %v2651 = vpop.f32.mrb[0].mxu0
  %2652 = vdwg.mxu0
  %2653 = vrot.lane.b32.xlu0 %v144, 112
  %v2654 = vpop.permute.xlu0 %2653
  %2655 = vrot.lane.b32.xlu0 %v144, 80
  %v2656 = vpop.permute.xlu0 %2655
  %v2657 = vsel %vm168, %v2654, 0
  %v2659 = vsel %vm168, %v2656, 0
  %2661 = vmatprep.subr.mxu0 0.0
  %2662 = vmatpush1.xpose.msra.mxu0 %v2659
  %2663 = vmatprep.subr.mxu0 0.0
  %2664 = vmatpush1.xpose.msra.mxu0 0.0
  %2665 = vmatprep.subr.mxu0 0.0
  %2666 = vmatpush1.xpose.msra.mxu0 0.0
  %2667 = vmatprep.subr.mxu0 0.0
  %2668 = vmatpush1.xpose.msra.mxu0 0.0
  %2669 = vmatprep.subr.mxu0 0.0
  %2670 = vmatpush1.xpose.msra.mxu0 0.0
  %2671 = vmatprep.subr.mxu0 0.0
  %2672 = vmatpush1.xpose.msra.mxu0 0.0
  %2673 = vmatprep.subr.mxu0 0.0
  %2674 = vmatpush1.xpose.msra.mxu0 0.0
  %2675 = vmatprep.subr.mxu0 0.0
  %2676 = vmatpush1.xpose.msra.mxu0 0.0
  %2677 = vmatprep.subr.mxu0 0.0
  %2678 = vmatpush1.xpose.msra.mxu0 0.0
  %2679 = vmatprep.subr.mxu0 0.0
  %2680 = vmatpush1.xpose.msra.mxu0 0.0
  %2681 = vmatprep.subr.mxu0 0.0
  %2682 = vmatpush1.xpose.msra.mxu0 0.0
  %2683 = vmatprep.subr.mxu0 0.0
  %2684 = vmatpush1.xpose.msra.mxu0 0.0
  %2685 = vmatprep.subr.mxu0 0.0
  %2686 = vmatpush1.xpose.msra.mxu0 0.0
  %2687 = vmatprep.subr.mxu0 0.0
  %2688 = vmatpush1.xpose.msra.mxu0 0.0
  %2689 = vmatprep.subr.mxu0 0.0
  %2690 = vmatpush1.xpose.msra.mxu0 0.0
  %2691 = vmatprep.subr.mxu0 0.0
  %2692 = vmatpush1.xpose.msra.mxu0 0.0
  %2693 = vmatprep.subr.mxu0 0.0
  %2694 = vmatpush1.xpose.msra.mxu0 0.0
  %2695 = vmatprep.subr.mxu0 0.0
  %2696 = vmatpush1.xpose.msra.mxu0 0.0
  %2697 = vmatprep.subr.mxu0 0.0
  %2698 = vmatpush1.xpose.msra.mxu0 0.0
  %2699 = vmatprep.subr.mxu0 0.0
  %2700 = vmatpush1.xpose.msra.mxu0 0.0
  %2701 = vmatprep.subr.mxu0 0.0
  %2702 = vmatpush1.xpose.msra.mxu0 0.0
  %2703 = vmatprep.subr.mxu0 0.0
  %2704 = vmatpush1.xpose.msra.mxu0 0.0
  %2705 = vmatprep.subr.mxu0 0.0
  %2706 = vmatpush1.xpose.msra.mxu0 0.0
  %2707 = vmatprep.subr.mxu0 0.0
  %2708 = vmatpush1.xpose.msra.mxu0 0.0
  %2709 = vmatprep.subr.mxu0 0.0
  %2710 = vmatpush1.xpose.msra.mxu0 0.0
  %2711 = vmatprep.subr.mxu0 0.0
  %2712 = vmatpush1.xpose.msra.mxu0 0.0
  %2713 = vmatprep.subr.mxu0 0.0
  %2714 = vmatpush1.xpose.msra.mxu0 0.0
  %2715 = vmatprep.subr.mxu0 0.0
  %2716 = vmatpush1.xpose.msra.mxu0 0.0
  %2717 = vmatprep.subr.mxu0 0.0
  %2718 = vmatpush1.xpose.msra.mxu0 0.0
  %2719 = vmatprep.subr.mxu0 0.0
  %2720 = vmatpush1.xpose.msra.mxu0 0.0
  %2721 = vmatprep.subr.mxu0 0.0
  %2722 = vmatpush1.xpose.msra.mxu0 0.0
  %2723 = vmatprep.subr.mxu0 0.0
  %2724 = vmatpush1.xpose.msra.mxu0 0.0
  %2725 = vmatprep.mubr.f32.mxu0 0.0
  %2726 = vmatmul.mubr.f32.gmra.mrb[0].mxu0 %v2657
  %v2727 = vpop.f32.mrb[0].mxu0
  %v2728 = vadd.f32 0.0, %v2727
  %v2729 = vpop.f32.mrb[0].mxu0
  %2730 = vdwg.mxu0
  %2731 = vrot.lane.b32.xlu0 %v147, 112
  %v2732 = vpop.permute.xlu0 %2731
  %2733 = vrot.lane.b32.xlu0 %v147, 80
  %v2734 = vpop.permute.xlu0 %2733
  %v2735 = vsel %vm168, %v2732, 0
  %v2737 = vsel %vm168, %v2734, 0
  %2739 = vmatprep.subr.mxu0 0.0
  %2740 = vmatpush1.xpose.msra.mxu0 %v2737
  %2741 = vmatprep.subr.mxu0 0.0
  %2742 = vmatpush1.xpose.msra.mxu0 0.0
  %2743 = vmatprep.subr.mxu0 0.0
  %2744 = vmatpush1.xpose.msra.mxu0 0.0
  %2745 = vmatprep.subr.mxu0 0.0
  %2746 = vmatpush1.xpose.msra.mxu0 0.0
  %2747 = vmatprep.subr.mxu0 0.0
  %2748 = vmatpush1.xpose.msra.mxu0 0.0
  %2749 = vmatprep.subr.mxu0 0.0
  %2750 = vmatpush1.xpose.msra.mxu0 0.0
  %2751 = vmatprep.subr.mxu0 0.0
  %2752 = vmatpush1.xpose.msra.mxu0 0.0
  %2753 = vmatprep.subr.mxu0 0.0
  %2754 = vmatpush1.xpose.msra.mxu0 0.0
  %2755 = vmatprep.subr.mxu0 0.0
  %2756 = vmatpush1.xpose.msra.mxu0 0.0
  %2757 = vmatprep.subr.mxu0 0.0
  %2758 = vmatpush1.xpose.msra.mxu0 0.0
  %2759 = vmatprep.subr.mxu0 0.0
  %2760 = vmatpush1.xpose.msra.mxu0 0.0
  %2761 = vmatprep.subr.mxu0 0.0
  %2762 = vmatpush1.xpose.msra.mxu0 0.0
  %2763 = vmatprep.subr.mxu0 0.0
  %2764 = vmatpush1.xpose.msra.mxu0 0.0
  %2765 = vmatprep.subr.mxu0 0.0
  %2766 = vmatpush1.xpose.msra.mxu0 0.0
  %2767 = vmatprep.subr.mxu0 0.0
  %2768 = vmatpush1.xpose.msra.mxu0 0.0
  %2769 = vmatprep.subr.mxu0 0.0
  %2770 = vmatpush1.xpose.msra.mxu0 0.0
  %2771 = vmatprep.subr.mxu0 0.0
  %2772 = vmatpush1.xpose.msra.mxu0 0.0
  %2773 = vmatprep.subr.mxu0 0.0
  %2774 = vmatpush1.xpose.msra.mxu0 0.0
  %2775 = vmatprep.subr.mxu0 0.0
  %2776 = vmatpush1.xpose.msra.mxu0 0.0
  %2777 = vmatprep.subr.mxu0 0.0
  %2778 = vmatpush1.xpose.msra.mxu0 0.0
  %2779 = vmatprep.subr.mxu0 0.0
  %2780 = vmatpush1.xpose.msra.mxu0 0.0
  %2781 = vmatprep.subr.mxu0 0.0
  %2782 = vmatpush1.xpose.msra.mxu0 0.0
  %2783 = vmatprep.subr.mxu0 0.0
  %2784 = vmatpush1.xpose.msra.mxu0 0.0
  %2785 = vmatprep.subr.mxu0 0.0
  %2786 = vmatpush1.xpose.msra.mxu0 0.0
  %2787 = vmatprep.subr.mxu0 0.0
  %2788 = vmatpush1.xpose.msra.mxu0 0.0
  %2789 = vmatprep.subr.mxu0 0.0
  %2790 = vmatpush1.xpose.msra.mxu0 0.0
  %2791 = vmatprep.subr.mxu0 0.0
  %2792 = vmatpush1.xpose.msra.mxu0 0.0
  %2793 = vmatprep.subr.mxu0 0.0
  %2794 = vmatpush1.xpose.msra.mxu0 0.0
  %2795 = vmatprep.subr.mxu0 0.0
  %2796 = vmatpush1.xpose.msra.mxu0 0.0
  %2797 = vmatprep.subr.mxu0 0.0
  %2798 = vmatpush1.xpose.msra.mxu0 0.0
  %2799 = vmatprep.subr.mxu0 0.0
  %2800 = vmatpush1.xpose.msra.mxu0 0.0
  %2801 = vmatprep.subr.mxu0 0.0
  %2802 = vmatpush1.xpose.msra.mxu0 0.0
  %2803 = vmatprep.mubr.f32.mxu0 0.0
  %2804 = vmatmul.mubr.f32.gmra.mrb[0].mxu0 %v2735
  %v2805 = vpop.f32.mrb[0].mxu0
  %v2806 = vadd.f32 0.0, %v2805
  %v2807 = vpop.f32.mrb[0].mxu0
  %2808 = vdwg.mxu0
  %2809 = vrot.lane.b32.xlu0 %v152, 112
  %v2810 = vpop.permute.xlu0 %2809
  %2811 = vrot.lane.b32.xlu0 %v152, 80
  %v2812 = vpop.permute.xlu0 %2811
  %v2813 = vsel %vm168, %v2810, 0
  %v2815 = vsel %vm168, %v2812, 0
  %2817 = vmatprep.subr.mxu0 0.0
  %2818 = vmatpush1.xpose.msra.mxu0 %v2815
  %2819 = vmatprep.subr.mxu0 0.0
  %2820 = vmatpush1.xpose.msra.mxu0 0.0
  %2821 = vmatprep.subr.mxu0 0.0
  %2822 = vmatpush1.xpose.msra.mxu0 0.0
  %2823 = vmatprep.subr.mxu0 0.0
  %2824 = vmatpush1.xpose.msra.mxu0 0.0
  %2825 = vmatprep.subr.mxu0 0.0
  %2826 = vmatpush1.xpose.msra.mxu0 0.0
  %2827 = vmatprep.subr.mxu0 0.0
  %2828 = vmatpush1.xpose.msra.mxu0 0.0
  %2829 = vmatprep.subr.mxu0 0.0
  %2830 = vmatpush1.xpose.msra.mxu0 0.0
  %2831 = vmatprep.subr.mxu0 0.0
  %2832 = vmatpush1.xpose.msra.mxu0 0.0
  %2833 = vmatprep.subr.mxu0 0.0
  %2834 = vmatpush1.xpose.msra.mxu0 0.0
  %2835 = vmatprep.subr.mxu0 0.0
  %2836 = vmatpush1.xpose.msra.mxu0 0.0
  %2837 = vmatprep.subr.mxu0 0.0
  %2838 = vmatpush1.xpose.msra.mxu0 0.0
  %2839 = vmatprep.subr.mxu0 0.0
  %2840 = vmatpush1.xpose.msra.mxu0 0.0
  %2841 = vmatprep.subr.mxu0 0.0
  %2842 = vmatpush1.xpose.msra.mxu0 0.0
  %2843 = vmatprep.subr.mxu0 0.0
  %2844 = vmatpush1.xpose.msra.mxu0 0.0
  %2845 = vmatprep.subr.mxu0 0.0
  %2846 = vmatpush1.xpose.msra.mxu0 0.0
  %2847 = vmatprep.subr.mxu0 0.0
  %2848 = vmatpush1.xpose.msra.mxu0 0.0
  %2849 = vmatprep.subr.mxu0 0.0
  %2850 = vmatpush1.xpose.msra.mxu0 0.0
  %2851 = vmatprep.subr.mxu0 0.0
  %2852 = vmatpush1.xpose.msra.mxu0 0.0
  %2853 = vmatprep.subr.mxu0 0.0
  %2854 = vmatpush1.xpose.msra.mxu0 0.0
  %2855 = vmatprep.subr.mxu0 0.0
  %2856 = vmatpush1.xpose.msra.mxu0 0.0
  %2857 = vmatprep.subr.mxu0 0.0
  %2858 = vmatpush1.xpose.msra.mxu0 0.0
  %2859 = vmatprep.subr.mxu0 0.0
  %2860 = vmatpush1.xpose.msra.mxu0 0.0
  %2861 = vmatprep.subr.mxu0 0.0
  %2862 = vmatpush1.xpose.msra.mxu0 0.0
  %2863 = vmatprep.subr.mxu0 0.0
  %2864 = vmatpush1.xpose.msra.mxu0 0.0
  %2865 = vmatprep.subr.mxu0 0.0
  %2866 = vmatpush1.xpose.msra.mxu0 0.0
  %2867 = vmatprep.subr.mxu0 0.0
  %2868 = vmatpush1.xpose.msra.mxu0 0.0
  %2869 = vmatprep.subr.mxu0 0.0
  %2870 = vmatpush1.xpose.msra.mxu0 0.0
  %2871 = vmatprep.subr.mxu0 0.0
  %2872 = vmatpush1.xpose.msra.mxu0 0.0
  %2873 = vmatprep.subr.mxu0 0.0
  %2874 = vmatpush1.xpose.msra.mxu0 0.0
  %2875 = vmatprep.subr.mxu0 0.0
  %2876 = vmatpush1.xpose.msra.mxu0 0.0
  %2877 = vmatprep.subr.mxu0 0.0
  %2878 = vmatpush1.xpose.msra.mxu0 0.0
  %2879 = vmatprep.subr.mxu0 0.0
  %2880 = vmatpush1.xpose.msra.mxu0 0.0
  %2881 = vmatprep.mubr.f32.mxu0 0.0
  %2882 = vmatmul.mubr.f32.gmra.mrb[0].mxu0 %v2813
  %v2883 = vpop.f32.mrb[0].mxu0
  %v2884 = vadd.f32 0.0, %v2883
  %v2885 = vpop.f32.mrb[0].mxu0
  %2886 = vdwg.mxu0
  %2887 = vrot.lane.b32.xlu0 %v155, 112
  %v2888 = vpop.permute.xlu0 %2887
  %2889 = vrot.lane.b32.xlu0 %v155, 80
  %v2890 = vpop.permute.xlu0 %2889
  %v2891 = vsel %vm168, %v2888, 0
  %v2893 = vsel %vm168, %v2890, 0
  %2895 = vmatprep.subr.mxu0 0.0
  %2896 = vmatpush1.xpose.msra.mxu0 %v2893
  %2897 = vmatprep.subr.mxu0 0.0
  %2898 = vmatpush1.xpose.msra.mxu0 0.0
  %2899 = vmatprep.subr.mxu0 0.0
  %2900 = vmatpush1.xpose.msra.mxu0 0.0
  %2901 = vmatprep.subr.mxu0 0.0
  %2902 = vmatpush1.xpose.msra.mxu0 0.0
  %2903 = vmatprep.subr.mxu0 0.0
  %2904 = vmatpush1.xpose.msra.mxu0 0.0
  %2905 = vmatprep.subr.mxu0 0.0
  %2906 = vmatpush1.xpose.msra.mxu0 0.0
  %2907 = vmatprep.subr.mxu0 0.0
  %2908 = vmatpush1.xpose.msra.mxu0 0.0
  %2909 = vmatprep.subr.mxu0 0.0
  %2910 = vmatpush1.xpose.msra.mxu0 0.0
  %2911 = vmatprep.subr.mxu0 0.0
  %2912 = vmatpush1.xpose.msra.mxu0 0.0
  %2913 = vmatprep.subr.mxu0 0.0
  %2914 = vmatpush1.xpose.msra.mxu0 0.0
  %2915 = vmatprep.subr.mxu0 0.0
  %2916 = vmatpush1.xpose.msra.mxu0 0.0
  %2917 = vmatprep.subr.mxu0 0.0
  %2918 = vmatpush1.xpose.msra.mxu0 0.0
  %2919 = vmatprep.subr.mxu0 0.0
  %2920 = vmatpush1.xpose.msra.mxu0 0.0
  %2921 = vmatprep.subr.mxu0 0.0
  %2922 = vmatpush1.xpose.msra.mxu0 0.0
  %2923 = vmatprep.subr.mxu0 0.0
  %2924 = vmatpush1.xpose.msra.mxu0 0.0
  %2925 = vmatprep.subr.mxu0 0.0
  %2926 = vmatpush1.xpose.msra.mxu0 0.0
  %2927 = vmatprep.subr.mxu0 0.0
  %2928 = vmatpush1.xpose.msra.mxu0 0.0
  %2929 = vmatprep.subr.mxu0 0.0
  %2930 = vmatpush1.xpose.msra.mxu0 0.0
  %2931 = vmatprep.subr.mxu0 0.0
  %2932 = vmatpush1.xpose.msra.mxu0 0.0
  %2933 = vmatprep.subr.mxu0 0.0
  %2934 = vmatpush1.xpose.msra.mxu0 0.0
  %2935 = vmatprep.subr.mxu0 0.0
  %2936 = vmatpush1.xpose.msra.mxu0 0.0
  %2937 = vmatprep.subr.mxu0 0.0
  %2938 = vmatpush1.xpose.msra.mxu0 0.0
  %2939 = vmatprep.subr.mxu0 0.0
  %2940 = vmatpush1.xpose.msra.mxu0 0.0
  %2941 = vmatprep.subr.mxu0 0.0
  %2942 = vmatpush1.xpose.msra.mxu0 0.0
  %2943 = vmatprep.subr.mxu0 0.0
  %2944 = vmatpush1.xpose.msra.mxu0 0.0
  %2945 = vmatprep.subr.mxu0 0.0
  %2946 = vmatpush1.xpose.msra.mxu0 0.0
  %2947 = vmatprep.subr.mxu0 0.0
  %2948 = vmatpush1.xpose.msra.mxu0 0.0
  %2949 = vmatprep.subr.mxu0 0.0
  %2950 = vmatpush1.xpose.msra.mxu0 0.0
  %2951 = vmatprep.subr.mxu0 0.0
  %2952 = vmatpush1.xpose.msra.mxu0 0.0
  %2953 = vmatprep.subr.mxu0 0.0
  %2954 = vmatpush1.xpose.msra.mxu0 0.0
  %2955 = vmatprep.subr.mxu0 0.0
  %2956 = vmatpush1.xpose.msra.mxu0 0.0
  %2957 = vmatprep.subr.mxu0 0.0
  %2958 = vmatpush1.xpose.msra.mxu0 0.0
  %2959 = vmatprep.mubr.f32.mxu0 0.0
  %2960 = vmatmul.mubr.f32.gmra.mrb[0].mxu0 %v2891
  %v2961 = vpop.f32.mrb[0].mxu0
  %v2962 = vadd.f32 0.0, %v2961
  %v2963 = vpop.f32.mrb[0].mxu0
  %2964 = vdwg.mxu0
  %2965 = vrot.lane.b32.xlu0 %v160, 112
  %v2966 = vpop.permute.xlu0 %2965
  %2967 = vrot.lane.b32.xlu0 %v160, 80
  %v2968 = vpop.permute.xlu0 %2967
  %v2969 = vsel %vm168, %v2966, 0
  %v2971 = vsel %vm168, %v2968, 0
  %2973 = vmatprep.subr.mxu0 0.0
  %2974 = vmatpush1.xpose.msra.mxu0 %v2971
  %2975 = vmatprep.subr.mxu0 0.0
  %2976 = vmatpush1.xpose.msra.mxu0 0.0
  %2977 = vmatprep.subr.mxu0 0.0
  %2978 = vmatpush1.xpose.msra.mxu0 0.0
  %2979 = vmatprep.subr.mxu0 0.0
  %2980 = vmatpush1.xpose.msra.mxu0 0.0
  %2981 = vmatprep.subr.mxu0 0.0
  %2982 = vmatpush1.xpose.msra.mxu0 0.0
  %2983 = vmatprep.subr.mxu0 0.0
  %2984 = vmatpush1.xpose.msra.mxu0 0.0
  %2985 = vmatprep.subr.mxu0 0.0
  %2986 = vmatpush1.xpose.msra.mxu0 0.0
  %2987 = vmatprep.subr.mxu0 0.0
  %2988 = vmatpush1.xpose.msra.mxu0 0.0
  %2989 = vmatprep.subr.mxu0 0.0
  %2990 = vmatpush1.xpose.msra.mxu0 0.0
  %2991 = vmatprep.subr.mxu0 0.0
  %2992 = vmatpush1.xpose.msra.mxu0 0.0
  %2993 = vmatprep.subr.mxu0 0.0
  %2994 = vmatpush1.xpose.msra.mxu0 0.0
  %2995 = vmatprep.subr.mxu0 0.0
  %2996 = vmatpush1.xpose.msra.mxu0 0.0
  %2997 = vmatprep.subr.mxu0 0.0
  %2998 = vmatpush1.xpose.msra.mxu0 0.0
  %2999 = vmatprep.subr.mxu0 0.0
  %3000 = vmatpush1.xpose.msra.mxu0 0.0
  %3001 = vmatprep.subr.mxu0 0.0
  %3002 = vmatpush1.xpose.msra.mxu0 0.0
  %3003 = vmatprep.subr.mxu0 0.0
  %3004 = vmatpush1.xpose.msra.mxu0 0.0
  %3005 = vmatprep.subr.mxu0 0.0
  %3006 = vmatpush1.xpose.msra.mxu0 0.0
  %3007 = vmatprep.subr.mxu0 0.0
  %3008 = vmatpush1.xpose.msra.mxu0 0.0
  %3009 = vmatprep.subr.mxu0 0.0
  %3010 = vmatpush1.xpose.msra.mxu0 0.0
  %3011 = vmatprep.subr.mxu0 0.0
  %3012 = vmatpush1.xpose.msra.mxu0 0.0
  %3013 = vmatprep.subr.mxu0 0.0
  %3014 = vmatpush1.xpose.msra.mxu0 0.0
  %3015 = vmatprep.subr.mxu0 0.0
  %3016 = vmatpush1.xpose.msra.mxu0 0.0
  %3017 = vmatprep.subr.mxu0 0.0
  %3018 = vmatpush1.xpose.msra.mxu0 0.0
  %3019 = vmatprep.subr.mxu0 0.0
  %3020 = vmatpush1.xpose.msra.mxu0 0.0
  %3021 = vmatprep.subr.mxu0 0.0
  %3022 = vmatpush1.xpose.msra.mxu0 0.0
  %3023 = vmatprep.subr.mxu0 0.0
  %3024 = vmatpush1.xpose.msra.mxu0 0.0
  %3025 = vmatprep.subr.mxu0 0.0
  %3026 = vmatpush1.xpose.msra.mxu0 0.0
  %3027 = vmatprep.subr.mxu0 0.0
  %3028 = vmatpush1.xpose.msra.mxu0 0.0
  %3029 = vmatprep.subr.mxu0 0.0
  %3030 = vmatpush1.xpose.msra.mxu0 0.0
  %3031 = vmatprep.subr.mxu0 0.0
  %3032 = vmatpush1.xpose.msra.mxu0 0.0
  %3033 = vmatprep.subr.mxu0 0.0
  %3034 = vmatpush1.xpose.msra.mxu0 0.0
  %3035 = vmatprep.subr.mxu0 0.0
  %3036 = vmatpush1.xpose.msra.mxu0 0.0
  %3037 = vmatprep.mubr.f32.mxu0 0.0
  %3038 = vmatmul.mubr.f32.gmra.mrb[0].mxu0 %v2969
  %v3039 = vpop.f32.mrb[0].mxu0
  %v3040 = vadd.f32 0.0, %v3039
  %v3041 = vpop.f32.mrb[0].mxu0
  %3042 = vdwg.mxu0
  %v3043 = vmul.f32 %v2572, 0.35355338
  %v3044 = vmul.f32 %v2650, 0.35355338
  %v3045 = vmul.f32 %v2728, 0.35355338
  %v3046 = vmul.f32 %v2806, 0.35355338
  %v3047 = vmul.f32 %v2884, 0.35355338
  %v3048 = vmul.f32 %v2962, 0.35355338
  %v3049 = vmul.f32 %v3040, 0.35355338
  %v3050 = vadd.f32 %v3043, %v54
  %v3051 = vadd.f32 %v3044, %v55
  %v3052 = vadd.f32 %v3045, %v56
  %v3053 = vadd.f32 %v3046, %v57
  %v3054 = vadd.f32 %v3047, %v58
  %v3055 = vadd.f32 %v3048, %v59
  %v3056 = vadd.f32 %v3049, %v60
  %v3057 = vsel %vm168, %v3050, -inf
  %3058 = vmax.xlane.f32.xlu0 %v3057
  %v3059 = vpop.xlane.xlu0 %3058
  %v3060 = vsel %vm168, %v3051, -inf
  %3061 = vmax.xlane.f32.xlu0 %v3060
  %v3062 = vpop.xlane.xlu0 %3061
  %v3063 = vsel %vm168, %v3052, -inf
  %3064 = vmax.xlane.f32.xlu0 %v3063
  %v3065 = vpop.xlane.xlu0 %3064
  %v3066 = vsel %vm168, %v3053, -inf
  %3067 = vmax.xlane.f32.xlu0 %v3066
  %v3068 = vpop.xlane.xlu0 %3067
  %v3069 = vsel %vm168, %v3054, -inf
  %3070 = vmax.xlane.f32.xlu0 %v3069
  %v3071 = vpop.xlane.xlu0 %3070
  %v3072 = vsel %vm168, %v3055, -inf
  %3073 = vmax.xlane.f32.xlu0 %v3072
  %v3074 = vpop.xlane.xlu0 %3073
  %v3075 = vsel %vm168, %v3056, -inf
  %3076 = vmax.xlane.f32.xlu0 %v3075
  %v3077 = vpop.xlane.xlu0 %3076
  %v3078 = vsub.f32 %v3050, %v3059
  %v3079 = vsub.f32 %v3051, %v3062
  %v3080 = vsub.f32 %v3052, %v3065
  %v3081 = vsub.f32 %v3053, %v3068
  %v3082 = vsub.f32 %v3054, %v3071
  %v3083 = vsub.f32 %v3055, %v3074
  %v3084 = vsub.f32 %v3056, %v3077
  %v3085 = vmul.f32 %v3078, 1.442695
  %v3086 = vpow.pop %v3085
  %v3087 = vmul.f32 %v3079, 1.442695
  %v3088 = vpow.pop %v3087
  %v3089 = vmul.f32 %v3080, 1.442695
  %v3090 = vpow.pop %v3089
  %v3091 = vmul.f32 %v3081, 1.442695
  %v3092 = vpow.pop %v3091
  %v3093 = vmul.f32 %v3082, 1.442695
  %v3094 = vpow.pop %v3093
  %v3095 = vmul.f32 %v3083, 1.442695
  %v3096 = vpow.pop %v3095
  %v3097 = vmul.f32 %v3084, 1.442695
  %v3098 = vpow.pop %v3097
  %v3099 = vsel %vm168, %v3086, 0.0
  %3100 = vadd.xlane.f32.xlu0 %v3099
  %v3101 = vpop.xlane.xlu0 %3100
  %v3102 = vsel %vm168, %v3088, 0.0
  %3103 = vadd.xlane.f32.xlu0 %v3102
  %v3104 = vpop.xlane.xlu0 %3103
  %v3105 = vsel %vm168, %v3090, 0.0
  %3106 = vadd.xlane.f32.xlu0 %v3105
  %v3107 = vpop.xlane.xlu0 %3106
  %v3108 = vsel %vm168, %v3092, 0.0
  %3109 = vadd.xlane.f32.xlu0 %v3108
  %v3110 = vpop.xlane.xlu0 %3109
  %v3111 = vsel %vm168, %v3094, 0.0
  %3112 = vadd.xlane.f32.xlu0 %v3111
  %v3113 = vpop.xlane.xlu0 %3112
  %v3114 = vsel %vm168, %v3096, 0.0
  %3115 = vadd.xlane.f32.xlu0 %v3114
  %v3116 = vpop.xlane.xlu0 %3115
  %v3117 = vsel %vm168, %v3098, 0.0
  %3118 = vadd.xlane.f32.xlu0 %v3117
  %v3119 = vpop.xlane.xlu0 %3118
  %v3120 = vrcp.pop %v3101
  %v3121 = vrcp.pop %v3104
  %v3122 = vrcp.pop %v3107
  %v3123 = vrcp.pop %v3110
  %v3124 = vrcp.pop %v3113
  %v3125 = vrcp.pop %v3116
  %v3126 = vrcp.pop %v3119
  %v3127 = vmul.f32 %v3086, %v3120
  %v3128 = vmul.f32 %v3088, %v3121
  %v3129 = vmul.f32 %v3090, %v3122
  %v3130 = vmul.f32 %v3092, %v3123
  %v3131 = vmul.f32 %v3094, %v3124
  %v3132 = vmul.f32 %v3096, %v3125
  %v3133 = vmul.f32 %v3098, %v3126
  %3134 = vrot.lane.b32.xlu0 %v136, 48
  %v3135 = vpop.permute.xlu0 %3134
  %v3138 = vsel %vm168, %v3127, 0
  %3140 = vmatprep.subr.mxu0 0.0
  %3141 = vmatpush1.msra.mxu0 %v3135
  %3142 = vmatprep.subr.mxu0 0.0
  %3143 = vmatpush1.msra.mxu0 0.0
  %3144 = vmatprep.subr.mxu0 0.0
  %3145 = vmatpush1.msra.mxu0 0.0
  %3146 = vmatprep.subr.mxu0 0.0
  %3147 = vmatpush1.msra.mxu0 0.0
  %3148 = vmatprep.subr.mxu0 0.0
  %3149 = vmatpush1.msra.mxu0 0.0
  %3150 = vmatprep.subr.mxu0 0.0
  %3151 = vmatpush1.msra.mxu0 0.0
  %3152 = vmatprep.subr.mxu0 0.0
  %3153 = vmatpush1.msra.mxu0 0.0
  %3154 = vmatprep.subr.mxu0 0.0
  %3155 = vmatpush1.msra.mxu0 0.0
  %3156 = vmatprep.subr.mxu0 0.0
  %3157 = vmatpush1.msra.mxu0 0.0
  %3158 = vmatprep.subr.mxu0 0.0
  %3159 = vmatpush1.msra.mxu0 0.0
  %3160 = vmatprep.subr.mxu0 0.0
  %3161 = vmatpush1.msra.mxu0 0.0
  %3162 = vmatprep.subr.mxu0 0.0
  %3163 = vmatpush1.msra.mxu0 0.0
  %3164 = vmatprep.subr.mxu0 0.0
  %3165 = vmatpush1.msra.mxu0 0.0
  %3166 = vmatprep.subr.mxu0 0.0
  %3167 = vmatpush1.msra.mxu0 0.0
  %3168 = vmatprep.subr.mxu0 0.0
  %3169 = vmatpush1.msra.mxu0 0.0
  %3170 = vmatprep.subr.mxu0 0.0
  %3171 = vmatpush1.msra.mxu0 0.0
  %3172 = vmatprep.subr.mxu0 0.0
  %3173 = vmatpush1.msra.mxu0 0.0
  %3174 = vmatprep.subr.mxu0 0.0
  %3175 = vmatpush1.msra.mxu0 0.0
  %3176 = vmatprep.subr.mxu0 0.0
  %3177 = vmatpush1.msra.mxu0 0.0
  %3178 = vmatprep.subr.mxu0 0.0
  %3179 = vmatpush1.msra.mxu0 0.0
  %3180 = vmatprep.subr.mxu0 0.0
  %3181 = vmatpush1.msra.mxu0 0.0
  %3182 = vmatprep.subr.mxu0 0.0
  %3183 = vmatpush1.msra.mxu0 0.0
  %3184 = vmatprep.subr.mxu0 0.0
  %3185 = vmatpush1.msra.mxu0 0.0
  %3186 = vmatprep.subr.mxu0 0.0
  %3187 = vmatpush1.msra.mxu0 0.0
  %3188 = vmatprep.subr.mxu0 0.0
  %3189 = vmatpush1.msra.mxu0 0.0
  %3190 = vmatprep.subr.mxu0 0.0
  %3191 = vmatpush1.msra.mxu0 0.0
  %3192 = vmatprep.subr.mxu0 0.0
  %3193 = vmatpush1.msra.mxu0 0.0
  %3194 = vmatprep.subr.mxu0 0.0
  %3195 = vmatpush1.msra.mxu0 0.0
  %3196 = vmatprep.subr.mxu0 0.0
  %3197 = vmatpush1.msra.mxu0 0.0
  %3198 = vmatprep.subr.mxu0 0.0
  %3199 = vmatpush1.msra.mxu0 0.0
  %3200 = vmatprep.subr.mxu0 0.0
  %3201 = vmatpush1.msra.mxu0 0.0
  %3202 = vmatprep.subr.mxu0 0.0
  %3203 = vmatpush1.msra.mxu0 0.0
  %3204 = vmatprep.mubr.f32.mxu0 0.0
  %3205 = vmatmul.mubr.f32.gmra.mrb[0].mxu0 %v3138
  %v3206 = vpop.f32.mrb[0].mxu0
  %v3207 = vadd.f32 0.0, %v3206
  %v3208 = vpop.f32.mrb[0].mxu0
  %3209 = vdwg.mxu0
  %3210 = vrot.lane.b32.xlu0 %v139, 48
  %v3211 = vpop.permute.xlu0 %3210
  %v3214 = vsel %vm168, %v3128, 0
  %3216 = vmatprep.subr.mxu0 0.0
  %3217 = vmatpush1.msra.mxu0 %v3211
  %3218 = vmatprep.subr.mxu0 0.0
  %3219 = vmatpush1.msra.mxu0 0.0
  %3220 = vmatprep.subr.mxu0 0.0
  %3221 = vmatpush1.msra.mxu0 0.0
  %3222 = vmatprep.subr.mxu0 0.0
  %3223 = vmatpush1.msra.mxu0 0.0
  %3224 = vmatprep.subr.mxu0 0.0
  %3225 = vmatpush1.msra.mxu0 0.0
  %3226 = vmatprep.subr.mxu0 0.0
  %3227 = vmatpush1.msra.mxu0 0.0
  %3228 = vmatprep.subr.mxu0 0.0
  %3229 = vmatpush1.msra.mxu0 0.0
  %3230 = vmatprep.subr.mxu0 0.0
  %3231 = vmatpush1.msra.mxu0 0.0
  %3232 = vmatprep.subr.mxu0 0.0
  %3233 = vmatpush1.msra.mxu0 0.0
  %3234 = vmatprep.subr.mxu0 0.0
  %3235 = vmatpush1.msra.mxu0 0.0
  %3236 = vmatprep.subr.mxu0 0.0
  %3237 = vmatpush1.msra.mxu0 0.0
  %3238 = vmatprep.subr.mxu0 0.0
  %3239 = vmatpush1.msra.mxu0 0.0
  %3240 = vmatprep.subr.mxu0 0.0
  %3241 = vmatpush1.msra.mxu0 0.0
  %3242 = vmatprep.subr.mxu0 0.0
  %3243 = vmatpush1.msra.mxu0 0.0
  %3244 = vmatprep.subr.mxu0 0.0
  %3245 = vmatpush1.msra.mxu0 0.0
  %3246 = vmatprep.subr.mxu0 0.0
  %3247 = vmatpush1.msra.mxu0 0.0
  %3248 = vmatprep.subr.mxu0 0.0
  %3249 = vmatpush1.msra.mxu0 0.0
  %3250 = vmatprep.subr.mxu0 0.0
  %3251 = vmatpush1.msra.mxu0 0.0
  %3252 = vmatprep.subr.mxu0 0.0
  %3253 = vmatpush1.msra.mxu0 0.0
  %3254 = vmatprep.subr.mxu0 0.0
  %3255 = vmatpush1.msra.mxu0 0.0
  %3256 = vmatprep.subr.mxu0 0.0
  %3257 = vmatpush1.msra.mxu0 0.0
  %3258 = vmatprep.subr.mxu0 0.0
  %3259 = vmatpush1.msra.mxu0 0.0
  %3260 = vmatprep.subr.mxu0 0.0
  %3261 = vmatpush1.msra.mxu0 0.0
  %3262 = vmatprep.subr.mxu0 0.0
  %3263 = vmatpush1.msra.mxu0 0.0
  %3264 = vmatprep.subr.mxu0 0.0
  %3265 = vmatpush1.msra.mxu0 0.0
  %3266 = vmatprep.subr.mxu0 0.0
  %3267 = vmatpush1.msra.mxu0 0.0
  %3268 = vmatprep.subr.mxu0 0.0
  %3269 = vmatpush1.msra.mxu0 0.0
  %3270 = vmatprep.subr.mxu0 0.0
  %3271 = vmatpush1.msra.mxu0 0.0
  %3272 = vmatprep.subr.mxu0 0.0
  %3273 = vmatpush1.msra.mxu0 0.0
  %3274 = vmatprep.subr.mxu0 0.0
  %3275 = vmatpush1.msra.mxu0 0.0
  %3276 = vmatprep.subr.mxu0 0.0
  %3277 = vmatpush1.msra.mxu0 0.0
  %3278 = vmatprep.subr.mxu0 0.0
  %3279 = vmatpush1.msra.mxu0 0.0
  %3280 = vmatprep.mubr.f32.mxu0 0.0
  %3281 = vmatmul.mubr.f32.gmra.mrb[0].mxu0 %v3214
  %v3282 = vpop.f32.mrb[0].mxu0
  %v3283 = vadd.f32 0.0, %v3282
  %v3284 = vpop.f32.mrb[0].mxu0
  %3285 = vdwg.mxu0
  %3286 = vrot.lane.b32.xlu0 %v144, 48
  %v3287 = vpop.permute.xlu0 %3286
  %v3290 = vsel %vm168, %v3129, 0
  %3292 = vmatprep.subr.mxu0 0.0
  %3293 = vmatpush1.msra.mxu0 %v3287
  %3294 = vmatprep.subr.mxu0 0.0
  %3295 = vmatpush1.msra.mxu0 0.0
  %3296 = vmatprep.subr.mxu0 0.0
  %3297 = vmatpush1.msra.mxu0 0.0
  %3298 = vmatprep.subr.mxu0 0.0
  %3299 = vmatpush1.msra.mxu0 0.0
  %3300 = vmatprep.subr.mxu0 0.0
  %3301 = vmatpush1.msra.mxu0 0.0
  %3302 = vmatprep.subr.mxu0 0.0
  %3303 = vmatpush1.msra.mxu0 0.0
  %3304 = vmatprep.subr.mxu0 0.0
  %3305 = vmatpush1.msra.mxu0 0.0
  %3306 = vmatprep.subr.mxu0 0.0
  %3307 = vmatpush1.msra.mxu0 0.0
  %3308 = vmatprep.subr.mxu0 0.0
  %3309 = vmatpush1.msra.mxu0 0.0
  %3310 = vmatprep.subr.mxu0 0.0
  %3311 = vmatpush1.msra.mxu0 0.0
  %3312 = vmatprep.subr.mxu0 0.0
  %3313 = vmatpush1.msra.mxu0 0.0
  %3314 = vmatprep.subr.mxu0 0.0
  %3315 = vmatpush1.msra.mxu0 0.0
  %3316 = vmatprep.subr.mxu0 0.0
  %3317 = vmatpush1.msra.mxu0 0.0
  %3318 = vmatprep.subr.mxu0 0.0
  %3319 = vmatpush1.msra.mxu0 0.0
  %3320 = vmatprep.subr.mxu0 0.0
  %3321 = vmatpush1.msra.mxu0 0.0
  %3322 = vmatprep.subr.mxu0 0.0
  %3323 = vmatpush1.msra.mxu0 0.0
  %3324 = vmatprep.subr.mxu0 0.0
  %3325 = vmatpush1.msra.mxu0 0.0
  %3326 = vmatprep.subr.mxu0 0.0
  %3327 = vmatpush1.msra.mxu0 0.0
  %3328 = vmatprep.subr.mxu0 0.0
  %3329 = vmatpush1.msra.mxu0 0.0
  %3330 = vmatprep.subr.mxu0 0.0
  %3331 = vmatpush1.msra.mxu0 0.0
  %3332 = vmatprep.subr.mxu0 0.0
  %3333 = vmatpush1.msra.mxu0 0.0
  %3334 = vmatprep.subr.mxu0 0.0
  %3335 = vmatpush1.msra.mxu0 0.0
  %3336 = vmatprep.subr.mxu0 0.0
  %3337 = vmatpush1.msra.mxu0 0.0
  %3338 = vmatprep.subr.mxu0 0.0
  %3339 = vmatpush1.msra.mxu0 0.0
  %3340 = vmatprep.subr.mxu0 0.0
  %3341 = vmatpush1.msra.mxu0 0.0
  %3342 = vmatprep.subr.mxu0 0.0
  %3343 = vmatpush1.msra.mxu0 0.0
  %3344 = vmatprep.subr.mxu0 0.0
  %3345 = vmatpush1.msra.mxu0 0.0
  %3346 = vmatprep.subr.mxu0 0.0
  %3347 = vmatpush1.msra.mxu0 0.0
  %3348 = vmatprep.subr.mxu0 0.0
  %3349 = vmatpush1.msra.mxu0 0.0
  %3350 = vmatprep.subr.mxu0 0.0
  %3351 = vmatpush1.msra.mxu0 0.0
  %3352 = vmatprep.subr.mxu0 0.0
  %3353 = vmatpush1.msra.mxu0 0.0
  %3354 = vmatprep.subr.mxu0 0.0
  %3355 = vmatpush1.msra.mxu0 0.0
  %3356 = vmatprep.mubr.f32.mxu0 0.0
  %3357 = vmatmul.mubr.f32.gmra.mrb[0].mxu0 %v3290
  %v3358 = vpop.f32.mrb[0].mxu0
  %v3359 = vadd.f32 0.0, %v3358
  %v3360 = vpop.f32.mrb[0].mxu0
  %3361 = vdwg.mxu0
  %3362 = vrot.lane.b32.xlu0 %v147, 48
  %v3363 = vpop.permute.xlu0 %3362
  %v3366 = vsel %vm168, %v3130, 0
  %3368 = vmatprep.subr.mxu0 0.0
  %3369 = vmatpush1.msra.mxu0 %v3363
  %3370 = vmatprep.subr.mxu0 0.0
  %3371 = vmatpush1.msra.mxu0 0.0
  %3372 = vmatprep.subr.mxu0 0.0
  %3373 = vmatpush1.msra.mxu0 0.0
  %3374 = vmatprep.subr.mxu0 0.0
  %3375 = vmatpush1.msra.mxu0 0.0
  %3376 = vmatprep.subr.mxu0 0.0
  %3377 = vmatpush1.msra.mxu0 0.0
  %3378 = vmatprep.subr.mxu0 0.0
  %3379 = vmatpush1.msra.mxu0 0.0
  %3380 = vmatprep.subr.mxu0 0.0
  %3381 = vmatpush1.msra.mxu0 0.0
  %3382 = vmatprep.subr.mxu0 0.0
  %3383 = vmatpush1.msra.mxu0 0.0
  %3384 = vmatprep.subr.mxu0 0.0
  %3385 = vmatpush1.msra.mxu0 0.0
  %3386 = vmatprep.subr.mxu0 0.0
  %3387 = vmatpush1.msra.mxu0 0.0
  %3388 = vmatprep.subr.mxu0 0.0
  %3389 = vmatpush1.msra.mxu0 0.0
  %3390 = vmatprep.subr.mxu0 0.0
  %3391 = vmatpush1.msra.mxu0 0.0
  %3392 = vmatprep.subr.mxu0 0.0
  %3393 = vmatpush1.msra.mxu0 0.0
  %3394 = vmatprep.subr.mxu0 0.0
  %3395 = vmatpush1.msra.mxu0 0.0
  %3396 = vmatprep.subr.mxu0 0.0
  %3397 = vmatpush1.msra.mxu0 0.0
  %3398 = vmatprep.subr.mxu0 0.0
  %3399 = vmatpush1.msra.mxu0 0.0
  %3400 = vmatprep.subr.mxu0 0.0
  %3401 = vmatpush1.msra.mxu0 0.0
  %3402 = vmatprep.subr.mxu0 0.0
  %3403 = vmatpush1.msra.mxu0 0.0
  %3404 = vmatprep.subr.mxu0 0.0
  %3405 = vmatpush1.msra.mxu0 0.0
  %3406 = vmatprep.subr.mxu0 0.0
  %3407 = vmatpush1.msra.mxu0 0.0
  %3408 = vmatprep.subr.mxu0 0.0
  %3409 = vmatpush1.msra.mxu0 0.0
  %3410 = vmatprep.subr.mxu0 0.0
  %3411 = vmatpush1.msra.mxu0 0.0
  %3412 = vmatprep.subr.mxu0 0.0
  %3413 = vmatpush1.msra.mxu0 0.0
  %3414 = vmatprep.subr.mxu0 0.0
  %3415 = vmatpush1.msra.mxu0 0.0
  %3416 = vmatprep.subr.mxu0 0.0
  %3417 = vmatpush1.msra.mxu0 0.0
  %3418 = vmatprep.subr.mxu0 0.0
  %3419 = vmatpush1.msra.mxu0 0.0
  %3420 = vmatprep.subr.mxu0 0.0
  %3421 = vmatpush1.msra.mxu0 0.0
  %3422 = vmatprep.subr.mxu0 0.0
  %3423 = vmatpush1.msra.mxu0 0.0
  %3424 = vmatprep.subr.mxu0 0.0
  %3425 = vmatpush1.msra.mxu0 0.0
  %3426 = vmatprep.subr.mxu0 0.0
  %3427 = vmatpush1.msra.mxu0 0.0
  %3428 = vmatprep.subr.mxu0 0.0
  %3429 = vmatpush1.msra.mxu0 0.0
  %3430 = vmatprep.subr.mxu0 0.0
  %3431 = vmatpush1.msra.mxu0 0.0
  %3432 = vmatprep.mubr.f32.mxu0 0.0
  %3433 = vmatmul.mubr.f32.gmra.mrb[0].mxu0 %v3366
  %v3434 = vpop.f32.mrb[0].mxu0
  %v3435 = vadd.f32 0.0, %v3434
  %v3436 = vpop.f32.mrb[0].mxu0
  %3437 = vdwg.mxu0
  %3438 = vrot.lane.b32.xlu0 %v152, 48
  %v3439 = vpop.permute.xlu0 %3438
  %v3442 = vsel %vm168, %v3131, 0
  %3444 = vmatprep.subr.mxu0 0.0
  %3445 = vmatpush1.msra.mxu0 %v3439
  %3446 = vmatprep.subr.mxu0 0.0
  %3447 = vmatpush1.msra.mxu0 0.0
  %3448 = vmatprep.subr.mxu0 0.0
  %3449 = vmatpush1.msra.mxu0 0.0
  %3450 = vmatprep.subr.mxu0 0.0
  %3451 = vmatpush1.msra.mxu0 0.0
  %3452 = vmatprep.subr.mxu0 0.0
  %3453 = vmatpush1.msra.mxu0 0.0
  %3454 = vmatprep.subr.mxu0 0.0
  %3455 = vmatpush1.msra.mxu0 0.0
  %3456 = vmatprep.subr.mxu0 0.0
  %3457 = vmatpush1.msra.mxu0 0.0
  %3458 = vmatprep.subr.mxu0 0.0
  %3459 = vmatpush1.msra.mxu0 0.0
  %3460 = vmatprep.subr.mxu0 0.0
  %3461 = vmatpush1.msra.mxu0 0.0
  %3462 = vmatprep.subr.mxu0 0.0
  %3463 = vmatpush1.msra.mxu0 0.0
  %3464 = vmatprep.subr.mxu0 0.0
  %3465 = vmatpush1.msra.mxu0 0.0
  %3466 = vmatprep.subr.mxu0 0.0
  %3467 = vmatpush1.msra.mxu0 0.0
  %3468 = vmatprep.subr.mxu0 0.0
  %3469 = vmatpush1.msra.mxu0 0.0
  %3470 = vmatprep.subr.mxu0 0.0
  %3471 = vmatpush1.msra.mxu0 0.0
  %3472 = vmatprep.subr.mxu0 0.0
  %3473 = vmatpush1.msra.mxu0 0.0
  %3474 = vmatprep.subr.mxu0 0.0
  %3475 = vmatpush1.msra.mxu0 0.0
  %3476 = vmatprep.subr.mxu0 0.0
  %3477 = vmatpush1.msra.mxu0 0.0
  %3478 = vmatprep.subr.mxu0 0.0
  %3479 = vmatpush1.msra.mxu0 0.0
  %3480 = vmatprep.subr.mxu0 0.0
  %3481 = vmatpush1.msra.mxu0 0.0
  %3482 = vmatprep.subr.mxu0 0.0
  %3483 = vmatpush1.msra.mxu0 0.0
  %3484 = vmatprep.subr.mxu0 0.0
  %3485 = vmatpush1.msra.mxu0 0.0
  %3486 = vmatprep.subr.mxu0 0.0
  %3487 = vmatpush1.msra.mxu0 0.0
  %3488 = vmatprep.subr.mxu0 0.0
  %3489 = vmatpush1.msra.mxu0 0.0
  %3490 = vmatprep.subr.mxu0 0.0
  %3491 = vmatpush1.msra.mxu0 0.0
  %3492 = vmatprep.subr.mxu0 0.0
  %3493 = vmatpush1.msra.mxu0 0.0
  %3494 = vmatprep.subr.mxu0 0.0
  %3495 = vmatpush1.msra.mxu0 0.0
  %3496 = vmatprep.subr.mxu0 0.0
  %3497 = vmatpush1.msra.mxu0 0.0
  %3498 = vmatprep.subr.mxu0 0.0
  %3499 = vmatpush1.msra.mxu0 0.0
  %3500 = vmatprep.subr.mxu0 0.0
  %3501 = vmatpush1.msra.mxu0 0.0
  %3502 = vmatprep.subr.mxu0 0.0
  %3503 = vmatpush1.msra.mxu0 0.0
  %3504 = vmatprep.subr.mxu0 0.0
  %3505 = vmatpush1.msra.mxu0 0.0
  %3506 = vmatprep.subr.mxu0 0.0
  %3507 = vmatpush1.msra.mxu0 0.0
  %3508 = vmatprep.mubr.f32.mxu0 0.0
  %3509 = vmatmul.mubr.f32.gmra.mrb[0].mxu0 %v3442
  %v3510 = vpop.f32.mrb[0].mxu0
  %v3511 = vadd.f32 0.0, %v3510
  %v3512 = vpop.f32.mrb[0].mxu0
  %3513 = vdwg.mxu0
  %3514 = vrot.lane.b32.xlu0 %v155, 48
  %v3515 = vpop.permute.xlu0 %3514
  %v3518 = vsel %vm168, %v3132, 0
  %3520 = vmatprep.subr.mxu0 0.0
  %3521 = vmatpush1.msra.mxu0 %v3515
  %3522 = vmatprep.subr.mxu0 0.0
  %3523 = vmatpush1.msra.mxu0 0.0
  %3524 = vmatprep.subr.mxu0 0.0
  %3525 = vmatpush1.msra.mxu0 0.0
  %3526 = vmatprep.subr.mxu0 0.0
  %3527 = vmatpush1.msra.mxu0 0.0
  %3528 = vmatprep.subr.mxu0 0.0
  %3529 = vmatpush1.msra.mxu0 0.0
  %3530 = vmatprep.subr.mxu0 0.0
  %3531 = vmatpush1.msra.mxu0 0.0
  %3532 = vmatprep.subr.mxu0 0.0
  %3533 = vmatpush1.msra.mxu0 0.0
  %3534 = vmatprep.subr.mxu0 0.0
  %3535 = vmatpush1.msra.mxu0 0.0
  %3536 = vmatprep.subr.mxu0 0.0
  %3537 = vmatpush1.msra.mxu0 0.0
  %3538 = vmatprep.subr.mxu0 0.0
  %3539 = vmatpush1.msra.mxu0 0.0
  %3540 = vmatprep.subr.mxu0 0.0
  %3541 = vmatpush1.msra.mxu0 0.0
  %3542 = vmatprep.subr.mxu0 0.0
  %3543 = vmatpush1.msra.mxu0 0.0
  %3544 = vmatprep.subr.mxu0 0.0
  %3545 = vmatpush1.msra.mxu0 0.0
  %3546 = vmatprep.subr.mxu0 0.0
  %3547 = vmatpush1.msra.mxu0 0.0
  %3548 = vmatprep.subr.mxu0 0.0
  %3549 = vmatpush1.msra.mxu0 0.0
  %3550 = vmatprep.subr.mxu0 0.0
  %3551 = vmatpush1.msra.mxu0 0.0
  %3552 = vmatprep.subr.mxu0 0.0
  %3553 = vmatpush1.msra.mxu0 0.0
  %3554 = vmatprep.subr.mxu0 0.0
  %3555 = vmatpush1.msra.mxu0 0.0
  %3556 = vmatprep.subr.mxu0 0.0
  %3557 = vmatpush1.msra.mxu0 0.0
  %3558 = vmatprep.subr.mxu0 0.0
  %3559 = vmatpush1.msra.mxu0 0.0
  %3560 = vmatprep.subr.mxu0 0.0
  %3561 = vmatpush1.msra.mxu0 0.0
  %3562 = vmatprep.subr.mxu0 0.0
  %3563 = vmatpush1.msra.mxu0 0.0
  %3564 = vmatprep.subr.mxu0 0.0
  %3565 = vmatpush1.msra.mxu0 0.0
  %3566 = vmatprep.subr.mxu0 0.0
  %3567 = vmatpush1.msra.mxu0 0.0
  %3568 = vmatprep.subr.mxu0 0.0
  %3569 = vmatpush1.msra.mxu0 0.0
  %3570 = vmatprep.subr.mxu0 0.0
  %3571 = vmatpush1.msra.mxu0 0.0
  %3572 = vmatprep.subr.mxu0 0.0
  %3573 = vmatpush1.msra.mxu0 0.0
  %3574 = vmatprep.subr.mxu0 0.0
  %3575 = vmatpush1.msra.mxu0 0.0
  %3576 = vmatprep.subr.mxu0 0.0
  %3577 = vmatpush1.msra.mxu0 0.0
  %3578 = vmatprep.subr.mxu0 0.0
  %3579 = vmatpush1.msra.mxu0 0.0
  %3580 = vmatprep.subr.mxu0 0.0
  %3581 = vmatpush1.msra.mxu0 0.0
  %3582 = vmatprep.subr.mxu0 0.0
  %3583 = vmatpush1.msra.mxu0 0.0
  %3584 = vmatprep.mubr.f32.mxu0 0.0
  %3585 = vmatmul.mubr.f32.gmra.mrb[0].mxu0 %v3518
  %v3586 = vpop.f32.mrb[0].mxu0
  %v3587 = vadd.f32 0.0, %v3586
  %v3588 = vpop.f32.mrb[0].mxu0
  %3589 = vdwg.mxu0
  %3590 = vrot.lane.b32.xlu0 %v160, 48
  %v3591 = vpop.permute.xlu0 %3590
  %v3594 = vsel %vm168, %v3133, 0
  %3596 = vmatprep.subr.mxu0 0.0
  %3597 = vmatpush1.msra.mxu0 %v3591
  %3598 = vmatprep.subr.mxu0 0.0
  %3599 = vmatpush1.msra.mxu0 0.0
  %3600 = vmatprep.subr.mxu0 0.0
  %3601 = vmatpush1.msra.mxu0 0.0
  %3602 = vmatprep.subr.mxu0 0.0
  %3603 = vmatpush1.msra.mxu0 0.0
  %3604 = vmatprep.subr.mxu0 0.0
  %3605 = vmatpush1.msra.mxu0 0.0
  %3606 = vmatprep.subr.mxu0 0.0
  %3607 = vmatpush1.msra.mxu0 0.0
  %3608 = vmatprep.subr.mxu0 0.0
  %3609 = vmatpush1.msra.mxu0 0.0
  %3610 = vmatprep.subr.mxu0 0.0
  %3611 = vmatpush1.msra.mxu0 0.0
  %3612 = vmatprep.subr.mxu0 0.0
  %3613 = vmatpush1.msra.mxu0 0.0
  %3614 = vmatprep.subr.mxu0 0.0
  %3615 = vmatpush1.msra.mxu0 0.0
  %3616 = vmatprep.subr.mxu0 0.0
  %3617 = vmatpush1.msra.mxu0 0.0
  %3618 = vmatprep.subr.mxu0 0.0
  %3619 = vmatpush1.msra.mxu0 0.0
  %3620 = vmatprep.subr.mxu0 0.0
  %3621 = vmatpush1.msra.mxu0 0.0
  %3622 = vmatprep.subr.mxu0 0.0
  %3623 = vmatpush1.msra.mxu0 0.0
  %3624 = vmatprep.subr.mxu0 0.0
  %3625 = vmatpush1.msra.mxu0 0.0
  %3626 = vmatprep.subr.mxu0 0.0
  %3627 = vmatpush1.msra.mxu0 0.0
  %3628 = vmatprep.subr.mxu0 0.0
  %3629 = vmatpush1.msra.mxu0 0.0
  %3630 = vmatprep.subr.mxu0 0.0
  %3631 = vmatpush1.msra.mxu0 0.0
  %3632 = vmatprep.subr.mxu0 0.0
  %3633 = vmatpush1.msra.mxu0 0.0
  %3634 = vmatprep.subr.mxu0 0.0
  %3635 = vmatpush1.msra.mxu0 0.0
  %3636 = vmatprep.subr.mxu0 0.0
  %3637 = vmatpush1.msra.mxu0 0.0
  %3638 = vmatprep.subr.mxu0 0.0
  %3639 = vmatpush1.msra.mxu0 0.0
  %3640 = vmatprep.subr.mxu0 0.0
  %3641 = vmatpush1.msra.mxu0 0.0
  %3642 = vmatprep.subr.mxu0 0.0
  %3643 = vmatpush1.msra.mxu0 0.0
  %3644 = vmatprep.subr.mxu0 0.0
  %3645 = vmatpush1.msra.mxu0 0.0
  %3646 = vmatprep.subr.mxu0 0.0
  %3647 = vmatpush1.msra.mxu0 0.0
  %3648 = vmatprep.subr.mxu0 0.0
  %3649 = vmatpush1.msra.mxu0 0.0
  %3650 = vmatprep.subr.mxu0 0.0
  %3651 = vmatpush1.msra.mxu0 0.0
  %3652 = vmatprep.subr.mxu0 0.0
  %3653 = vmatpush1.msra.mxu0 0.0
  %3654 = vmatprep.subr.mxu0 0.0
  %3655 = vmatpush1.msra.mxu0 0.0
  %3656 = vmatprep.subr.mxu0 0.0
  %3657 = vmatpush1.msra.mxu0 0.0
  %3658 = vmatprep.subr.mxu0 0.0
  %3659 = vmatpush1.msra.mxu0 0.0
  %3660 = vmatprep.mubr.f32.mxu0 0.0
  %3661 = vmatmul.mubr.f32.gmra.mrb[0].mxu0 %v3594
  %v3662 = vpop.f32.mrb[0].mxu0
  %v3663 = vadd.f32 0.0, %v3662
  %v3664 = vpop.f32.mrb[0].mxu0
  %3665 = vdwg.mxu0
  %3666 = vrot.lane.b32.xlu0 %v136, 104
  %v3667 = vpop.permute.xlu0 %3666
  %3668 = vrot.lane.b32.xlu0 %v136, 72
  %v3669 = vpop.permute.xlu0 %3668
  %v3670 = vsel %vm168, %v3667, 0
  %v3672 = vsel %vm168, %v3669, 0
  %3674 = vmatprep.subr.mxu0 0.0
  %3675 = vmatpush1.xpose.msra.mxu0 %v3672
  %3676 = vmatprep.subr.mxu0 0.0
  %3677 = vmatpush1.xpose.msra.mxu0 0.0
  %3678 = vmatprep.subr.mxu0 0.0
  %3679 = vmatpush1.xpose.msra.mxu0 0.0
  %3680 = vmatprep.subr.mxu0 0.0
  %3681 = vmatpush1.xpose.msra.mxu0 0.0
  %3682 = vmatprep.subr.mxu0 0.0
  %3683 = vmatpush1.xpose.msra.mxu0 0.0
  %3684 = vmatprep.subr.mxu0 0.0
  %3685 = vmatpush1.xpose.msra.mxu0 0.0
  %3686 = vmatprep.subr.mxu0 0.0
  %3687 = vmatpush1.xpose.msra.mxu0 0.0
  %3688 = vmatprep.subr.mxu0 0.0
  %3689 = vmatpush1.xpose.msra.mxu0 0.0
  %3690 = vmatprep.subr.mxu0 0.0
  %3691 = vmatpush1.xpose.msra.mxu0 0.0
  %3692 = vmatprep.subr.mxu0 0.0
  %3693 = vmatpush1.xpose.msra.mxu0 0.0
  %3694 = vmatprep.subr.mxu0 0.0
  %3695 = vmatpush1.xpose.msra.mxu0 0.0
  %3696 = vmatprep.subr.mxu0 0.0
  %3697 = vmatpush1.xpose.msra.mxu0 0.0
  %3698 = vmatprep.subr.mxu0 0.0
  %3699 = vmatpush1.xpose.msra.mxu0 0.0
  %3700 = vmatprep.subr.mxu0 0.0
  %3701 = vmatpush1.xpose.msra.mxu0 0.0
  %3702 = vmatprep.subr.mxu0 0.0
  %3703 = vmatpush1.xpose.msra.mxu0 0.0
  %3704 = vmatprep.subr.mxu0 0.0
  %3705 = vmatpush1.xpose.msra.mxu0 0.0
  %3706 = vmatprep.subr.mxu0 0.0
  %3707 = vmatpush1.xpose.msra.mxu0 0.0
  %3708 = vmatprep.subr.mxu0 0.0
  %3709 = vmatpush1.xpose.msra.mxu0 0.0
  %3710 = vmatprep.subr.mxu0 0.0
  %3711 = vmatpush1.xpose.msra.mxu0 0.0
  %3712 = vmatprep.subr.mxu0 0.0
  %3713 = vmatpush1.xpose.msra.mxu0 0.0
  %3714 = vmatprep.subr.mxu0 0.0
  %3715 = vmatpush1.xpose.msra.mxu0 0.0
  %3716 = vmatprep.subr.mxu0 0.0
  %3717 = vmatpush1.xpose.msra.mxu0 0.0
  %3718 = vmatprep.subr.mxu0 0.0
  %3719 = vmatpush1.xpose.msra.mxu0 0.0
  %3720 = vmatprep.subr.mxu0 0.0
  %3721 = vmatpush1.xpose.msra.mxu0 0.0
  %3722 = vmatprep.subr.mxu0 0.0
  %3723 = vmatpush1.xpose.msra.mxu0 0.0
  %3724 = vmatprep.subr.mxu0 0.0
  %3725 = vmatpush1.xpose.msra.mxu0 0.0
  %3726 = vmatprep.subr.mxu0 0.0
  %3727 = vmatpush1.xpose.msra.mxu0 0.0
  %3728 = vmatprep.subr.mxu0 0.0
  %3729 = vmatpush1.xpose.msra.mxu0 0.0
  %3730 = vmatprep.subr.mxu0 0.0
  %3731 = vmatpush1.xpose.msra.mxu0 0.0
  %3732 = vmatprep.subr.mxu0 0.0
  %3733 = vmatpush1.xpose.msra.mxu0 0.0
  %3734 = vmatprep.subr.mxu0 0.0
  %3735 = vmatpush1.xpose.msra.mxu0 0.0
  %3736 = vmatprep.subr.mxu0 0.0
  %3737 = vmatpush1.xpose.msra.mxu0 0.0
  %3738 = vmatprep.mubr.f32.mxu0 0.0
  %3739 = vmatmul.mubr.f32.gmra.mrb[0].mxu0 %v3670
  %v3740 = vpop.f32.mrb[0].mxu0
  %v3741 = vadd.f32 0.0, %v3740
  %v3742 = vpop.f32.mrb[0].mxu0
  %3743 = vdwg.mxu0
  %3744 = vrot.lane.b32.xlu0 %v139, 104
  %v3745 = vpop.permute.xlu0 %3744
  %3746 = vrot.lane.b32.xlu0 %v139, 72
  %v3747 = vpop.permute.xlu0 %3746
  %v3748 = vsel %vm168, %v3745, 0
  %v3750 = vsel %vm168, %v3747, 0
  %3752 = vmatprep.subr.mxu0 0.0
  %3753 = vmatpush1.xpose.msra.mxu0 %v3750
  %3754 = vmatprep.subr.mxu0 0.0
  %3755 = vmatpush1.xpose.msra.mxu0 0.0
  %3756 = vmatprep.subr.mxu0 0.0
  %3757 = vmatpush1.xpose.msra.mxu0 0.0
  %3758 = vmatprep.subr.mxu0 0.0
  %3759 = vmatpush1.xpose.msra.mxu0 0.0
  %3760 = vmatprep.subr.mxu0 0.0
  %3761 = vmatpush1.xpose.msra.mxu0 0.0
  %3762 = vmatprep.subr.mxu0 0.0
  %3763 = vmatpush1.xpose.msra.mxu0 0.0
  %3764 = vmatprep.subr.mxu0 0.0
  %3765 = vmatpush1.xpose.msra.mxu0 0.0
  %3766 = vmatprep.subr.mxu0 0.0
  %3767 = vmatpush1.xpose.msra.mxu0 0.0
  %3768 = vmatprep.subr.mxu0 0.0
  %3769 = vmatpush1.xpose.msra.mxu0 0.0
  %3770 = vmatprep.subr.mxu0 0.0
  %3771 = vmatpush1.xpose.msra.mxu0 0.0
  %3772 = vmatprep.subr.mxu0 0.0
  %3773 = vmatpush1.xpose.msra.mxu0 0.0
  %3774 = vmatprep.subr.mxu0 0.0
  %3775 = vmatpush1.xpose.msra.mxu0 0.0
  %3776 = vmatprep.subr.mxu0 0.0
  %3777 = vmatpush1.xpose.msra.mxu0 0.0
  %3778 = vmatprep.subr.mxu0 0.0
  %3779 = vmatpush1.xpose.msra.mxu0 0.0
  %3780 = vmatprep.subr.mxu0 0.0
  %3781 = vmatpush1.xpose.msra.mxu0 0.0
  %3782 = vmatprep.subr.mxu0 0.0
  %3783 = vmatpush1.xpose.msra.mxu0 0.0
  %3784 = vmatprep.subr.mxu0 0.0
  %3785 = vmatpush1.xpose.msra.mxu0 0.0
  %3786 = vmatprep.subr.mxu0 0.0
  %3787 = vmatpush1.xpose.msra.mxu0 0.0
  %3788 = vmatprep.subr.mxu0 0.0
  %3789 = vmatpush1.xpose.msra.mxu0 0.0
  %3790 = vmatprep.subr.mxu0 0.0
  %3791 = vmatpush1.xpose.msra.mxu0 0.0
  %3792 = vmatprep.subr.mxu0 0.0
  %3793 = vmatpush1.xpose.msra.mxu0 0.0
  %3794 = vmatprep.subr.mxu0 0.0
  %3795 = vmatpush1.xpose.msra.mxu0 0.0
  %3796 = vmatprep.subr.mxu0 0.0
  %3797 = vmatpush1.xpose.msra.mxu0 0.0
  %3798 = vmatprep.subr.mxu0 0.0
  %3799 = vmatpush1.xpose.msra.mxu0 0.0
  %3800 = vmatprep.subr.mxu0 0.0
  %3801 = vmatpush1.xpose.msra.mxu0 0.0
  %3802 = vmatprep.subr.mxu0 0.0
  %3803 = vmatpush1.xpose.msra.mxu0 0.0
  %3804 = vmatprep.subr.mxu0 0.0
  %3805 = vmatpush1.xpose.msra.mxu0 0.0
  %3806 = vmatprep.subr.mxu0 0.0
  %3807 = vmatpush1.xpose.msra.mxu0 0.0
  %3808 = vmatprep.subr.mxu0 0.0
  %3809 = vmatpush1.xpose.msra.mxu0 0.0
  %3810 = vmatprep.subr.mxu0 0.0
  %3811 = vmatpush1.xpose.msra.mxu0 0.0
  %3812 = vmatprep.subr.mxu0 0.0
  %3813 = vmatpush1.xpose.msra.mxu0 0.0
  %3814 = vmatprep.subr.mxu0 0.0
  %3815 = vmatpush1.xpose.msra.mxu0 0.0
  %3816 = vmatprep.mubr.f32.mxu0 0.0
  %3817 = vmatmul.mubr.f32.gmra.mrb[0].mxu0 %v3748
  %v3818 = vpop.f32.mrb[0].mxu0
  %v3819 = vadd.f32 0.0, %v3818
  %v3820 = vpop.f32.mrb[0].mxu0
  %3821 = vdwg.mxu0
  %3822 = vrot.lane.b32.xlu0 %v144, 104
  %v3823 = vpop.permute.xlu0 %3822
  %3824 = vrot.lane.b32.xlu0 %v144, 72
  %v3825 = vpop.permute.xlu0 %3824
  %v3826 = vsel %vm168, %v3823, 0
  %v3828 = vsel %vm168, %v3825, 0
  %3830 = vmatprep.subr.mxu0 0.0
  %3831 = vmatpush1.xpose.msra.mxu0 %v3828
  %3832 = vmatprep.subr.mxu0 0.0
  %3833 = vmatpush1.xpose.msra.mxu0 0.0
  %3834 = vmatprep.subr.mxu0 0.0
  %3835 = vmatpush1.xpose.msra.mxu0 0.0
  %3836 = vmatprep.subr.mxu0 0.0
  %3837 = vmatpush1.xpose.msra.mxu0 0.0
  %3838 = vmatprep.subr.mxu0 0.0
  %3839 = vmatpush1.xpose.msra.mxu0 0.0
  %3840 = vmatprep.subr.mxu0 0.0
  %3841 = vmatpush1.xpose.msra.mxu0 0.0
  %3842 = vmatprep.subr.mxu0 0.0
  %3843 = vmatpush1.xpose.msra.mxu0 0.0
  %3844 = vmatprep.subr.mxu0 0.0
  %3845 = vmatpush1.xpose.msra.mxu0 0.0
  %3846 = vmatprep.subr.mxu0 0.0
  %3847 = vmatpush1.xpose.msra.mxu0 0.0
  %3848 = vmatprep.subr.mxu0 0.0
  %3849 = vmatpush1.xpose.msra.mxu0 0.0
  %3850 = vmatprep.subr.mxu0 0.0
  %3851 = vmatpush1.xpose.msra.mxu0 0.0
  %3852 = vmatprep.subr.mxu0 0.0
  %3853 = vmatpush1.xpose.msra.mxu0 0.0
  %3854 = vmatprep.subr.mxu0 0.0
  %3855 = vmatpush1.xpose.msra.mxu0 0.0
  %3856 = vmatprep.subr.mxu0 0.0
  %3857 = vmatpush1.xpose.msra.mxu0 0.0
  %3858 = vmatprep.subr.mxu0 0.0
  %3859 = vmatpush1.xpose.msra.mxu0 0.0
  %3860 = vmatprep.subr.mxu0 0.0
  %3861 = vmatpush1.xpose.msra.mxu0 0.0
  %3862 = vmatprep.subr.mxu0 0.0
  %3863 = vmatpush1.xpose.msra.mxu0 0.0
  %3864 = vmatprep.subr.mxu0 0.0
  %3865 = vmatpush1.xpose.msra.mxu0 0.0
  %3866 = vmatprep.subr.mxu0 0.0
  %3867 = vmatpush1.xpose.msra.mxu0 0.0
  %3868 = vmatprep.subr.mxu0 0.0
  %3869 = vmatpush1.xpose.msra.mxu0 0.0
  %3870 = vmatprep.subr.mxu0 0.0
  %3871 = vmatpush1.xpose.msra.mxu0 0.0
  %3872 = vmatprep.subr.mxu0 0.0
  %3873 = vmatpush1.xpose.msra.mxu0 0.0
  %3874 = vmatprep.subr.mxu0 0.0
  %3875 = vmatpush1.xpose.msra.mxu0 0.0
  %3876 = vmatprep.subr.mxu0 0.0
  %3877 = vmatpush1.xpose.msra.mxu0 0.0
  %3878 = vmatprep.subr.mxu0 0.0
  %3879 = vmatpush1.xpose.msra.mxu0 0.0
  %3880 = vmatprep.subr.mxu0 0.0
  %3881 = vmatpush1.xpose.msra.mxu0 0.0
  %3882 = vmatprep.subr.mxu0 0.0
  %3883 = vmatpush1.xpose.msra.mxu0 0.0
  %3884 = vmatprep.subr.mxu0 0.0
  %3885 = vmatpush1.xpose.msra.mxu0 0.0
  %3886 = vmatprep.subr.mxu0 0.0
  %3887 = vmatpush1.xpose.msra.mxu0 0.0
  %3888 = vmatprep.subr.mxu0 0.0
  %3889 = vmatpush1.xpose.msra.mxu0 0.0
  %3890 = vmatprep.subr.mxu0 0.0
  %3891 = vmatpush1.xpose.msra.mxu0 0.0
  %3892 = vmatprep.subr.mxu0 0.0
  %3893 = vmatpush1.xpose.msra.mxu0 0.0
  %3894 = vmatprep.mubr.f32.mxu0 0.0
  %3895 = vmatmul.mubr.f32.gmra.mrb[0].mxu0 %v3826
  %v3896 = vpop.f32.mrb[0].mxu0
  %v3897 = vadd.f32 0.0, %v3896
  %v3898 = vpop.f32.mrb[0].mxu0
  %3899 = vdwg.mxu0
  %3900 = vrot.lane.b32.xlu0 %v147, 104
  %v3901 = vpop.permute.xlu0 %3900
  %3902 = vrot.lane.b32.xlu0 %v147, 72
  %v3903 = vpop.permute.xlu0 %3902
  %v3904 = vsel %vm168, %v3901, 0
  %v3906 = vsel %vm168, %v3903, 0
  %3908 = vmatprep.subr.mxu0 0.0
  %3909 = vmatpush1.xpose.msra.mxu0 %v3906
  %3910 = vmatprep.subr.mxu0 0.0
  %3911 = vmatpush1.xpose.msra.mxu0 0.0
  %3912 = vmatprep.subr.mxu0 0.0
  %3913 = vmatpush1.xpose.msra.mxu0 0.0
  %3914 = vmatprep.subr.mxu0 0.0
  %3915 = vmatpush1.xpose.msra.mxu0 0.0
  %3916 = vmatprep.subr.mxu0 0.0
  %3917 = vmatpush1.xpose.msra.mxu0 0.0
  %3918 = vmatprep.subr.mxu0 0.0
  %3919 = vmatpush1.xpose.msra.mxu0 0.0
  %3920 = vmatprep.subr.mxu0 0.0
  %3921 = vmatpush1.xpose.msra.mxu0 0.0
  %3922 = vmatprep.subr.mxu0 0.0
  %3923 = vmatpush1.xpose.msra.mxu0 0.0
  %3924 = vmatprep.subr.mxu0 0.0
  %3925 = vmatpush1.xpose.msra.mxu0 0.0
  %3926 = vmatprep.subr.mxu0 0.0
  %3927 = vmatpush1.xpose.msra.mxu0 0.0
  %3928 = vmatprep.subr.mxu0 0.0
  %3929 = vmatpush1.xpose.msra.mxu0 0.0
  %3930 = vmatprep.subr.mxu0 0.0
  %3931 = vmatpush1.xpose.msra.mxu0 0.0
  %3932 = vmatprep.subr.mxu0 0.0
  %3933 = vmatpush1.xpose.msra.mxu0 0.0
  %3934 = vmatprep.subr.mxu0 0.0
  %3935 = vmatpush1.xpose.msra.mxu0 0.0
  %3936 = vmatprep.subr.mxu0 0.0
  %3937 = vmatpush1.xpose.msra.mxu0 0.0
  %3938 = vmatprep.subr.mxu0 0.0
  %3939 = vmatpush1.xpose.msra.mxu0 0.0
  %3940 = vmatprep.subr.mxu0 0.0
  %3941 = vmatpush1.xpose.msra.mxu0 0.0
  %3942 = vmatprep.subr.mxu0 0.0
  %3943 = vmatpush1.xpose.msra.mxu0 0.0
  %3944 = vmatprep.subr.mxu0 0.0
  %3945 = vmatpush1.xpose.msra.mxu0 0.0
  %3946 = vmatprep.subr.mxu0 0.0
  %3947 = vmatpush1.xpose.msra.mxu0 0.0
  %3948 = vmatprep.subr.mxu0 0.0
  %3949 = vmatpush1.xpose.msra.mxu0 0.0
  %3950 = vmatprep.subr.mxu0 0.0
  %3951 = vmatpush1.xpose.msra.mxu0 0.0
  %3952 = vmatprep.subr.mxu0 0.0
  %3953 = vmatpush1.xpose.msra.mxu0 0.0
  %3954 = vmatprep.subr.mxu0 0.0
  %3955 = vmatpush1.xpose.msra.mxu0 0.0
  %3956 = vmatprep.subr.mxu0 0.0
  %3957 = vmatpush1.xpose.msra.mxu0 0.0
  %3958 = vmatprep.subr.mxu0 0.0
  %3959 = vmatpush1.xpose.msra.mxu0 0.0
  %3960 = vmatprep.subr.mxu0 0.0
  %3961 = vmatpush1.xpose.msra.mxu0 0.0
  %3962 = vmatprep.subr.mxu0 0.0
  %3963 = vmatpush1.xpose.msra.mxu0 0.0
  %3964 = vmatprep.subr.mxu0 0.0
  %3965 = vmatpush1.xpose.msra.mxu0 0.0
  %3966 = vmatprep.subr.mxu0 0.0
  %3967 = vmatpush1.xpose.msra.mxu0 0.0
  %3968 = vmatprep.subr.mxu0 0.0
  %3969 = vmatpush1.xpose.msra.mxu0 0.0
  %3970 = vmatprep.subr.mxu0 0.0
  %3971 = vmatpush1.xpose.msra.mxu0 0.0
  %3972 = vmatprep.mubr.f32.mxu0 0.0
  %3973 = vmatmul.mubr.f32.gmra.mrb[0].mxu0 %v3904
  %v3974 = vpop.f32.mrb[0].mxu0
  %v3975 = vadd.f32 0.0, %v3974
  %v3976 = vpop.f32.mrb[0].mxu0
  %3977 = vdwg.mxu0
  %3978 = vrot.lane.b32.xlu0 %v152, 104
  %v3979 = vpop.permute.xlu0 %3978
  %3980 = vrot.lane.b32.xlu0 %v152, 72
  %v3981 = vpop.permute.xlu0 %3980
  %v3982 = vsel %vm168, %v3979, 0
  %v3984 = vsel %vm168, %v3981, 0
  %3986 = vmatprep.subr.mxu0 0.0
  %3987 = vmatpush1.xpose.msra.mxu0 %v3984
  %3988 = vmatprep.subr.mxu0 0.0
  %3989 = vmatpush1.xpose.msra.mxu0 0.0
  %3990 = vmatprep.subr.mxu0 0.0
  %3991 = vmatpush1.xpose.msra.mxu0 0.0
  %3992 = vmatprep.subr.mxu0 0.0
  %3993 = vmatpush1.xpose.msra.mxu0 0.0
  %3994 = vmatprep.subr.mxu0 0.0
  %3995 = vmatpush1.xpose.msra.mxu0 0.0
  %3996 = vmatprep.subr.mxu0 0.0
  %3997 = vmatpush1.xpose.msra.mxu0 0.0
  %3998 = vmatprep.subr.mxu0 0.0
  %3999 = vmatpush1.xpose.msra.mxu0 0.0
  %4000 = vmatprep.subr.mxu0 0.0
  %4001 = vmatpush1.xpose.msra.mxu0 0.0
  %4002 = vmatprep.subr.mxu0 0.0
  %4003 = vmatpush1.xpose.msra.mxu0 0.0
  %4004 = vmatprep.subr.mxu0 0.0
  %4005 = vmatpush1.xpose.msra.mxu0 0.0
  %4006 = vmatprep.subr.mxu0 0.0
  %4007 = vmatpush1.xpose.msra.mxu0 0.0
  %4008 = vmatprep.subr.mxu0 0.0
  %4009 = vmatpush1.xpose.msra.mxu0 0.0
  %4010 = vmatprep.subr.mxu0 0.0
  %4011 = vmatpush1.xpose.msra.mxu0 0.0
  %4012 = vmatprep.subr.mxu0 0.0
  %4013 = vmatpush1.xpose.msra.mxu0 0.0
  %4014 = vmatprep.subr.mxu0 0.0
  %4015 = vmatpush1.xpose.msra.mxu0 0.0
  %4016 = vmatprep.subr.mxu0 0.0
  %4017 = vmatpush1.xpose.msra.mxu0 0.0
  %4018 = vmatprep.subr.mxu0 0.0
  %4019 = vmatpush1.xpose.msra.mxu0 0.0
  %4020 = vmatprep.subr.mxu0 0.0
  %4021 = vmatpush1.xpose.msra.mxu0 0.0
  %4022 = vmatprep.subr.mxu0 0.0
  %4023 = vmatpush1.xpose.msra.mxu0 0.0
  %4024 = vmatprep.subr.mxu0 0.0
  %4025 = vmatpush1.xpose.msra.mxu0 0.0
  %4026 = vmatprep.subr.mxu0 0.0
  %4027 = vmatpush1.xpose.msra.mxu0 0.0
  %4028 = vmatprep.subr.mxu0 0.0
  %4029 = vmatpush1.xpose.msra.mxu0 0.0
  %4030 = vmatprep.subr.mxu0 0.0
  %4031 = vmatpush1.xpose.msra.mxu0 0.0
  %4032 = vmatprep.subr.mxu0 0.0
  %4033 = vmatpush1.xpose.msra.mxu0 0.0
  %4034 = vmatprep.subr.mxu0 0.0
  %4035 = vmatpush1.xpose.msra.mxu0 0.0
  %4036 = vmatprep.subr.mxu0 0.0
  %4037 = vmatpush1.xpose.msra.mxu0 0.0
  %4038 = vmatprep.subr.mxu0 0.0
  %4039 = vmatpush1.xpose.msra.mxu0 0.0
  %4040 = vmatprep.subr.mxu0 0.0
  %4041 = vmatpush1.xpose.msra.mxu0 0.0
  %4042 = vmatprep.subr.mxu0 0.0
  %4043 = vmatpush1.xpose.msra.mxu0 0.0
  %4044 = vmatprep.subr.mxu0 0.0
  %4045 = vmatpush1.xpose.msra.mxu0 0.0
  %4046 = vmatprep.subr.mxu0 0.0
  %4047 = vmatpush1.xpose.msra.mxu0 0.0
  %4048 = vmatprep.subr.mxu0 0.0
  %4049 = vmatpush1.xpose.msra.mxu0 0.0
  %4050 = vmatprep.mubr.f32.mxu0 0.0
  %4051 = vmatmul.mubr.f32.gmra.mrb[0].mxu0 %v3982
  %v4052 = vpop.f32.mrb[0].mxu0
  %v4053 = vadd.f32 0.0, %v4052
  %v4054 = vpop.f32.mrb[0].mxu0
  %4055 = vdwg.mxu0
  %4056 = vrot.lane.b32.xlu0 %v155, 104
  %v4057 = vpop.permute.xlu0 %4056
  %4058 = vrot.lane.b32.xlu0 %v155, 72
  %v4059 = vpop.permute.xlu0 %4058
  %v4060 = vsel %vm168, %v4057, 0
  %v4062 = vsel %vm168, %v4059, 0
  %4064 = vmatprep.subr.mxu0 0.0
  %4065 = vmatpush1.xpose.msra.mxu0 %v4062
  %4066 = vmatprep.subr.mxu0 0.0
  %4067 = vmatpush1.xpose.msra.mxu0 0.0
  %4068 = vmatprep.subr.mxu0 0.0
  %4069 = vmatpush1.xpose.msra.mxu0 0.0
  %4070 = vmatprep.subr.mxu0 0.0
  %4071 = vmatpush1.xpose.msra.mxu0 0.0
  %4072 = vmatprep.subr.mxu0 0.0
  %4073 = vmatpush1.xpose.msra.mxu0 0.0
  %4074 = vmatprep.subr.mxu0 0.0
  %4075 = vmatpush1.xpose.msra.mxu0 0.0
  %4076 = vmatprep.subr.mxu0 0.0
  %4077 = vmatpush1.xpose.msra.mxu0 0.0
  %4078 = vmatprep.subr.mxu0 0.0
  %4079 = vmatpush1.xpose.msra.mxu0 0.0
  %4080 = vmatprep.subr.mxu0 0.0
  %4081 = vmatpush1.xpose.msra.mxu0 0.0
  %4082 = vmatprep.subr.mxu0 0.0
  %4083 = vmatpush1.xpose.msra.mxu0 0.0
  %4084 = vmatprep.subr.mxu0 0.0
  %4085 = vmatpush1.xpose.msra.mxu0 0.0
  %4086 = vmatprep.subr.mxu0 0.0
  %4087 = vmatpush1.xpose.msra.mxu0 0.0
  %4088 = vmatprep.subr.mxu0 0.0
  %4089 = vmatpush1.xpose.msra.mxu0 0.0
  %4090 = vmatprep.subr.mxu0 0.0
  %4091 = vmatpush1.xpose.msra.mxu0 0.0
  %4092 = vmatprep.subr.mxu0 0.0
  %4093 = vmatpush1.xpose.msra.mxu0 0.0
  %4094 = vmatprep.subr.mxu0 0.0
  %4095 = vmatpush1.xpose.msra.mxu0 0.0
  %4096 = vmatprep.subr.mxu0 0.0
  %4097 = vmatpush1.xpose.msra.mxu0 0.0
  %4098 = vmatprep.subr.mxu0 0.0
  %4099 = vmatpush1.xpose.msra.mxu0 0.0
  %4100 = vmatprep.subr.mxu0 0.0
  %4101 = vmatpush1.xpose.msra.mxu0 0.0
  %4102 = vmatprep.subr.mxu0 0.0
  %4103 = vmatpush1.xpose.msra.mxu0 0.0
  %4104 = vmatprep.subr.mxu0 0.0
  %4105 = vmatpush1.xpose.msra.mxu0 0.0
  %4106 = vmatprep.subr.mxu0 0.0
  %4107 = vmatpush1.xpose.msra.mxu0 0.0
  %4108 = vmatprep.subr.mxu0 0.0
  %4109 = vmatpush1.xpose.msra.mxu0 0.0
  %4110 = vmatprep.subr.mxu0 0.0
  %4111 = vmatpush1.xpose.msra.mxu0 0.0
  %4112 = vmatprep.subr.mxu0 0.0
  %4113 = vmatpush1.xpose.msra.mxu0 0.0
  %4114 = vmatprep.subr.mxu0 0.0
  %4115 = vmatpush1.xpose.msra.mxu0 0.0
  %4116 = vmatprep.subr.mxu0 0.0
  %4117 = vmatpush1.xpose.msra.mxu0 0.0
  %4118 = vmatprep.subr.mxu0 0.0
  %4119 = vmatpush1.xpose.msra.mxu0 0.0
  %4120 = vmatprep.subr.mxu0 0.0
  %4121 = vmatpush1.xpose.msra.mxu0 0.0
  %4122 = vmatprep.subr.mxu0 0.0
  %4123 = vmatpush1.xpose.msra.mxu0 0.0
  %4124 = vmatprep.subr.mxu0 0.0
  %4125 = vmatpush1.xpose.msra.mxu0 0.0
  %4126 = vmatprep.subr.mxu0 0.0
  %4127 = vmatpush1.xpose.msra.mxu0 0.0
  %4128 = vmatprep.mubr.f32.mxu0 0.0
  %4129 = vmatmul.mubr.f32.gmra.mrb[0].mxu0 %v4060
  %v4130 = vpop.f32.mrb[0].mxu0
  %v4131 = vadd.f32 0.0, %v4130
  %v4132 = vpop.f32.mrb[0].mxu0
  %4133 = vdwg.mxu0
  %4134 = vrot.lane.b32.xlu0 %v160, 104
  %v4135 = vpop.permute.xlu0 %4134
  %4136 = vrot.lane.b32.xlu0 %v160, 72
  %v4137 = vpop.permute.xlu0 %4136
  %v4138 = vsel %vm168, %v4135, 0
  %v4140 = vsel %vm168, %v4137, 0
  %4142 = vmatprep.subr.mxu0 0.0
  %4143 = vmatpush1.xpose.msra.mxu0 %v4140
  %4144 = vmatprep.subr.mxu0 0.0
  %4145 = vmatpush1.xpose.msra.mxu0 0.0
  %4146 = vmatprep.subr.mxu0 0.0
  %4147 = vmatpush1.xpose.msra.mxu0 0.0
  %4148 = vmatprep.subr.mxu0 0.0
  %4149 = vmatpush1.xpose.msra.mxu0 0.0
  %4150 = vmatprep.subr.mxu0 0.0
  %4151 = vmatpush1.xpose.msra.mxu0 0.0
  %4152 = vmatprep.subr.mxu0 0.0
  %4153 = vmatpush1.xpose.msra.mxu0 0.0
  %4154 = vmatprep.subr.mxu0 0.0
  %4155 = vmatpush1.xpose.msra.mxu0 0.0
  %4156 = vmatprep.subr.mxu0 0.0
  %4157 = vmatpush1.xpose.msra.mxu0 0.0
  %4158 = vmatprep.subr.mxu0 0.0
  %4159 = vmatpush1.xpose.msra.mxu0 0.0
  %4160 = vmatprep.subr.mxu0 0.0
  %4161 = vmatpush1.xpose.msra.mxu0 0.0
  %4162 = vmatprep.subr.mxu0 0.0
  %4163 = vmatpush1.xpose.msra.mxu0 0.0
  %4164 = vmatprep.subr.mxu0 0.0
  %4165 = vmatpush1.xpose.msra.mxu0 0.0
  %4166 = vmatprep.subr.mxu0 0.0
  %4167 = vmatpush1.xpose.msra.mxu0 0.0
  %4168 = vmatprep.subr.mxu0 0.0
  %4169 = vmatpush1.xpose.msra.mxu0 0.0
  %4170 = vmatprep.subr.mxu0 0.0
  %4171 = vmatpush1.xpose.msra.mxu0 0.0
  %4172 = vmatprep.subr.mxu0 0.0
  %4173 = vmatpush1.xpose.msra.mxu0 0.0
  %4174 = vmatprep.subr.mxu0 0.0
  %4175 = vmatpush1.xpose.msra.mxu0 0.0
  %4176 = vmatprep.subr.mxu0 0.0
  %4177 = vmatpush1.xpose.msra.mxu0 0.0
  %4178 = vmatprep.subr.mxu0 0.0
  %4179 = vmatpush1.xpose.msra.mxu0 0.0
  %4180 = vmatprep.subr.mxu0 0.0
  %4181 = vmatpush1.xpose.msra.mxu0 0.0
  %4182 = vmatprep.subr.mxu0 0.0
  %4183 = vmatpush1.xpose.msra.mxu0 0.0
  %4184 = vmatprep.subr.mxu0 0.0
  %4185 = vmatpush1.xpose.msra.mxu0 0.0
  %4186 = vmatprep.subr.mxu0 0.0
  %4187 = vmatpush1.xpose.msra.mxu0 0.0
  %4188 = vmatprep.subr.mxu0 0.0
  %4189 = vmatpush1.xpose.msra.mxu0 0.0
  %4190 = vmatprep.subr.mxu0 0.0
  %4191 = vmatpush1.xpose.msra.mxu0 0.0
  %4192 = vmatprep.subr.mxu0 0.0
  %4193 = vmatpush1.xpose.msra.mxu0 0.0
  %4194 = vmatprep.subr.mxu0 0.0
  %4195 = vmatpush1.xpose.msra.mxu0 0.0
  %4196 = vmatprep.subr.mxu0 0.0
  %4197 = vmatpush1.xpose.msra.mxu0 0.0
  %4198 = vmatprep.subr.mxu0 0.0
  %4199 = vmatpush1.xpose.msra.mxu0 0.0
  %4200 = vmatprep.subr.mxu0 0.0
  %4201 = vmatpush1.xpose.msra.mxu0 0.0
  %4202 = vmatprep.subr.mxu0 0.0
  %4203 = vmatpush1.xpose.msra.mxu0 0.0
  %4204 = vmatprep.subr.mxu0 0.0
  %4205 = vmatpush1.xpose.msra.mxu0 0.0
  %4206 = vmatprep.mubr.f32.mxu0 0.0
  %4207 = vmatmul.mubr.f32.gmra.mrb[0].mxu0 %v4138
  %v4208 = vpop.f32.mrb[0].mxu0
  %v4209 = vadd.f32 0.0, %v4208
  %v4210 = vpop.f32.mrb[0].mxu0
  %4211 = vdwg.mxu0
  %v4212 = vmul.f32 %v3741, 0.35355338
  %v4213 = vmul.f32 %v3819, 0.35355338
  %v4214 = vmul.f32 %v3897, 0.35355338
  %v4215 = vmul.f32 %v3975, 0.35355338
  %v4216 = vmul.f32 %v4053, 0.35355338
  %v4217 = vmul.f32 %v4131, 0.35355338
  %v4218 = vmul.f32 %v4209, 0.35355338
  %v4219 = vadd.f32 %v4212, %v54
  %v4220 = vadd.f32 %v4213, %v55
  %v4221 = vadd.f32 %v4214, %v56
  %v4222 = vadd.f32 %v4215, %v57
  %v4223 = vadd.f32 %v4216, %v58
  %v4224 = vadd.f32 %v4217, %v59
  %v4225 = vadd.f32 %v4218, %v60
  %v4226 = vsel %vm168, %v4219, -inf
  %4227 = vmax.xlane.f32.xlu0 %v4226
  %v4228 = vpop.xlane.xlu0 %4227
  %v4229 = vsel %vm168, %v4220, -inf
  %4230 = vmax.xlane.f32.xlu0 %v4229
  %v4231 = vpop.xlane.xlu0 %4230
  %v4232 = vsel %vm168, %v4221, -inf
  %4233 = vmax.xlane.f32.xlu0 %v4232
  %v4234 = vpop.xlane.xlu0 %4233
  %v4235 = vsel %vm168, %v4222, -inf
  %4236 = vmax.xlane.f32.xlu0 %v4235
  %v4237 = vpop.xlane.xlu0 %4236
  %v4238 = vsel %vm168, %v4223, -inf
  %4239 = vmax.xlane.f32.xlu0 %v4238
  %v4240 = vpop.xlane.xlu0 %4239
  %v4241 = vsel %vm168, %v4224, -inf
  %4242 = vmax.xlane.f32.xlu0 %v4241
  %v4243 = vpop.xlane.xlu0 %4242
  %v4244 = vsel %vm168, %v4225, -inf
  %4245 = vmax.xlane.f32.xlu0 %v4244
  %v4246 = vpop.xlane.xlu0 %4245
  %v4247 = vsub.f32 %v4219, %v4228
  %v4248 = vsub.f32 %v4220, %v4231
  %v4249 = vsub.f32 %v4221, %v4234
  %v4250 = vsub.f32 %v4222, %v4237
  %v4251 = vsub.f32 %v4223, %v4240
  %v4252 = vsub.f32 %v4224, %v4243
  %v4253 = vsub.f32 %v4225, %v4246
  %v4254 = vmul.f32 %v4247, 1.442695
  %v4255 = vpow.pop %v4254
  %v4256 = vmul.f32 %v4248, 1.442695
  %v4257 = vpow.pop %v4256
  %v4258 = vmul.f32 %v4249, 1.442695
  %v4259 = vpow.pop %v4258
  %v4260 = vmul.f32 %v4250, 1.442695
  %v4261 = vpow.pop %v4260
  %v4262 = vmul.f32 %v4251, 1.442695
  %v4263 = vpow.pop %v4262
  %v4264 = vmul.f32 %v4252, 1.442695
  %v4265 = vpow.pop %v4264
  %v4266 = vmul.f32 %v4253, 1.442695
  %v4267 = vpow.pop %v4266
  %v4268 = vsel %vm168, %v4255, 0.0
  %4269 = vadd.xlane.f32.xlu0 %v4268
  %v4270 = vpop.xlane.xlu0 %4269
  %v4271 = vsel %vm168, %v4257, 0.0
  %4272 = vadd.xlane.f32.xlu0 %v4271
  %v4273 = vpop.xlane.xlu0 %4272
  %v4274 = vsel %vm168, %v4259, 0.0
  %4275 = vadd.xlane.f32.xlu0 %v4274
  %v4276 = vpop.xlane.xlu0 %4275
  %v4277 = vsel %vm168, %v4261, 0.0
  %4278 = vadd.xlane.f32.xlu0 %v4277
  %v4279 = vpop.xlane.xlu0 %4278
  %v4280 = vsel %vm168, %v4263, 0.0
  %4281 = vadd.xlane.f32.xlu0 %v4280
  %v4282 = vpop.xlane.xlu0 %4281
  %v4283 = vsel %vm168, %v4265, 0.0
  %4284 = vadd.xlane.f32.xlu0 %v4283
  %v4285 = vpop.xlane.xlu0 %4284
  %v4286 = vsel %vm168, %v4267, 0.0
  %4287 = vadd.xlane.f32.xlu0 %v4286
  %v4288 = vpop.xlane.xlu0 %4287
  %v4289 = vrcp.pop %v4270
  %v4290 = vrcp.pop %v4273
  %v4291 = vrcp.pop %v4276
  %v4292 = vrcp.pop %v4279
  %v4293 = vrcp.pop %v4282
  %v4294 = vrcp.pop %v4285
  %v4295 = vrcp.pop %v4288
  %v4296 = vmul.f32 %v4255, %v4289
  %v4297 = vmul.f32 %v4257, %v4290
  %v4298 = vmul.f32 %v4259, %v4291
  %v4299 = vmul.f32 %v4261, %v4292
  %v4300 = vmul.f32 %v4263, %v4293
  %v4301 = vmul.f32 %v4265, %v4294
  %v4302 = vmul.f32 %v4267, %v4295
  %4303 = vrot.lane.b32.xlu0 %v136, 40
  %v4304 = vpop.permute.xlu0 %4303
  %v4307 = vsel %vm168, %v4296, 0
  %4309 = vmatprep.subr.mxu0 0.0
  %4310 = vmatpush1.msra.mxu0 %v4304
  %4311 = vmatprep.subr.mxu0 0.0
  %4312 = vmatpush1.msra.mxu0 0.0
  %4313 = vmatprep.subr.mxu0 0.0
  %4314 = vmatpush1.msra.mxu0 0.0
  %4315 = vmatprep.subr.mxu0 0.0
  %4316 = vmatpush1.msra.mxu0 0.0
  %4317 = vmatprep.subr.mxu0 0.0
  %4318 = vmatpush1.msra.mxu0 0.0
  %4319 = vmatprep.subr.mxu0 0.0
  %4320 = vmatpush1.msra.mxu0 0.0
  %4321 = vmatprep.subr.mxu0 0.0
  %4322 = vmatpush1.msra.mxu0 0.0
  %4323 = vmatprep.subr.mxu0 0.0
  %4324 = vmatpush1.msra.mxu0 0.0
  %4325 = vmatprep.subr.mxu0 0.0
  %4326 = vmatpush1.msra.mxu0 0.0
  %4327 = vmatprep.subr.mxu0 0.0
  %4328 = vmatpush1.msra.mxu0 0.0
  %4329 = vmatprep.subr.mxu0 0.0
  %4330 = vmatpush1.msra.mxu0 0.0
  %4331 = vmatprep.subr.mxu0 0.0
  %4332 = vmatpush1.msra.mxu0 0.0
  %4333 = vmatprep.subr.mxu0 0.0
  %4334 = vmatpush1.msra.mxu0 0.0
  %4335 = vmatprep.subr.mxu0 0.0
  %4336 = vmatpush1.msra.mxu0 0.0
  %4337 = vmatprep.subr.mxu0 0.0
  %4338 = vmatpush1.msra.mxu0 0.0
  %4339 = vmatprep.subr.mxu0 0.0
  %4340 = vmatpush1.msra.mxu0 0.0
  %4341 = vmatprep.subr.mxu0 0.0
  %4342 = vmatpush1.msra.mxu0 0.0
  %4343 = vmatprep.subr.mxu0 0.0
  %4344 = vmatpush1.msra.mxu0 0.0
  %4345 = vmatprep.subr.mxu0 0.0
  %4346 = vmatpush1.msra.mxu0 0.0
  %4347 = vmatprep.subr.mxu0 0.0
  %4348 = vmatpush1.msra.mxu0 0.0
  %4349 = vmatprep.subr.mxu0 0.0
  %4350 = vmatpush1.msra.mxu0 0.0
  %4351 = vmatprep.subr.mxu0 0.0
  %4352 = vmatpush1.msra.mxu0 0.0
  %4353 = vmatprep.subr.mxu0 0.0
  %4354 = vmatpush1.msra.mxu0 0.0
  %4355 = vmatprep.subr.mxu0 0.0
  %4356 = vmatpush1.msra.mxu0 0.0
  %4357 = vmatprep.subr.mxu0 0.0
  %4358 = vmatpush1.msra.mxu0 0.0
  %4359 = vmatprep.subr.mxu0 0.0
  %4360 = vmatpush1.msra.mxu0 0.0
  %4361 = vmatprep.subr.mxu0 0.0
  %4362 = vmatpush1.msra.mxu0 0.0
  %4363 = vmatprep.subr.mxu0 0.0
  %4364 = vmatpush1.msra.mxu0 0.0
  %4365 = vmatprep.subr.mxu0 0.0
  %4366 = vmatpush1.msra.mxu0 0.0
  %4367 = vmatprep.subr.mxu0 0.0
  %4368 = vmatpush1.msra.mxu0 0.0
  %4369 = vmatprep.subr.mxu0 0.0
  %4370 = vmatpush1.msra.mxu0 0.0
  %4371 = vmatprep.subr.mxu0 0.0
  %4372 = vmatpush1.msra.mxu0 0.0
  %4373 = vmatprep.mubr.f32.mxu0 0.0
  %4374 = vmatmul.mubr.f32.gmra.mrb[0].mxu0 %v4307
  %v4375 = vpop.f32.mrb[0].mxu0
  %v4376 = vadd.f32 0.0, %v4375
  %v4377 = vpop.f32.mrb[0].mxu0
  %4378 = vdwg.mxu0
  %4379 = vrot.lane.b32.xlu0 %v139, 40
  %v4380 = vpop.permute.xlu0 %4379
  %v4383 = vsel %vm168, %v4297, 0
  %4385 = vmatprep.subr.mxu0 0.0
  %4386 = vmatpush1.msra.mxu0 %v4380
  %4387 = vmatprep.subr.mxu0 0.0
  %4388 = vmatpush1.msra.mxu0 0.0
  %4389 = vmatprep.subr.mxu0 0.0
  %4390 = vmatpush1.msra.mxu0 0.0
  %4391 = vmatprep.subr.mxu0 0.0
  %4392 = vmatpush1.msra.mxu0 0.0
  %4393 = vmatprep.subr.mxu0 0.0
  %4394 = vmatpush1.msra.mxu0 0.0
  %4395 = vmatprep.subr.mxu0 0.0
  %4396 = vmatpush1.msra.mxu0 0.0
  %4397 = vmatprep.subr.mxu0 0.0
  %4398 = vmatpush1.msra.mxu0 0.0
  %4399 = vmatprep.subr.mxu0 0.0
  %4400 = vmatpush1.msra.mxu0 0.0
  %4401 = vmatprep.subr.mxu0 0.0
  %4402 = vmatpush1.msra.mxu0 0.0
  %4403 = vmatprep.subr.mxu0 0.0
  %4404 = vmatpush1.msra.mxu0 0.0
  %4405 = vmatprep.subr.mxu0 0.0
  %4406 = vmatpush1.msra.mxu0 0.0
  %4407 = vmatprep.subr.mxu0 0.0
  %4408 = vmatpush1.msra.mxu0 0.0
  %4409 = vmatprep.subr.mxu0 0.0
  %4410 = vmatpush1.msra.mxu0 0.0
  %4411 = vmatprep.subr.mxu0 0.0
  %4412 = vmatpush1.msra.mxu0 0.0
  %4413 = vmatprep.subr.mxu0 0.0
  %4414 = vmatpush1.msra.mxu0 0.0
  %4415 = vmatprep.subr.mxu0 0.0
  %4416 = vmatpush1.msra.mxu0 0.0
  %4417 = vmatprep.subr.mxu0 0.0
  %4418 = vmatpush1.msra.mxu0 0.0
  %4419 = vmatprep.subr.mxu0 0.0
  %4420 = vmatpush1.msra.mxu0 0.0
  %4421 = vmatprep.subr.mxu0 0.0
  %4422 = vmatpush1.msra.mxu0 0.0
  %4423 = vmatprep.subr.mxu0 0.0
  %4424 = vmatpush1.msra.mxu0 0.0
  %4425 = vmatprep.subr.mxu0 0.0
  %4426 = vmatpush1.msra.mxu0 0.0
  %4427 = vmatprep.subr.mxu0 0.0
  %4428 = vmatpush1.msra.mxu0 0.0
  %4429 = vmatprep.subr.mxu0 0.0
  %4430 = vmatpush1.msra.mxu0 0.0
  %4431 = vmatprep.subr.mxu0 0.0
  %4432 = vmatpush1.msra.mxu0 0.0
  %4433 = vmatprep.subr.mxu0 0.0
  %4434 = vmatpush1.msra.mxu0 0.0
  %4435 = vmatprep.subr.mxu0 0.0
  %4436 = vmatpush1.msra.mxu0 0.0
  %4437 = vmatprep.subr.mxu0 0.0
  %4438 = vmatpush1.msra.mxu0 0.0
  %4439 = vmatprep.subr.mxu0 0.0
  %4440 = vmatpush1.msra.mxu0 0.0
  %4441 = vmatprep.subr.mxu0 0.0
  %4442 = vmatpush1.msra.mxu0 0.0
  %4443 = vmatprep.subr.mxu0 0.0
  %4444 = vmatpush1.msra.mxu0 0.0
  %4445 = vmatprep.subr.mxu0 0.0
  %4446 = vmatpush1.msra.mxu0 0.0
  %4447 = vmatprep.subr.mxu0 0.0
  %4448 = vmatpush1.msra.mxu0 0.0
  %4449 = vmatprep.mubr.f32.mxu0 0.0
  %4450 = vmatmul.mubr.f32.gmra.mrb[0].mxu0 %v4383
  %v4451 = vpop.f32.mrb[0].mxu0
  %v4452 = vadd.f32 0.0, %v4451
  %v4453 = vpop.f32.mrb[0].mxu0
  %4454 = vdwg.mxu0
  %4455 = vrot.lane.b32.xlu0 %v144, 40
  %v4456 = vpop.permute.xlu0 %4455
  %v4459 = vsel %vm168, %v4298, 0
  %4461 = vmatprep.subr.mxu0 0.0
  %4462 = vmatpush1.msra.mxu0 %v4456
  %4463 = vmatprep.subr.mxu0 0.0
  %4464 = vmatpush1.msra.mxu0 0.0
  %4465 = vmatprep.subr.mxu0 0.0
  %4466 = vmatpush1.msra.mxu0 0.0
  %4467 = vmatprep.subr.mxu0 0.0
  %4468 = vmatpush1.msra.mxu0 0.0
  %4469 = vmatprep.subr.mxu0 0.0
  %4470 = vmatpush1.msra.mxu0 0.0
  %4471 = vmatprep.subr.mxu0 0.0
  %4472 = vmatpush1.msra.mxu0 0.0
  %4473 = vmatprep.subr.mxu0 0.0
  %4474 = vmatpush1.msra.mxu0 0.0
  %4475 = vmatprep.subr.mxu0 0.0
  %4476 = vmatpush1.msra.mxu0 0.0
  %4477 = vmatprep.subr.mxu0 0.0
  %4478 = vmatpush1.msra.mxu0 0.0
  %4479 = vmatprep.subr.mxu0 0.0
  %4480 = vmatpush1.msra.mxu0 0.0
  %4481 = vmatprep.subr.mxu0 0.0
  %4482 = vmatpush1.msra.mxu0 0.0
  %4483 = vmatprep.subr.mxu0 0.0
  %4484 = vmatpush1.msra.mxu0 0.0
  %4485 = vmatprep.subr.mxu0 0.0
  %4486 = vmatpush1.msra.mxu0 0.0
  %4487 = vmatprep.subr.mxu0 0.0
  %4488 = vmatpush1.msra.mxu0 0.0
  %4489 = vmatprep.subr.mxu0 0.0
  %4490 = vmatpush1.msra.mxu0 0.0
  %4491 = vmatprep.subr.mxu0 0.0
  %4492 = vmatpush1.msra.mxu0 0.0
  %4493 = vmatprep.subr.mxu0 0.0
  %4494 = vmatpush1.msra.mxu0 0.0
  %4495 = vmatprep.subr.mxu0 0.0
  %4496 = vmatpush1.msra.mxu0 0.0
  %4497 = vmatprep.subr.mxu0 0.0
  %4498 = vmatpush1.msra.mxu0 0.0
  %4499 = vmatprep.subr.mxu0 0.0
  %4500 = vmatpush1.msra.mxu0 0.0
  %4501 = vmatprep.subr.mxu0 0.0
  %4502 = vmatpush1.msra.mxu0 0.0
  %4503 = vmatprep.subr.mxu0 0.0
  %4504 = vmatpush1.msra.mxu0 0.0
  %4505 = vmatprep.subr.mxu0 0.0
  %4506 = vmatpush1.msra.mxu0 0.0
  %4507 = vmatprep.subr.mxu0 0.0
  %4508 = vmatpush1.msra.mxu0 0.0
  %4509 = vmatprep.subr.mxu0 0.0
  %4510 = vmatpush1.msra.mxu0 0.0
  %4511 = vmatprep.subr.mxu0 0.0
  %4512 = vmatpush1.msra.mxu0 0.0
  %4513 = vmatprep.subr.mxu0 0.0
  %4514 = vmatpush1.msra.mxu0 0.0
  %4515 = vmatprep.subr.mxu0 0.0
  %4516 = vmatpush1.msra.mxu0 0.0
  %4517 = vmatprep.subr.mxu0 0.0
  %4518 = vmatpush1.msra.mxu0 0.0
  %4519 = vmatprep.subr.mxu0 0.0
  %4520 = vmatpush1.msra.mxu0 0.0
  %4521 = vmatprep.subr.mxu0 0.0
  %4522 = vmatpush1.msra.mxu0 0.0
  %4523 = vmatprep.subr.mxu0 0.0
  %4524 = vmatpush1.msra.mxu0 0.0
  %4525 = vmatprep.mubr.f32.mxu0 0.0
  %4526 = vmatmul.mubr.f32.gmra.mrb[0].mxu0 %v4459
  %v4527 = vpop.f32.mrb[0].mxu0
  %v4528 = vadd.f32 0.0, %v4527
  %v4529 = vpop.f32.mrb[0].mxu0
  %4530 = vdwg.mxu0
  %4531 = vrot.lane.b32.xlu0 %v147, 40
  %v4532 = vpop.permute.xlu0 %4531
  %v4535 = vsel %vm168, %v4299, 0
  %4537 = vmatprep.subr.mxu0 0.0
  %4538 = vmatpush1.msra.mxu0 %v4532
  %4539 = vmatprep.subr.mxu0 0.0
  %4540 = vmatpush1.msra.mxu0 0.0
  %4541 = vmatprep.subr.mxu0 0.0
  %4542 = vmatpush1.msra.mxu0 0.0
  %4543 = vmatprep.subr.mxu0 0.0
  %4544 = vmatpush1.msra.mxu0 0.0
  %4545 = vmatprep.subr.mxu0 0.0
  %4546 = vmatpush1.msra.mxu0 0.0
  %4547 = vmatprep.subr.mxu0 0.0
  %4548 = vmatpush1.msra.mxu0 0.0
  %4549 = vmatprep.subr.mxu0 0.0
  %4550 = vmatpush1.msra.mxu0 0.0
  %4551 = vmatprep.subr.mxu0 0.0
  %4552 = vmatpush1.msra.mxu0 0.0
  %4553 = vmatprep.subr.mxu0 0.0
  %4554 = vmatpush1.msra.mxu0 0.0
  %4555 = vmatprep.subr.mxu0 0.0
  %4556 = vmatpush1.msra.mxu0 0.0
  %4557 = vmatprep.subr.mxu0 0.0
  %4558 = vmatpush1.msra.mxu0 0.0
  %4559 = vmatprep.subr.mxu0 0.0
  %4560 = vmatpush1.msra.mxu0 0.0
  %4561 = vmatprep.subr.mxu0 0.0
  %4562 = vmatpush1.msra.mxu0 0.0
  %4563 = vmatprep.subr.mxu0 0.0
  %4564 = vmatpush1.msra.mxu0 0.0
  %4565 = vmatprep.subr.mxu0 0.0
  %4566 = vmatpush1.msra.mxu0 0.0
  %4567 = vmatprep.subr.mxu0 0.0
  %4568 = vmatpush1.msra.mxu0 0.0
  %4569 = vmatprep.subr.mxu0 0.0
  %4570 = vmatpush1.msra.mxu0 0.0
  %4571 = vmatprep.subr.mxu0 0.0
  %4572 = vmatpush1.msra.mxu0 0.0
  %4573 = vmatprep.subr.mxu0 0.0
  %4574 = vmatpush1.msra.mxu0 0.0
  %4575 = vmatprep.subr.mxu0 0.0
  %4576 = vmatpush1.msra.mxu0 0.0
  %4577 = vmatprep.subr.mxu0 0.0
  %4578 = vmatpush1.msra.mxu0 0.0
  %4579 = vmatprep.subr.mxu0 0.0
  %4580 = vmatpush1.msra.mxu0 0.0
  %4581 = vmatprep.subr.mxu0 0.0
  %4582 = vmatpush1.msra.mxu0 0.0
  %4583 = vmatprep.subr.mxu0 0.0
  %4584 = vmatpush1.msra.mxu0 0.0
  %4585 = vmatprep.subr.mxu0 0.0
  %4586 = vmatpush1.msra.mxu0 0.0
  %4587 = vmatprep.subr.mxu0 0.0
  %4588 = vmatpush1.msra.mxu0 0.0
  %4589 = vmatprep.subr.mxu0 0.0
  %4590 = vmatpush1.msra.mxu0 0.0
  %4591 = vmatprep.subr.mxu0 0.0
  %4592 = vmatpush1.msra.mxu0 0.0
  %4593 = vmatprep.subr.mxu0 0.0
  %4594 = vmatpush1.msra.mxu0 0.0
  %4595 = vmatprep.subr.mxu0 0.0
  %4596 = vmatpush1.msra.mxu0 0.0
  %4597 = vmatprep.subr.mxu0 0.0
  %4598 = vmatpush1.msra.mxu0 0.0
  %4599 = vmatprep.subr.mxu0 0.0
  %4600 = vmatpush1.msra.mxu0 0.0
  %4601 = vmatprep.mubr.f32.mxu0 0.0
  %4602 = vmatmul.mubr.f32.gmra.mrb[0].mxu0 %v4535
  %v4603 = vpop.f32.mrb[0].mxu0
  %v4604 = vadd.f32 0.0, %v4603
  %v4605 = vpop.f32.mrb[0].mxu0
  %4606 = vdwg.mxu0
  %4607 = vrot.lane.b32.xlu0 %v152, 40
  %v4608 = vpop.permute.xlu0 %4607
  %v4611 = vsel %vm168, %v4300, 0
  %4613 = vmatprep.subr.mxu0 0.0
  %4614 = vmatpush1.msra.mxu0 %v4608
  %4615 = vmatprep.subr.mxu0 0.0
  %4616 = vmatpush1.msra.mxu0 0.0
  %4617 = vmatprep.subr.mxu0 0.0
  %4618 = vmatpush1.msra.mxu0 0.0
  %4619 = vmatprep.subr.mxu0 0.0
  %4620 = vmatpush1.msra.mxu0 0.0
  %4621 = vmatprep.subr.mxu0 0.0
  %4622 = vmatpush1.msra.mxu0 0.0
  %4623 = vmatprep.subr.mxu0 0.0
  %4624 = vmatpush1.msra.mxu0 0.0
  %4625 = vmatprep.subr.mxu0 0.0
  %4626 = vmatpush1.msra.mxu0 0.0
  %4627 = vmatprep.subr.mxu0 0.0
  %4628 = vmatpush1.msra.mxu0 0.0
  %4629 = vmatprep.subr.mxu0 0.0
  %4630 = vmatpush1.msra.mxu0 0.0
  %4631 = vmatprep.subr.mxu0 0.0
  %4632 = vmatpush1.msra.mxu0 0.0
  %4633 = vmatprep.subr.mxu0 0.0
  %4634 = vmatpush1.msra.mxu0 0.0
  %4635 = vmatprep.subr.mxu0 0.0
  %4636 = vmatpush1.msra.mxu0 0.0
  %4637 = vmatprep.subr.mxu0 0.0
  %4638 = vmatpush1.msra.mxu0 0.0
  %4639 = vmatprep.subr.mxu0 0.0
  %4640 = vmatpush1.msra.mxu0 0.0
  %4641 = vmatprep.subr.mxu0 0.0
  %4642 = vmatpush1.msra.mxu0 0.0
  %4643 = vmatprep.subr.mxu0 0.0
  %4644 = vmatpush1.msra.mxu0 0.0
  %4645 = vmatprep.subr.mxu0 0.0
  %4646 = vmatpush1.msra.mxu0 0.0
  %4647 = vmatprep.subr.mxu0 0.0
  %4648 = vmatpush1.msra.mxu0 0.0
  %4649 = vmatprep.subr.mxu0 0.0
  %4650 = vmatpush1.msra.mxu0 0.0
  %4651 = vmatprep.subr.mxu0 0.0
  %4652 = vmatpush1.msra.mxu0 0.0
  %4653 = vmatprep.subr.mxu0 0.0
  %4654 = vmatpush1.msra.mxu0 0.0
  %4655 = vmatprep.subr.mxu0 0.0
  %4656 = vmatpush1.msra.mxu0 0.0
  %4657 = vmatprep.subr.mxu0 0.0
  %4658 = vmatpush1.msra.mxu0 0.0
  %4659 = vmatprep.subr.mxu0 0.0
  %4660 = vmatpush1.msra.mxu0 0.0
  %4661 = vmatprep.subr.mxu0 0.0
  %4662 = vmatpush1.msra.mxu0 0.0
  %4663 = vmatprep.subr.mxu0 0.0
  %4664 = vmatpush1.msra.mxu0 0.0
  %4665 = vmatprep.subr.mxu0 0.0
  %4666 = vmatpush1.msra.mxu0 0.0
  %4667 = vmatprep.subr.mxu0 0.0
  %4668 = vmatpush1.msra.mxu0 0.0
  %4669 = vmatprep.subr.mxu0 0.0
  %4670 = vmatpush1.msra.mxu0 0.0
  %4671 = vmatprep.subr.mxu0 0.0
  %4672 = vmatpush1.msra.mxu0 0.0
  %4673 = vmatprep.subr.mxu0 0.0
  %4674 = vmatpush1.msra.mxu0 0.0
  %4675 = vmatprep.subr.mxu0 0.0
  %4676 = vmatpush1.msra.mxu0 0.0
  %4677 = vmatprep.mubr.f32.mxu0 0.0
  %4678 = vmatmul.mubr.f32.gmra.mrb[0].mxu0 %v4611
  %v4679 = vpop.f32.mrb[0].mxu0
  %v4680 = vadd.f32 0.0, %v4679
  %v4681 = vpop.f32.mrb[0].mxu0
  %4682 = vdwg.mxu0
  %4683 = vrot.lane.b32.xlu0 %v155, 40
  %v4684 = vpop.permute.xlu0 %4683
  %v4687 = vsel %vm168, %v4301, 0
  %4689 = vmatprep.subr.mxu0 0.0
  %4690 = vmatpush1.msra.mxu0 %v4684
  %4691 = vmatprep.subr.mxu0 0.0
  %4692 = vmatpush1.msra.mxu0 0.0
  %4693 = vmatprep.subr.mxu0 0.0
  %4694 = vmatpush1.msra.mxu0 0.0
  %4695 = vmatprep.subr.mxu0 0.0
  %4696 = vmatpush1.msra.mxu0 0.0
  %4697 = vmatprep.subr.mxu0 0.0
  %4698 = vmatpush1.msra.mxu0 0.0
  %4699 = vmatprep.subr.mxu0 0.0
  %4700 = vmatpush1.msra.mxu0 0.0
  %4701 = vmatprep.subr.mxu0 0.0
  %4702 = vmatpush1.msra.mxu0 0.0
  %4703 = vmatprep.subr.mxu0 0.0
  %4704 = vmatpush1.msra.mxu0 0.0
  %4705 = vmatprep.subr.mxu0 0.0
  %4706 = vmatpush1.msra.mxu0 0.0
  %4707 = vmatprep.subr.mxu0 0.0
  %4708 = vmatpush1.msra.mxu0 0.0
  %4709 = vmatprep.subr.mxu0 0.0
  %4710 = vmatpush1.msra.mxu0 0.0
  %4711 = vmatprep.subr.mxu0 0.0
  %4712 = vmatpush1.msra.mxu0 0.0
  %4713 = vmatprep.subr.mxu0 0.0
  %4714 = vmatpush1.msra.mxu0 0.0
  %4715 = vmatprep.subr.mxu0 0.0
  %4716 = vmatpush1.msra.mxu0 0.0
  %4717 = vmatprep.subr.mxu0 0.0
  %4718 = vmatpush1.msra.mxu0 0.0
  %4719 = vmatprep.subr.mxu0 0.0
  %4720 = vmatpush1.msra.mxu0 0.0
  %4721 = vmatprep.subr.mxu0 0.0
  %4722 = vmatpush1.msra.mxu0 0.0
  %4723 = vmatprep.subr.mxu0 0.0
  %4724 = vmatpush1.msra.mxu0 0.0
  %4725 = vmatprep.subr.mxu0 0.0
  %4726 = vmatpush1.msra.mxu0 0.0
  %4727 = vmatprep.subr.mxu0 0.0
  %4728 = vmatpush1.msra.mxu0 0.0
  %4729 = vmatprep.subr.mxu0 0.0
  %4730 = vmatpush1.msra.mxu0 0.0
  %4731 = vmatprep.subr.mxu0 0.0
  %4732 = vmatpush1.msra.mxu0 0.0
  %4733 = vmatprep.subr.mxu0 0.0
  %4734 = vmatpush1.msra.mxu0 0.0
  %4735 = vmatprep.subr.mxu0 0.0
  %4736 = vmatpush1.msra.mxu0 0.0
  %4737 = vmatprep.subr.mxu0 0.0
  %4738 = vmatpush1.msra.mxu0 0.0
  %4739 = vmatprep.subr.mxu0 0.0
  %4740 = vmatpush1.msra.mxu0 0.0
  %4741 = vmatprep.subr.mxu0 0.0
  %4742 = vmatpush1.msra.mxu0 0.0
  %4743 = vmatprep.subr.mxu0 0.0
  %4744 = vmatpush1.msra.mxu0 0.0
  %4745 = vmatprep.subr.mxu0 0.0
  %4746 = vmatpush1.msra.mxu0 0.0
  %4747 = vmatprep.subr.mxu0 0.0
  %4748 = vmatpush1.msra.mxu0 0.0
  %4749 = vmatprep.subr.mxu0 0.0
  %4750 = vmatpush1.msra.mxu0 0.0
  %4751 = vmatprep.subr.mxu0 0.0
  %4752 = vmatpush1.msra.mxu0 0.0
  %4753 = vmatprep.mubr.f32.mxu0 0.0
  %4754 = vmatmul.mubr.f32.gmra.mrb[0].mxu0 %v4687
  %v4755 = vpop.f32.mrb[0].mxu0
  %v4756 = vadd.f32 0.0, %v4755
  %v4757 = vpop.f32.mrb[0].mxu0
  %4758 = vdwg.mxu0
  %4759 = vrot.lane.b32.xlu0 %v160, 40
  %v4760 = vpop.permute.xlu0 %4759
  %v4763 = vsel %vm168, %v4302, 0
  %4765 = vmatprep.subr.mxu0 0.0
  %4766 = vmatpush1.msra.mxu0 %v4760
  %4767 = vmatprep.subr.mxu0 0.0
  %4768 = vmatpush1.msra.mxu0 0.0
  %4769 = vmatprep.subr.mxu0 0.0
  %4770 = vmatpush1.msra.mxu0 0.0
  %4771 = vmatprep.subr.mxu0 0.0
  %4772 = vmatpush1.msra.mxu0 0.0
  %4773 = vmatprep.subr.mxu0 0.0
  %4774 = vmatpush1.msra.mxu0 0.0
  %4775 = vmatprep.subr.mxu0 0.0
  %4776 = vmatpush1.msra.mxu0 0.0
  %4777 = vmatprep.subr.mxu0 0.0
  %4778 = vmatpush1.msra.mxu0 0.0
  %4779 = vmatprep.subr.mxu0 0.0
  %4780 = vmatpush1.msra.mxu0 0.0
  %4781 = vmatprep.subr.mxu0 0.0
  %4782 = vmatpush1.msra.mxu0 0.0
  %4783 = vmatprep.subr.mxu0 0.0
  %4784 = vmatpush1.msra.mxu0 0.0
  %4785 = vmatprep.subr.mxu0 0.0
  %4786 = vmatpush1.msra.mxu0 0.0
  %4787 = vmatprep.subr.mxu0 0.0
  %4788 = vmatpush1.msra.mxu0 0.0
  %4789 = vmatprep.subr.mxu0 0.0
  %4790 = vmatpush1.msra.mxu0 0.0
  %4791 = vmatprep.subr.mxu0 0.0
  %4792 = vmatpush1.msra.mxu0 0.0
  %4793 = vmatprep.subr.mxu0 0.0
  %4794 = vmatpush1.msra.mxu0 0.0
  %4795 = vmatprep.subr.mxu0 0.0
  %4796 = vmatpush1.msra.mxu0 0.0
  %4797 = vmatprep.subr.mxu0 0.0
  %4798 = vmatpush1.msra.mxu0 0.0
  %4799 = vmatprep.subr.mxu0 0.0
  %4800 = vmatpush1.msra.mxu0 0.0
  %4801 = vmatprep.subr.mxu0 0.0
  %4802 = vmatpush1.msra.mxu0 0.0
  %4803 = vmatprep.subr.mxu0 0.0
  %4804 = vmatpush1.msra.mxu0 0.0
  %4805 = vmatprep.subr.mxu0 0.0
  %4806 = vmatpush1.msra.mxu0 0.0
  %4807 = vmatprep.subr.mxu0 0.0
  %4808 = vmatpush1.msra.mxu0 0.0
  %4809 = vmatprep.subr.mxu0 0.0
  %4810 = vmatpush1.msra.mxu0 0.0
  %4811 = vmatprep.subr.mxu0 0.0
  %4812 = vmatpush1.msra.mxu0 0.0
  %4813 = vmatprep.subr.mxu0 0.0
  %4814 = vmatpush1.msra.mxu0 0.0
  %4815 = vmatprep.subr.mxu0 0.0
  %4816 = vmatpush1.msra.mxu0 0.0
  %4817 = vmatprep.subr.mxu0 0.0
  %4818 = vmatpush1.msra.mxu0 0.0
  %4819 = vmatprep.subr.mxu0 0.0
  %4820 = vmatpush1.msra.mxu0 0.0
  %4821 = vmatprep.subr.mxu0 0.0
  %4822 = vmatpush1.msra.mxu0 0.0
  %4823 = vmatprep.subr.mxu0 0.0
  %4824 = vmatpush1.msra.mxu0 0.0
  %4825 = vmatprep.subr.mxu0 0.0
  %4826 = vmatpush1.msra.mxu0 0.0
  %4827 = vmatprep.subr.mxu0 0.0
  %4828 = vmatpush1.msra.mxu0 0.0
  %4829 = vmatprep.mubr.f32.mxu0 0.0
  %4830 = vmatmul.mubr.f32.gmra.mrb[0].mxu0 %v4763
  %v4831 = vpop.f32.mrb[0].mxu0
  %v4832 = vadd.f32 0.0, %v4831
  %v4833 = vpop.f32.mrb[0].mxu0
  %4834 = vdwg.mxu0
  %4842 = vrot.lane.b32.xlu0 %v2038, 8
  %v4843 = vpop.permute.xlu0 %4842
  %4844 = vrot.lane.b32.xlu0 %v2114, 8
  %v4845 = vpop.permute.xlu0 %4844
  %4846 = vrot.lane.b32.xlu0 %v2190, 8
  %v4847 = vpop.permute.xlu0 %4846
  %4848 = vrot.lane.b32.xlu0 %v2266, 8
  %v4849 = vpop.permute.xlu0 %4848
  %4850 = vrot.lane.b32.xlu0 %v2342, 8
  %v4851 = vpop.permute.xlu0 %4850
  %4852 = vrot.lane.b32.xlu0 %v2418, 8
  %v4853 = vpop.permute.xlu0 %4852
  %4854 = vrot.lane.b32.xlu0 %v2494, 8
  %v4855 = vpop.permute.xlu0 %4854
  %4870 = vrot.lane.b32.xlu0 %v3207, 16
  %v4871 = vpop.permute.xlu0 %4870
  %4872 = vrot.lane.b32.xlu0 %v3283, 16
  %v4873 = vpop.permute.xlu0 %4872
  %4874 = vrot.lane.b32.xlu0 %v3359, 16
  %v4875 = vpop.permute.xlu0 %4874
  %4876 = vrot.lane.b32.xlu0 %v3435, 16
  %v4877 = vpop.permute.xlu0 %4876
  %4878 = vrot.lane.b32.xlu0 %v3511, 16
  %v4879 = vpop.permute.xlu0 %4878
  %4880 = vrot.lane.b32.xlu0 %v3587, 16
  %v4881 = vpop.permute.xlu0 %4880
  %4882 = vrot.lane.b32.xlu0 %v3663, 16
  %v4883 = vpop.permute.xlu0 %4882
  %4898 = vrot.lane.b32.xlu0 %v4376, 24
  %v4899 = vpop.permute.xlu0 %4898
  %4900 = vrot.lane.b32.xlu0 %v4452, 24
  %v4901 = vpop.permute.xlu0 %4900
  %4902 = vrot.lane.b32.xlu0 %v4528, 24
  %v4903 = vpop.permute.xlu0 %4902
  %4904 = vrot.lane.b32.xlu0 %v4604, 24
  %v4905 = vpop.permute.xlu0 %4904
  %4906 = vrot.lane.b32.xlu0 %v4680, 24
  %v4907 = vpop.permute.xlu0 %4906
  %4908 = vrot.lane.b32.xlu0 %v4756, 24
  %v4909 = vpop.permute.xlu0 %4908
  %4910 = vrot.lane.b32.xlu0 %v4832, 24
  %v4911 = vpop.permute.xlu0 %4910
  %v4919 = vsel %vm168, %v869, %v4843
  %v4920 = vsel %vm168, %v945, %v4845
  %v4921 = vsel %vm168, %v1021, %v4847
  %v4922 = vsel %vm168, %v1097, %v4849
  %v4923 = vsel %vm168, %v1173, %v4851
  %v4924 = vsel %vm168, %v1249, %v4853
  %v4925 = vsel %vm168, %v1325, %v4855
  %vm4926 = vcmask 130048
  %v4927 = vsel %vm4926, %v4919, %v4871
  %v4928 = vsel %vm4926, %v4920, %v4873
  %v4929 = vsel %vm4926, %v4921, %v4875
  %v4930 = vsel %vm4926, %v4922, %v4877
  %v4931 = vsel %vm4926, %v4923, %v4879
  %v4932 = vsel %vm4926, %v4924, %v4881
  %v4933 = vsel %vm4926, %v4925, %v4883
  %vm4934 = vcmask 195584
  %v4935 = vsel %vm4934, %v4927, %v4899
  %v4936 = vsel %vm4934, %v4928, %v4901
  %v4937 = vsel %vm4934, %v4929, %v4903
  %v4938 = vsel %vm4934, %v4930, %v4905
  %v4939 = vsel %vm4934, %v4931, %v4907
  %v4940 = vsel %vm4934, %v4932, %v4909
  %v4941 = vsel %vm4934, %v4933, %v4911
  %v4942 = vpack.c.bf16 %v4936, %v4935
  %v4943 = vpack.c.bf16 %v4938, %v4937
  %v4944 = vpack.c.bf16 %v4940, %v4939
  %v4945 = vpack.c.bf16 %v4941, %v4941
  %v4946 = vld [vmem:[%s3] sm:$0xf]
  %v4947 = vld [vmem:[%s3 + $0x4] sm:$0xf]
  %v4948 = vld [vmem:[%s3 + $0x8] sm:$0xf]
  %v4949 = vld [vmem:[%s3 + $0xc] sm:$0xf]
  %v4950 = vld [vmem:[%s6 + $0x1] sm:$0x1]
  %v4952 = vlaneseq
  %v4953 = vshrl.u32 %v4952, 7
  %v4954 = vsub.s32 0, %v4953
  %v4955 = vrot.slane %v4950, %v4954
  %v4961 = vunpack.c.l.b16 %v4946
  %v4962 = vunpack.c.l.b16 %v4947
  %v4963 = vunpack.c.l.b16 %v4948
  %v4964 = vunpack.c.l.b16 %v4949
  %v4965 = vpack.c.b16 %v4962, %v4961
  %v4966 = vpack.c.b16 %v4964, %v4963
  %v4970 = vsel %vm88, %v4942, 0
  %v4973 = vsel %vm88, %v4943, 0
  %v4976 = vsel %vm88, %v4944, 0
  %v4979 = vsel %vm88, %v4945, 0
  %4981 = vmatprep.subr.bf16.mxu0 0
  %4982 = vmatpush1.bf16.msra.mxu0 %v4965
  %4983 = vmatprep.subr.bf16.mxu0 0
  %4984 = vmatpush1.bf16.msra.mxu0 %v4966
  %4985 = vmatprep.subr.bf16.mxu0 0
  %4986 = vmatpush1.bf16.msra.mxu0 0
  %4987 = vmatprep.subr.bf16.mxu0 0
  %4988 = vmatpush1.bf16.msra.mxu0 0
  %4989 = vmatprep.subr.bf16.mxu0 0
  %4990 = vmatpush1.bf16.msra.mxu0 0
  %4991 = vmatprep.subr.bf16.mxu0 0
  %4992 = vmatpush1.bf16.msra.mxu0 0
  %4993 = vmatprep.subr.bf16.mxu0 0
  %4994 = vmatpush1.bf16.msra.mxu0 0
  %4995 = vmatprep.subr.bf16.mxu0 0
  %4996 = vmatpush1.bf16.msra.mxu0 0
  %4997 = vmatprep.subr.bf16.mxu0 0
  %4998 = vmatpush1.bf16.msra.mxu0 0
  %4999 = vmatprep.subr.bf16.mxu0 0
  %5000 = vmatpush1.bf16.msra.mxu0 0
  %5001 = vmatprep.subr.bf16.mxu0 0
  %5002 = vmatpush1.bf16.msra.mxu0 0
  %5003 = vmatprep.subr.bf16.mxu0 0
  %5004 = vmatpush1.bf16.msra.mxu0 0
  %5005 = vmatprep.subr.bf16.mxu0 0
  %5006 = vmatpush1.bf16.msra.mxu0 0
  %5007 = vmatprep.subr.bf16.mxu0 0
  %5008 = vmatpush1.bf16.msra.mxu0 0
  %5009 = vmatprep.subr.bf16.mxu0 0
  %5010 = vmatpush1.bf16.msra.mxu0 0
  %5011 = vmatprep.subr.bf16.mxu0 0
  %5012 = vmatpush1.bf16.msra.mxu0 0
  %5013 = vmatprep.mubr.bf16.mxu0 0
  %5014 = vmatmul.mubr.bf16.gmra.mrb[0].mxu0 %v4970
  %v5015 = vpop.f32.mrb[0].mxu0
  %v5016 = vadd.f32 %v4955, %v5015
  %v5017 = vpop.f32.mrb[0].mxu0
  %v5018 = vpop.f32.mrb[0].mxu0
  %v5019 = vadd.f32 %v4955, %v5018
  %v5020 = vpop.f32.mrb[0].mxu0
  %5021 = vmatprep.mubr.bf16.mxu0 0
  %5022 = vmatmul.mubr.bf16.gmra.mrb[0].mxu0 %v4973
  %v5023 = vpop.f32.mrb[0].mxu0
  %v5024 = vadd.f32 %v4955, %v5023
  %v5025 = vpop.f32.mrb[0].mxu0
  %v5026 = vpop.f32.mrb[0].mxu0
  %v5027 = vadd.f32 %v4955, %v5026
  %v5028 = vpop.f32.mrb[0].mxu0
  %5029 = vmatprep.mubr.bf16.mxu0 0
  %5030 = vmatmul.mubr.bf16.gmra.mrb[0].mxu0 %v4976
  %v5031 = vpop.f32.mrb[0].mxu0
  %v5032 = vadd.f32 %v4955, %v5031
  %v5033 = vpop.f32.mrb[0].mxu0
  %v5034 = vpop.f32.mrb[0].mxu0
  %v5035 = vadd.f32 %v4955, %v5034
  %v5036 = vpop.f32.mrb[0].mxu0
  %5037 = vmatprep.mubr.bf16.mxu0 0
  %5038 = vmatmul.mubr.bf16.gmra.mrb[0].mxu0 %v4979
  %v5039 = vpop.f32.mrb[0].mxu0
  %v5040 = vadd.f32 %v4955, %v5039
  %v5041 = vpop.f32.mrb[0].mxu0
  %v5042 = vpop.f32.mrb[0].mxu0
  %v5043 = vpop.f32.mrb[0].mxu0
  %5044 = vdwg.mxu0
  %v5045 = vadd.f32 %v47, %v5016
  %v5046 = vadd.f32 %v48, %v5019
  %v5047 = vadd.f32 %v49, %v5024
  %v5048 = vadd.f32 %v50, %v5027
  %v5049 = vadd.f32 %v51, %v5032
  %v5050 = vadd.f32 %v52, %v5035
  %v5051 = vadd.f32 %v53, %v5040
  %v5052 = vld [vmem:[%s6 + $0x13] sm:$0x1]
  %v5053 = vld [vmem:[%s6 + $0x14] sm:$0x1]
  %v5054 = vsel %vm88, %v5045, 0.0
  %5055 = vadd.xlane.f32.xlu0 %v5054
  %v5056 = vpop.xlane.xlu0 %5055
  %v5057 = vsel %vm88, %v5046, 0.0
  %5058 = vadd.xlane.f32.xlu0 %v5057
  %v5059 = vpop.xlane.xlu0 %5058
  %v5060 = vsel %vm88, %v5047, 0.0
  %5061 = vadd.xlane.f32.xlu0 %v5060
  %v5062 = vpop.xlane.xlu0 %5061
  %v5063 = vsel %vm88, %v5048, 0.0
  %5064 = vadd.xlane.f32.xlu0 %v5063
  %v5065 = vpop.xlane.xlu0 %5064
  %v5066 = vsel %vm88, %v5049, 0.0
  %5067 = vadd.xlane.f32.xlu0 %v5066
  %v5068 = vpop.xlane.xlu0 %5067
  %v5069 = vsel %vm88, %v5050, 0.0
  %5070 = vadd.xlane.f32.xlu0 %v5069
  %v5071 = vpop.xlane.xlu0 %5070
  %v5072 = vsel %vm88, %v5051, 0.0
  %5073 = vadd.xlane.f32.xlu0 %v5072
  %v5074 = vpop.xlane.xlu0 %5073
  %v5075 = vrcp.pop 32.0
  %v5076 = vmul.f32 %v5056, %v5075
  %v5077 = vmul.f32 %v5059, %v5075
  %v5078 = vmul.f32 %v5062, %v5075
  %v5079 = vmul.f32 %v5065, %v5075
  %v5080 = vmul.f32 %v5068, %v5075
  %v5081 = vmul.f32 %v5071, %v5075
  %v5082 = vmul.f32 %v5074, %v5075
  %v5083 = vsub.f32 %v5045, %v5076
  %v5084 = vsub.f32 %v5046, %v5077
  %v5085 = vsub.f32 %v5047, %v5078
  %v5086 = vsub.f32 %v5048, %v5079
  %v5087 = vsub.f32 %v5049, %v5080
  %v5088 = vsub.f32 %v5050, %v5081
  %v5089 = vsub.f32 %v5051, %v5082
  %v5090 = vmul.f32 %v5083, %v5083
  %v5091 = vmul.f32 %v5084, %v5084
  %v5092 = vmul.f32 %v5085, %v5085
  %v5093 = vmul.f32 %v5086, %v5086
  %v5094 = vmul.f32 %v5087, %v5087
  %v5095 = vmul.f32 %v5088, %v5088
  %v5096 = vmul.f32 %v5089, %v5089
  %v5097 = vsel %vm88, %v5090, 0.0
  %5098 = vadd.xlane.f32.xlu0 %v5097
  %v5099 = vpop.xlane.xlu0 %5098
  %v5100 = vsel %vm88, %v5091, 0.0
  %5101 = vadd.xlane.f32.xlu0 %v5100
  %v5102 = vpop.xlane.xlu0 %5101
  %v5103 = vsel %vm88, %v5092, 0.0
  %5104 = vadd.xlane.f32.xlu0 %v5103
  %v5105 = vpop.xlane.xlu0 %5104
  %v5106 = vsel %vm88, %v5093, 0.0
  %5107 = vadd.xlane.f32.xlu0 %v5106
  %v5108 = vpop.xlane.xlu0 %5107
  %v5109 = vsel %vm88, %v5094, 0.0
  %5110 = vadd.xlane.f32.xlu0 %v5109
  %v5111 = vpop.xlane.xlu0 %5110
  %v5112 = vsel %vm88, %v5095, 0.0
  %5113 = vadd.xlane.f32.xlu0 %v5112
  %v5114 = vpop.xlane.xlu0 %5113
  %v5115 = vsel %vm88, %v5096, 0.0
  %5116 = vadd.xlane.f32.xlu0 %v5115
  %v5117 = vpop.xlane.xlu0 %5116
  %v5118 = vmul.f32 %v5099, %v5075
  %v5119 = vmul.f32 %v5102, %v5075
  %v5120 = vmul.f32 %v5105, %v5075
  %v5121 = vmul.f32 %v5108, %v5075
  %v5122 = vmul.f32 %v5111, %v5075
  %v5123 = vmul.f32 %v5114, %v5075
  %v5124 = vmul.f32 %v5117, %v5075
  %v5125 = vadd.f32 %v5118, 1e-05
  %v5126 = vadd.f32 %v5119, 1e-05
  %v5127 = vadd.f32 %v5120, 1e-05
  %v5128 = vadd.f32 %v5121, 1e-05
  %v5129 = vadd.f32 %v5122, 1e-05
  %v5130 = vadd.f32 %v5123, 1e-05
  %v5131 = vadd.f32 %v5124, 1e-05
  %v5132 = vrsqrt.pop %v5125
  %v5133 = vrsqrt.pop %v5126
  %v5134 = vrsqrt.pop %v5127
  %v5135 = vrsqrt.pop %v5128
  %v5136 = vrsqrt.pop %v5129
  %v5137 = vrsqrt.pop %v5130
  %v5138 = vrsqrt.pop %v5131
  %v5139 = vmul.f32 %v5083, %v5132
  %v5140 = vmul.f32 %v5084, %v5133
  %v5141 = vmul.f32 %v5085, %v5134
  %v5142 = vmul.f32 %v5086, %v5135
  %v5143 = vmul.f32 %v5087, %v5136
  %v5144 = vmul.f32 %v5088, %v5137
  %v5145 = vmul.f32 %v5089, %v5138
  %v5147 = vlaneseq
  %v5148 = vshrl.u32 %v5147, 7
  %v5149 = vsub.s32 0, %v5148
  %v5150 = vrot.slane %v5052, %v5149
  %v5152 = vmul.f32 %v5139, %v5150
  %v5153 = vmul.f32 %v5140, %v5150
  %v5154 = vmul.f32 %v5141, %v5150
  %v5155 = vmul.f32 %v5142, %v5150
  %v5156 = vmul.f32 %v5143, %v5150
  %v5157 = vmul.f32 %v5144, %v5150
  %v5158 = vmul.f32 %v5145, %v5150
  %v5160 = vlaneseq
  %v5161 = vshrl.u32 %v5160, 7
  %v5162 = vsub.s32 0, %v5161
  %v5163 = vrot.slane %v5053, %v5162
  %v5165 = vadd.f32 %v5152, %v5163
  %v5166 = vadd.f32 %v5153, %v5163
  %v5167 = vadd.f32 %v5154, %v5163
  %v5168 = vadd.f32 %v5155, %v5163
  %v5169 = vadd.f32 %v5156, %v5163
  %v5170 = vadd.f32 %v5157, %v5163
  %v5171 = vadd.f32 %v5158, %v5163
  %v5172 = vpack.c.bf16 %v5166, %v5165
  %v5173 = vpack.c.bf16 %v5168, %v5167
  %v5174 = vpack.c.bf16 %v5170, %v5169
  %v5175 = vpack.c.bf16 %v5171, %v5171
  %v5176 = vld [vmem:[%s4] sm:$0xff]
  %v5177 = vld [vmem:[%s4 + $0x8] sm:$0xff]
  %v5178 = vld [vmem:[%s4 + $0x10] sm:$0xff]
  %v5179 = vld [vmem:[%s4 + $0x18] sm:$0xff]
  %v5180 = vld [vmem:[%s4 + $0x20] sm:$0xff]
  %v5181 = vld [vmem:[%s4 + $0x28] sm:$0xff]
  %v5182 = vld [vmem:[%s4 + $0x30] sm:$0xff]
  %v5183 = vld [vmem:[%s4 + $0x38] sm:$0xff]
  %v5184 = vld [vmem:[%s4 + $0x40] sm:$0xff]
  %v5185 = vld [vmem:[%s4 + $0x48] sm:$0xff]
  %v5186 = vld [vmem:[%s4 + $0x50] sm:$0xff]
  %v5187 = vld [vmem:[%s4 + $0x58] sm:$0xff]
  %v5188 = vld [vmem:[%s4 + $0x60] sm:$0xff]
  %v5189 = vld [vmem:[%s4 + $0x68] sm:$0xff]
  %v5190 = vld [vmem:[%s4 + $0x70] sm:$0xff]
  %v5191 = vld [vmem:[%s4 + $0x78] sm:$0xff]
  %v5192 = vld [vmem:[%s4 + $0x80] sm:$0xff]
  %v5193 = vld [vmem:[%s4 + $0x88] sm:$0xff]
  %v5194 = vld [vmem:[%s4 + $0x90] sm:$0xff]
  %v5195 = vld [vmem:[%s4 + $0x98] sm:$0xff]
  %v5196 = vld [vmem:[%s4 + $0xa0] sm:$0xff]
  %v5197 = vld [vmem:[%s4 + $0xa8] sm:$0xff]
  %v5198 = vld [vmem:[%s4 + $0xb0] sm:$0xff]
  %v5199 = vld [vmem:[%s4 + $0xb8] sm:$0xff]
  %v5200 = vld [vmem:[%s4 + $0xc0] sm:$0xff]
  %v5201 = vld [vmem:[%s4 + $0xc8] sm:$0xff]
  %v5202 = vld [vmem:[%s4 + $0xd0] sm:$0xff]
  %v5203 = vld [vmem:[%s4 + $0xd8] sm:$0xff]
  %v5204 = vld [vmem:[%s4 + $0xe0] sm:$0xff]
  %v5205 = vld [vmem:[%s4 + $0xe8] sm:$0xff]
  %v5206 = vld [vmem:[%s4 + $0xf0] sm:$0xff]
  %v5207 = vld [vmem:[%s4 + $0xf8] sm:$0xff]
  %v5208 = vld [vmem:[%s6 + $0x2] sm:$0xff]
  %v5209 = vld [vmem:[%s6 + $0xa] sm:$0xff]
  %v5212 = vlaneseq
  %v5213 = vshrl.u32 %v5212, 7
  %v5214 = vsub.s32 0, %v5213
  %v5215 = vrot.slane %v5208, %v5214
  %v5216 = vlaneseq
  %v5217 = vshrl.u32 %v5216, 7
  %v5218 = vsub.s32 1, %v5217
  %v5219 = vrot.slane %v5208, %v5218
  %v5220 = vlaneseq
  %v5221 = vshrl.u32 %v5220, 7
  %v5222 = vsub.s32 2, %v5221
  %v5223 = vrot.slane %v5208, %v5222
  %v5224 = vlaneseq
  %v5225 = vshrl.u32 %v5224, 7
  %v5226 = vsub.s32 3, %v5225
  %v5227 = vrot.slane %v5208, %v5226
  %v5228 = vlaneseq
  %v5229 = vshrl.u32 %v5228, 7
  %v5230 = vsub.s32 4, %v5229
  %v5231 = vrot.slane %v5208, %v5230
  %v5232 = vlaneseq
  %v5233 = vshrl.u32 %v5232, 7
  %v5234 = vsub.s32 5, %v5233
  %v5235 = vrot.slane %v5208, %v5234
  %v5236 = vlaneseq
  %v5237 = vshrl.u32 %v5236, 7
  %v5238 = vsub.s32 6, %v5237
  %v5239 = vrot.slane %v5208, %v5238
  %v5240 = vlaneseq
  %v5241 = vshrl.u32 %v5240, 7
  %v5242 = vsub.s32 7, %v5241
  %v5243 = vrot.slane %v5208, %v5242
  %v5244 = vlaneseq
  %v5245 = vshrl.u32 %v5244, 7
  %v5246 = vsub.s32 0, %v5245
  %v5247 = vrot.slane %v5209, %v5246
  %v5248 = vlaneseq
  %v5249 = vshrl.u32 %v5248, 7
  %v5250 = vsub.s32 1, %v5249
  %v5251 = vrot.slane %v5209, %v5250
  %v5252 = vlaneseq
  %v5253 = vshrl.u32 %v5252, 7
  %v5254 = vsub.s32 2, %v5253
  %v5255 = vrot.slane %v5209, %v5254
  %v5256 = vlaneseq
  %v5257 = vshrl.u32 %v5256, 7
  %v5258 = vsub.s32 3, %v5257
  %v5259 = vrot.slane %v5209, %v5258
  %v5260 = vlaneseq
  %v5261 = vshrl.u32 %v5260, 7
  %v5262 = vsub.s32 4, %v5261
  %v5263 = vrot.slane %v5209, %v5262
  %v5264 = vlaneseq
  %v5265 = vshrl.u32 %v5264, 7
  %v5266 = vsub.s32 5, %v5265
  %v5267 = vrot.slane %v5209, %v5266
  %v5268 = vlaneseq
  %v5269 = vshrl.u32 %v5268, 7
  %v5270 = vsub.s32 6, %v5269
  %v5271 = vrot.slane %v5209, %v5270
  %v5272 = vlaneseq
  %v5273 = vshrl.u32 %v5272, 7
  %v5274 = vsub.s32 7, %v5273
  %v5275 = vrot.slane %v5209, %v5274
  %v5324 = vunpack.c.l.b16 %v5176
  %v5325 = vunpack.c.h.b16 %v5176
  %v5326 = vunpack.c.l.b16 %v5177
  %v5327 = vunpack.c.h.b16 %v5177
  %v5328 = vunpack.c.l.b16 %v5178
  %v5329 = vunpack.c.h.b16 %v5178
  %v5330 = vunpack.c.l.b16 %v5179
  %v5331 = vunpack.c.h.b16 %v5179
  %v5332 = vunpack.c.l.b16 %v5180
  %v5333 = vunpack.c.h.b16 %v5180
  %v5334 = vunpack.c.l.b16 %v5181
  %v5335 = vunpack.c.h.b16 %v5181
  %v5336 = vunpack.c.l.b16 %v5182
  %v5337 = vunpack.c.h.b16 %v5182
  %v5338 = vunpack.c.l.b16 %v5183
  %v5339 = vunpack.c.h.b16 %v5183
  %v5340 = vunpack.c.l.b16 %v5184
  %v5341 = vunpack.c.h.b16 %v5184
  %v5342 = vunpack.c.l.b16 %v5185
  %v5343 = vunpack.c.h.b16 %v5185
  %v5344 = vunpack.c.l.b16 %v5186
  %v5345 = vunpack.c.h.b16 %v5186
  %v5346 = vunpack.c.l.b16 %v5187
  %v5347 = vunpack.c.h.b16 %v5187
  %v5348 = vunpack.c.l.b16 %v5188
  %v5349 = vunpack.c.h.b16 %v5188
  %v5350 = vunpack.c.l.b16 %v5189
  %v5351 = vunpack.c.h.b16 %v5189
  %v5352 = vunpack.c.l.b16 %v5190
  %v5353 = vunpack.c.h.b16 %v5190
  %v5354 = vunpack.c.l.b16 %v5191
  %v5355 = vunpack.c.h.b16 %v5191
  %v5356 = vunpack.c.l.b16 %v5192
  %v5357 = vunpack.c.h.b16 %v5192
  %v5358 = vunpack.c.l.b16 %v5193
  %v5359 = vunpack.c.h.b16 %v5193
  %v5360 = vunpack.c.l.b16 %v5194
  %v5361 = vunpack.c.h.b16 %v5194
  %v5362 = vunpack.c.l.b16 %v5195
  %v5363 = vunpack.c.h.b16 %v5195
  %v5364 = vunpack.c.l.b16 %v5196
  %v5365 = vunpack.c.h.b16 %v5196
  %v5366 = vunpack.c.l.b16 %v5197
  %v5367 = vunpack.c.h.b16 %v5197
  %v5368 = vunpack.c.l.b16 %v5198
  %v5369 = vunpack.c.h.b16 %v5198
  %v5370 = vunpack.c.l.b16 %v5199
  %v5371 = vunpack.c.h.b16 %v5199
  %v5372 = vunpack.c.l.b16 %v5200
  %v5373 = vunpack.c.h.b16 %v5200
  %v5374 = vunpack.c.l.b16 %v5201
  %v5375 = vunpack.c.h.b16 %v5201
  %v5376 = vunpack.c.l.b16 %v5202
  %v5377 = vunpack.c.h.b16 %v5202
  %v5378 = vunpack.c.l.b16 %v5203
  %v5379 = vunpack.c.h.b16 %v5203
  %v5380 = vunpack.c.l.b16 %v5204
  %v5381 = vunpack.c.h.b16 %v5204
  %v5382 = vunpack.c.l.b16 %v5205
  %v5383 = vunpack.c.h.b16 %v5205
  %v5384 = vunpack.c.l.b16 %v5206
  %v5385 = vunpack.c.h.b16 %v5206
  %v5386 = vunpack.c.l.b16 %v5207
  %v5387 = vunpack.c.h.b16 %v5207
  %v5388 = vpack.c.b16 %v5340, %v5324
  %v5389 = vpack.c.b16 %v5341, %v5325
  %v5390 = vpack.c.b16 %v5342, %v5326
  %v5391 = vpack.c.b16 %v5343, %v5327
  %v5392 = vpack.c.b16 %v5344, %v5328
  %v5393 = vpack.c.b16 %v5345, %v5329
  %v5394 = vpack.c.b16 %v5346, %v5330
  %v5395 = vpack.c.b16 %v5347, %v5331
  %v5396 = vpack.c.b16 %v5348, %v5332
  %v5397 = vpack.c.b16 %v5349, %v5333
  %v5398 = vpack.c.b16 %v5350, %v5334
  %v5399 = vpack.c.b16 %v5351, %v5335
  %v5400 = vpack.c.b16 %v5352, %v5336
  %v5401 = vpack.c.b16 %v5353, %v5337
  %v5402 = vpack.c.b16 %v5354, %v5338
  %v5403 = vpack.c.b16 %v5355, %v5339
  %v5404 = vpack.c.b16 %v5372, %v5356
  %v5405 = vpack.c.b16 %v5373, %v5357
  %v5406 = vpack.c.b16 %v5374, %v5358
  %v5407 = vpack.c.b16 %v5375, %v5359
  %v5408 = vpack.c.b16 %v5376, %v5360
  %v5409 = vpack.c.b16 %v5377, %v5361
  %v5410 = vpack.c.b16 %v5378, %v5362
  %v5411 = vpack.c.b16 %v5379, %v5363
  %v5412 = vpack.c.b16 %v5380, %v5364
  %v5413 = vpack.c.b16 %v5381, %v5365
  %v5414 = vpack.c.b16 %v5382, %v5366
  %v5415 = vpack.c.b16 %v5383, %v5367
  %v5416 = vpack.c.b16 %v5384, %v5368
  %v5417 = vpack.c.b16 %v5385, %v5369
  %v5418 = vpack.c.b16 %v5386, %v5370
  %v5419 = vpack.c.b16 %v5387, %v5371
  %v5453 = vsel %vm88, %v5172, 0
  %v5456 = vsel %vm88, %v5173, 0
  %v5459 = vsel %vm88, %v5174, 0
  %v5462 = vsel %vm88, %v5175, 0
  %5464 = vmatprep.subr.bf16.mxu0 %v5389
  %5465 = vmatpush1.bf16.msra.mxu0 %v5388
  %5466 = vmatprep.subr.bf16.mxu0 %v5405
  %5467 = vmatpush1.bf16.msra.mxu0 %v5404
  %5468 = vmatprep.subr.bf16.mxu0 0
  %5469 = vmatpush1.bf16.msra.mxu0 0
  %5470 = vmatprep.subr.bf16.mxu0 0
  %5471 = vmatpush1.bf16.msra.mxu0 0
  %5472 = vmatprep.subr.bf16.mxu0 0
  %5473 = vmatpush1.bf16.msra.mxu0 0
  %5474 = vmatprep.subr.bf16.mxu0 0
  %5475 = vmatpush1.bf16.msra.mxu0 0
  %5476 = vmatprep.subr.bf16.mxu0 0
  %5477 = vmatpush1.bf16.msra.mxu0 0
  %5478 = vmatprep.subr.bf16.mxu0 0
  %5479 = vmatpush1.bf16.msra.mxu0 0
  %5480 = vmatprep.subr.bf16.mxu0 0
  %5481 = vmatpush1.bf16.msra.mxu0 0
  %5482 = vmatprep.subr.bf16.mxu0 0
  %5483 = vmatpush1.bf16.msra.mxu0 0
  %5484 = vmatprep.subr.bf16.mxu0 0
  %5485 = vmatpush1.bf16.msra.mxu0 0
  %5486 = vmatprep.subr.bf16.mxu0 0
  %5487 = vmatpush1.bf16.msra.mxu0 0
  %5488 = vmatprep.subr.bf16.mxu0 0
  %5489 = vmatpush1.bf16.msra.mxu0 0
  %5490 = vmatprep.subr.bf16.mxu0 0
  %5491 = vmatpush1.bf16.msra.mxu0 0
  %5492 = vmatprep.subr.bf16.mxu0 0
  %5493 = vmatpush1.bf16.msra.mxu0 0
  %5494 = vmatprep.subr.bf16.mxu0 0
  %5495 = vmatpush1.bf16.msra.mxu0 0
  %5496 = vmatprep.mubr.bf16.mxu0 0
  %5497 = vmatmul.mubr.bf16.gmra.mrb[0].mxu0 %v5453
  %v5498 = vpop.f32.mrb[0].mxu0
  %v5499 = vadd.f32 %v5215, %v5498
  %v5500 = vpop.f32.mrb[0].mxu0
  %v5501 = vadd.f32 %v5219, %v5500
  %v5502 = vpop.f32.mrb[0].mxu0
  %v5503 = vadd.f32 %v5215, %v5502
  %v5504 = vpop.f32.mrb[0].mxu0
  %v5505 = vadd.f32 %v5219, %v5504
  %5506 = vmatprep.mubr.bf16.mxu0 0
  %5507 = vmatmul.mubr.bf16.gmra.mrb[0].mxu0 %v5456
  %v5508 = vpop.f32.mrb[0].mxu0
  %v5509 = vadd.f32 %v5215, %v5508
  %v5510 = vpop.f32.mrb[0].mxu0
  %v5511 = vadd.f32 %v5219, %v5510
  %v5512 = vpop.f32.mrb[0].mxu0
  %v5513 = vadd.f32 %v5215, %v5512
  %v5514 = vpop.f32.mrb[0].mxu0
  %v5515 = vadd.f32 %v5219, %v5514
  %5516 = vmatprep.mubr.bf16.mxu0 0
  %5517 = vmatmul.mubr.bf16.gmra.mrb[0].mxu0 %v5459
  %v5518 = vpop.f32.mrb[0].mxu0
  %v5519 = vadd.f32 %v5215, %v5518
  %v5520 = vpop.f32.mrb[0].mxu0
  %v5521 = vadd.f32 %v5219, %v5520
  %v5522 = vpop.f32.mrb[0].mxu0
  %v5523 = vadd.f32 %v5215, %v5522
  %v5524 = vpop.f32.mrb[0].mxu0
  %v5525 = vadd.f32 %v5219, %v5524
  %5526 = vmatprep.mubr.bf16.mxu0 0
  %5527 = vmatmul.mubr.bf16.gmra.mrb[0].mxu0 %v5462
  %v5528 = vpop.f32.mrb[0].mxu0
  %v5529 = vadd.f32 %v5215, %v5528
  %v5530 = vpop.f32.mrb[0].mxu0
  %v5531 = vadd.f32 %v5219, %v5530
  %v5532 = vpop.f32.mrb[0].mxu0
  %v5533 = vpop.f32.mrb[0].mxu0
  %5534 = vdwg.mxu0
  %5535 = vmatprep.subr.bf16.mxu0 %v5391
  %5536 = vmatpush1.bf16.msra.mxu0 %v5390
  %5537 = vmatprep.subr.bf16.mxu0 %v5407
  %5538 = vmatpush1.bf16.msra.mxu0 %v5406
  %5539 = vmatprep.subr.bf16.mxu0 0
  %5540 = vmatpush1.bf16.msra.mxu0 0
  %5541 = vmatprep.subr.bf16.mxu0 0
  %5542 = vmatpush1.bf16.msra.mxu0 0
  %5543 = vmatprep.subr.bf16.mxu0 0
  %5544 = vmatpush1.bf16.msra.mxu0 0
  %5545 = vmatprep.subr.bf16.mxu0 0
  %5546 = vmatpush1.bf16.msra.mxu0 0
  %5547 = vmatprep.subr.bf16.mxu0 0
  %5548 = vmatpush1.bf16.msra.mxu0 0
  %5549 = vmatprep.subr.bf16.mxu0 0
  %5550 = vmatpush1.bf16.msra.mxu0 0
  %5551 = vmatprep.subr.bf16.mxu0 0
  %5552 = vmatpush1.bf16.msra.mxu0 0
  %5553 = vmatprep.subr.bf16.mxu0 0
  %5554 = vmatpush1.bf16.msra.mxu0 0
  %5555 = vmatprep.subr.bf16.mxu0 0
  %5556 = vmatpush1.bf16.msra.mxu0 0
  %5557 = vmatprep.subr.bf16.mxu0 0
  %5558 = vmatpush1.bf16.msra.mxu0 0
  %5559 = vmatprep.subr.bf16.mxu0 0
  %5560 = vmatpush1.bf16.msra.mxu0 0
  %5561 = vmatprep.subr.bf16.mxu0 0
  %5562 = vmatpush1.bf16.msra.mxu0 0
  %5563 = vmatprep.subr.bf16.mxu0 0
  %5564 = vmatpush1.bf16.msra.mxu0 0
  %5565 = vmatprep.subr.bf16.mxu0 0
  %5566 = vmatpush1.bf16.msra.mxu0 0
  %5567 = vmatprep.mubr.bf16.mxu0 0
  %5568 = vmatmul.mubr.bf16.gmra.mrb[0].mxu0 %v5453
  %v5569 = vpop.f32.mrb[0].mxu0
  %v5570 = vadd.f32 %v5223, %v5569
  %v5571 = vpop.f32.mrb[0].mxu0
  %v5572 = vadd.f32 %v5227, %v5571
  %v5573 = vpop.f32.mrb[0].mxu0
  %v5574 = vadd.f32 %v5223, %v5573
  %v5575 = vpop.f32.mrb[0].mxu0
  %v5576 = vadd.f32 %v5227, %v5575
  %5577 = vmatprep.mubr.bf16.mxu0 0
  %5578 = vmatmul.mubr.bf16.gmra.mrb[0].mxu0 %v5456
  %v5579 = vpop.f32.mrb[0].mxu0
  %v5580 = vadd.f32 %v5223, %v5579
  %v5581 = vpop.f32.mrb[0].mxu0
  %v5582 = vadd.f32 %v5227, %v5581
  %v5583 = vpop.f32.mrb[0].mxu0
  %v5584 = vadd.f32 %v5223, %v5583
  %v5585 = vpop.f32.mrb[0].mxu0
  %v5586 = vadd.f32 %v5227, %v5585
  %5587 = vmatprep.mubr.bf16.mxu0 0
  %5588 = vmatmul.mubr.bf16.gmra.mrb[0].mxu0 %v5459
  %v5589 = vpop.f32.mrb[0].mxu0
  %v5590 = vadd.f32 %v5223, %v5589
  %v5591 = vpop.f32.mrb[0].mxu0
  %v5592 = vadd.f32 %v5227, %v5591
  %v5593 = vpop.f32.mrb[0].mxu0
  %v5594 = vadd.f32 %v5223, %v5593
  %v5595 = vpop.f32.mrb[0].mxu0
  %v5596 = vadd.f32 %v5227, %v5595
  %5597 = vmatprep.mubr.bf16.mxu0 0
  %5598 = vmatmul.mubr.bf16.gmra.mrb[0].mxu0 %v5462
  %v5599 = vpop.f32.mrb[0].mxu0
  %v5600 = vadd.f32 %v5223, %v5599
  %v5601 = vpop.f32.mrb[0].mxu0
  %v5602 = vadd.f32 %v5227, %v5601
  %v5603 = vpop.f32.mrb[0].mxu0
  %v5604 = vpop.f32.mrb[0].mxu0
  %5605 = vdwg.mxu0
  %5606 = vmatprep.subr.bf16.mxu0 %v5393
  %5607 = vmatpush1.bf16.msra.mxu0 %v5392
  %5608 = vmatprep.subr.bf16.mxu0 %v5409
  %5609 = vmatpush1.bf16.msra.mxu0 %v5408
  %5610 = vmatprep.subr.bf16.mxu0 0
  %5611 = vmatpush1.bf16.msra.mxu0 0
  %5612 = vmatprep.subr.bf16.mxu0 0
  %5613 = vmatpush1.bf16.msra.mxu0 0
  %5614 = vmatprep.subr.bf16.mxu0 0
  %5615 = vmatpush1.bf16.msra.mxu0 0
  %5616 = vmatprep.subr.bf16.mxu0 0
  %5617 = vmatpush1.bf16.msra.mxu0 0
  %5618 = vmatprep.subr.bf16.mxu0 0
  %5619 = vmatpush1.bf16.msra.mxu0 0
  %5620 = vmatprep.subr.bf16.mxu0 0
  %5621 = vmatpush1.bf16.msra.mxu0 0
  %5622 = vmatprep.subr.bf16.mxu0 0
  %5623 = vmatpush1.bf16.msra.mxu0 0
  %5624 = vmatprep.subr.bf16.mxu0 0
  %5625 = vmatpush1.bf16.msra.mxu0 0
  %5626 = vmatprep.subr.bf16.mxu0 0
  %5627 = vmatpush1.bf16.msra.mxu0 0
  %5628 = vmatprep.subr.bf16.mxu0 0
  %5629 = vmatpush1.bf16.msra.mxu0 0
  %5630 = vmatprep.subr.bf16.mxu0 0
  %5631 = vmatpush1.bf16.msra.mxu0 0
  %5632 = vmatprep.subr.bf16.mxu0 0
  %5633 = vmatpush1.bf16.msra.mxu0 0
  %5634 = vmatprep.subr.bf16.mxu0 0
  %5635 = vmatpush1.bf16.msra.mxu0 0
  %5636 = vmatprep.subr.bf16.mxu0 0
  %5637 = vmatpush1.bf16.msra.mxu0 0
  %5638 = vmatprep.mubr.bf16.mxu0 0
  %5639 = vmatmul.mubr.bf16.gmra.mrb[0].mxu0 %v5453
  %v5640 = vpop.f32.mrb[0].mxu0
  %v5641 = vadd.f32 %v5231, %v5640
  %v5642 = vpop.f32.mrb[0].mxu0
  %v5643 = vadd.f32 %v5235, %v5642
  %v5644 = vpop.f32.mrb[0].mxu0
  %v5645 = vadd.f32 %v5231, %v5644
  %v5646 = vpop.f32.mrb[0].mxu0
  %v5647 = vadd.f32 %v5235, %v5646
  %5648 = vmatprep.mubr.bf16.mxu0 0
  %5649 = vmatmul.mubr.bf16.gmra.mrb[0].mxu0 %v5456
  %v5650 = vpop.f32.mrb[0].mxu0
  %v5651 = vadd.f32 %v5231, %v5650
  %v5652 = vpop.f32.mrb[0].mxu0
  %v5653 = vadd.f32 %v5235, %v5652
  %v5654 = vpop.f32.mrb[0].mxu0
  %v5655 = vadd.f32 %v5231, %v5654
  %v5656 = vpop.f32.mrb[0].mxu0
  %v5657 = vadd.f32 %v5235, %v5656
  %5658 = vmatprep.mubr.bf16.mxu0 0
  %5659 = vmatmul.mubr.bf16.gmra.mrb[0].mxu0 %v5459
  %v5660 = vpop.f32.mrb[0].mxu0
  %v5661 = vadd.f32 %v5231, %v5660
  %v5662 = vpop.f32.mrb[0].mxu0
  %v5663 = vadd.f32 %v5235, %v5662
  %v5664 = vpop.f32.mrb[0].mxu0
  %v5665 = vadd.f32 %v5231, %v5664
  %v5666 = vpop.f32.mrb[0].mxu0
  %v5667 = vadd.f32 %v5235, %v5666
  %5668 = vmatprep.mubr.bf16.mxu0 0
  %5669 = vmatmul.mubr.bf16.gmra.mrb[0].mxu0 %v5462
  %v5670 = vpop.f32.mrb[0].mxu0
  %v5671 = vadd.f32 %v5231, %v5670
  %v5672 = vpop.f32.mrb[0].mxu0
  %v5673 = vadd.f32 %v5235, %v5672
  %v5674 = vpop.f32.mrb[0].mxu0
  %v5675 = vpop.f32.mrb[0].mxu0
  %5676 = vdwg.mxu0
  %5677 = vmatprep.subr.bf16.mxu0 %v5395
  %5678 = vmatpush1.bf16.msra.mxu0 %v5394
  %5679 = vmatprep.subr.bf16.mxu0 %v5411
  %5680 = vmatpush1.bf16.msra.mxu0 %v5410
  %5681 = vmatprep.subr.bf16.mxu0 0
  %5682 = vmatpush1.bf16.msra.mxu0 0
  %5683 = vmatprep.subr.bf16.mxu0 0
  %5684 = vmatpush1.bf16.msra.mxu0 0
  %5685 = vmatprep.subr.bf16.mxu0 0
  %5686 = vmatpush1.bf16.msra.mxu0 0
  %5687 = vmatprep.subr.bf16.mxu0 0
  %5688 = vmatpush1.bf16.msra.mxu0 0
  %5689 = vmatprep.subr.bf16.mxu0 0
  %5690 = vmatpush1.bf16.msra.mxu0 0
  %5691 = vmatprep.subr.bf16.mxu0 0
  %5692 = vmatpush1.bf16.msra.mxu0 0
  %5693 = vmatprep.subr.bf16.mxu0 0
  %5694 = vmatpush1.bf16.msra.mxu0 0
  %5695 = vmatprep.subr.bf16.mxu0 0
  %5696 = vmatpush1.bf16.msra.mxu0 0
  %5697 = vmatprep.subr.bf16.mxu0 0
  %5698 = vmatpush1.bf16.msra.mxu0 0
  %5699 = vmatprep.subr.bf16.mxu0 0
  %5700 = vmatpush1.bf16.msra.mxu0 0
  %5701 = vmatprep.subr.bf16.mxu0 0
  %5702 = vmatpush1.bf16.msra.mxu0 0
  %5703 = vmatprep.subr.bf16.mxu0 0
  %5704 = vmatpush1.bf16.msra.mxu0 0
  %5705 = vmatprep.subr.bf16.mxu0 0
  %5706 = vmatpush1.bf16.msra.mxu0 0
  %5707 = vmatprep.subr.bf16.mxu0 0
  %5708 = vmatpush1.bf16.msra.mxu0 0
  %5709 = vmatprep.mubr.bf16.mxu0 0
  %5710 = vmatmul.mubr.bf16.gmra.mrb[0].mxu0 %v5453
  %v5711 = vpop.f32.mrb[0].mxu0
  %v5712 = vadd.f32 %v5239, %v5711
  %v5713 = vpop.f32.mrb[0].mxu0
  %v5714 = vadd.f32 %v5243, %v5713
  %v5715 = vpop.f32.mrb[0].mxu0
  %v5716 = vadd.f32 %v5239, %v5715
  %v5717 = vpop.f32.mrb[0].mxu0
  %v5718 = vadd.f32 %v5243, %v5717
  %5719 = vmatprep.mubr.bf16.mxu0 0
  %5720 = vmatmul.mubr.bf16.gmra.mrb[0].mxu0 %v5456
  %v5721 = vpop.f32.mrb[0].mxu0
  %v5722 = vadd.f32 %v5239, %v5721
  %v5723 = vpop.f32.mrb[0].mxu0
  %v5724 = vadd.f32 %v5243, %v5723
  %v5725 = vpop.f32.mrb[0].mxu0
  %v5726 = vadd.f32 %v5239, %v5725
  %v5727 = vpop.f32.mrb[0].mxu0
  %v5728 = vadd.f32 %v5243, %v5727
  %5729 = vmatprep.mubr.bf16.mxu0 0
  %5730 = vmatmul.mubr.bf16.gmra.mrb[0].mxu0 %v5459
  %v5731 = vpop.f32.mrb[0].mxu0
  %v5732 = vadd.f32 %v5239, %v5731
  %v5733 = vpop.f32.mrb[0].mxu0
  %v5734 = vadd.f32 %v5243, %v5733
  %v5735 = vpop.f32.mrb[0].mxu0
  %v5736 = vadd.f32 %v5239, %v5735
  %v5737 = vpop.f32.mrb[0].mxu0
  %v5738 = vadd.f32 %v5243, %v5737
  %5739 = vmatprep.mubr.bf16.mxu0 0
  %5740 = vmatmul.mubr.bf16.gmra.mrb[0].mxu0 %v5462
  %v5741 = vpop.f32.mrb[0].mxu0
  %v5742 = vadd.f32 %v5239, %v5741
  %v5743 = vpop.f32.mrb[0].mxu0
  %v5744 = vadd.f32 %v5243, %v5743
  %v5745 = vpop.f32.mrb[0].mxu0
  %v5746 = vpop.f32.mrb[0].mxu0
  %5747 = vdwg.mxu0
  %5748 = vmatprep.subr.bf16.mxu0 %v5397
  %5749 = vmatpush1.bf16.msra.mxu0 %v5396
  %5750 = vmatprep.subr.bf16.mxu0 %v5413
  %5751 = vmatpush1.bf16.msra.mxu0 %v5412
  %5752 = vmatprep.subr.bf16.mxu0 0
  %5753 = vmatpush1.bf16.msra.mxu0 0
  %5754 = vmatprep.subr.bf16.mxu0 0
  %5755 = vmatpush1.bf16.msra.mxu0 0
  %5756 = vmatprep.subr.bf16.mxu0 0
  %5757 = vmatpush1.bf16.msra.mxu0 0
  %5758 = vmatprep.subr.bf16.mxu0 0
  %5759 = vmatpush1.bf16.msra.mxu0 0
  %5760 = vmatprep.subr.bf16.mxu0 0
  %5761 = vmatpush1.bf16.msra.mxu0 0
  %5762 = vmatprep.subr.bf16.mxu0 0
  %5763 = vmatpush1.bf16.msra.mxu0 0
  %5764 = vmatprep.subr.bf16.mxu0 0
  %5765 = vmatpush1.bf16.msra.mxu0 0
  %5766 = vmatprep.subr.bf16.mxu0 0
  %5767 = vmatpush1.bf16.msra.mxu0 0
  %5768 = vmatprep.subr.bf16.mxu0 0
  %5769 = vmatpush1.bf16.msra.mxu0 0
  %5770 = vmatprep.subr.bf16.mxu0 0
  %5771 = vmatpush1.bf16.msra.mxu0 0
  %5772 = vmatprep.subr.bf16.mxu0 0
  %5773 = vmatpush1.bf16.msra.mxu0 0
  %5774 = vmatprep.subr.bf16.mxu0 0
  %5775 = vmatpush1.bf16.msra.mxu0 0
  %5776 = vmatprep.subr.bf16.mxu0 0
  %5777 = vmatpush1.bf16.msra.mxu0 0
  %5778 = vmatprep.subr.bf16.mxu0 0
  %5779 = vmatpush1.bf16.msra.mxu0 0
  %5780 = vmatprep.mubr.bf16.mxu0 0
  %5781 = vmatmul.mubr.bf16.gmra.mrb[0].mxu0 %v5453
  %v5782 = vpop.f32.mrb[0].mxu0
  %v5783 = vadd.f32 %v5247, %v5782
  %v5784 = vpop.f32.mrb[0].mxu0
  %v5785 = vadd.f32 %v5251, %v5784
  %v5786 = vpop.f32.mrb[0].mxu0
  %v5787 = vadd.f32 %v5247, %v5786
  %v5788 = vpop.f32.mrb[0].mxu0
  %v5789 = vadd.f32 %v5251, %v5788
  %5790 = vmatprep.mubr.bf16.mxu0 0
  %5791 = vmatmul.mubr.bf16.gmra.mrb[0].mxu0 %v5456
  %v5792 = vpop.f32.mrb[0].mxu0
  %v5793 = vadd.f32 %v5247, %v5792
  %v5794 = vpop.f32.mrb[0].mxu0
  %v5795 = vadd.f32 %v5251, %v5794
  %v5796 = vpop.f32.mrb[0].mxu0
  %v5797 = vadd.f32 %v5247, %v5796
  %v5798 = vpop.f32.mrb[0].mxu0
  %v5799 = vadd.f32 %v5251, %v5798
  %5800 = vmatprep.mubr.bf16.mxu0 0
  %5801 = vmatmul.mubr.bf16.gmra.mrb[0].mxu0 %v5459
  %v5802 = vpop.f32.mrb[0].mxu0
  %v5803 = vadd.f32 %v5247, %v5802
  %v5804 = vpop.f32.mrb[0].mxu0
  %v5805 = vadd.f32 %v5251, %v5804
  %v5806 = vpop.f32.mrb[0].mxu0
  %v5807 = vadd.f32 %v5247, %v5806
  %v5808 = vpop.f32.mrb[0].mxu0
  %v5809 = vadd.f32 %v5251, %v5808
  %5810 = vmatprep.mubr.bf16.mxu0 0
  %5811 = vmatmul.mubr.bf16.gmra.mrb[0].mxu0 %v5462
  %v5812 = vpop.f32.mrb[0].mxu0
  %v5813 = vadd.f32 %v5247, %v5812
  %v5814 = vpop.f32.mrb[0].mxu0
  %v5815 = vadd.f32 %v5251, %v5814
  %v5816 = vpop.f32.mrb[0].mxu0
  %v5817 = vpop.f32.mrb[0].mxu0
  %5818 = vdwg.mxu0
  %5819 = vmatprep.subr.bf16.mxu0 %v5399
  %5820 = vmatpush1.bf16.msra.mxu0 %v5398
  %5821 = vmatprep.subr.bf16.mxu0 %v5415
  %5822 = vmatpush1.bf16.msra.mxu0 %v5414
  %5823 = vmatprep.subr.bf16.mxu0 0
  %5824 = vmatpush1.bf16.msra.mxu0 0
  %5825 = vmatprep.subr.bf16.mxu0 0
  %5826 = vmatpush1.bf16.msra.mxu0 0
  %5827 = vmatprep.subr.bf16.mxu0 0
  %5828 = vmatpush1.bf16.msra.mxu0 0
  %5829 = vmatprep.subr.bf16.mxu0 0
  %5830 = vmatpush1.bf16.msra.mxu0 0
  %5831 = vmatprep.subr.bf16.mxu0 0
  %5832 = vmatpush1.bf16.msra.mxu0 0
  %5833 = vmatprep.subr.bf16.mxu0 0
  %5834 = vmatpush1.bf16.msra.mxu0 0
  %5835 = vmatprep.subr.bf16.mxu0 0
  %5836 = vmatpush1.bf16.msra.mxu0 0
  %5837 = vmatprep.subr.bf16.mxu0 0
  %5838 = vmatpush1.bf16.msra.mxu0 0
  %5839 = vmatprep.subr.bf16.mxu0 0
  %5840 = vmatpush1.bf16.msra.mxu0 0
  %5841 = vmatprep.subr.bf16.mxu0 0
  %5842 = vmatpush1.bf16.msra.mxu0 0
  %5843 = vmatprep.subr.bf16.mxu0 0
  %5844 = vmatpush1.bf16.msra.mxu0 0
  %5845 = vmatprep.subr.bf16.mxu0 0
  %5846 = vmatpush1.bf16.msra.mxu0 0
  %5847 = vmatprep.subr.bf16.mxu0 0
  %5848 = vmatpush1.bf16.msra.mxu0 0
  %5849 = vmatprep.subr.bf16.mxu0 0
  %5850 = vmatpush1.bf16.msra.mxu0 0
  %5851 = vmatprep.mubr.bf16.mxu0 0
  %5852 = vmatmul.mubr.bf16.gmra.mrb[0].mxu0 %v5453
  %v5853 = vpop.f32.mrb[0].mxu0
  %v5854 = vadd.f32 %v5255, %v5853
  %v5855 = vpop.f32.mrb[0].mxu0
  %v5856 = vadd.f32 %v5259, %v5855
  %v5857 = vpop.f32.mrb[0].mxu0
  %v5858 = vadd.f32 %v5255, %v5857
  %v5859 = vpop.f32.mrb[0].mxu0
  %v5860 = vadd.f32 %v5259, %v5859
  %5861 = vmatprep.mubr.bf16.mxu0 0
  %5862 = vmatmul.mubr.bf16.gmra.mrb[0].mxu0 %v5456
  %v5863 = vpop.f32.mrb[0].mxu0
  %v5864 = vadd.f32 %v5255, %v5863
  %v5865 = vpop.f32.mrb[0].mxu0
  %v5866 = vadd.f32 %v5259, %v5865
  %v5867 = vpop.f32.mrb[0].mxu0
  %v5868 = vadd.f32 %v5255, %v5867
  %v5869 = vpop.f32.mrb[0].mxu0
  %v5870 = vadd.f32 %v5259, %v5869
  %5871 = vmatprep.mubr.bf16.mxu0 0
  %5872 = vmatmul.mubr.bf16.gmra.mrb[0].mxu0 %v5459
  %v5873 = vpop.f32.mrb[0].mxu0
  %v5874 = vadd.f32 %v5255, %v5873
  %v5875 = vpop.f32.mrb[0].mxu0
  %v5876 = vadd.f32 %v5259, %v5875
  %v5877 = vpop.f32.mrb[0].mxu0
  %v5878 = vadd.f32 %v5255, %v5877
  %v5879 = vpop.f32.mrb[0].mxu0
  %v5880 = vadd.f32 %v5259, %v5879
  %5881 = vmatprep.mubr.bf16.mxu0 0
  %5882 = vmatmul.mubr.bf16.gmra.mrb[0].mxu0 %v5462
  %v5883 = vpop.f32.mrb[0].mxu0
  %v5884 = vadd.f32 %v5255, %v5883
  %v5885 = vpop.f32.mrb[0].mxu0
  %v5886 = vadd.f32 %v5259, %v5885
  %v5887 = vpop.f32.mrb[0].mxu0
  %v5888 = vpop.f32.mrb[0].mxu0
  %5889 = vdwg.mxu0
  %5890 = vmatprep.subr.bf16.mxu0 %v5401
  %5891 = vmatpush1.bf16.msra.mxu0 %v5400
  %5892 = vmatprep.subr.bf16.mxu0 %v5417
  %5893 = vmatpush1.bf16.msra.mxu0 %v5416
  %5894 = vmatprep.subr.bf16.mxu0 0
  %5895 = vmatpush1.bf16.msra.mxu0 0
  %5896 = vmatprep.subr.bf16.mxu0 0
  %5897 = vmatpush1.bf16.msra.mxu0 0
  %5898 = vmatprep.subr.bf16.mxu0 0
  %5899 = vmatpush1.bf16.msra.mxu0 0
  %5900 = vmatprep.subr.bf16.mxu0 0
  %5901 = vmatpush1.bf16.msra.mxu0 0
  %5902 = vmatprep.subr.bf16.mxu0 0
  %5903 = vmatpush1.bf16.msra.mxu0 0
  %5904 = vmatprep.subr.bf16.mxu0 0
  %5905 = vmatpush1.bf16.msra.mxu0 0
  %5906 = vmatprep.subr.bf16.mxu0 0
  %5907 = vmatpush1.bf16.msra.mxu0 0
  %5908 = vmatprep.subr.bf16.mxu0 0
  %5909 = vmatpush1.bf16.msra.mxu0 0
  %5910 = vmatprep.subr.bf16.mxu0 0
  %5911 = vmatpush1.bf16.msra.mxu0 0
  %5912 = vmatprep.subr.bf16.mxu0 0
  %5913 = vmatpush1.bf16.msra.mxu0 0
  %5914 = vmatprep.subr.bf16.mxu0 0
  %5915 = vmatpush1.bf16.msra.mxu0 0
  %5916 = vmatprep.subr.bf16.mxu0 0
  %5917 = vmatpush1.bf16.msra.mxu0 0
  %5918 = vmatprep.subr.bf16.mxu0 0
  %5919 = vmatpush1.bf16.msra.mxu0 0
  %5920 = vmatprep.subr.bf16.mxu0 0
  %5921 = vmatpush1.bf16.msra.mxu0 0
  %5922 = vmatprep.mubr.bf16.mxu0 0
  %5923 = vmatmul.mubr.bf16.gmra.mrb[0].mxu0 %v5453
  %v5924 = vpop.f32.mrb[0].mxu0
  %v5925 = vadd.f32 %v5263, %v5924
  %v5926 = vpop.f32.mrb[0].mxu0
  %v5927 = vadd.f32 %v5267, %v5926
  %v5928 = vpop.f32.mrb[0].mxu0
  %v5929 = vadd.f32 %v5263, %v5928
  %v5930 = vpop.f32.mrb[0].mxu0
  %v5931 = vadd.f32 %v5267, %v5930
  %5932 = vmatprep.mubr.bf16.mxu0 0
  %5933 = vmatmul.mubr.bf16.gmra.mrb[0].mxu0 %v5456
  %v5934 = vpop.f32.mrb[0].mxu0
  %v5935 = vadd.f32 %v5263, %v5934
  %v5936 = vpop.f32.mrb[0].mxu0
  %v5937 = vadd.f32 %v5267, %v5936
  %v5938 = vpop.f32.mrb[0].mxu0
  %v5939 = vadd.f32 %v5263, %v5938
  %v5940 = vpop.f32.mrb[0].mxu0
  %v5941 = vadd.f32 %v5267, %v5940
  %5942 = vmatprep.mubr.bf16.mxu0 0
  %5943 = vmatmul.mubr.bf16.gmra.mrb[0].mxu0 %v5459
  %v5944 = vpop.f32.mrb[0].mxu0
  %v5945 = vadd.f32 %v5263, %v5944
  %v5946 = vpop.f32.mrb[0].mxu0
  %v5947 = vadd.f32 %v5267, %v5946
  %v5948 = vpop.f32.mrb[0].mxu0
  %v5949 = vadd.f32 %v5263, %v5948
  %v5950 = vpop.f32.mrb[0].mxu0
  %v5951 = vadd.f32 %v5267, %v5950
  %5952 = vmatprep.mubr.bf16.mxu0 0
  %5953 = vmatmul.mubr.bf16.gmra.mrb[0].mxu0 %v5462
  %v5954 = vpop.f32.mrb[0].mxu0
  %v5955 = vadd.f32 %v5263, %v5954
  %v5956 = vpop.f32.mrb[0].mxu0
  %v5957 = vadd.f32 %v5267, %v5956
  %v5958 = vpop.f32.mrb[0].mxu0
  %v5959 = vpop.f32.mrb[0].mxu0
  %5960 = vdwg.mxu0
  %5961 = vmatprep.subr.bf16.mxu0 %v5403
  %5962 = vmatpush1.bf16.msra.mxu0 %v5402
  %5963 = vmatprep.subr.bf16.mxu0 %v5419
  %5964 = vmatpush1.bf16.msra.mxu0 %v5418
  %5965 = vmatprep.subr.bf16.mxu0 0
  %5966 = vmatpush1.bf16.msra.mxu0 0
  %5967 = vmatprep.subr.bf16.mxu0 0
  %5968 = vmatpush1.bf16.msra.mxu0 0
  %5969 = vmatprep.subr.bf16.mxu0 0
  %5970 = vmatpush1.bf16.msra.mxu0 0
  %5971 = vmatprep.subr.bf16.mxu0 0
  %5972 = vmatpush1.bf16.msra.mxu0 0
  %5973 = vmatprep.subr.bf16.mxu0 0
  %5974 = vmatpush1.bf16.msra.mxu0 0
  %5975 = vmatprep.subr.bf16.mxu0 0
  %5976 = vmatpush1.bf16.msra.mxu0 0
  %5977 = vmatprep.subr.bf16.mxu0 0
  %5978 = vmatpush1.bf16.msra.mxu0 0
  %5979 = vmatprep.subr.bf16.mxu0 0
  %5980 = vmatpush1.bf16.msra.mxu0 0
  %5981 = vmatprep.subr.bf16.mxu0 0
  %5982 = vmatpush1.bf16.msra.mxu0 0
  %5983 = vmatprep.subr.bf16.mxu0 0
  %5984 = vmatpush1.bf16.msra.mxu0 0
  %5985 = vmatprep.subr.bf16.mxu0 0
  %5986 = vmatpush1.bf16.msra.mxu0 0
  %5987 = vmatprep.subr.bf16.mxu0 0
  %5988 = vmatpush1.bf16.msra.mxu0 0
  %5989 = vmatprep.subr.bf16.mxu0 0
  %5990 = vmatpush1.bf16.msra.mxu0 0
  %5991 = vmatprep.subr.bf16.mxu0 0
  %5992 = vmatpush1.bf16.msra.mxu0 0
  %5993 = vmatprep.mubr.bf16.mxu0 0
  %5994 = vmatmul.mubr.bf16.gmra.mrb[0].mxu0 %v5453
  %v5995 = vpop.f32.mrb[0].mxu0
  %v5996 = vadd.f32 %v5271, %v5995
  %v5997 = vpop.f32.mrb[0].mxu0
  %v5998 = vadd.f32 %v5275, %v5997
  %v5999 = vpop.f32.mrb[0].mxu0
  %v6000 = vadd.f32 %v5271, %v5999
  %v6001 = vpop.f32.mrb[0].mxu0
  %v6002 = vadd.f32 %v5275, %v6001
  %6003 = vmatprep.mubr.bf16.mxu0 0
  %6004 = vmatmul.mubr.bf16.gmra.mrb[0].mxu0 %v5456
  %v6005 = vpop.f32.mrb[0].mxu0
  %v6006 = vadd.f32 %v5271, %v6005
  %v6007 = vpop.f32.mrb[0].mxu0
  %v6008 = vadd.f32 %v5275, %v6007
  %v6009 = vpop.f32.mrb[0].mxu0
  %v6010 = vadd.f32 %v5271, %v6009
  %v6011 = vpop.f32.mrb[0].mxu0
  %v6012 = vadd.f32 %v5275, %v6011
  %6013 = vmatprep.mubr.bf16.mxu0 0
  %6014 = vmatmul.mubr.bf16.gmra.mrb[0].mxu0 %v5459
  %v6015 = vpop.f32.mrb[0].mxu0
  %v6016 = vadd.f32 %v5271, %v6015
  %v6017 = vpop.f32.mrb[0].mxu0
  %v6018 = vadd.f32 %v5275, %v6017
  %v6019 = vpop.f32.mrb[0].mxu0
  %v6020 = vadd.f32 %v5271, %v6019
  %v6021 = vpop.f32.mrb[0].mxu0
  %v6022 = vadd.f32 %v5275, %v6021
  %6023 = vmatprep.mubr.bf16.mxu0 0
  %6024 = vmatmul.mubr.bf16.gmra.mrb[0].mxu0 %v5462
  %v6025 = vpop.f32.mrb[0].mxu0
  %v6026 = vadd.f32 %v5271, %v6025
  %v6027 = vpop.f32.mrb[0].mxu0
  %v6028 = vadd.f32 %v5275, %v6027
  %v6029 = vpop.f32.mrb[0].mxu0
  %v6030 = vpop.f32.mrb[0].mxu0
  %6031 = vdwg.mxu0
  %v6032 = vmax.f32 %v5499, 0.0
  %v6033 = vmax.f32 %v5501, 0.0
  %v6034 = vmax.f32 %v5570, 0.0
  %v6035 = vmax.f32 %v5572, 0.0
  %v6036 = vmax.f32 %v5641, 0.0
  %v6037 = vmax.f32 %v5643, 0.0
  %v6038 = vmax.f32 %v5712, 0.0
  %v6039 = vmax.f32 %v5714, 0.0
  %v6040 = vmax.f32 %v5783, 0.0
  %v6041 = vmax.f32 %v5785, 0.0
  %v6042 = vmax.f32 %v5854, 0.0
  %v6043 = vmax.f32 %v5856, 0.0
  %v6044 = vmax.f32 %v5925, 0.0
  %v6045 = vmax.f32 %v5927, 0.0
  %v6046 = vmax.f32 %v5996, 0.0
  %v6047 = vmax.f32 %v5998, 0.0
  %v6048 = vmax.f32 %v5503, 0.0
  %v6049 = vmax.f32 %v5505, 0.0
  %v6050 = vmax.f32 %v5574, 0.0
  %v6051 = vmax.f32 %v5576, 0.0
  %v6052 = vmax.f32 %v5645, 0.0
  %v6053 = vmax.f32 %v5647, 0.0
  %v6054 = vmax.f32 %v5716, 0.0
  %v6055 = vmax.f32 %v5718, 0.0
  %v6056 = vmax.f32 %v5787, 0.0
  %v6057 = vmax.f32 %v5789, 0.0
  %v6058 = vmax.f32 %v5858, 0.0
  %v6059 = vmax.f32 %v5860, 0.0
  %v6060 = vmax.f32 %v5929, 0.0
  %v6061 = vmax.f32 %v5931, 0.0
  %v6062 = vmax.f32 %v6000, 0.0
  %v6063 = vmax.f32 %v6002, 0.0
  %v6064 = vmax.f32 %v5509, 0.0
  %v6065 = vmax.f32 %v5511, 0.0
  %v6066 = vmax.f32 %v5580, 0.0
  %v6067 = vmax.f32 %v5582, 0.0
  %v6068 = vmax.f32 %v5651, 0.0
  %v6069 = vmax.f32 %v5653, 0.0
  %v6070 = vmax.f32 %v5722, 0.0
  %v6071 = vmax.f32 %v5724, 0.0
  %v6072 = vmax.f32 %v5793, 0.0
  %v6073 = vmax.f32 %v5795, 0.0
  %v6074 = vmax.f32 %v5864, 0.0
  %v6075 = vmax.f32 %v5866, 0.0
  %v6076 = vmax.f32 %v5935, 0.0
  %v6077 = vmax.f32 %v5937, 0.0
  %v6078 = vmax.f32 %v6006, 0.0
  %v6079 = vmax.f32 %v6008, 0.0
  %v6080 = vmax.f32 %v5513, 0.0
  %v6081 = vmax.f32 %v5515, 0.0
  %v6082 = vmax.f32 %v5584, 0.0
  %v6083 = vmax.f32 %v5586, 0.0
  %v6084 = vmax.f32 %v5655, 0.0
  %v6085 = vmax.f32 %v5657, 0.0
  %v6086 = vmax.f32 %v5726, 0.0
  %v6087 = vmax.f32 %v5728, 0.0
  %v6088 = vmax.f32 %v5797, 0.0
  %v6089 = vmax.f32 %v5799, 0.0
  %v6090 = vmax.f32 %v5868, 0.0
  %v6091 = vmax.f32 %v5870, 0.0
  %v6092 = vmax.f32 %v5939, 0.0
  %v6093 = vmax.f32 %v5941, 0.0
  %v6094 = vmax.f32 %v6010, 0.0
  %v6095 = vmax.f32 %v6012, 0.0
  %v6096 = vmax.f32 %v5519, 0.0
  %v6097 = vmax.f32 %v5521, 0.0
  %v6098 = vmax.f32 %v5590, 0.0
  %v6099 = vmax.f32 %v5592, 0.0
  %v6100 = vmax.f32 %v5661, 0.0
  %v6101 = vmax.f32 %v5663, 0.0
  %v6102 = vmax.f32 %v5732, 0.0
  %v6103 = vmax.f32 %v5734, 0.0
  %v6104 = vmax.f32 %v5803, 0.0
  %v6105 = vmax.f32 %v5805, 0.0
  %v6106 = vmax.f32 %v5874, 0.0
  %v6107 = vmax.f32 %v5876, 0.0
  %v6108 = vmax.f32 %v5945, 0.0
  %v6109 = vmax.f32 %v5947, 0.0
  %v6110 = vmax.f32 %v6016, 0.0
  %v6111 = vmax.f32 %v6018, 0.0
  %v6112 = vmax.f32 %v5523, 0.0
  %v6113 = vmax.f32 %v5525, 0.0
  %v6114 = vmax.f32 %v5594, 0.0
  %v6115 = vmax.f32 %v5596, 0.0
  %v6116 = vmax.f32 %v5665, 0.0
  %v6117 = vmax.f32 %v5667, 0.0
  %v6118 = vmax.f32 %v5736, 0.0
  %v6119 = vmax.f32 %v5738, 0.0
  %v6120 = vmax.f32 %v5807, 0.0
  %v6121 = vmax.f32 %v5809, 0.0
  %v6122 = vmax.f32 %v5878, 0.0
  %v6123 = vmax.f32 %v5880, 0.0
  %v6124 = vmax.f32 %v5949, 0.0
  %v6125 = vmax.f32 %v5951, 0.0
  %v6126 = vmax.f32 %v6020, 0.0
  %v6127 = vmax.f32 %v6022, 0.0
  %v6128 = vmax.f32 %v5529, 0.0
  %v6129 = vmax.f32 %v5531, 0.0
  %v6130 = vmax.f32 %v5600, 0.0
  %v6131 = vmax.f32 %v5602, 0.0
  %v6132 = vmax.f32 %v5671, 0.0
  %v6133 = vmax.f32 %v5673, 0.0
  %v6134 = vmax.f32 %v5742, 0.0
  %v6135 = vmax.f32 %v5744, 0.0
  %v6136 = vmax.f32 %v5813, 0.0
  %v6137 = vmax.f32 %v5815, 0.0
  %v6138 = vmax.f32 %v5884, 0.0
  %v6139 = vmax.f32 %v5886, 0.0
  %v6140 = vmax.f32 %v5955, 0.0
  %v6141 = vmax.f32 %v5957, 0.0
  %v6142 = vmax.f32 %v6026, 0.0
  %v6143 = vmax.f32 %v6028, 0.0
  %v6144 = vpack.c.bf16 %v6048, %v6032
  %v6145 = vpack.c.bf16 %v6049, %v6033
  %v6146 = vpack.c.bf16 %v6050, %v6034
  %v6147 = vpack.c.bf16 %v6051, %v6035
  %v6148 = vpack.c.bf16 %v6052, %v6036
  %v6149 = vpack.c.bf16 %v6053, %v6037
  %v6150 = vpack.c.bf16 %v6054, %v6038
  %v6151 = vpack.c.bf16 %v6055, %v6039
  %v6152 = vpack.c.bf16 %v6056, %v6040
  %v6153 = vpack.c.bf16 %v6057, %v6041
  %v6154 = vpack.c.bf16 %v6058, %v6042
  %v6155 = vpack.c.bf16 %v6059, %v6043
  %v6156 = vpack.c.bf16 %v6060, %v6044
  %v6157 = vpack.c.bf16 %v6061, %v6045
  %v6158 = vpack.c.bf16 %v6062, %v6046
  %v6159 = vpack.c.bf16 %v6063, %v6047
  %v6160 = vpack.c.bf16 %v6080, %v6064
  %v6161 = vpack.c.bf16 %v6081, %v6065
  %v6162 = vpack.c.bf16 %v6082, %v6066
  %v6163 = vpack.c.bf16 %v6083, %v6067
  %v6164 = vpack.c.bf16 %v6084, %v6068
  %v6165 = vpack.c.bf16 %v6085, %v6069
  %v6166 = vpack.c.bf16 %v6086, %v6070
  %v6167 = vpack.c.bf16 %v6087, %v6071
  %v6168 = vpack.c.bf16 %v6088, %v6072
  %v6169 = vpack.c.bf16 %v6089, %v6073
  %v6170 = vpack.c.bf16 %v6090, %v6074
  %v6171 = vpack.c.bf16 %v6091, %v6075
  %v6172 = vpack.c.bf16 %v6092, %v6076
  %v6173 = vpack.c.bf16 %v6093, %v6077
  %v6174 = vpack.c.bf16 %v6094, %v6078
  %v6175 = vpack.c.bf16 %v6095, %v6079
  %v6176 = vpack.c.bf16 %v6112, %v6096
  %v6177 = vpack.c.bf16 %v6113, %v6097
  %v6178 = vpack.c.bf16 %v6114, %v6098
  %v6179 = vpack.c.bf16 %v6115, %v6099
  %v6180 = vpack.c.bf16 %v6116, %v6100
  %v6181 = vpack.c.bf16 %v6117, %v6101
  %v6182 = vpack.c.bf16 %v6118, %v6102
  %v6183 = vpack.c.bf16 %v6119, %v6103
  %v6184 = vpack.c.bf16 %v6120, %v6104
  %v6185 = vpack.c.bf16 %v6121, %v6105
  %v6186 = vpack.c.bf16 %v6122, %v6106
  %v6187 = vpack.c.bf16 %v6123, %v6107
  %v6188 = vpack.c.bf16 %v6124, %v6108
  %v6189 = vpack.c.bf16 %v6125, %v6109
  %v6190 = vpack.c.bf16 %v6126, %v6110
  %v6191 = vpack.c.bf16 %v6127, %v6111
  %v6192 = vpack.c.bf16 %v6128, %v6128
  %v6193 = vpack.c.bf16 %v6129, %v6129
  %v6194 = vpack.c.bf16 %v6130, %v6130
  %v6195 = vpack.c.bf16 %v6131, %v6131
  %v6196 = vpack.c.bf16 %v6132, %v6132
  %v6197 = vpack.c.bf16 %v6133, %v6133
  %v6198 = vpack.c.bf16 %v6134, %v6134
  %v6199 = vpack.c.bf16 %v6135, %v6135
  %v6200 = vpack.c.bf16 %v6136, %v6136
  %v6201 = vpack.c.bf16 %v6137, %v6137
  %v6202 = vpack.c.bf16 %v6138, %v6138
  %v6203 = vpack.c.bf16 %v6139, %v6139
  %v6204 = vpack.c.bf16 %v6140, %v6140
  %v6205 = vpack.c.bf16 %v6141, %v6141
  %v6206 = vpack.c.bf16 %v6142, %v6142
  %v6207 = vpack.c.bf16 %v6143, %v6143
  %v6208 = vld [vmem:[%s5] sm:$0xf]
  %v6209 = vld [vmem:[%s5 + $0x4] sm:$0xf]
  %v6210 = vld [vmem:[%s5 + $0x8] sm:$0xf]
  %v6211 = vld [vmem:[%s5 + $0xc] sm:$0xf]
  %v6212 = vld [vmem:[%s5 + $0x10] sm:$0xf]
  %v6213 = vld [vmem:[%s5 + $0x14] sm:$0xf]
  %v6214 = vld [vmem:[%s5 + $0x18] sm:$0xf]
  %v6215 = vld [vmem:[%s5 + $0x1c] sm:$0xf]
  %v6216 = vld [vmem:[%s5 + $0x20] sm:$0xf]
  %v6217 = vld [vmem:[%s5 + $0x24] sm:$0xf]
  %v6218 = vld [vmem:[%s5 + $0x28] sm:$0xf]
  %v6219 = vld [vmem:[%s5 + $0x2c] sm:$0xf]
  %v6220 = vld [vmem:[%s5 + $0x30] sm:$0xf]
  %v6221 = vld [vmem:[%s5 + $0x34] sm:$0xf]
  %v6222 = vld [vmem:[%s5 + $0x38] sm:$0xf]
  %v6223 = vld [vmem:[%s5 + $0x3c] sm:$0xf]
  %v6224 = vld [vmem:[%s5 + $0x40] sm:$0xf]
  %v6225 = vld [vmem:[%s5 + $0x44] sm:$0xf]
  %v6226 = vld [vmem:[%s5 + $0x48] sm:$0xf]
  %v6227 = vld [vmem:[%s5 + $0x4c] sm:$0xf]
  %v6228 = vld [vmem:[%s5 + $0x50] sm:$0xf]
  %v6229 = vld [vmem:[%s5 + $0x54] sm:$0xf]
  %v6230 = vld [vmem:[%s5 + $0x58] sm:$0xf]
  %v6231 = vld [vmem:[%s5 + $0x5c] sm:$0xf]
  %v6232 = vld [vmem:[%s5 + $0x60] sm:$0xf]
  %v6233 = vld [vmem:[%s5 + $0x64] sm:$0xf]
  %v6234 = vld [vmem:[%s5 + $0x68] sm:$0xf]
  %v6235 = vld [vmem:[%s5 + $0x6c] sm:$0xf]
  %v6236 = vld [vmem:[%s5 + $0x70] sm:$0xf]
  %v6237 = vld [vmem:[%s5 + $0x74] sm:$0xf]
  %v6238 = vld [vmem:[%s5 + $0x78] sm:$0xf]
  %v6239 = vld [vmem:[%s5 + $0x7c] sm:$0xf]
  %v6240 = vld [vmem:[%s5 + $0x80] sm:$0xf]
  %v6241 = vld [vmem:[%s5 + $0x84] sm:$0xf]
  %v6242 = vld [vmem:[%s5 + $0x88] sm:$0xf]
  %v6243 = vld [vmem:[%s5 + $0x8c] sm:$0xf]
  %v6244 = vld [vmem:[%s5 + $0x90] sm:$0xf]
  %v6245 = vld [vmem:[%s5 + $0x94] sm:$0xf]
  %v6246 = vld [vmem:[%s5 + $0x98] sm:$0xf]
  %v6247 = vld [vmem:[%s5 + $0x9c] sm:$0xf]
  %v6248 = vld [vmem:[%s5 + $0xa0] sm:$0xf]
  %v6249 = vld [vmem:[%s5 + $0xa4] sm:$0xf]
  %v6250 = vld [vmem:[%s5 + $0xa8] sm:$0xf]
  %v6251 = vld [vmem:[%s5 + $0xac] sm:$0xf]
  %v6252 = vld [vmem:[%s5 + $0xb0] sm:$0xf]
  %v6253 = vld [vmem:[%s5 + $0xb4] sm:$0xf]
  %v6254 = vld [vmem:[%s5 + $0xb8] sm:$0xf]
  %v6255 = vld [vmem:[%s5 + $0xbc] sm:$0xf]
  %v6256 = vld [vmem:[%s5 + $0xc0] sm:$0xf]
  %v6257 = vld [vmem:[%s5 + $0xc4] sm:$0xf]
  %v6258 = vld [vmem:[%s5 + $0xc8] sm:$0xf]
  %v6259 = vld [vmem:[%s5 + $0xcc] sm:$0xf]
  %v6260 = vld [vmem:[%s5 + $0xd0] sm:$0xf]
  %v6261 = vld [vmem:[%s5 + $0xd4] sm:$0xf]
  %v6262 = vld [vmem:[%s5 + $0xd8] sm:$0xf]
  %v6263 = vld [vmem:[%s5 + $0xdc] sm:$0xf]
  %v6264 = vld [vmem:[%s5 + $0xe0] sm:$0xf]
  %v6265 = vld [vmem:[%s5 + $0xe4] sm:$0xf]
  %v6266 = vld [vmem:[%s5 + $0xe8] sm:$0xf]
  %v6267 = vld [vmem:[%s5 + $0xec] sm:$0xf]
  %v6268 = vld [vmem:[%s5 + $0xf0] sm:$0xf]
  %v6269 = vld [vmem:[%s5 + $0xf4] sm:$0xf]
  %v6270 = vld [vmem:[%s5 + $0xf8] sm:$0xf]
  %v6271 = vld [vmem:[%s5 + $0xfc] sm:$0xf]
  %v6272 = vld [vmem:[%s5 + $0x100] sm:$0xf]
  %v6273 = vld [vmem:[%s5 + $0x104] sm:$0xf]
  %v6274 = vld [vmem:[%s5 + $0x108] sm:$0xf]
  %v6275 = vld [vmem:[%s5 + $0x10c] sm:$0xf]
  %v6276 = vld [vmem:[%s5 + $0x110] sm:$0xf]
  %v6277 = vld [vmem:[%s5 + $0x114] sm:$0xf]
  %v6278 = vld [vmem:[%s5 + $0x118] sm:$0xf]
  %v6279 = vld [vmem:[%s5 + $0x11c] sm:$0xf]
  %v6280 = vld [vmem:[%s5 + $0x120] sm:$0xf]
  %v6281 = vld [vmem:[%s5 + $0x124] sm:$0xf]
  %v6282 = vld [vmem:[%s5 + $0x128] sm:$0xf]
  %v6283 = vld [vmem:[%s5 + $0x12c] sm:$0xf]
  %v6284 = vld [vmem:[%s5 + $0x130] sm:$0xf]
  %v6285 = vld [vmem:[%s5 + $0x134] sm:$0xf]
  %v6286 = vld [vmem:[%s5 + $0x138] sm:$0xf]
  %v6287 = vld [vmem:[%s5 + $0x13c] sm:$0xf]
  %v6288 = vld [vmem:[%s5 + $0x140] sm:$0xf]
  %v6289 = vld [vmem:[%s5 + $0x144] sm:$0xf]
  %v6290 = vld [vmem:[%s5 + $0x148] sm:$0xf]
  %v6291 = vld [vmem:[%s5 + $0x14c] sm:$0xf]
  %v6292 = vld [vmem:[%s5 + $0x150] sm:$0xf]
  %v6293 = vld [vmem:[%s5 + $0x154] sm:$0xf]
  %v6294 = vld [vmem:[%s5 + $0x158] sm:$0xf]
  %v6295 = vld [vmem:[%s5 + $0x15c] sm:$0xf]
  %v6296 = vld [vmem:[%s5 + $0x160] sm:$0xf]
  %v6297 = vld [vmem:[%s5 + $0x164] sm:$0xf]
  %v6298 = vld [vmem:[%s5 + $0x168] sm:$0xf]
  %v6299 = vld [vmem:[%s5 + $0x16c] sm:$0xf]
  %v6300 = vld [vmem:[%s5 + $0x170] sm:$0xf]
  %v6301 = vld [vmem:[%s5 + $0x174] sm:$0xf]
  %v6302 = vld [vmem:[%s5 + $0x178] sm:$0xf]
  %v6303 = vld [vmem:[%s5 + $0x17c] sm:$0xf]
  %v6304 = vld [vmem:[%s5 + $0x180] sm:$0xf]
  %v6305 = vld [vmem:[%s5 + $0x184] sm:$0xf]
  %v6306 = vld [vmem:[%s5 + $0x188] sm:$0xf]
  %v6307 = vld [vmem:[%s5 + $0x18c] sm:$0xf]
  %v6308 = vld [vmem:[%s5 + $0x190] sm:$0xf]
  %v6309 = vld [vmem:[%s5 + $0x194] sm:$0xf]
  %v6310 = vld [vmem:[%s5 + $0x198] sm:$0xf]
  %v6311 = vld [vmem:[%s5 + $0x19c] sm:$0xf]
  %v6312 = vld [vmem:[%s5 + $0x1a0] sm:$0xf]
  %v6313 = vld [vmem:[%s5 + $0x1a4] sm:$0xf]
  %v6314 = vld [vmem:[%s5 + $0x1a8] sm:$0xf]
  %v6315 = vld [vmem:[%s5 + $0x1ac] sm:$0xf]
  %v6316 = vld [vmem:[%s5 + $0x1b0] sm:$0xf]
  %v6317 = vld [vmem:[%s5 + $0x1b4] sm:$0xf]
  %v6318 = vld [vmem:[%s5 + $0x1b8] sm:$0xf]
  %v6319 = vld [vmem:[%s5 + $0x1bc] sm:$0xf]
  %v6320 = vld [vmem:[%s5 + $0x1c0] sm:$0xf]
  %v6321 = vld [vmem:[%s5 + $0x1c4] sm:$0xf]
  %v6322 = vld [vmem:[%s5 + $0x1c8] sm:$0xf]
  %v6323 = vld [vmem:[%s5 + $0x1cc] sm:$0xf]
  %v6324 = vld [vmem:[%s5 + $0x1d0] sm:$0xf]
  %v6325 = vld [vmem:[%s5 + $0x1d4] sm:$0xf]
  %v6326 = vld [vmem:[%s5 + $0x1d8] sm:$0xf]
  %v6327 = vld [vmem:[%s5 + $0x1dc] sm:$0xf]
  %v6328 = vld [vmem:[%s5 + $0x1e0] sm:$0xf]
  %v6329 = vld [vmem:[%s5 + $0x1e4] sm:$0xf]
  %v6330 = vld [vmem:[%s5 + $0x1e8] sm:$0xf]
  %v6331 = vld [vmem:[%s5 + $0x1ec] sm:$0xf]
  %v6332 = vld [vmem:[%s5 + $0x1f0] sm:$0xf]
  %v6333 = vld [vmem:[%s5 + $0x1f4] sm:$0xf]
  %v6334 = vld [vmem:[%s5 + $0x1f8] sm:$0xf]
  %v6335 = vld [vmem:[%s5 + $0x1fc] sm:$0xf]
  %v6336 = vld [vmem:[%s5 + $0x200] sm:$0xf]
  %v6337 = vld [vmem:[%s5 + $0x204] sm:$0xf]
  %v6338 = vld [vmem:[%s5 + $0x208] sm:$0xf]
  %v6339 = vld [vmem:[%s5 + $0x20c] sm:$0xf]
  %v6340 = vld [vmem:[%s5 + $0x210] sm:$0xf]
  %v6341 = vld [vmem:[%s5 + $0x214] sm:$0xf]
  %v6342 = vld [vmem:[%s5 + $0x218] sm:$0xf]
  %v6343 = vld [vmem:[%s5 + $0x21c] sm:$0xf]
  %v6344 = vld [vmem:[%s5 + $0x220] sm:$0xf]
  %v6345 = vld [vmem:[%s5 + $0x224] sm:$0xf]
  %v6346 = vld [vmem:[%s5 + $0x228] sm:$0xf]
  %v6347 = vld [vmem:[%s5 + $0x22c] sm:$0xf]
  %v6348 = vld [vmem:[%s5 + $0x230] sm:$0xf]
  %v6349 = vld [vmem:[%s5 + $0x234] sm:$0xf]
  %v6350 = vld [vmem:[%s5 + $0x238] sm:$0xf]
  %v6351 = vld [vmem:[%s5 + $0x23c] sm:$0xf]
  %v6352 = vld [vmem:[%s5 + $0x240] sm:$0xf]
  %v6353 = vld [vmem:[%s5 + $0x244] sm:$0xf]
  %v6354 = vld [vmem:[%s5 + $0x248] sm:$0xf]
  %v6355 = vld [vmem:[%s5 + $0x24c] sm:$0xf]
  %v6356 = vld [vmem:[%s5 + $0x250] sm:$0xf]
  %v6357 = vld [vmem:[%s5 + $0x254] sm:$0xf]
  %v6358 = vld [vmem:[%s5 + $0x258] sm:$0xf]
  %v6359 = vld [vmem:[%s5 + $0x25c] sm:$0xf]
  %v6360 = vld [vmem:[%s5 + $0x260] sm:$0xf]
  %v6361 = vld [vmem:[%s5 + $0x264] sm:$0xf]
  %v6362 = vld [vmem:[%s5 + $0x268] sm:$0xf]
  %v6363 = vld [vmem:[%s5 + $0x26c] sm:$0xf]
  %v6364 = vld [vmem:[%s5 + $0x270] sm:$0xf]
  %v6365 = vld [vmem:[%s5 + $0x274] sm:$0xf]
  %v6366 = vld [vmem:[%s5 + $0x278] sm:$0xf]
  %v6367 = vld [vmem:[%s5 + $0x27c] sm:$0xf]
  %v6368 = vld [vmem:[%s5 + $0x280] sm:$0xf]
  %v6369 = vld [vmem:[%s5 + $0x284] sm:$0xf]
  %v6370 = vld [vmem:[%s5 + $0x288] sm:$0xf]
  %v6371 = vld [vmem:[%s5 + $0x28c] sm:$0xf]
  %v6372 = vld [vmem:[%s5 + $0x290] sm:$0xf]
  %v6373 = vld [vmem:[%s5 + $0x294] sm:$0xf]
  %v6374 = vld [vmem:[%s5 + $0x298] sm:$0xf]
  %v6375 = vld [vmem:[%s5 + $0x29c] sm:$0xf]
  %v6376 = vld [vmem:[%s5 + $0x2a0] sm:$0xf]
  %v6377 = vld [vmem:[%s5 + $0x2a4] sm:$0xf]
  %v6378 = vld [vmem:[%s5 + $0x2a8] sm:$0xf]
  %v6379 = vld [vmem:[%s5 + $0x2ac] sm:$0xf]
  %v6380 = vld [vmem:[%s5 + $0x2b0] sm:$0xf]
  %v6381 = vld [vmem:[%s5 + $0x2b4] sm:$0xf]
  %v6382 = vld [vmem:[%s5 + $0x2b8] sm:$0xf]
  %v6383 = vld [vmem:[%s5 + $0x2bc] sm:$0xf]
  %v6384 = vld [vmem:[%s5 + $0x2c0] sm:$0xf]
  %v6385 = vld [vmem:[%s5 + $0x2c4] sm:$0xf]
  %v6386 = vld [vmem:[%s5 + $0x2c8] sm:$0xf]
  %v6387 = vld [vmem:[%s5 + $0x2cc] sm:$0xf]
  %v6388 = vld [vmem:[%s5 + $0x2d0] sm:$0xf]
  %v6389 = vld [vmem:[%s5 + $0x2d4] sm:$0xf]
  %v6390 = vld [vmem:[%s5 + $0x2d8] sm:$0xf]
  %v6391 = vld [vmem:[%s5 + $0x2dc] sm:$0xf]
  %v6392 = vld [vmem:[%s5 + $0x2e0] sm:$0xf]
  %v6393 = vld [vmem:[%s5 + $0x2e4] sm:$0xf]
  %v6394 = vld [vmem:[%s5 + $0x2e8] sm:$0xf]
  %v6395 = vld [vmem:[%s5 + $0x2ec] sm:$0xf]
  %v6396 = vld [vmem:[%s5 + $0x2f0] sm:$0xf]
  %v6397 = vld [vmem:[%s5 + $0x2f4] sm:$0xf]
  %v6398 = vld [vmem:[%s5 + $0x2f8] sm:$0xf]
  %v6399 = vld [vmem:[%s5 + $0x2fc] sm:$0xf]
  %v6400 = vld [vmem:[%s5 + $0x300] sm:$0xf]
  %v6401 = vld [vmem:[%s5 + $0x304] sm:$0xf]
  %v6402 = vld [vmem:[%s5 + $0x308] sm:$0xf]
  %v6403 = vld [vmem:[%s5 + $0x30c] sm:$0xf]
  %v6404 = vld [vmem:[%s5 + $0x310] sm:$0xf]
  %v6405 = vld [vmem:[%s5 + $0x314] sm:$0xf]
  %v6406 = vld [vmem:[%s5 + $0x318] sm:$0xf]
  %v6407 = vld [vmem:[%s5 + $0x31c] sm:$0xf]
  %v6408 = vld [vmem:[%s5 + $0x320] sm:$0xf]
  %v6409 = vld [vmem:[%s5 + $0x324] sm:$0xf]
  %v6410 = vld [vmem:[%s5 + $0x328] sm:$0xf]
  %v6411 = vld [vmem:[%s5 + $0x32c] sm:$0xf]
  %v6412 = vld [vmem:[%s5 + $0x330] sm:$0xf]
  %v6413 = vld [vmem:[%s5 + $0x334] sm:$0xf]
  %v6414 = vld [vmem:[%s5 + $0x338] sm:$0xf]
  %v6415 = vld [vmem:[%s5 + $0x33c] sm:$0xf]
  %v6416 = vld [vmem:[%s5 + $0x340] sm:$0xf]
  %v6417 = vld [vmem:[%s5 + $0x344] sm:$0xf]
  %v6418 = vld [vmem:[%s5 + $0x348] sm:$0xf]
  %v6419 = vld [vmem:[%s5 + $0x34c] sm:$0xf]
  %v6420 = vld [vmem:[%s5 + $0x350] sm:$0xf]
  %v6421 = vld [vmem:[%s5 + $0x354] sm:$0xf]
  %v6422 = vld [vmem:[%s5 + $0x358] sm:$0xf]
  %v6423 = vld [vmem:[%s5 + $0x35c] sm:$0xf]
  %v6424 = vld [vmem:[%s5 + $0x360] sm:$0xf]
  %v6425 = vld [vmem:[%s5 + $0x364] sm:$0xf]
  %v6426 = vld [vmem:[%s5 + $0x368] sm:$0xf]
  %v6427 = vld [vmem:[%s5 + $0x36c] sm:$0xf]
  %v6428 = vld [vmem:[%s5 + $0x370] sm:$0xf]
  %v6429 = vld [vmem:[%s5 + $0x374] sm:$0xf]
  %v6430 = vld [vmem:[%s5 + $0x378] sm:$0xf]
  %v6431 = vld [vmem:[%s5 + $0x37c] sm:$0xf]
  %v6432 = vld [vmem:[%s5 + $0x380] sm:$0xf]
  %v6433 = vld [vmem:[%s5 + $0x384] sm:$0xf]
  %v6434 = vld [vmem:[%s5 + $0x388] sm:$0xf]
  %v6435 = vld [vmem:[%s5 + $0x38c] sm:$0xf]
  %v6436 = vld [vmem:[%s5 + $0x390] sm:$0xf]
  %v6437 = vld [vmem:[%s5 + $0x394] sm:$0xf]
  %v6438 = vld [vmem:[%s5 + $0x398] sm:$0xf]
  %v6439 = vld [vmem:[%s5 + $0x39c] sm:$0xf]
  %v6440 = vld [vmem:[%s5 + $0x3a0] sm:$0xf]
  %v6441 = vld [vmem:[%s5 + $0x3a4] sm:$0xf]
  %v6442 = vld [vmem:[%s5 + $0x3a8] sm:$0xf]
  %v6443 = vld [vmem:[%s5 + $0x3ac] sm:$0xf]
  %v6444 = vld [vmem:[%s5 + $0x3b0] sm:$0xf]
  %v6445 = vld [vmem:[%s5 + $0x3b4] sm:$0xf]
  %v6446 = vld [vmem:[%s5 + $0x3b8] sm:$0xf]
  %v6447 = vld [vmem:[%s5 + $0x3bc] sm:$0xf]
  %v6448 = vld [vmem:[%s5 + $0x3c0] sm:$0xf]
  %v6449 = vld [vmem:[%s5 + $0x3c4] sm:$0xf]
  %v6450 = vld [vmem:[%s5 + $0x3c8] sm:$0xf]
  %v6451 = vld [vmem:[%s5 + $0x3cc] sm:$0xf]
  %v6452 = vld [vmem:[%s5 + $0x3d0] sm:$0xf]
  %v6453 = vld [vmem:[%s5 + $0x3d4] sm:$0xf]
  %v6454 = vld [vmem:[%s5 + $0x3d8] sm:$0xf]
  %v6455 = vld [vmem:[%s5 + $0x3dc] sm:$0xf]
  %v6456 = vld [vmem:[%s5 + $0x3e0] sm:$0xf]
  %v6457 = vld [vmem:[%s5 + $0x3e4] sm:$0xf]
  %v6458 = vld [vmem:[%s5 + $0x3e8] sm:$0xf]
  %v6459 = vld [vmem:[%s5 + $0x3ec] sm:$0xf]
  %v6460 = vld [vmem:[%s5 + $0x3f0] sm:$0xf]
  %v6461 = vld [vmem:[%s5 + $0x3f4] sm:$0xf]
  %v6462 = vld [vmem:[%s5 + $0x3f8] sm:$0xf]
  %v6463 = vld [vmem:[%s5 + $0x3fc] sm:$0xf]
  %v6464 = vld [vmem:[%s6 + $0x12] sm:$0x1]
  %v6466 = vlaneseq
  %v6467 = vshrl.u32 %v6466, 7
  %v6468 = vsub.s32 0, %v6467
  %v6469 = vrot.slane %v6464, %v6468
  %v6727 = vunpack.c.l.b16 %v6208
  %v6728 = vunpack.c.l.b16 %v6209
  %v6729 = vunpack.c.l.b16 %v6210
  %v6730 = vunpack.c.l.b16 %v6211
  %v6731 = vunpack.c.l.b16 %v6212
  %v6732 = vunpack.c.l.b16 %v6213
  %v6733 = vunpack.c.l.b16 %v6214
  %v6734 = vunpack.c.l.b16 %v6215
  %v6735 = vunpack.c.l.b16 %v6216
  %v6736 = vunpack.c.l.b16 %v6217
  %v6737 = vunpack.c.l.b16 %v6218
  %v6738 = vunpack.c.l.b16 %v6219
  %v6739 = vunpack.c.l.b16 %v6220
  %v6740 = vunpack.c.l.b16 %v6221
  %v6741 = vunpack.c.l.b16 %v6222
  %v6742 = vunpack.c.l.b16 %v6223
  %v6743 = vunpack.c.l.b16 %v6224
  %v6744 = vunpack.c.l.b16 %v6225
  %v6745 = vunpack.c.l.b16 %v6226
  %v6746 = vunpack.c.l.b16 %v6227
  %v6747 = vunpack.c.l.b16 %v6228
  %v6748 = vunpack.c.l.b16 %v6229
  %v6749 = vunpack.c.l.b16 %v6230
  %v6750 = vunpack.c.l.b16 %v6231
  %v6751 = vunpack.c.l.b16 %v6232
  %v6752 = vunpack.c.l.b16 %v6233
  %v6753 = vunpack.c.l.b16 %v6234
  %v6754 = vunpack.c.l.b16 %v6235
  %v6755 = vunpack.c.l.b16 %v6236
  %v6756 = vunpack.c.l.b16 %v6237
  %v6757 = vunpack.c.l.b16 %v6238
  %v6758 = vunpack.c.l.b16 %v6239
  %v6759 = vunpack.c.l.b16 %v6240
  %v6760 = vunpack.c.l.b16 %v6241
  %v6761 = vunpack.c.l.b16 %v6242
  %v6762 = vunpack.c.l.b16 %v6243
  %v6763 = vunpack.c.l.b16 %v6244
  %v6764 = vunpack.c.l.b16 %v6245
  %v6765 = vunpack.c.l.b16 %v6246
  %v6766 = vunpack.c.l.b16 %v6247
  %v6767 = vunpack.c.l.b16 %v6248
  %v6768 = vunpack.c.l.b16 %v6249
  %v6769 = vunpack.c.l.b16 %v6250
  %v6770 = vunpack.c.l.b16 %v6251
  %v6771 = vunpack.c.l.b16 %v6252
  %v6772 = vunpack.c.l.b16 %v6253
  %v6773 = vunpack.c.l.b16 %v6254
  %v6774 = vunpack.c.l.b16 %v6255
  %v6775 = vunpack.c.l.b16 %v6256
  %v6776 = vunpack.c.l.b16 %v6257
  %v6777 = vunpack.c.l.b16 %v6258
  %v6778 = vunpack.c.l.b16 %v6259
  %v6779 = vunpack.c.l.b16 %v6260
  %v6780 = vunpack.c.l.b16 %v6261
  %v6781 = vunpack.c.l.b16 %v6262
  %v6782 = vunpack.c.l.b16 %v6263
  %v6783 = vunpack.c.l.b16 %v6264
  %v6784 = vunpack.c.l.b16 %v6265
  %v6785 = vunpack.c.l.b16 %v6266
  %v6786 = vunpack.c.l.b16 %v6267
  %v6787 = vunpack.c.l.b16 %v6268
  %v6788 = vunpack.c.l.b16 %v6269
  %v6789 = vunpack.c.l.b16 %v6270
  %v6790 = vunpack.c.l.b16 %v6271
  %v6791 = vunpack.c.l.b16 %v6272
  %v6792 = vunpack.c.l.b16 %v6273
  %v6793 = vunpack.c.l.b16 %v6274
  %v6794 = vunpack.c.l.b16 %v6275
  %v6795 = vunpack.c.l.b16 %v6276
  %v6796 = vunpack.c.l.b16 %v6277
  %v6797 = vunpack.c.l.b16 %v6278
  %v6798 = vunpack.c.l.b16 %v6279
  %v6799 = vunpack.c.l.b16 %v6280
  %v6800 = vunpack.c.l.b16 %v6281
  %v6801 = vunpack.c.l.b16 %v6282
  %v6802 = vunpack.c.l.b16 %v6283
  %v6803 = vunpack.c.l.b16 %v6284
  %v6804 = vunpack.c.l.b16 %v6285
  %v6805 = vunpack.c.l.b16 %v6286
  %v6806 = vunpack.c.l.b16 %v6287
  %v6807 = vunpack.c.l.b16 %v6288
  %v6808 = vunpack.c.l.b16 %v6289
  %v6809 = vunpack.c.l.b16 %v6290
  %v6810 = vunpack.c.l.b16 %v6291
  %v6811 = vunpack.c.l.b16 %v6292
  %v6812 = vunpack.c.l.b16 %v6293
  %v6813 = vunpack.c.l.b16 %v6294
  %v6814 = vunpack.c.l.b16 %v6295
  %v6815 = vunpack.c.l.b16 %v6296
  %v6816 = vunpack.c.l.b16 %v6297
  %v6817 = vunpack.c.l.b16 %v6298
  %v6818 = vunpack.c.l.b16 %v6299
  %v6819 = vunpack.c.l.b16 %v6300
  %v6820 = vunpack.c.l.b16 %v6301
  %v6821 = vunpack.c.l.b16 %v6302
  %v6822 = vunpack.c.l.b16 %v6303
  %v6823 = vunpack.c.l.b16 %v6304
  %v6824 = vunpack.c.l.b16 %v6305
  %v6825 = vunpack.c.l.b16 %v6306
  %v6826 = vunpack.c.l.b16 %v6307
  %v6827 = vunpack.c.l.b16 %v6308
  %v6828 = vunpack.c.l.b16 %v6309
  %v6829 = vunpack.c.l.b16 %v6310
  %v6830 = vunpack.c.l.b16 %v6311
  %v6831 = vunpack.c.l.b16 %v6312
  %v6832 = vunpack.c.l.b16 %v6313
  %v6833 = vunpack.c.l.b16 %v6314
  %v6834 = vunpack.c.l.b16 %v6315
  %v6835 = vunpack.c.l.b16 %v6316
  %v6836 = vunpack.c.l.b16 %v6317
  %v6837 = vunpack.c.l.b16 %v6318
  %v6838 = vunpack.c.l.b16 %v6319
  %v6839 = vunpack.c.l.b16 %v6320
  %v6840 = vunpack.c.l.b16 %v6321
  %v6841 = vunpack.c.l.b16 %v6322
  %v6842 = vunpack.c.l.b16 %v6323
  %v6843 = vunpack.c.l.b16 %v6324
  %v6844 = vunpack.c.l.b16 %v6325
  %v6845 = vunpack.c.l.b16 %v6326
  %v6846 = vunpack.c.l.b16 %v6327
  %v6847 = vunpack.c.l.b16 %v6328
  %v6848 = vunpack.c.l.b16 %v6329
  %v6849 = vunpack.c.l.b16 %v6330
  %v6850 = vunpack.c.l.b16 %v6331
  %v6851 = vunpack.c.l.b16 %v6332
  %v6852 = vunpack.c.l.b16 %v6333
  %v6853 = vunpack.c.l.b16 %v6334
  %v6854 = vunpack.c.l.b16 %v6335
  %v6855 = vunpack.c.l.b16 %v6336
  %v6856 = vunpack.c.l.b16 %v6337
  %v6857 = vunpack.c.l.b16 %v6338
  %v6858 = vunpack.c.l.b16 %v6339
  %v6859 = vunpack.c.l.b16 %v6340
  %v6860 = vunpack.c.l.b16 %v6341
  %v6861 = vunpack.c.l.b16 %v6342
  %v6862 = vunpack.c.l.b16 %v6343
  %v6863 = vunpack.c.l.b16 %v6344
  %v6864 = vunpack.c.l.b16 %v6345
  %v6865 = vunpack.c.l.b16 %v6346
  %v6866 = vunpack.c.l.b16 %v6347
  %v6867 = vunpack.c.l.b16 %v6348
  %v6868 = vunpack.c.l.b16 %v6349
  %v6869 = vunpack.c.l.b16 %v6350
  %v6870 = vunpack.c.l.b16 %v6351
  %v6871 = vunpack.c.l.b16 %v6352
  %v6872 = vunpack.c.l.b16 %v6353
  %v6873 = vunpack.c.l.b16 %v6354
  %v6874 = vunpack.c.l.b16 %v6355
  %v6875 = vunpack.c.l.b16 %v6356
  %v6876 = vunpack.c.l.b16 %v6357
  %v6877 = vunpack.c.l.b16 %v6358
  %v6878 = vunpack.c.l.b16 %v6359
  %v6879 = vunpack.c.l.b16 %v6360
  %v6880 = vunpack.c.l.b16 %v6361
  %v6881 = vunpack.c.l.b16 %v6362
  %v6882 = vunpack.c.l.b16 %v6363
  %v6883 = vunpack.c.l.b16 %v6364
  %v6884 = vunpack.c.l.b16 %v6365
  %v6885 = vunpack.c.l.b16 %v6366
  %v6886 = vunpack.c.l.b16 %v6367
  %v6887 = vunpack.c.l.b16 %v6368
  %v6888 = vunpack.c.l.b16 %v6369
  %v6889 = vunpack.c.l.b16 %v6370
  %v6890 = vunpack.c.l.b16 %v6371
  %v6891 = vunpack.c.l.b16 %v6372
  %v6892 = vunpack.c.l.b16 %v6373
  %v6893 = vunpack.c.l.b16 %v6374
  %v6894 = vunpack.c.l.b16 %v6375
  %v6895 = vunpack.c.l.b16 %v6376
  %v6896 = vunpack.c.l.b16 %v6377
  %v6897 = vunpack.c.l.b16 %v6378
  %v6898 = vunpack.c.l.b16 %v6379
  %v6899 = vunpack.c.l.b16 %v6380
  %v6900 = vunpack.c.l.b16 %v6381
  %v6901 = vunpack.c.l.b16 %v6382
  %v6902 = vunpack.c.l.b16 %v6383
  %v6903 = vunpack.c.l.b16 %v6384
  %v6904 = vunpack.c.l.b16 %v6385
  %v6905 = vunpack.c.l.b16 %v6386
  %v6906 = vunpack.c.l.b16 %v6387
  %v6907 = vunpack.c.l.b16 %v6388
  %v6908 = vunpack.c.l.b16 %v6389
  %v6909 = vunpack.c.l.b16 %v6390
  %v6910 = vunpack.c.l.b16 %v6391
  %v6911 = vunpack.c.l.b16 %v6392
  %v6912 = vunpack.c.l.b16 %v6393
  %v6913 = vunpack.c.l.b16 %v6394
  %v6914 = vunpack.c.l.b16 %v6395
  %v6915 = vunpack.c.l.b16 %v6396
  %v6916 = vunpack.c.l.b16 %v6397
  %v6917 = vunpack.c.l.b16 %v6398
  %v6918 = vunpack.c.l.b16 %v6399
  %v6919 = vunpack.c.l.b16 %v6400
  %v6920 = vunpack.c.l.b16 %v6401
  %v6921 = vunpack.c.l.b16 %v6402
  %v6922 = vunpack.c.l.b16 %v6403
  %v6923 = vunpack.c.l.b16 %v6404
  %v6924 = vunpack.c.l.b16 %v6405
  %v6925 = vunpack.c.l.b16 %v6406
  %v6926 = vunpack.c.l.b16 %v6407
  %v6927 = vunpack.c.l.b16 %v6408
  %v6928 = vunpack.c.l.b16 %v6409
  %v6929 = vunpack.c.l.b16 %v6410
  %v6930 = vunpack.c.l.b16 %v6411
  %v6931 = vunpack.c.l.b16 %v6412
  %v6932 = vunpack.c.l.b16 %v6413
  %v6933 = vunpack.c.l.b16 %v6414
  %v6934 = vunpack.c.l.b16 %v6415
  %v6935 = vunpack.c.l.b16 %v6416
  %v6936 = vunpack.c.l.b16 %v6417
  %v6937 = vunpack.c.l.b16 %v6418
  %v6938 = vunpack.c.l.b16 %v6419
  %v6939 = vunpack.c.l.b16 %v6420
  %v6940 = vunpack.c.l.b16 %v6421
  %v6941 = vunpack.c.l.b16 %v6422
  %v6942 = vunpack.c.l.b16 %v6423
  %v6943 = vunpack.c.l.b16 %v6424
  %v6944 = vunpack.c.l.b16 %v6425
  %v6945 = vunpack.c.l.b16 %v6426
  %v6946 = vunpack.c.l.b16 %v6427
  %v6947 = vunpack.c.l.b16 %v6428
  %v6948 = vunpack.c.l.b16 %v6429
  %v6949 = vunpack.c.l.b16 %v6430
  %v6950 = vunpack.c.l.b16 %v6431
  %v6951 = vunpack.c.l.b16 %v6432
  %v6952 = vunpack.c.l.b16 %v6433
  %v6953 = vunpack.c.l.b16 %v6434
  %v6954 = vunpack.c.l.b16 %v6435
  %v6955 = vunpack.c.l.b16 %v6436
  %v6956 = vunpack.c.l.b16 %v6437
  %v6957 = vunpack.c.l.b16 %v6438
  %v6958 = vunpack.c.l.b16 %v6439
  %v6959 = vunpack.c.l.b16 %v6440
  %v6960 = vunpack.c.l.b16 %v6441
  %v6961 = vunpack.c.l.b16 %v6442
  %v6962 = vunpack.c.l.b16 %v6443
  %v6963 = vunpack.c.l.b16 %v6444
  %v6964 = vunpack.c.l.b16 %v6445
  %v6965 = vunpack.c.l.b16 %v6446
  %v6966 = vunpack.c.l.b16 %v6447
  %v6967 = vunpack.c.l.b16 %v6448
  %v6968 = vunpack.c.l.b16 %v6449
  %v6969 = vunpack.c.l.b16 %v6450
  %v6970 = vunpack.c.l.b16 %v6451
  %v6971 = vunpack.c.l.b16 %v6452
  %v6972 = vunpack.c.l.b16 %v6453
  %v6973 = vunpack.c.l.b16 %v6454
  %v6974 = vunpack.c.l.b16 %v6455
  %v6975 = vunpack.c.l.b16 %v6456
  %v6976 = vunpack.c.l.b16 %v6457
  %v6977 = vunpack.c.l.b16 %v6458
  %v6978 = vunpack.c.l.b16 %v6459
  %v6979 = vunpack.c.l.b16 %v6460
  %v6980 = vunpack.c.l.b16 %v6461
  %v6981 = vunpack.c.l.b16 %v6462
  %v6982 = vunpack.c.l.b16 %v6463
  %v6983 = vpack.c.b16 %v6728, %v6727
  %v6984 = vpack.c.b16 %v6730, %v6729
  %v6985 = vpack.c.b16 %v6732, %v6731
  %v6986 = vpack.c.b16 %v6734, %v6733
  %v6987 = vpack.c.b16 %v6736, %v6735
  %v6988 = vpack.c.b16 %v6738, %v6737
  %v6989 = vpack.c.b16 %v6740, %v6739
  %v6990 = vpack.c.b16 %v6742, %v6741
  %v6991 = vpack.c.b16 %v6744, %v6743
  %v6992 = vpack.c.b16 %v6746, %v6745
  %v6993 = vpack.c.b16 %v6748, %v6747
  %v6994 = vpack.c.b16 %v6750, %v6749
  %v6995 = vpack.c.b16 %v6752, %v6751
  %v6996 = vpack.c.b16 %v6754, %v6753
  %v6997 = vpack.c.b16 %v6756, %v6755
  %v6998 = vpack.c.b16 %v6758, %v6757
  %v6999 = vpack.c.b16 %v6760, %v6759
  %v7000 = vpack.c.b16 %v6762, %v6761
  %v7001 = vpack.c.b16 %v6764, %v6763
  %v7002 = vpack.c.b16 %v6766, %v6765
  %v7003 = vpack.c.b16 %v6768, %v6767
  %v7004 = vpack.c.b16 %v6770, %v6769
  %v7005 = vpack.c.b16 %v6772, %v6771
  %v7006 = vpack.c.b16 %v6774, %v6773
  %v7007 = vpack.c.b16 %v6776, %v6775
  %v7008 = vpack.c.b16 %v6778, %v6777
  %v7009 = vpack.c.b16 %v6780, %v6779
  %v7010 = vpack.c.b16 %v6782, %v6781
  %v7011 = vpack.c.b16 %v6784, %v6783
  %v7012 = vpack.c.b16 %v6786, %v6785
  %v7013 = vpack.c.b16 %v6788, %v6787
  %v7014 = vpack.c.b16 %v6790, %v6789
  %v7015 = vpack.c.b16 %v6792, %v6791
  %v7016 = vpack.c.b16 %v6794, %v6793
  %v7017 = vpack.c.b16 %v6796, %v6795
  %v7018 = vpack.c.b16 %v6798, %v6797
  %v7019 = vpack.c.b16 %v6800, %v6799
  %v7020 = vpack.c.b16 %v6802, %v6801
  %v7021 = vpack.c.b16 %v6804, %v6803
  %v7022 = vpack.c.b16 %v6806, %v6805
  %v7023 = vpack.c.b16 %v6808, %v6807
  %v7024 = vpack.c.b16 %v6810, %v6809
  %v7025 = vpack.c.b16 %v6812, %v6811
  %v7026 = vpack.c.b16 %v6814, %v6813
  %v7027 = vpack.c.b16 %v6816, %v6815
  %v7028 = vpack.c.b16 %v6818, %v6817
  %v7029 = vpack.c.b16 %v6820, %v6819
  %v7030 = vpack.c.b16 %v6822, %v6821
  %v7031 = vpack.c.b16 %v6824, %v6823
  %v7032 = vpack.c.b16 %v6826, %v6825
  %v7033 = vpack.c.b16 %v6828, %v6827
  %v7034 = vpack.c.b16 %v6830, %v6829
  %v7035 = vpack.c.b16 %v6832, %v6831
  %v7036 = vpack.c.b16 %v6834, %v6833
  %v7037 = vpack.c.b16 %v6836, %v6835
  %v7038 = vpack.c.b16 %v6838, %v6837
  %v7039 = vpack.c.b16 %v6840, %v6839
  %v7040 = vpack.c.b16 %v6842, %v6841
  %v7041 = vpack.c.b16 %v6844, %v6843
  %v7042 = vpack.c.b16 %v6846, %v6845
  %v7043 = vpack.c.b16 %v6848, %v6847
  %v7044 = vpack.c.b16 %v6850, %v6849
  %v7045 = vpack.c.b16 %v6852, %v6851
  %v7046 = vpack.c.b16 %v6854, %v6853
  %v7047 = vpack.c.b16 %v6856, %v6855
  %v7048 = vpack.c.b16 %v6858, %v6857
  %v7049 = vpack.c.b16 %v6860, %v6859
  %v7050 = vpack.c.b16 %v6862, %v6861
  %v7051 = vpack.c.b16 %v6864, %v6863
  %v7052 = vpack.c.b16 %v6866, %v6865
  %v7053 = vpack.c.b16 %v6868, %v6867
  %v7054 = vpack.c.b16 %v6870, %v6869
  %v7055 = vpack.c.b16 %v6872, %v6871
  %v7056 = vpack.c.b16 %v6874, %v6873
  %v7057 = vpack.c.b16 %v6876, %v6875
  %v7058 = vpack.c.b16 %v6878, %v6877
  %v7059 = vpack.c.b16 %v6880, %v6879
  %v7060 = vpack.c.b16 %v6882, %v6881
  %v7061 = vpack.c.b16 %v6884, %v6883
  %v7062 = vpack.c.b16 %v6886, %v6885
  %v7063 = vpack.c.b16 %v6888, %v6887
  %v7064 = vpack.c.b16 %v6890, %v6889
  %v7065 = vpack.c.b16 %v6892, %v6891
  %v7066 = vpack.c.b16 %v6894, %v6893
  %v7067 = vpack.c.b16 %v6896, %v6895
  %v7068 = vpack.c.b16 %v6898, %v6897
  %v7069 = vpack.c.b16 %v6900, %v6899
  %v7070 = vpack.c.b16 %v6902, %v6901
  %v7071 = vpack.c.b16 %v6904, %v6903
  %v7072 = vpack.c.b16 %v6906, %v6905
  %v7073 = vpack.c.b16 %v6908, %v6907
  %v7074 = vpack.c.b16 %v6910, %v6909
  %v7075 = vpack.c.b16 %v6912, %v6911
  %v7076 = vpack.c.b16 %v6914, %v6913
  %v7077 = vpack.c.b16 %v6916, %v6915
  %v7078 = vpack.c.b16 %v6918, %v6917
  %v7079 = vpack.c.b16 %v6920, %v6919
  %v7080 = vpack.c.b16 %v6922, %v6921
  %v7081 = vpack.c.b16 %v6924, %v6923
  %v7082 = vpack.c.b16 %v6926, %v6925
  %v7083 = vpack.c.b16 %v6928, %v6927
  %v7084 = vpack.c.b16 %v6930, %v6929
  %v7085 = vpack.c.b16 %v6932, %v6931
  %v7086 = vpack.c.b16 %v6934, %v6933
  %v7087 = vpack.c.b16 %v6936, %v6935
  %v7088 = vpack.c.b16 %v6938, %v6937
  %v7089 = vpack.c.b16 %v6940, %v6939
  %v7090 = vpack.c.b16 %v6942, %v6941
  %v7091 = vpack.c.b16 %v6944, %v6943
  %v7092 = vpack.c.b16 %v6946, %v6945
  %v7093 = vpack.c.b16 %v6948, %v6947
  %v7094 = vpack.c.b16 %v6950, %v6949
  %v7095 = vpack.c.b16 %v6952, %v6951
  %v7096 = vpack.c.b16 %v6954, %v6953
  %v7097 = vpack.c.b16 %v6956, %v6955
  %v7098 = vpack.c.b16 %v6958, %v6957
  %v7099 = vpack.c.b16 %v6960, %v6959
  %v7100 = vpack.c.b16 %v6962, %v6961
  %v7101 = vpack.c.b16 %v6964, %v6963
  %v7102 = vpack.c.b16 %v6966, %v6965
  %v7103 = vpack.c.b16 %v6968, %v6967
  %v7104 = vpack.c.b16 %v6970, %v6969
  %v7105 = vpack.c.b16 %v6972, %v6971
  %v7106 = vpack.c.b16 %v6974, %v6973
  %v7107 = vpack.c.b16 %v6976, %v6975
  %v7108 = vpack.c.b16 %v6978, %v6977
  %v7109 = vpack.c.b16 %v6980, %v6979
  %v7110 = vpack.c.b16 %v6982, %v6981
  %7239 = vmatprep.subr.bf16.mxu0 0
  %7240 = vmatpush1.bf16.msra.mxu0 %v6983
  %7241 = vmatprep.subr.bf16.mxu0 0
  %7242 = vmatpush1.bf16.msra.mxu0 %v6984
  %7243 = vmatprep.subr.bf16.mxu0 0
  %7244 = vmatpush1.bf16.msra.mxu0 %v6985
  %7245 = vmatprep.subr.bf16.mxu0 0
  %7246 = vmatpush1.bf16.msra.mxu0 %v6986
  %7247 = vmatprep.subr.bf16.mxu0 0
  %7248 = vmatpush1.bf16.msra.mxu0 %v6987
  %7249 = vmatprep.subr.bf16.mxu0 0
  %7250 = vmatpush1.bf16.msra.mxu0 %v6988
  %7251 = vmatprep.subr.bf16.mxu0 0
  %7252 = vmatpush1.bf16.msra.mxu0 %v6989
  %7253 = vmatprep.subr.bf16.mxu0 0
  %7254 = vmatpush1.bf16.msra.mxu0 %v6990
  %7255 = vmatprep.subr.bf16.mxu0 0
  %7256 = vmatpush1.bf16.msra.mxu0 %v6991
  %7257 = vmatprep.subr.bf16.mxu0 0
  %7258 = vmatpush1.bf16.msra.mxu0 %v6992
  %7259 = vmatprep.subr.bf16.mxu0 0
  %7260 = vmatpush1.bf16.msra.mxu0 %v6993
  %7261 = vmatprep.subr.bf16.mxu0 0
  %7262 = vmatpush1.bf16.msra.mxu0 %v6994
  %7263 = vmatprep.subr.bf16.mxu0 0
  %7264 = vmatpush1.bf16.msra.mxu0 %v6995
  %7265 = vmatprep.subr.bf16.mxu0 0
  %7266 = vmatpush1.bf16.msra.mxu0 %v6996
  %7267 = vmatprep.subr.bf16.mxu0 0
  %7268 = vmatpush1.bf16.msra.mxu0 %v6997
  %7269 = vmatprep.subr.bf16.mxu0 0
  %7270 = vmatpush1.bf16.msra.mxu0 %v6998
  %7271 = vmatprep.mubr.bf16.mxu0 %v6145
  %7272 = vmatmul.mubr.bf16.gmra.mrb[0].mxu0 %v6144
  %v7273 = vpop.f32.mrb[0].mxu0
  %v7274 = vadd.f32 %v6469, %v7273
  %v7275 = vpop.f32.mrb[0].mxu0
  %v7276 = vpop.f32.mrb[0].mxu0
  %v7277 = vadd.f32 %v6469, %v7276
  %v7278 = vpop.f32.mrb[0].mxu0
  %7279 = vmatprep.mubr.bf16.mxu0 %v6161
  %7280 = vmatmul.mubr.bf16.gmra.mrb[0].mxu0 %v6160
  %v7281 = vpop.f32.mrb[0].mxu0
  %v7282 = vadd.f32 %v6469, %v7281
  %v7283 = vpop.f32.mrb[0].mxu0
  %v7284 = vpop.f32.mrb[0].mxu0
  %v7285 = vadd.f32 %v6469, %v7284
  %v7286 = vpop.f32.mrb[0].mxu0
  %7287 = vmatprep.mubr.bf16.mxu0 %v6177
  %7288 = vmatmul.mubr.bf16.gmra.mrb[0].mxu0 %v6176
  %v7289 = vpop.f32.mrb[0].mxu0
  %v7290 = vadd.f32 %v6469, %v7289
  %v7291 = vpop.f32.mrb[0].mxu0
  %v7292 = vpop.f32.mrb[0].mxu0
  %v7293 = vadd.f32 %v6469, %v7292
  %v7294 = vpop.f32.mrb[0].mxu0
  %7295 = vmatprep.mubr.bf16.mxu0 %v6193
  %7296 = vmatmul.mubr.bf16.gmra.mrb[0].mxu0 %v6192
  %v7297 = vpop.f32.mrb[0].mxu0
  %v7298 = vadd.f32 %v6469, %v7297
  %v7299 = vpop.f32.mrb[0].mxu0
  %v7300 = vpop.f32.mrb[0].mxu0
  %v7301 = vpop.f32.mrb[0].mxu0
  %7302 = vdwg.mxu0
  %7303 = vmatprep.subr.bf16.mxu0 0
  %7304 = vmatpush1.bf16.msra.mxu0 %v6999
  %7305 = vmatprep.subr.bf16.mxu0 0
  %7306 = vmatpush1.bf16.msra.mxu0 %v7000
  %7307 = vmatprep.subr.bf16.mxu0 0
  %7308 = vmatpush1.bf16.msra.mxu0 %v7001
  %7309 = vmatprep.subr.bf16.mxu0 0
  %7310 = vmatpush1.bf16.msra.mxu0 %v7002
  %7311 = vmatprep.subr.bf16.mxu0 0
  %7312 = vmatpush1.bf16.msra.mxu0 %v7003
  %7313 = vmatprep.subr.bf16.mxu0 0
  %7314 = vmatpush1.bf16.msra.mxu0 %v7004
  %7315 = vmatprep.subr.bf16.mxu0 0
  %7316 = vmatpush1.bf16.msra.mxu0 %v7005
  %7317 = vmatprep.subr.bf16.mxu0 0
  %7318 = vmatpush1.bf16.msra.mxu0 %v7006
  %7319 = vmatprep.subr.bf16.mxu0 0
  %7320 = vmatpush1.bf16.msra.mxu0 %v7007
  %7321 = vmatprep.subr.bf16.mxu0 0
  %7322 = vmatpush1.bf16.msra.mxu0 %v7008
  %7323 = vmatprep.subr.bf16.mxu0 0
  %7324 = vmatpush1.bf16.msra.mxu0 %v7009
  %7325 = vmatprep.subr.bf16.mxu0 0
  %7326 = vmatpush1.bf16.msra.mxu0 %v7010
  %7327 = vmatprep.subr.bf16.mxu0 0
  %7328 = vmatpush1.bf16.msra.mxu0 %v7011
  %7329 = vmatprep.subr.bf16.mxu0 0
  %7330 = vmatpush1.bf16.msra.mxu0 %v7012
  %7331 = vmatprep.subr.bf16.mxu0 0
  %7332 = vmatpush1.bf16.msra.mxu0 %v7013
  %7333 = vmatprep.subr.bf16.mxu0 0
  %7334 = vmatpush1.bf16.msra.mxu0 %v7014
  %7335 = vmatprep.mubr.bf16.mxu0 %v6147
  %7336 = vmatmul.mubr.bf16.gmra.mrb[0].mxu0 %v6146
  %v7337 = vpop.f32.mrb[0].mxu0
  %v7338 = vadd.f32 %v7274, %v7337
  %v7339 = vpop.f32.mrb[0].mxu0
  %v7340 = vpop.f32.mrb[0].mxu0
  %v7341 = vadd.f32 %v7277, %v7340
  %v7342 = vpop.f32.mrb[0].mxu0
  %7343 = vmatprep.mubr.bf16.mxu0 %v6163
  %7344 = vmatmul.mubr.bf16.gmra.mrb[0].mxu0 %v6162
  %v7345 = vpop.f32.mrb[0].mxu0
  %v7346 = vadd.f32 %v7282, %v7345
  %v7347 = vpop.f32.mrb[0].mxu0
  %v7348 = vpop.f32.mrb[0].mxu0
  %v7349 = vadd.f32 %v7285, %v7348
  %v7350 = vpop.f32.mrb[0].mxu0
  %7351 = vmatprep.mubr.bf16.mxu0 %v6179
  %7352 = vmatmul.mubr.bf16.gmra.mrb[0].mxu0 %v6178
  %v7353 = vpop.f32.mrb[0].mxu0
  %v7354 = vadd.f32 %v7290, %v7353
  %v7355 = vpop.f32.mrb[0].mxu0
  %v7356 = vpop.f32.mrb[0].mxu0
  %v7357 = vadd.f32 %v7293, %v7356
  %v7358 = vpop.f32.mrb[0].mxu0
  %7359 = vmatprep.mubr.bf16.mxu0 %v6195
  %7360 = vmatmul.mubr.bf16.gmra.mrb[0].mxu0 %v6194
  %v7361 = vpop.f32.mrb[0].mxu0
  %v7362 = vadd.f32 %v7298, %v7361
  %v7363 = vpop.f32.mrb[0].mxu0
  %v7364 = vpop.f32.mrb[0].mxu0
  %v7365 = vpop.f32.mrb[0].mxu0
  %7366 = vdwg.mxu0
  %7367 = vmatprep.subr.bf16.mxu0 0
  %7368 = vmatpush1.bf16.msra.mxu0 %v7015
  %7369 = vmatprep.subr.bf16.mxu0 0
  %7370 = vmatpush1.bf16.msra.mxu0 %v7016
  %7371 = vmatprep.subr.bf16.mxu0 0
  %7372 = vmatpush1.bf16.msra.mxu0 %v7017
  %7373 = vmatprep.subr.bf16.mxu0 0
  %7374 = vmatpush1.bf16.msra.mxu0 %v7018
  %7375 = vmatprep.subr.bf16.mxu0 0
  %7376 = vmatpush1.bf16.msra.mxu0 %v7019
  %7377 = vmatprep.subr.bf16.mxu0 0
  %7378 = vmatpush1.bf16.msra.mxu0 %v7020
  %7379 = vmatprep.subr.bf16.mxu0 0
  %7380 = vmatpush1.bf16.msra.mxu0 %v7021
  %7381 = vmatprep.subr.bf16.mxu0 0
  %7382 = vmatpush1.bf16.msra.mxu0 %v7022
  %7383 = vmatprep.subr.bf16.mxu0 0
  %7384 = vmatpush1.bf16.msra.mxu0 %v7023
  %7385 = vmatprep.subr.bf16.mxu0 0
  %7386 = vmatpush1.bf16.msra.mxu0 %v7024
  %7387 = vmatprep.subr.bf16.mxu0 0
  %7388 = vmatpush1.bf16.msra.mxu0 %v7025
  %7389 = vmatprep.subr.bf16.mxu0 0
  %7390 = vmatpush1.bf16.msra.mxu0 %v7026
  %7391 = vmatprep.subr.bf16.mxu0 0
  %7392 = vmatpush1.bf16.msra.mxu0 %v7027
  %7393 = vmatprep.subr.bf16.mxu0 0
  %7394 = vmatpush1.bf16.msra.mxu0 %v7028
  %7395 = vmatprep.subr.bf16.mxu0 0
  %7396 = vmatpush1.bf16.msra.mxu0 %v7029
  %7397 = vmatprep.subr.bf16.mxu0 0
  %7398 = vmatpush1.bf16.msra.mxu0 %v7030
  %7399 = vmatprep.mubr.bf16.mxu0 %v6149
  %7400 = vmatmul.mubr.bf16.gmra.mrb[0].mxu0 %v6148
  %v7401 = vpop.f32.mrb[0].mxu0
  %v7402 = vadd.f32 %v7338, %v7401
  %v7403 = vpop.f32.mrb[0].mxu0
  %v7404 = vpop.f32.mrb[0].mxu0
  %v7405 = vadd.f32 %v7341, %v7404
  %v7406 = vpop.f32.mrb[0].mxu0
  %7407 = vmatprep.mubr.bf16.mxu0 %v6165
  %7408 = vmatmul.mubr.bf16.gmra.mrb[0].mxu0 %v6164
  %v7409 = vpop.f32.mrb[0].mxu0
  %v7410 = vadd.f32 %v7346, %v7409
  %v7411 = vpop.f32.mrb[0].mxu0
  %v7412 = vpop.f32.mrb[0].mxu0
  %v7413 = vadd.f32 %v7349, %v7412
  %v7414 = vpop.f32.mrb[0].mxu0
  %7415 = vmatprep.mubr.bf16.mxu0 %v6181
  %7416 = vmatmul.mubr.bf16.gmra.mrb[0].mxu0 %v6180
  %v7417 = vpop.f32.mrb[0].mxu0
  %v7418 = vadd.f32 %v7354, %v7417
  %v7419 = vpop.f32.mrb[0].mxu0
  %v7420 = vpop.f32.mrb[0].mxu0
  %v7421 = vadd.f32 %v7357, %v7420
  %v7422 = vpop.f32.mrb[0].mxu0
  %7423 = vmatprep.mubr.bf16.mxu0 %v6197
  %7424 = vmatmul.mubr.bf16.gmra.mrb[0].mxu0 %v6196
  %v7425 = vpop.f32.mrb[0].mxu0
  %v7426 = vadd.f32 %v7362, %v7425
  %v7427 = vpop.f32.mrb[0].mxu0
  %v7428 = vpop.f32.mrb[0].mxu0
  %v7429 = vpop.f32.mrb[0].mxu0
  %7430 = vdwg.mxu0
  %7431 = vmatprep.subr.bf16.mxu0 0
  %7432 = vmatpush1.bf16.msra.mxu0 %v7031
  %7433 = vmatprep.subr.bf16.mxu0 0
  %7434 = vmatpush1.bf16.msra.mxu0 %v7032
  %7435 = vmatprep.subr.bf16.mxu0 0
  %7436 = vmatpush1.bf16.msra.mxu0 %v7033
  %7437 = vmatprep.subr.bf16.mxu0 0
  %7438 = vmatpush1.bf16.msra.mxu0 %v7034
  %7439 = vmatprep.subr.bf16.mxu0 0
  %7440 = vmatpush1.bf16.msra.mxu0 %v7035
  %7441 = vmatprep.subr.bf16.mxu0 0
  %7442 = vmatpush1.bf16.msra.mxu0 %v7036
  %7443 = vmatprep.subr.bf16.mxu0 0
  %7444 = vmatpush1.bf16.msra.mxu0 %v7037
  %7445 = vmatprep.subr.bf16.mxu0 0
  %7446 = vmatpush1.bf16.msra.mxu0 %v7038
  %7447 = vmatprep.subr.bf16.mxu0 0
  %7448 = vmatpush1.bf16.msra.mxu0 %v7039
  %7449 = vmatprep.subr.bf16.mxu0 0
  %7450 = vmatpush1.bf16.msra.mxu0 %v7040
  %7451 = vmatprep.subr.bf16.mxu0 0
  %7452 = vmatpush1.bf16.msra.mxu0 %v7041
  %7453 = vmatprep.subr.bf16.mxu0 0
  %7454 = vmatpush1.bf16.msra.mxu0 %v7042
  %7455 = vmatprep.subr.bf16.mxu0 0
  %7456 = vmatpush1.bf16.msra.mxu0 %v7043
  %7457 = vmatprep.subr.bf16.mxu0 0
  %7458 = vmatpush1.bf16.msra.mxu0 %v7044
  %7459 = vmatprep.subr.bf16.mxu0 0
  %7460 = vmatpush1.bf16.msra.mxu0 %v7045
  %7461 = vmatprep.subr.bf16.mxu0 0
  %7462 = vmatpush1.bf16.msra.mxu0 %v7046
  %7463 = vmatprep.mubr.bf16.mxu0 %v6151
  %7464 = vmatmul.mubr.bf16.gmra.mrb[0].mxu0 %v6150
  %v7465 = vpop.f32.mrb[0].mxu0
  %v7466 = vadd.f32 %v7402, %v7465
  %v7467 = vpop.f32.mrb[0].mxu0
  %v7468 = vpop.f32.mrb[0].mxu0
  %v7469 = vadd.f32 %v7405, %v7468
  %v7470 = vpop.f32.mrb[0].mxu0
  %7471 = vmatprep.mubr.bf16.mxu0 %v6167
  %7472 = vmatmul.mubr.bf16.gmra.mrb[0].mxu0 %v6166
  %v7473 = vpop.f32.mrb[0].mxu0
  %v7474 = vadd.f32 %v7410, %v7473
  %v7475 = vpop.f32.mrb[0].mxu0
  %v7476 = vpop.f32.mrb[0].mxu0
  %v7477 = vadd.f32 %v7413, %v7476
  %v7478 = vpop.f32.mrb[0].mxu0
  %7479 = vmatprep.mubr.bf16.mxu0 %v6183
  %7480 = vmatmul.mubr.bf16.gmra.mrb[0].mxu0 %v6182
  %v7481 = vpop.f32.mrb[0].mxu0
  %v7482 = vadd.f32 %v7418, %v7481
  %v7483 = vpop.f32.mrb[0].mxu0
  %v7484 = vpop.f32.mrb[0].mxu0
  %v7485 = vadd.f32 %v7421, %v7484
  %v7486 = vpop.f32.mrb[0].mxu0
  %7487 = vmatprep.mubr.bf16.mxu0 %v6199
  %7488 = vmatmul.mubr.bf16.gmra.mrb[0].mxu0 %v6198
  %v7489 = vpop.f32.mrb[0].mxu0
  %v7490 = vadd.f32 %v7426, %v7489
  %v7491 = vpop.f32.mrb[0].mxu0
  %v7492 = vpop.f32.mrb[0].mxu0
  %v7493 = vpop.f32.mrb[0].mxu0
  %7494 = vdwg.mxu0
  %7495 = vmatprep.subr.bf16.mxu0 0
  %7496 = vmatpush1.bf16.msra.mxu0 %v7047
  %7497 = vmatprep.subr.bf16.mxu0 0
  %7498 = vmatpush1.bf16.msra.mxu0 %v7048
  %7499 = vmatprep.subr.bf16.mxu0 0
  %7500 = vmatpush1.bf16.msra.mxu0 %v7049
  %7501 = vmatprep.subr.bf16.mxu0 0
  %7502 = vmatpush1.bf16.msra.mxu0 %v7050
  %7503 = vmatprep.subr.bf16.mxu0 0
  %7504 = vmatpush1.bf16.msra.mxu0 %v7051
  %7505 = vmatprep.subr.bf16.mxu0 0
  %7506 = vmatpush1.bf16.msra.mxu0 %v7052
  %7507 = vmatprep.subr.bf16.mxu0 0
  %7508 = vmatpush1.bf16.msra.mxu0 %v7053
  %7509 = vmatprep.subr.bf16.mxu0 0
  %7510 = vmatpush1.bf16.msra.mxu0 %v7054
  %7511 = vmatprep.subr.bf16.mxu0 0
  %7512 = vmatpush1.bf16.msra.mxu0 %v7055
  %7513 = vmatprep.subr.bf16.mxu0 0
  %7514 = vmatpush1.bf16.msra.mxu0 %v7056
  %7515 = vmatprep.subr.bf16.mxu0 0
  %7516 = vmatpush1.bf16.msra.mxu0 %v7057
  %7517 = vmatprep.subr.bf16.mxu0 0
  %7518 = vmatpush1.bf16.msra.mxu0 %v7058
  %7519 = vmatprep.subr.bf16.mxu0 0
  %7520 = vmatpush1.bf16.msra.mxu0 %v7059
  %7521 = vmatprep.subr.bf16.mxu0 0
  %7522 = vmatpush1.bf16.msra.mxu0 %v7060
  %7523 = vmatprep.subr.bf16.mxu0 0
  %7524 = vmatpush1.bf16.msra.mxu0 %v7061
  %7525 = vmatprep.subr.bf16.mxu0 0
  %7526 = vmatpush1.bf16.msra.mxu0 %v7062
  %7527 = vmatprep.mubr.bf16.mxu0 %v6153
  %7528 = vmatmul.mubr.bf16.gmra.mrb[0].mxu0 %v6152
  %v7529 = vpop.f32.mrb[0].mxu0
  %v7530 = vadd.f32 %v7466, %v7529
  %v7531 = vpop.f32.mrb[0].mxu0
  %v7532 = vpop.f32.mrb[0].mxu0
  %v7533 = vadd.f32 %v7469, %v7532
  %v7534 = vpop.f32.mrb[0].mxu0
  %7535 = vmatprep.mubr.bf16.mxu0 %v6169
  %7536 = vmatmul.mubr.bf16.gmra.mrb[0].mxu0 %v6168
  %v7537 = vpop.f32.mrb[0].mxu0
  %v7538 = vadd.f32 %v7474, %v7537
  %v7539 = vpop.f32.mrb[0].mxu0
  %v7540 = vpop.f32.mrb[0].mxu0
  %v7541 = vadd.f32 %v7477, %v7540
  %v7542 = vpop.f32.mrb[0].mxu0
  %7543 = vmatprep.mubr.bf16.mxu0 %v6185
  %7544 = vmatmul.mubr.bf16.gmra.mrb[0].mxu0 %v6184
  %v7545 = vpop.f32.mrb[0].mxu0
  %v7546 = vadd.f32 %v7482, %v7545
  %v7547 = vpop.f32.mrb[0].mxu0
  %v7548 = vpop.f32.mrb[0].mxu0
  %v7549 = vadd.f32 %v7485, %v7548
  %v7550 = vpop.f32.mrb[0].mxu0
  %7551 = vmatprep.mubr.bf16.mxu0 %v6201
  %7552 = vmatmul.mubr.bf16.gmra.mrb[0].mxu0 %v6200
  %v7553 = vpop.f32.mrb[0].mxu0
  %v7554 = vadd.f32 %v7490, %v7553
  %v7555 = vpop.f32.mrb[0].mxu0
  %v7556 = vpop.f32.mrb[0].mxu0
  %v7557 = vpop.f32.mrb[0].mxu0
  %7558 = vdwg.mxu0
  %7559 = vmatprep.subr.bf16.mxu0 0
  %7560 = vmatpush1.bf16.msra.mxu0 %v7063
  %7561 = vmatprep.subr.bf16.mxu0 0
  %7562 = vmatpush1.bf16.msra.mxu0 %v7064
  %7563 = vmatprep.subr.bf16.mxu0 0
  %7564 = vmatpush1.bf16.msra.mxu0 %v7065
  %7565 = vmatprep.subr.bf16.mxu0 0
  %7566 = vmatpush1.bf16.msra.mxu0 %v7066
  %7567 = vmatprep.subr.bf16.mxu0 0
  %7568 = vmatpush1.bf16.msra.mxu0 %v7067
  %7569 = vmatprep.subr.bf16.mxu0 0
  %7570 = vmatpush1.bf16.msra.mxu0 %v7068
  %7571 = vmatprep.subr.bf16.mxu0 0
  %7572 = vmatpush1.bf16.msra.mxu0 %v7069
  %7573 = vmatprep.subr.bf16.mxu0 0
  %7574 = vmatpush1.bf16.msra.mxu0 %v7070
  %7575 = vmatprep.subr.bf16.mxu0 0
  %7576 = vmatpush1.bf16.msra.mxu0 %v7071
  %7577 = vmatprep.subr.bf16.mxu0 0
  %7578 = vmatpush1.bf16.msra.mxu0 %v7072
  %7579 = vmatprep.subr.bf16.mxu0 0
  %7580 = vmatpush1.bf16.msra.mxu0 %v7073
  %7581 = vmatprep.subr.bf16.mxu0 0
  %7582 = vmatpush1.bf16.msra.mxu0 %v7074
  %7583 = vmatprep.subr.bf16.mxu0 0
  %7584 = vmatpush1.bf16.msra.mxu0 %v7075
  %7585 = vmatprep.subr.bf16.mxu0 0
  %7586 = vmatpush1.bf16.msra.mxu0 %v7076
  %7587 = vmatprep.subr.bf16.mxu0 0
  %7588 = vmatpush1.bf16.msra.mxu0 %v7077
  %7589 = vmatprep.subr.bf16.mxu0 0
  %7590 = vmatpush1.bf16.msra.mxu0 %v7078
  %7591 = vmatprep.mubr.bf16.mxu0 %v6155
  %7592 = vmatmul.mubr.bf16.gmra.mrb[0].mxu0 %v6154
  %v7593 = vpop.f32.mrb[0].mxu0
  %v7594 = vadd.f32 %v7530, %v7593
  %v7595 = vpop.f32.mrb[0].mxu0
  %v7596 = vpop.f32.mrb[0].mxu0
  %v7597 = vadd.f32 %v7533, %v7596
  %v7598 = vpop.f32.mrb[0].mxu0
  %7599 = vmatprep.mubr.bf16.mxu0 %v6171
  %7600 = vmatmul.mubr.bf16.gmra.mrb[0].mxu0 %v6170
  %v7601 = vpop.f32.mrb[0].mxu0
  %v7602 = vadd.f32 %v7538, %v7601
  %v7603 = vpop.f32.mrb[0].mxu0
  %v7604 = vpop.f32.mrb[0].mxu0
  %v7605 = vadd.f32 %v7541, %v7604
  %v7606 = vpop.f32.mrb[0].mxu0
  %7607 = vmatprep.mubr.bf16.mxu0 %v6187
  %7608 = vmatmul.mubr.bf16.gmra.mrb[0].mxu0 %v6186
  %v7609 = vpop.f32.mrb[0].mxu0
  %v7610 = vadd.f32 %v7546, %v7609
  %v7611 = vpop.f32.mrb[0].mxu0
  %v7612 = vpop.f32.mrb[0].mxu0
  %v7613 = vadd.f32 %v7549, %v7612
  %v7614 = vpop.f32.mrb[0].mxu0
  %7615 = vmatprep.mubr.bf16.mxu0 %v6203
  %7616 = vmatmul.mubr.bf16.gmra.mrb[0].mxu0 %v6202
  %v7617 = vpop.f32.mrb[0].mxu0
  %v7618 = vadd.f32 %v7554, %v7617
  %v7619 = vpop.f32.mrb[0].mxu0
  %v7620 = vpop.f32.mrb[0].mxu0
  %v7621 = vpop.f32.mrb[0].mxu0
  %7622 = vdwg.mxu0
  %7623 = vmatprep.subr.bf16.mxu0 0
  %7624 = vmatpush1.bf16.msra.mxu0 %v7079
  %7625 = vmatprep.subr.bf16.mxu0 0
  %7626 = vmatpush1.bf16.msra.mxu0 %v7080
  %7627 = vmatprep.subr.bf16.mxu0 0
  %7628 = vmatpush1.bf16.msra.mxu0 %v7081
  %7629 = vmatprep.subr.bf16.mxu0 0
  %7630 = vmatpush1.bf16.msra.mxu0 %v7082
  %7631 = vmatprep.subr.bf16.mxu0 0
  %7632 = vmatpush1.bf16.msra.mxu0 %v7083
  %7633 = vmatprep.subr.bf16.mxu0 0
  %7634 = vmatpush1.bf16.msra.mxu0 %v7084
  %7635 = vmatprep.subr.bf16.mxu0 0
  %7636 = vmatpush1.bf16.msra.mxu0 %v7085
  %7637 = vmatprep.subr.bf16.mxu0 0
  %7638 = vmatpush1.bf16.msra.mxu0 %v7086
  %7639 = vmatprep.subr.bf16.mxu0 0
  %7640 = vmatpush1.bf16.msra.mxu0 %v7087
  %7641 = vmatprep.subr.bf16.mxu0 0
  %7642 = vmatpush1.bf16.msra.mxu0 %v7088
  %7643 = vmatprep.subr.bf16.mxu0 0
  %7644 = vmatpush1.bf16.msra.mxu0 %v7089
  %7645 = vmatprep.subr.bf16.mxu0 0
  %7646 = vmatpush1.bf16.msra.mxu0 %v7090
  %7647 = vmatprep.subr.bf16.mxu0 0
  %7648 = vmatpush1.bf16.msra.mxu0 %v7091
  %7649 = vmatprep.subr.bf16.mxu0 0
  %7650 = vmatpush1.bf16.msra.mxu0 %v7092
  %7651 = vmatprep.subr.bf16.mxu0 0
  %7652 = vmatpush1.bf16.msra.mxu0 %v7093
  %7653 = vmatprep.subr.bf16.mxu0 0
  %7654 = vmatpush1.bf16.msra.mxu0 %v7094
  %7655 = vmatprep.mubr.bf16.mxu0 %v6157
  %7656 = vmatmul.mubr.bf16.gmra.mrb[0].mxu0 %v6156
  %v7657 = vpop.f32.mrb[0].mxu0
  %v7658 = vadd.f32 %v7594, %v7657
  %v7659 = vpop.f32.mrb[0].mxu0
  %v7660 = vpop.f32.mrb[0].mxu0
  %v7661 = vadd.f32 %v7597, %v7660
  %v7662 = vpop.f32.mrb[0].mxu0
  %7663 = vmatprep.mubr.bf16.mxu0 %v6173
  %7664 = vmatmul.mubr.bf16.gmra.mrb[0].mxu0 %v6172
  %v7665 = vpop.f32.mrb[0].mxu0
  %v7666 = vadd.f32 %v7602, %v7665
  %v7667 = vpop.f32.mrb[0].mxu0
  %v7668 = vpop.f32.mrb[0].mxu0
  %v7669 = vadd.f32 %v7605, %v7668
  %v7670 = vpop.f32.mrb[0].mxu0
  %7671 = vmatprep.mubr.bf16.mxu0 %v6189
  %7672 = vmatmul.mubr.bf16.gmra.mrb[0].mxu0 %v6188
  %v7673 = vpop.f32.mrb[0].mxu0
  %v7674 = vadd.f32 %v7610, %v7673
  %v7675 = vpop.f32.mrb[0].mxu0
  %v7676 = vpop.f32.mrb[0].mxu0
  %v7677 = vadd.f32 %v7613, %v7676
  %v7678 = vpop.f32.mrb[0].mxu0
  %7679 = vmatprep.mubr.bf16.mxu0 %v6205
  %7680 = vmatmul.mubr.bf16.gmra.mrb[0].mxu0 %v6204
  %v7681 = vpop.f32.mrb[0].mxu0
  %v7682 = vadd.f32 %v7618, %v7681
  %v7683 = vpop.f32.mrb[0].mxu0
  %v7684 = vpop.f32.mrb[0].mxu0
  %v7685 = vpop.f32.mrb[0].mxu0
  %7686 = vdwg.mxu0
  %7687 = vmatprep.subr.bf16.mxu0 0
  %7688 = vmatpush1.bf16.msra.mxu0 %v7095
  %7689 = vmatprep.subr.bf16.mxu0 0
  %7690 = vmatpush1.bf16.msra.mxu0 %v7096
  %7691 = vmatprep.subr.bf16.mxu0 0
  %7692 = vmatpush1.bf16.msra.mxu0 %v7097
  %7693 = vmatprep.subr.bf16.mxu0 0
  %7694 = vmatpush1.bf16.msra.mxu0 %v7098
  %7695 = vmatprep.subr.bf16.mxu0 0
  %7696 = vmatpush1.bf16.msra.mxu0 %v7099
  %7697 = vmatprep.subr.bf16.mxu0 0
  %7698 = vmatpush1.bf16.msra.mxu0 %v7100
  %7699 = vmatprep.subr.bf16.mxu0 0
  %7700 = vmatpush1.bf16.msra.mxu0 %v7101
  %7701 = vmatprep.subr.bf16.mxu0 0
  %7702 = vmatpush1.bf16.msra.mxu0 %v7102
  %7703 = vmatprep.subr.bf16.mxu0 0
  %7704 = vmatpush1.bf16.msra.mxu0 %v7103
  %7705 = vmatprep.subr.bf16.mxu0 0
  %7706 = vmatpush1.bf16.msra.mxu0 %v7104
  %7707 = vmatprep.subr.bf16.mxu0 0
  %7708 = vmatpush1.bf16.msra.mxu0 %v7105
  %7709 = vmatprep.subr.bf16.mxu0 0
  %7710 = vmatpush1.bf16.msra.mxu0 %v7106
  %7711 = vmatprep.subr.bf16.mxu0 0
  %7712 = vmatpush1.bf16.msra.mxu0 %v7107
  %7713 = vmatprep.subr.bf16.mxu0 0
  %7714 = vmatpush1.bf16.msra.mxu0 %v7108
  %7715 = vmatprep.subr.bf16.mxu0 0
  %7716 = vmatpush1.bf16.msra.mxu0 %v7109
  %7717 = vmatprep.subr.bf16.mxu0 0
  %7718 = vmatpush1.bf16.msra.mxu0 %v7110
  %7719 = vmatprep.mubr.bf16.mxu0 %v6159
  %7720 = vmatmul.mubr.bf16.gmra.mrb[0].mxu0 %v6158
  %v7721 = vpop.f32.mrb[0].mxu0
  %v7722 = vadd.f32 %v7658, %v7721
  %v7723 = vpop.f32.mrb[0].mxu0
  %v7724 = vpop.f32.mrb[0].mxu0
  %v7725 = vadd.f32 %v7661, %v7724
  %v7726 = vpop.f32.mrb[0].mxu0
  %7727 = vmatprep.mubr.bf16.mxu0 %v6175
  %7728 = vmatmul.mubr.bf16.gmra.mrb[0].mxu0 %v6174
  %v7729 = vpop.f32.mrb[0].mxu0
  %v7730 = vadd.f32 %v7666, %v7729
  %v7731 = vpop.f32.mrb[0].mxu0
  %v7732 = vpop.f32.mrb[0].mxu0
  %v7733 = vadd.f32 %v7669, %v7732
  %v7734 = vpop.f32.mrb[0].mxu0
  %7735 = vmatprep.mubr.bf16.mxu0 %v6191
  %7736 = vmatmul.mubr.bf16.gmra.mrb[0].mxu0 %v6190
  %v7737 = vpop.f32.mrb[0].mxu0
  %v7738 = vadd.f32 %v7674, %v7737
  %v7739 = vpop.f32.mrb[0].mxu0
  %v7740 = vpop.f32.mrb[0].mxu0
  %v7741 = vadd.f32 %v7677, %v7740
  %v7742 = vpop.f32.mrb[0].mxu0
  %7743 = vmatprep.mubr.bf16.mxu0 %v6207
  %7744 = vmatmul.mubr.bf16.gmra.mrb[0].mxu0 %v6206
  %v7745 = vpop.f32.mrb[0].mxu0
  %v7746 = vadd.f32 %v7682, %v7745
  %v7747 = vpop.f32.mrb[0].mxu0
  %v7748 = vpop.f32.mrb[0].mxu0
  %v7749 = vpop.f32.mrb[0].mxu0
  %7750 = vdwg.mxu0
  %v7751 = vadd.f32 %v5165, %v7722
  %v7752 = vadd.f32 %v5166, %v7725
  %v7753 = vadd.f32 %v5167, %v7730
  %v7754 = vadd.f32 %v5168, %v7733
  %v7755 = vadd.f32 %v5169, %v7738
  %v7756 = vadd.f32 %v5170, %v7741
  %v7757 = vadd.f32 %v5171, %v7746
  %v7758 = vld [vmem:[%s6 + $0x15] sm:$0x1]
  %v7759 = vld [vmem:[%s6 + $0x16] sm:$0x1]
  %v7760 = vsel %vm88, %v7751, 0.0
  %7761 = vadd.xlane.f32.xlu0 %v7760
  %v7762 = vpop.xlane.xlu0 %7761
  %v7763 = vsel %vm88, %v7752, 0.0
  %7764 = vadd.xlane.f32.xlu0 %v7763
  %v7765 = vpop.xlane.xlu0 %7764
  %v7766 = vsel %vm88, %v7753, 0.0
  %7767 = vadd.xlane.f32.xlu0 %v7766
  %v7768 = vpop.xlane.xlu0 %7767
  %v7769 = vsel %vm88, %v7754, 0.0
  %7770 = vadd.xlane.f32.xlu0 %v7769
  %v7771 = vpop.xlane.xlu0 %7770
  %v7772 = vsel %vm88, %v7755, 0.0
  %7773 = vadd.xlane.f32.xlu0 %v7772
  %v7774 = vpop.xlane.xlu0 %7773
  %v7775 = vsel %vm88, %v7756, 0.0
  %7776 = vadd.xlane.f32.xlu0 %v7775
  %v7777 = vpop.xlane.xlu0 %7776
  %v7778 = vsel %vm88, %v7757, 0.0
  %7779 = vadd.xlane.f32.xlu0 %v7778
  %v7780 = vpop.xlane.xlu0 %7779
  %v7781 = vmul.f32 %v7762, %v5075
  %v7782 = vmul.f32 %v7765, %v5075
  %v7783 = vmul.f32 %v7768, %v5075
  %v7784 = vmul.f32 %v7771, %v5075
  %v7785 = vmul.f32 %v7774, %v5075
  %v7786 = vmul.f32 %v7777, %v5075
  %v7787 = vmul.f32 %v7780, %v5075
  %v7788 = vsub.f32 %v7751, %v7781
  %v7789 = vsub.f32 %v7752, %v7782
  %v7790 = vsub.f32 %v7753, %v7783
  %v7791 = vsub.f32 %v7754, %v7784
  %v7792 = vsub.f32 %v7755, %v7785
  %v7793 = vsub.f32 %v7756, %v7786
  %v7794 = vsub.f32 %v7757, %v7787
  %v7795 = vmul.f32 %v7788, %v7788
  %v7796 = vmul.f32 %v7789, %v7789
  %v7797 = vmul.f32 %v7790, %v7790
  %v7798 = vmul.f32 %v7791, %v7791
  %v7799 = vmul.f32 %v7792, %v7792
  %v7800 = vmul.f32 %v7793, %v7793
  %v7801 = vmul.f32 %v7794, %v7794
  %v7802 = vsel %vm88, %v7795, 0.0
  %7803 = vadd.xlane.f32.xlu0 %v7802
  %v7804 = vpop.xlane.xlu0 %7803
  %v7805 = vsel %vm88, %v7796, 0.0
  %7806 = vadd.xlane.f32.xlu0 %v7805
  %v7807 = vpop.xlane.xlu0 %7806
  %v7808 = vsel %vm88, %v7797, 0.0
  %7809 = vadd.xlane.f32.xlu0 %v7808
  %v7810 = vpop.xlane.xlu0 %7809
  %v7811 = vsel %vm88, %v7798, 0.0
  %7812 = vadd.xlane.f32.xlu0 %v7811
  %v7813 = vpop.xlane.xlu0 %7812
  %v7814 = vsel %vm88, %v7799, 0.0
  %7815 = vadd.xlane.f32.xlu0 %v7814
  %v7816 = vpop.xlane.xlu0 %7815
  %v7817 = vsel %vm88, %v7800, 0.0
  %7818 = vadd.xlane.f32.xlu0 %v7817
  %v7819 = vpop.xlane.xlu0 %7818
  %v7820 = vsel %vm88, %v7801, 0.0
  %7821 = vadd.xlane.f32.xlu0 %v7820
  %v7822 = vpop.xlane.xlu0 %7821
  %v7823 = vmul.f32 %v7804, %v5075
  %v7824 = vmul.f32 %v7807, %v5075
  %v7825 = vmul.f32 %v7810, %v5075
  %v7826 = vmul.f32 %v7813, %v5075
  %v7827 = vmul.f32 %v7816, %v5075
  %v7828 = vmul.f32 %v7819, %v5075
  %v7829 = vmul.f32 %v7822, %v5075
  %v7830 = vadd.f32 %v7823, 1e-05
  %v7831 = vadd.f32 %v7824, 1e-05
  %v7832 = vadd.f32 %v7825, 1e-05
  %v7833 = vadd.f32 %v7826, 1e-05
  %v7834 = vadd.f32 %v7827, 1e-05
  %v7835 = vadd.f32 %v7828, 1e-05
  %v7836 = vadd.f32 %v7829, 1e-05
  %v7837 = vrsqrt.pop %v7830
  %v7838 = vrsqrt.pop %v7831
  %v7839 = vrsqrt.pop %v7832
  %v7840 = vrsqrt.pop %v7833
  %v7841 = vrsqrt.pop %v7834
  %v7842 = vrsqrt.pop %v7835
  %v7843 = vrsqrt.pop %v7836
  %v7844 = vmul.f32 %v7788, %v7837
  %v7845 = vmul.f32 %v7789, %v7838
  %v7846 = vmul.f32 %v7790, %v7839
  %v7847 = vmul.f32 %v7791, %v7840
  %v7848 = vmul.f32 %v7792, %v7841
  %v7849 = vmul.f32 %v7793, %v7842
  %v7850 = vmul.f32 %v7794, %v7843
  %v7852 = vlaneseq
  %v7853 = vshrl.u32 %v7852, 7
  %v7854 = vsub.s32 0, %v7853
  %v7855 = vrot.slane %v7758, %v7854
  %v7857 = vmul.f32 %v7844, %v7855
  %v7858 = vmul.f32 %v7845, %v7855
  %v7859 = vmul.f32 %v7846, %v7855
  %v7860 = vmul.f32 %v7847, %v7855
  %v7861 = vmul.f32 %v7848, %v7855
  %v7862 = vmul.f32 %v7849, %v7855
  %v7863 = vmul.f32 %v7850, %v7855
  %v7865 = vlaneseq
  %v7866 = vshrl.u32 %v7865, 7
  %v7867 = vsub.s32 0, %v7866
  %v7868 = vrot.slane %v7759, %v7867
  %v7870 = vadd.f32 %v7857, %v7868
  %v7871 = vadd.f32 %v7858, %v7868
  %v7872 = vadd.f32 %v7859, %v7868
  %v7873 = vadd.f32 %v7860, %v7868
  %v7874 = vadd.f32 %v7861, %v7868
  %v7875 = vadd.f32 %v7862, %v7868
  %v7876 = vadd.f32 %v7863, %v7868
  %v7877 = vpack.c.bf16 %v7871, %v7870
  %v7878 = vld [vmem:[%s7] sm:$0xf]
  %v7879 = vld [vmem:[%s7 + $0x4] sm:$0xf]
  %v7880 = vld [vmem:[%s7 + $0x8] sm:$0xf]
  %v7881 = vld [vmem:[%s7 + $0xc] sm:$0xf]
  %v7882 = vld [vmem:[%s11] sm:$0x1]
  %v7884 = vlaneseq
  %v7885 = vshrl.u32 %v7884, 7
  %v7886 = vsub.s32 0, %v7885
  %v7887 = vrot.slane %v7882, %v7886
  %v7893 = vunpack.c.l.b16 %v7878
  %v7894 = vunpack.c.l.b16 %v7879
  %v7895 = vunpack.c.l.b16 %v7880
  %v7896 = vunpack.c.l.b16 %v7881
  %v7897 = vpack.c.b16 %v7894, %v7893
  %v7898 = vpack.c.b16 %v7896, %v7895
  %v7902 = vsel %vm88, %v7877, 0
  %7904 = vmatprep.subr.bf16.mxu0 0
  %7905 = vmatpush1.bf16.msra.mxu0 %v7897
  %7906 = vmatprep.subr.bf16.mxu0 0
  %7907 = vmatpush1.bf16.msra.mxu0 %v7898
  %7908 = vmatprep.subr.bf16.mxu0 0
  %7909 = vmatpush1.bf16.msra.mxu0 0
  %7910 = vmatprep.subr.bf16.mxu0 0
  %7911 = vmatpush1.bf16.msra.mxu0 0
  %7912 = vmatprep.subr.bf16.mxu0 0
  %7913 = vmatpush1.bf16.msra.mxu0 0
  %7914 = vmatprep.subr.bf16.mxu0 0
  %7915 = vmatpush1.bf16.msra.mxu0 0
  %7916 = vmatprep.subr.bf16.mxu0 0
  %7917 = vmatpush1.bf16.msra.mxu0 0
  %7918 = vmatprep.subr.bf16.mxu0 0
  %7919 = vmatpush1.bf16.msra.mxu0 0
  %7920 = vmatprep.subr.bf16.mxu0 0
  %7921 = vmatpush1.bf16.msra.mxu0 0
  %7922 = vmatprep.subr.bf16.mxu0 0
  %7923 = vmatpush1.bf16.msra.mxu0 0
  %7924 = vmatprep.subr.bf16.mxu0 0
  %7925 = vmatpush1.bf16.msra.mxu0 0
  %7926 = vmatprep.subr.bf16.mxu0 0
  %7927 = vmatpush1.bf16.msra.mxu0 0
  %7928 = vmatprep.subr.bf16.mxu0 0
  %7929 = vmatpush1.bf16.msra.mxu0 0
  %7930 = vmatprep.subr.bf16.mxu0 0
  %7931 = vmatpush1.bf16.msra.mxu0 0
  %7932 = vmatprep.subr.bf16.mxu0 0
  %7933 = vmatpush1.bf16.msra.mxu0 0
  %7934 = vmatprep.subr.bf16.mxu0 0
  %7935 = vmatpush1.bf16.msra.mxu0 0
  %7936 = vmatprep.mubr.bf16.mxu0 0
  %7937 = vmatmul.mubr.bf16.gmra.mrb[0].mxu0 %v7902
  %v7938 = vpop.f32.mrb[0].mxu0
  %v7939 = vadd.f32 %v7887, %v7938
  %v7940 = vpop.f32.mrb[0].mxu0
  %v7941 = vpop.f32.mrb[0].mxu0
  %v7942 = vadd.f32 %v7887, %v7941
  %v7943 = vpop.f32.mrb[0].mxu0
  %7944 = vdwg.mxu0
  %7946 = vrot.lane.b32.xlu0 %v7939, 96
  %v7947 = vpop.permute.xlu0 %7946
  %v7948 = vsel %vm168, %v7939, 0
  %v7950 = vsel %vm168, %v7947, 0
  %7952 = vmatprep.subr.mxu0 0.0
  %7953 = vmatpush1.xpose.msra.mxu0 %v7950
  %7954 = vmatprep.subr.mxu0 0.0
  %7955 = vmatpush1.xpose.msra.mxu0 0.0
  %7956 = vmatprep.subr.mxu0 0.0
  %7957 = vmatpush1.xpose.msra.mxu0 0.0
  %7958 = vmatprep.subr.mxu0 0.0
  %7959 = vmatpush1.xpose.msra.mxu0 0.0
  %7960 = vmatprep.subr.mxu0 0.0
  %7961 = vmatpush1.xpose.msra.mxu0 0.0
  %7962 = vmatprep.subr.mxu0 0.0
  %7963 = vmatpush1.xpose.msra.mxu0 0.0
  %7964 = vmatprep.subr.mxu0 0.0
  %7965 = vmatpush1.xpose.msra.mxu0 0.0
  %7966 = vmatprep.subr.mxu0 0.0
  %7967 = vmatpush1.xpose.msra.mxu0 0.0
  %7968 = vmatprep.subr.mxu0 0.0
  %7969 = vmatpush1.xpose.msra.mxu0 0.0
  %7970 = vmatprep.subr.mxu0 0.0
  %7971 = vmatpush1.xpose.msra.mxu0 0.0
  %7972 = vmatprep.subr.mxu0 0.0
  %7973 = vmatpush1.xpose.msra.mxu0 0.0
  %7974 = vmatprep.subr.mxu0 0.0
  %7975 = vmatpush1.xpose.msra.mxu0 0.0
  %7976 = vmatprep.subr.mxu0 0.0
  %7977 = vmatpush1.xpose.msra.mxu0 0.0
  %7978 = vmatprep.subr.mxu0 0.0
  %7979 = vmatpush1.xpose.msra.mxu0 0.0
  %7980 = vmatprep.subr.mxu0 0.0
  %7981 = vmatpush1.xpose.msra.mxu0 0.0
  %7982 = vmatprep.subr.mxu0 0.0
  %7983 = vmatpush1.xpose.msra.mxu0 0.0
  %7984 = vmatprep.subr.mxu0 0.0
  %7985 = vmatpush1.xpose.msra.mxu0 0.0
  %7986 = vmatprep.subr.mxu0 0.0
  %7987 = vmatpush1.xpose.msra.mxu0 0.0
  %7988 = vmatprep.subr.mxu0 0.0
  %7989 = vmatpush1.xpose.msra.mxu0 0.0
  %7990 = vmatprep.subr.mxu0 0.0
  %7991 = vmatpush1.xpose.msra.mxu0 0.0
  %7992 = vmatprep.subr.mxu0 0.0
  %7993 = vmatpush1.xpose.msra.mxu0 0.0
  %7994 = vmatprep.subr.mxu0 0.0
  %7995 = vmatpush1.xpose.msra.mxu0 0.0
  %7996 = vmatprep.subr.mxu0 0.0
  %7997 = vmatpush1.xpose.msra.mxu0 0.0
  %7998 = vmatprep.subr.mxu0 0.0
  %7999 = vmatpush1.xpose.msra.mxu0 0.0
  %8000 = vmatprep.subr.mxu0 0.0
  %8001 = vmatpush1.xpose.msra.mxu0 0.0
  %8002 = vmatprep.subr.mxu0 0.0
  %8003 = vmatpush1.xpose.msra.mxu0 0.0
  %8004 = vmatprep.subr.mxu0 0.0
  %8005 = vmatpush1.xpose.msra.mxu0 0.0
  %8006 = vmatprep.subr.mxu0 0.0
  %8007 = vmatpush1.xpose.msra.mxu0 0.0
  %8008 = vmatprep.subr.mxu0 0.0
  %8009 = vmatpush1.xpose.msra.mxu0 0.0
  %8010 = vmatprep.subr.mxu0 0.0
  %8011 = vmatpush1.xpose.msra.mxu0 0.0
  %8012 = vmatprep.subr.mxu0 0.0
  %8013 = vmatpush1.xpose.msra.mxu0 0.0
  %8014 = vmatprep.subr.mxu0 0.0
  %8015 = vmatpush1.xpose.msra.mxu0 0.0
  %8016 = vmatprep.mubr.f32.mxu0 0.0
  %8017 = vmatmul.mubr.f32.gmra.mrb[0].mxu0 %v7948
  %v8018 = vpop.f32.mrb[0].mxu0
  %v8019 = vadd.f32 0.0, %v8018
  %v8020 = vpop.f32.mrb[0].mxu0
  %8021 = vdwg.mxu0
  %8023 = vrot.lane.b32.xlu0 %v7942, 96
  %v8024 = vpop.permute.xlu0 %8023
  %v8025 = vsel %vm168, %v7942, 0
  %v8027 = vsel %vm168, %v8024, 0
  %8029 = vmatprep.subr.mxu0 0.0
  %8030 = vmatpush1.xpose.msra.mxu0 %v8027
  %8031 = vmatprep.subr.mxu0 0.0
  %8032 = vmatpush1.xpose.msra.mxu0 0.0
  %8033 = vmatprep.subr.mxu0 0.0
  %8034 = vmatpush1.xpose.msra.mxu0 0.0
  %8035 = vmatprep.subr.mxu0 0.0
  %8036 = vmatpush1.xpose.msra.mxu0 0.0
  %8037 = vmatprep.subr.mxu0 0.0
  %8038 = vmatpush1.xpose.msra.mxu0 0.0
  %8039 = vmatprep.subr.mxu0 0.0
  %8040 = vmatpush1.xpose.msra.mxu0 0.0
  %8041 = vmatprep.subr.mxu0 0.0
  %8042 = vmatpush1.xpose.msra.mxu0 0.0
  %8043 = vmatprep.subr.mxu0 0.0
  %8044 = vmatpush1.xpose.msra.mxu0 0.0
  %8045 = vmatprep.subr.mxu0 0.0
  %8046 = vmatpush1.xpose.msra.mxu0 0.0
  %8047 = vmatprep.subr.mxu0 0.0
  %8048 = vmatpush1.xpose.msra.mxu0 0.0
  %8049 = vmatprep.subr.mxu0 0.0
  %8050 = vmatpush1.xpose.msra.mxu0 0.0
  %8051 = vmatprep.subr.mxu0 0.0
  %8052 = vmatpush1.xpose.msra.mxu0 0.0
  %8053 = vmatprep.subr.mxu0 0.0
  %8054 = vmatpush1.xpose.msra.mxu0 0.0
  %8055 = vmatprep.subr.mxu0 0.0
  %8056 = vmatpush1.xpose.msra.mxu0 0.0
  %8057 = vmatprep.subr.mxu0 0.0
  %8058 = vmatpush1.xpose.msra.mxu0 0.0
  %8059 = vmatprep.subr.mxu0 0.0
  %8060 = vmatpush1.xpose.msra.mxu0 0.0
  %8061 = vmatprep.subr.mxu0 0.0
  %8062 = vmatpush1.xpose.msra.mxu0 0.0
  %8063 = vmatprep.subr.mxu0 0.0
  %8064 = vmatpush1.xpose.msra.mxu0 0.0
  %8065 = vmatprep.subr.mxu0 0.0
  %8066 = vmatpush1.xpose.msra.mxu0 0.0
  %8067 = vmatprep.subr.mxu0 0.0
  %8068 = vmatpush1.xpose.msra.mxu0 0.0
  %8069 = vmatprep.subr.mxu0 0.0
  %8070 = vmatpush1.xpose.msra.mxu0 0.0
  %8071 = vmatprep.subr.mxu0 0.0
  %8072 = vmatpush1.xpose.msra.mxu0 0.0
  %8073 = vmatprep.subr.mxu0 0.0
  %8074 = vmatpush1.xpose.msra.mxu0 0.0
  %8075 = vmatprep.subr.mxu0 0.0
  %8076 = vmatpush1.xpose.msra.mxu0 0.0
  %8077 = vmatprep.subr.mxu0 0.0
  %8078 = vmatpush1.xpose.msra.mxu0 0.0
  %8079 = vmatprep.subr.mxu0 0.0
  %8080 = vmatpush1.xpose.msra.mxu0 0.0
  %8081 = vmatprep.subr.mxu0 0.0
  %8082 = vmatpush1.xpose.msra.mxu0 0.0
  %8083 = vmatprep.subr.mxu0 0.0
  %8084 = vmatpush1.xpose.msra.mxu0 0.0
  %8085 = vmatprep.subr.mxu0 0.0
  %8086 = vmatpush1.xpose.msra.mxu0 0.0
  %8087 = vmatprep.subr.mxu0 0.0
  %8088 = vmatpush1.xpose.msra.mxu0 0.0
  %8089 = vmatprep.subr.mxu0 0.0
  %8090 = vmatpush1.xpose.msra.mxu0 0.0
  %8091 = vmatprep.subr.mxu0 0.0
  %8092 = vmatpush1.xpose.msra.mxu0 0.0
  %8093 = vmatprep.mubr.f32.mxu0 0.0
  %8094 = vmatmul.mubr.f32.gmra.mrb[0].mxu0 %v8025
  %v8095 = vpop.f32.mrb[0].mxu0
  %v8096 = vadd.f32 0.0, %v8095
  %v8097 = vpop.f32.mrb[0].mxu0
  %8098 = vdwg.mxu0
  %v8099 = vmul.f32 %v8019, 0.35355338
  %v8100 = vmul.f32 %v8096, 0.35355338
  %v8101 = vsel %vm168, %v8099, -inf
  %8102 = vmax.xlane.f32.xlu0 %v8101
  %v8103 = vpop.xlane.xlu0 %8102
  %v8104 = vsel %vm168, %v8100, -inf
  %8105 = vmax.xlane.f32.xlu0 %v8104
  %v8106 = vpop.xlane.xlu0 %8105
  %v8107 = vsub.f32 %v8099, %v8103
  %v8108 = vsub.f32 %v8100, %v8106
  %v8109 = vmul.f32 %v8107, 1.442695
  %v8110 = vpow.pop %v8109
  %v8111 = vmul.f32 %v8108, 1.442695
  %v8112 = vpow.pop %v8111
  %v8113 = vsel %vm168, %v8110, 0.0
  %8114 = vadd.xlane.f32.xlu0 %v8113
  %v8115 = vpop.xlane.xlu0 %8114
  %v8116 = vsel %vm168, %v8112, 0.0
  %8117 = vadd.xlane.f32.xlu0 %v8116
  %v8118 = vpop.xlane.xlu0 %8117
  %v8119 = vrcp.pop %v8115
  %v8120 = vrcp.pop %v8118
  %v8121 = vmul.f32 %v8110, %v8119
  %v8122 = vmul.f32 %v8112, %v8120
  %8123 = vrot.lane.b32.xlu0 %v7939, 64
  %v8124 = vpop.permute.xlu0 %8123
  %v8127 = vsel %vm168, %v8121, 0
  %8129 = vmatprep.subr.mxu0 0.0
  %8130 = vmatpush1.msra.mxu0 %v8124
  %8131 = vmatprep.subr.mxu0 0.0
  %8132 = vmatpush1.msra.mxu0 0.0
  %8133 = vmatprep.subr.mxu0 0.0
  %8134 = vmatpush1.msra.mxu0 0.0
  %8135 = vmatprep.subr.mxu0 0.0
  %8136 = vmatpush1.msra.mxu0 0.0
  %8137 = vmatprep.subr.mxu0 0.0
  %8138 = vmatpush1.msra.mxu0 0.0
  %8139 = vmatprep.subr.mxu0 0.0
  %8140 = vmatpush1.msra.mxu0 0.0
  %8141 = vmatprep.subr.mxu0 0.0
  %8142 = vmatpush1.msra.mxu0 0.0
  %8143 = vmatprep.subr.mxu0 0.0
  %8144 = vmatpush1.msra.mxu0 0.0
  %8145 = vmatprep.subr.mxu0 0.0
  %8146 = vmatpush1.msra.mxu0 0.0
  %8147 = vmatprep.subr.mxu0 0.0
  %8148 = vmatpush1.msra.mxu0 0.0
  %8149 = vmatprep.subr.mxu0 0.0
  %8150 = vmatpush1.msra.mxu0 0.0
  %8151 = vmatprep.subr.mxu0 0.0
  %8152 = vmatpush1.msra.mxu0 0.0
  %8153 = vmatprep.subr.mxu0 0.0
  %8154 = vmatpush1.msra.mxu0 0.0
  %8155 = vmatprep.subr.mxu0 0.0
  %8156 = vmatpush1.msra.mxu0 0.0
  %8157 = vmatprep.subr.mxu0 0.0
  %8158 = vmatpush1.msra.mxu0 0.0
  %8159 = vmatprep.subr.mxu0 0.0
  %8160 = vmatpush1.msra.mxu0 0.0
  %8161 = vmatprep.subr.mxu0 0.0
  %8162 = vmatpush1.msra.mxu0 0.0
  %8163 = vmatprep.subr.mxu0 0.0
  %8164 = vmatpush1.msra.mxu0 0.0
  %8165 = vmatprep.subr.mxu0 0.0
  %8166 = vmatpush1.msra.mxu0 0.0
  %8167 = vmatprep.subr.mxu0 0.0
  %8168 = vmatpush1.msra.mxu0 0.0
  %8169 = vmatprep.subr.mxu0 0.0
  %8170 = vmatpush1.msra.mxu0 0.0
  %8171 = vmatprep.subr.mxu0 0.0
  %8172 = vmatpush1.msra.mxu0 0.0
  %8173 = vmatprep.subr.mxu0 0.0
  %8174 = vmatpush1.msra.mxu0 0.0
  %8175 = vmatprep.subr.mxu0 0.0
  %8176 = vmatpush1.msra.mxu0 0.0
  %8177 = vmatprep.subr.mxu0 0.0
  %8178 = vmatpush1.msra.mxu0 0.0
  %8179 = vmatprep.subr.mxu0 0.0
  %8180 = vmatpush1.msra.mxu0 0.0
  %8181 = vmatprep.subr.mxu0 0.0
  %8182 = vmatpush1.msra.mxu0 0.0
  %8183 = vmatprep.subr.mxu0 0.0
  %8184 = vmatpush1.msra.mxu0 0.0
  %8185 = vmatprep.subr.mxu0 0.0
  %8186 = vmatpush1.msra.mxu0 0.0
  %8187 = vmatprep.subr.mxu0 0.0
  %8188 = vmatpush1.msra.mxu0 0.0
  %8189 = vmatprep.subr.mxu0 0.0
  %8190 = vmatpush1.msra.mxu0 0.0
  %8191 = vmatprep.subr.mxu0 0.0
  %8192 = vmatpush1.msra.mxu0 0.0
  %8193 = vmatprep.mubr.f32.mxu0 0.0
  %8194 = vmatmul.mubr.f32.gmra.mrb[0].mxu0 %v8127
  %v8195 = vpop.f32.mrb[0].mxu0
  %v8196 = vadd.f32 0.0, %v8195
  %v8197 = vpop.f32.mrb[0].mxu0
  %8198 = vdwg.mxu0
  %8199 = vrot.lane.b32.xlu0 %v7942, 64
  %v8200 = vpop.permute.xlu0 %8199
  %v8203 = vsel %vm168, %v8122, 0
  %8205 = vmatprep.subr.mxu0 0.0
  %8206 = vmatpush1.msra.mxu0 %v8200
  %8207 = vmatprep.subr.mxu0 0.0
  %8208 = vmatpush1.msra.mxu0 0.0
  %8209 = vmatprep.subr.mxu0 0.0
  %8210 = vmatpush1.msra.mxu0 0.0
  %8211 = vmatprep.subr.mxu0 0.0
  %8212 = vmatpush1.msra.mxu0 0.0
  %8213 = vmatprep.subr.mxu0 0.0
  %8214 = vmatpush1.msra.mxu0 0.0
  %8215 = vmatprep.subr.mxu0 0.0
  %8216 = vmatpush1.msra.mxu0 0.0
  %8217 = vmatprep.subr.mxu0 0.0
  %8218 = vmatpush1.msra.mxu0 0.0
  %8219 = vmatprep.subr.mxu0 0.0
  %8220 = vmatpush1.msra.mxu0 0.0
  %8221 = vmatprep.subr.mxu0 0.0
  %8222 = vmatpush1.msra.mxu0 0.0
  %8223 = vmatprep.subr.mxu0 0.0
  %8224 = vmatpush1.msra.mxu0 0.0
  %8225 = vmatprep.subr.mxu0 0.0
  %8226 = vmatpush1.msra.mxu0 0.0
  %8227 = vmatprep.subr.mxu0 0.0
  %8228 = vmatpush1.msra.mxu0 0.0
  %8229 = vmatprep.subr.mxu0 0.0
  %8230 = vmatpush1.msra.mxu0 0.0
  %8231 = vmatprep.subr.mxu0 0.0
  %8232 = vmatpush1.msra.mxu0 0.0
  %8233 = vmatprep.subr.mxu0 0.0
  %8234 = vmatpush1.msra.mxu0 0.0
  %8235 = vmatprep.subr.mxu0 0.0
  %8236 = vmatpush1.msra.mxu0 0.0
  %8237 = vmatprep.subr.mxu0 0.0
  %8238 = vmatpush1.msra.mxu0 0.0
  %8239 = vmatprep.subr.mxu0 0.0
  %8240 = vmatpush1.msra.mxu0 0.0
  %8241 = vmatprep.subr.mxu0 0.0
  %8242 = vmatpush1.msra.mxu0 0.0
  %8243 = vmatprep.subr.mxu0 0.0
  %8244 = vmatpush1.msra.mxu0 0.0
  %8245 = vmatprep.subr.mxu0 0.0
  %8246 = vmatpush1.msra.mxu0 0.0
  %8247 = vmatprep.subr.mxu0 0.0
  %8248 = vmatpush1.msra.mxu0 0.0
  %8249 = vmatprep.subr.mxu0 0.0
  %8250 = vmatpush1.msra.mxu0 0.0
  %8251 = vmatprep.subr.mxu0 0.0
  %8252 = vmatpush1.msra.mxu0 0.0
  %8253 = vmatprep.subr.mxu0 0.0
  %8254 = vmatpush1.msra.mxu0 0.0
  %8255 = vmatprep.subr.mxu0 0.0
  %8256 = vmatpush1.msra.mxu0 0.0
  %8257 = vmatprep.subr.mxu0 0.0
  %8258 = vmatpush1.msra.mxu0 0.0
  %8259 = vmatprep.subr.mxu0 0.0
  %8260 = vmatpush1.msra.mxu0 0.0
  %8261 = vmatprep.subr.mxu0 0.0
  %8262 = vmatpush1.msra.mxu0 0.0
  %8263 = vmatprep.subr.mxu0 0.0
  %8264 = vmatpush1.msra.mxu0 0.0
  %8265 = vmatprep.subr.mxu0 0.0
  %8266 = vmatpush1.msra.mxu0 0.0
  %8267 = vmatprep.subr.mxu0 0.0
  %8268 = vmatpush1.msra.mxu0 0.0
  %8269 = vmatprep.mubr.f32.mxu0 0.0
  %8270 = vmatmul.mubr.f32.gmra.mrb[0].mxu0 %v8203
  %v8271 = vpop.f32.mrb[0].mxu0
  %v8272 = vadd.f32 0.0, %v8271
  %v8273 = vpop.f32.mrb[0].mxu0
  %8274 = vdwg.mxu0
  %8275 = vrot.lane.b32.xlu0 %v7939, 120
  %v8276 = vpop.permute.xlu0 %8275
  %8277 = vrot.lane.b32.xlu0 %v7939, 88
  %v8278 = vpop.permute.xlu0 %8277
  %v8279 = vsel %vm168, %v8276, 0
  %v8281 = vsel %vm168, %v8278, 0
  %8283 = vmatprep.subr.mxu0 0.0
  %8284 = vmatpush1.xpose.msra.mxu0 %v8281
  %8285 = vmatprep.subr.mxu0 0.0
  %8286 = vmatpush1.xpose.msra.mxu0 0.0
  %8287 = vmatprep.subr.mxu0 0.0
  %8288 = vmatpush1.xpose.msra.mxu0 0.0
  %8289 = vmatprep.subr.mxu0 0.0
  %8290 = vmatpush1.xpose.msra.mxu0 0.0
  %8291 = vmatprep.subr.mxu0 0.0
  %8292 = vmatpush1.xpose.msra.mxu0 0.0
  %8293 = vmatprep.subr.mxu0 0.0
  %8294 = vmatpush1.xpose.msra.mxu0 0.0
  %8295 = vmatprep.subr.mxu0 0.0
  %8296 = vmatpush1.xpose.msra.mxu0 0.0
  %8297 = vmatprep.subr.mxu0 0.0
  %8298 = vmatpush1.xpose.msra.mxu0 0.0
  %8299 = vmatprep.subr.mxu0 0.0
  %8300 = vmatpush1.xpose.msra.mxu0 0.0
  %8301 = vmatprep.subr.mxu0 0.0
  %8302 = vmatpush1.xpose.msra.mxu0 0.0
  %8303 = vmatprep.subr.mxu0 0.0
  %8304 = vmatpush1.xpose.msra.mxu0 0.0
  %8305 = vmatprep.subr.mxu0 0.0
  %8306 = vmatpush1.xpose.msra.mxu0 0.0
  %8307 = vmatprep.subr.mxu0 0.0
  %8308 = vmatpush1.xpose.msra.mxu0 0.0
  %8309 = vmatprep.subr.mxu0 0.0
  %8310 = vmatpush1.xpose.msra.mxu0 0.0
  %8311 = vmatprep.subr.mxu0 0.0
  %8312 = vmatpush1.xpose.msra.mxu0 0.0
  %8313 = vmatprep.subr.mxu0 0.0
  %8314 = vmatpush1.xpose.msra.mxu0 0.0
  %8315 = vmatprep.subr.mxu0 0.0
  %8316 = vmatpush1.xpose.msra.mxu0 0.0
  %8317 = vmatprep.subr.mxu0 0.0
  %8318 = vmatpush1.xpose.msra.mxu0 0.0
  %8319 = vmatprep.subr.mxu0 0.0
  %8320 = vmatpush1.xpose.msra.mxu0 0.0
  %8321 = vmatprep.subr.mxu0 0.0
  %8322 = vmatpush1.xpose.msra.mxu0 0.0
  %8323 = vmatprep.subr.mxu0 0.0
  %8324 = vmatpush1.xpose.msra.mxu0 0.0
  %8325 = vmatprep.subr.mxu0 0.0
  %8326 = vmatpush1.xpose.msra.mxu0 0.0
  %8327 = vmatprep.subr.mxu0 0.0
  %8328 = vmatpush1.xpose.msra.mxu0 0.0
  %8329 = vmatprep.subr.mxu0 0.0
  %8330 = vmatpush1.xpose.msra.mxu0 0.0
  %8331 = vmatprep.subr.mxu0 0.0
  %8332 = vmatpush1.xpose.msra.mxu0 0.0
  %8333 = vmatprep.subr.mxu0 0.0
  %8334 = vmatpush1.xpose.msra.mxu0 0.0
  %8335 = vmatprep.subr.mxu0 0.0
  %8336 = vmatpush1.xpose.msra.mxu0 0.0
  %8337 = vmatprep.subr.mxu0 0.0
  %8338 = vmatpush1.xpose.msra.mxu0 0.0
  %8339 = vmatprep.subr.mxu0 0.0
  %8340 = vmatpush1.xpose.msra.mxu0 0.0
  %8341 = vmatprep.subr.mxu0 0.0
  %8342 = vmatpush1.xpose.msra.mxu0 0.0
  %8343 = vmatprep.subr.mxu0 0.0
  %8344 = vmatpush1.xpose.msra.mxu0 0.0
  %8345 = vmatprep.subr.mxu0 0.0
  %8346 = vmatpush1.xpose.msra.mxu0 0.0
  %8347 = vmatprep.mubr.f32.mxu0 0.0
  %8348 = vmatmul.mubr.f32.gmra.mrb[0].mxu0 %v8279
  %v8349 = vpop.f32.mrb[0].mxu0
  %v8350 = vadd.f32 0.0, %v8349
  %v8351 = vpop.f32.mrb[0].mxu0
  %8352 = vdwg.mxu0
  %8353 = vrot.lane.b32.xlu0 %v7942, 120
  %v8354 = vpop.permute.xlu0 %8353
  %8355 = vrot.lane.b32.xlu0 %v7942, 88
  %v8356 = vpop.permute.xlu0 %8355
  %v8357 = vsel %vm168, %v8354, 0
  %v8359 = vsel %vm168, %v8356, 0
  %8361 = vmatprep.subr.mxu0 0.0
  %8362 = vmatpush1.xpose.msra.mxu0 %v8359
  %8363 = vmatprep.subr.mxu0 0.0
  %8364 = vmatpush1.xpose.msra.mxu0 0.0
  %8365 = vmatprep.subr.mxu0 0.0
  %8366 = vmatpush1.xpose.msra.mxu0 0.0
  %8367 = vmatprep.subr.mxu0 0.0
  %8368 = vmatpush1.xpose.msra.mxu0 0.0
  %8369 = vmatprep.subr.mxu0 0.0
  %8370 = vmatpush1.xpose.msra.mxu0 0.0
  %8371 = vmatprep.subr.mxu0 0.0
  %8372 = vmatpush1.xpose.msra.mxu0 0.0
  %8373 = vmatprep.subr.mxu0 0.0
  %8374 = vmatpush1.xpose.msra.mxu0 0.0
  %8375 = vmatprep.subr.mxu0 0.0
  %8376 = vmatpush1.xpose.msra.mxu0 0.0
  %8377 = vmatprep.subr.mxu0 0.0
  %8378 = vmatpush1.xpose.msra.mxu0 0.0
  %8379 = vmatprep.subr.mxu0 0.0
  %8380 = vmatpush1.xpose.msra.mxu0 0.0
  %8381 = vmatprep.subr.mxu0 0.0
  %8382 = vmatpush1.xpose.msra.mxu0 0.0
  %8383 = vmatprep.subr.mxu0 0.0
  %8384 = vmatpush1.xpose.msra.mxu0 0.0
  %8385 = vmatprep.subr.mxu0 0.0
  %8386 = vmatpush1.xpose.msra.mxu0 0.0
  %8387 = vmatprep.subr.mxu0 0.0
  %8388 = vmatpush1.xpose.msra.mxu0 0.0
  %8389 = vmatprep.subr.mxu0 0.0
  %8390 = vmatpush1.xpose.msra.mxu0 0.0
  %8391 = vmatprep.subr.mxu0 0.0
  %8392 = vmatpush1.xpose.msra.mxu0 0.0
  %8393 = vmatprep.subr.mxu0 0.0
  %8394 = vmatpush1.xpose.msra.mxu0 0.0
  %8395 = vmatprep.subr.mxu0 0.0
  %8396 = vmatpush1.xpose.msra.mxu0 0.0
  %8397 = vmatprep.subr.mxu0 0.0
  %8398 = vmatpush1.xpose.msra.mxu0 0.0
  %8399 = vmatprep.subr.mxu0 0.0
  %8400 = vmatpush1.xpose.msra.mxu0 0.0
  %8401 = vmatprep.subr.mxu0 0.0
  %8402 = vmatpush1.xpose.msra.mxu0 0.0
  %8403 = vmatprep.subr.mxu0 0.0
  %8404 = vmatpush1.xpose.msra.mxu0 0.0
  %8405 = vmatprep.subr.mxu0 0.0
  %8406 = vmatpush1.xpose.msra.mxu0 0.0
  %8407 = vmatprep.subr.mxu0 0.0
  %8408 = vmatpush1.xpose.msra.mxu0 0.0
  %8409 = vmatprep.subr.mxu0 0.0
  %8410 = vmatpush1.xpose.msra.mxu0 0.0
  %8411 = vmatprep.subr.mxu0 0.0
  %8412 = vmatpush1.xpose.msra.mxu0 0.0
  %8413 = vmatprep.subr.mxu0 0.0
  %8414 = vmatpush1.xpose.msra.mxu0 0.0
  %8415 = vmatprep.subr.mxu0 0.0
  %8416 = vmatpush1.xpose.msra.mxu0 0.0
  %8417 = vmatprep.subr.mxu0 0.0
  %8418 = vmatpush1.xpose.msra.mxu0 0.0
  %8419 = vmatprep.subr.mxu0 0.0
  %8420 = vmatpush1.xpose.msra.mxu0 0.0
  %8421 = vmatprep.subr.mxu0 0.0
  %8422 = vmatpush1.xpose.msra.mxu0 0.0
  %8423 = vmatprep.subr.mxu0 0.0
  %8424 = vmatpush1.xpose.msra.mxu0 0.0
  %8425 = vmatprep.mubr.f32.mxu0 0.0
  %8426 = vmatmul.mubr.f32.gmra.mrb[0].mxu0 %v8357
  %v8427 = vpop.f32.mrb[0].mxu0
  %v8428 = vadd.f32 0.0, %v8427
  %v8429 = vpop.f32.mrb[0].mxu0
  %8430 = vdwg.mxu0
  %v8431 = vmul.f32 %v8350, 0.35355338
  %v8432 = vmul.f32 %v8428, 0.35355338
  %v8433 = vsel %vm168, %v8431, -inf
  %8434 = vmax.xlane.f32.xlu0 %v8433
  %v8435 = vpop.xlane.xlu0 %8434
  %v8436 = vsel %vm168, %v8432, -inf
  %8437 = vmax.xlane.f32.xlu0 %v8436
  %v8438 = vpop.xlane.xlu0 %8437
  %v8439 = vsub.f32 %v8431, %v8435
  %v8440 = vsub.f32 %v8432, %v8438
  %v8441 = vmul.f32 %v8439, 1.442695
  %v8442 = vpow.pop %v8441
  %v8443 = vmul.f32 %v8440, 1.442695
  %v8444 = vpow.pop %v8443
  %v8445 = vsel %vm168, %v8442, 0.0
  %8446 = vadd.xlane.f32.xlu0 %v8445
  %v8447 = vpop.xlane.xlu0 %8446
  %v8448 = vsel %vm168, %v8444, 0.0
  %8449 = vadd.xlane.f32.xlu0 %v8448
  %v8450 = vpop.xlane.xlu0 %8449
  %v8451 = vrcp.pop %v8447
  %v8452 = vrcp.pop %v8450
  %v8453 = vmul.f32 %v8442, %v8451
  %v8454 = vmul.f32 %v8444, %v8452
  %8455 = vrot.lane.b32.xlu0 %v7939, 56
  %v8456 = vpop.permute.xlu0 %8455
  %v8459 = vsel %vm168, %v8453, 0
  %8461 = vmatprep.subr.mxu0 0.0
  %8462 = vmatpush1.msra.mxu0 %v8456
  %8463 = vmatprep.subr.mxu0 0.0
  %8464 = vmatpush1.msra.mxu0 0.0
  %8465 = vmatprep.subr.mxu0 0.0
  %8466 = vmatpush1.msra.mxu0 0.0
  %8467 = vmatprep.subr.mxu0 0.0
  %8468 = vmatpush1.msra.mxu0 0.0
  %8469 = vmatprep.subr.mxu0 0.0
  %8470 = vmatpush1.msra.mxu0 0.0
  %8471 = vmatprep.subr.mxu0 0.0
  %8472 = vmatpush1.msra.mxu0 0.0
  %8473 = vmatprep.subr.mxu0 0.0
  %8474 = vmatpush1.msra.mxu0 0.0
  %8475 = vmatprep.subr.mxu0 0.0
  %8476 = vmatpush1.msra.mxu0 0.0
  %8477 = vmatprep.subr.mxu0 0.0
  %8478 = vmatpush1.msra.mxu0 0.0
  %8479 = vmatprep.subr.mxu0 0.0
  %8480 = vmatpush1.msra.mxu0 0.0
  %8481 = vmatprep.subr.mxu0 0.0
  %8482 = vmatpush1.msra.mxu0 0.0
  %8483 = vmatprep.subr.mxu0 0.0
  %8484 = vmatpush1.msra.mxu0 0.0
  %8485 = vmatprep.subr.mxu0 0.0
  %8486 = vmatpush1.msra.mxu0 0.0
  %8487 = vmatprep.subr.mxu0 0.0
  %8488 = vmatpush1.msra.mxu0 0.0
  %8489 = vmatprep.subr.mxu0 0.0
  %8490 = vmatpush1.msra.mxu0 0.0
  %8491 = vmatprep.subr.mxu0 0.0
  %8492 = vmatpush1.msra.mxu0 0.0
  %8493 = vmatprep.subr.mxu0 0.0
  %8494 = vmatpush1.msra.mxu0 0.0
  %8495 = vmatprep.subr.mxu0 0.0
  %8496 = vmatpush1.msra.mxu0 0.0
  %8497 = vmatprep.subr.mxu0 0.0
  %8498 = vmatpush1.msra.mxu0 0.0
  %8499 = vmatprep.subr.mxu0 0.0
  %8500 = vmatpush1.msra.mxu0 0.0
  %8501 = vmatprep.subr.mxu0 0.0
  %8502 = vmatpush1.msra.mxu0 0.0
  %8503 = vmatprep.subr.mxu0 0.0
  %8504 = vmatpush1.msra.mxu0 0.0
  %8505 = vmatprep.subr.mxu0 0.0
  %8506 = vmatpush1.msra.mxu0 0.0
  %8507 = vmatprep.subr.mxu0 0.0
  %8508 = vmatpush1.msra.mxu0 0.0
  %8509 = vmatprep.subr.mxu0 0.0
  %8510 = vmatpush1.msra.mxu0 0.0
  %8511 = vmatprep.subr.mxu0 0.0
  %8512 = vmatpush1.msra.mxu0 0.0
  %8513 = vmatprep.subr.mxu0 0.0
  %8514 = vmatpush1.msra.mxu0 0.0
  %8515 = vmatprep.subr.mxu0 0.0
  %8516 = vmatpush1.msra.mxu0 0.0
  %8517 = vmatprep.subr.mxu0 0.0
  %8518 = vmatpush1.msra.mxu0 0.0
  %8519 = vmatprep.subr.mxu0 0.0
  %8520 = vmatpush1.msra.mxu0 0.0
  %8521 = vmatprep.subr.mxu0 0.0
  %8522 = vmatpush1.msra.mxu0 0.0
  %8523 = vmatprep.subr.mxu0 0.0
  %8524 = vmatpush1.msra.mxu0 0.0
  %8525 = vmatprep.mubr.f32.mxu0 0.0
  %8526 = vmatmul.mubr.f32.gmra.mrb[0].mxu0 %v8459
  %v8527 = vpop.f32.mrb[0].mxu0
  %v8528 = vadd.f32 0.0, %v8527
  %v8529 = vpop.f32.mrb[0].mxu0
  %8530 = vdwg.mxu0
  %8531 = vrot.lane.b32.xlu0 %v7942, 56
  %v8532 = vpop.permute.xlu0 %8531
  %v8535 = vsel %vm168, %v8454, 0
  %8537 = vmatprep.subr.mxu0 0.0
  %8538 = vmatpush1.msra.mxu0 %v8532
  %8539 = vmatprep.subr.mxu0 0.0
  %8540 = vmatpush1.msra.mxu0 0.0
  %8541 = vmatprep.subr.mxu0 0.0
  %8542 = vmatpush1.msra.mxu0 0.0
  %8543 = vmatprep.subr.mxu0 0.0
  %8544 = vmatpush1.msra.mxu0 0.0
  %8545 = vmatprep.subr.mxu0 0.0
  %8546 = vmatpush1.msra.mxu0 0.0
  %8547 = vmatprep.subr.mxu0 0.0
  %8548 = vmatpush1.msra.mxu0 0.0
  %8549 = vmatprep.subr.mxu0 0.0
  %8550 = vmatpush1.msra.mxu0 0.0
  %8551 = vmatprep.subr.mxu0 0.0
  %8552 = vmatpush1.msra.mxu0 0.0
  %8553 = vmatprep.subr.mxu0 0.0
  %8554 = vmatpush1.msra.mxu0 0.0
  %8555 = vmatprep.subr.mxu0 0.0
  %8556 = vmatpush1.msra.mxu0 0.0
  %8557 = vmatprep.subr.mxu0 0.0
  %8558 = vmatpush1.msra.mxu0 0.0
  %8559 = vmatprep.subr.mxu0 0.0
  %8560 = vmatpush1.msra.mxu0 0.0
  %8561 = vmatprep.subr.mxu0 0.0
  %8562 = vmatpush1.msra.mxu0 0.0
  %8563 = vmatprep.subr.mxu0 0.0
  %8564 = vmatpush1.msra.mxu0 0.0
  %8565 = vmatprep.subr.mxu0 0.0
  %8566 = vmatpush1.msra.mxu0 0.0
  %8567 = vmatprep.subr.mxu0 0.0
  %8568 = vmatpush1.msra.mxu0 0.0
  %8569 = vmatprep.subr.mxu0 0.0
  %8570 = vmatpush1.msra.mxu0 0.0
  %8571 = vmatprep.subr.mxu0 0.0
  %8572 = vmatpush1.msra.mxu0 0.0
  %8573 = vmatprep.subr.mxu0 0.0
  %8574 = vmatpush1.msra.mxu0 0.0
  %8575 = vmatprep.subr.mxu0 0.0
  %8576 = vmatpush1.msra.mxu0 0.0
  %8577 = vmatprep.subr.mxu0 0.0
  %8578 = vmatpush1.msra.mxu0 0.0
  %8579 = vmatprep.subr.mxu0 0.0
  %8580 = vmatpush1.msra.mxu0 0.0
  %8581 = vmatprep.subr.mxu0 0.0
  %8582 = vmatpush1.msra.mxu0 0.0
  %8583 = vmatprep.subr.mxu0 0.0
  %8584 = vmatpush1.msra.mxu0 0.0
  %8585 = vmatprep.subr.mxu0 0.0
  %8586 = vmatpush1.msra.mxu0 0.0
  %8587 = vmatprep.subr.mxu0 0.0
  %8588 = vmatpush1.msra.mxu0 0.0
  %8589 = vmatprep.subr.mxu0 0.0
  %8590 = vmatpush1.msra.mxu0 0.0
  %8591 = vmatprep.subr.mxu0 0.0
  %8592 = vmatpush1.msra.mxu0 0.0
  %8593 = vmatprep.subr.mxu0 0.0
  %8594 = vmatpush1.msra.mxu0 0.0
  %8595 = vmatprep.subr.mxu0 0.0
  %8596 = vmatpush1.msra.mxu0 0.0
  %8597 = vmatprep.subr.mxu0 0.0
  %8598 = vmatpush1.msra.mxu0 0.0
  %8599 = vmatprep.subr.mxu0 0.0
  %8600 = vmatpush1.msra.mxu0 0.0
  %8601 = vmatprep.mubr.f32.mxu0 0.0
  %8602 = vmatmul.mubr.f32.gmra.mrb[0].mxu0 %v8535
  %v8603 = vpop.f32.mrb[0].mxu0
  %v8604 = vadd.f32 0.0, %v8603
  %v8605 = vpop.f32.mrb[0].mxu0
  %8606 = vdwg.mxu0
  %8607 = vrot.lane.b32.xlu0 %v7939, 112
  %v8608 = vpop.permute.xlu0 %8607
  %8609 = vrot.lane.b32.xlu0 %v7939, 80
  %v8610 = vpop.permute.xlu0 %8609
  %v8611 = vsel %vm168, %v8608, 0
  %v8613 = vsel %vm168, %v8610, 0
  %8615 = vmatprep.subr.mxu0 0.0
  %8616 = vmatpush1.xpose.msra.mxu0 %v8613
  %8617 = vmatprep.subr.mxu0 0.0
  %8618 = vmatpush1.xpose.msra.mxu0 0.0
  %8619 = vmatprep.subr.mxu0 0.0
  %8620 = vmatpush1.xpose.msra.mxu0 0.0
  %8621 = vmatprep.subr.mxu0 0.0
  %8622 = vmatpush1.xpose.msra.mxu0 0.0
  %8623 = vmatprep.subr.mxu0 0.0
  %8624 = vmatpush1.xpose.msra.mxu0 0.0
  %8625 = vmatprep.subr.mxu0 0.0
  %8626 = vmatpush1.xpose.msra.mxu0 0.0
  %8627 = vmatprep.subr.mxu0 0.0
  %8628 = vmatpush1.xpose.msra.mxu0 0.0
  %8629 = vmatprep.subr.mxu0 0.0
  %8630 = vmatpush1.xpose.msra.mxu0 0.0
  %8631 = vmatprep.subr.mxu0 0.0
  %8632 = vmatpush1.xpose.msra.mxu0 0.0
  %8633 = vmatprep.subr.mxu0 0.0
  %8634 = vmatpush1.xpose.msra.mxu0 0.0
  %8635 = vmatprep.subr.mxu0 0.0
  %8636 = vmatpush1.xpose.msra.mxu0 0.0
  %8637 = vmatprep.subr.mxu0 0.0
  %8638 = vmatpush1.xpose.msra.mxu0 0.0
  %8639 = vmatprep.subr.mxu0 0.0
  %8640 = vmatpush1.xpose.msra.mxu0 0.0
  %8641 = vmatprep.subr.mxu0 0.0
  %8642 = vmatpush1.xpose.msra.mxu0 0.0
  %8643 = vmatprep.subr.mxu0 0.0
  %8644 = vmatpush1.xpose.msra.mxu0 0.0
  %8645 = vmatprep.subr.mxu0 0.0
  %8646 = vmatpush1.xpose.msra.mxu0 0.0
  %8647 = vmatprep.subr.mxu0 0.0
  %8648 = vmatpush1.xpose.msra.mxu0 0.0
  %8649 = vmatprep.subr.mxu0 0.0
  %8650 = vmatpush1.xpose.msra.mxu0 0.0
  %8651 = vmatprep.subr.mxu0 0.0
  %8652 = vmatpush1.xpose.msra.mxu0 0.0
  %8653 = vmatprep.subr.mxu0 0.0
  %8654 = vmatpush1.xpose.msra.mxu0 0.0
  %8655 = vmatprep.subr.mxu0 0.0
  %8656 = vmatpush1.xpose.msra.mxu0 0.0
  %8657 = vmatprep.subr.mxu0 0.0
  %8658 = vmatpush1.xpose.msra.mxu0 0.0
  %8659 = vmatprep.subr.mxu0 0.0
  %8660 = vmatpush1.xpose.msra.mxu0 0.0
  %8661 = vmatprep.subr.mxu0 0.0
  %8662 = vmatpush1.xpose.msra.mxu0 0.0
  %8663 = vmatprep.subr.mxu0 0.0
  %8664 = vmatpush1.xpose.msra.mxu0 0.0
  %8665 = vmatprep.subr.mxu0 0.0
  %8666 = vmatpush1.xpose.msra.mxu0 0.0
  %8667 = vmatprep.subr.mxu0 0.0
  %8668 = vmatpush1.xpose.msra.mxu0 0.0
  %8669 = vmatprep.subr.mxu0 0.0
  %8670 = vmatpush1.xpose.msra.mxu0 0.0
  %8671 = vmatprep.subr.mxu0 0.0
  %8672 = vmatpush1.xpose.msra.mxu0 0.0
  %8673 = vmatprep.subr.mxu0 0.0
  %8674 = vmatpush1.xpose.msra.mxu0 0.0
  %8675 = vmatprep.subr.mxu0 0.0
  %8676 = vmatpush1.xpose.msra.mxu0 0.0
  %8677 = vmatprep.subr.mxu0 0.0
  %8678 = vmatpush1.xpose.msra.mxu0 0.0
  %8679 = vmatprep.mubr.f32.mxu0 0.0
  %8680 = vmatmul.mubr.f32.gmra.mrb[0].mxu0 %v8611
  %v8681 = vpop.f32.mrb[0].mxu0
  %v8682 = vadd.f32 0.0, %v8681
  %v8683 = vpop.f32.mrb[0].mxu0
  %8684 = vdwg.mxu0
  %8685 = vrot.lane.b32.xlu0 %v7942, 112
  %v8686 = vpop.permute.xlu0 %8685
  %8687 = vrot.lane.b32.xlu0 %v7942, 80
  %v8688 = vpop.permute.xlu0 %8687
  %v8689 = vsel %vm168, %v8686, 0
  %v8691 = vsel %vm168, %v8688, 0
  %8693 = vmatprep.subr.mxu0 0.0
  %8694 = vmatpush1.xpose.msra.mxu0 %v8691
  %8695 = vmatprep.subr.mxu0 0.0
  %8696 = vmatpush1.xpose.msra.mxu0 0.0
  %8697 = vmatprep.subr.mxu0 0.0
  %8698 = vmatpush1.xpose.msra.mxu0 0.0
  %8699 = vmatprep.subr.mxu0 0.0
  %8700 = vmatpush1.xpose.msra.mxu0 0.0
  %8701 = vmatprep.subr.mxu0 0.0
  %8702 = vmatpush1.xpose.msra.mxu0 0.0
  %8703 = vmatprep.subr.mxu0 0.0
  %8704 = vmatpush1.xpose.msra.mxu0 0.0
  %8705 = vmatprep.subr.mxu0 0.0
  %8706 = vmatpush1.xpose.msra.mxu0 0.0
  %8707 = vmatprep.subr.mxu0 0.0
  %8708 = vmatpush1.xpose.msra.mxu0 0.0
  %8709 = vmatprep.subr.mxu0 0.0
  %8710 = vmatpush1.xpose.msra.mxu0 0.0
  %8711 = vmatprep.subr.mxu0 0.0
  %8712 = vmatpush1.xpose.msra.mxu0 0.0
  %8713 = vmatprep.subr.mxu0 0.0
  %8714 = vmatpush1.xpose.msra.mxu0 0.0
  %8715 = vmatprep.subr.mxu0 0.0
  %8716 = vmatpush1.xpose.msra.mxu0 0.0
  %8717 = vmatprep.subr.mxu0 0.0
  %8718 = vmatpush1.xpose.msra.mxu0 0.0
  %8719 = vmatprep.subr.mxu0 0.0
  %8720 = vmatpush1.xpose.msra.mxu0 0.0
  %8721 = vmatprep.subr.mxu0 0.0
  %8722 = vmatpush1.xpose.msra.mxu0 0.0
  %8723 = vmatprep.subr.mxu0 0.0
  %8724 = vmatpush1.xpose.msra.mxu0 0.0
  %8725 = vmatprep.subr.mxu0 0.0
  %8726 = vmatpush1.xpose.msra.mxu0 0.0
  %8727 = vmatprep.subr.mxu0 0.0
  %8728 = vmatpush1.xpose.msra.mxu0 0.0
  %8729 = vmatprep.subr.mxu0 0.0
  %8730 = vmatpush1.xpose.msra.mxu0 0.0
  %8731 = vmatprep.subr.mxu0 0.0
  %8732 = vmatpush1.xpose.msra.mxu0 0.0
  %8733 = vmatprep.subr.mxu0 0.0
  %8734 = vmatpush1.xpose.msra.mxu0 0.0
  %8735 = vmatprep.subr.mxu0 0.0
  %8736 = vmatpush1.xpose.msra.mxu0 0.0
  %8737 = vmatprep.subr.mxu0 0.0
  %8738 = vmatpush1.xpose.msra.mxu0 0.0
  %8739 = vmatprep.subr.mxu0 0.0
  %8740 = vmatpush1.xpose.msra.mxu0 0.0
  %8741 = vmatprep.subr.mxu0 0.0
  %8742 = vmatpush1.xpose.msra.mxu0 0.0
  %8743 = vmatprep.subr.mxu0 0.0
  %8744 = vmatpush1.xpose.msra.mxu0 0.0
  %8745 = vmatprep.subr.mxu0 0.0
  %8746 = vmatpush1.xpose.msra.mxu0 0.0
  %8747 = vmatprep.subr.mxu0 0.0
  %8748 = vmatpush1.xpose.msra.mxu0 0.0
  %8749 = vmatprep.subr.mxu0 0.0
  %8750 = vmatpush1.xpose.msra.mxu0 0.0
  %8751 = vmatprep.subr.mxu0 0.0
  %8752 = vmatpush1.xpose.msra.mxu0 0.0
  %8753 = vmatprep.subr.mxu0 0.0
  %8754 = vmatpush1.xpose.msra.mxu0 0.0
  %8755 = vmatprep.subr.mxu0 0.0
  %8756 = vmatpush1.xpose.msra.mxu0 0.0
  %8757 = vmatprep.mubr.f32.mxu0 0.0
  %8758 = vmatmul.mubr.f32.gmra.mrb[0].mxu0 %v8689
  %v8759 = vpop.f32.mrb[0].mxu0
  %v8760 = vadd.f32 0.0, %v8759
  %v8761 = vpop.f32.mrb[0].mxu0
  %8762 = vdwg.mxu0
  %v8763 = vmul.f32 %v8682, 0.35355338
  %v8764 = vmul.f32 %v8760, 0.35355338
  %v8765 = vsel %vm168, %v8763, -inf
  %8766 = vmax.xlane.f32.xlu0 %v8765
  %v8767 = vpop.xlane.xlu0 %8766
  %v8768 = vsel %vm168, %v8764, -inf
  %8769 = vmax.xlane.f32.xlu0 %v8768
  %v8770 = vpop.xlane.xlu0 %8769
  %v8771 = vsub.f32 %v8763, %v8767
  %v8772 = vsub.f32 %v8764, %v8770
  %v8773 = vmul.f32 %v8771, 1.442695
  %v8774 = vpow.pop %v8773
  %v8775 = vmul.f32 %v8772, 1.442695
  %v8776 = vpow.pop %v8775
  %v8777 = vsel %vm168, %v8774, 0.0
  %8778 = vadd.xlane.f32.xlu0 %v8777
  %v8779 = vpop.xlane.xlu0 %8778
  %v8780 = vsel %vm168, %v8776, 0.0
  %8781 = vadd.xlane.f32.xlu0 %v8780
  %v8782 = vpop.xlane.xlu0 %8781
  %v8783 = vrcp.pop %v8779
  %v8784 = vrcp.pop %v8782
  %v8785 = vmul.f32 %v8774, %v8783
  %v8786 = vmul.f32 %v8776, %v8784
  %8787 = vrot.lane.b32.xlu0 %v7939, 48
  %v8788 = vpop.permute.xlu0 %8787
  %v8791 = vsel %vm168, %v8785, 0
  %8793 = vmatprep.subr.mxu0 0.0
  %8794 = vmatpush1.msra.mxu0 %v8788
  %8795 = vmatprep.subr.mxu0 0.0
  %8796 = vmatpush1.msra.mxu0 0.0
  %8797 = vmatprep.subr.mxu0 0.0
  %8798 = vmatpush1.msra.mxu0 0.0
  %8799 = vmatprep.subr.mxu0 0.0
  %8800 = vmatpush1.msra.mxu0 0.0
  %8801 = vmatprep.subr.mxu0 0.0
  %8802 = vmatpush1.msra.mxu0 0.0
  %8803 = vmatprep.subr.mxu0 0.0
  %8804 = vmatpush1.msra.mxu0 0.0
  %8805 = vmatprep.subr.mxu0 0.0
  %8806 = vmatpush1.msra.mxu0 0.0
  %8807 = vmatprep.subr.mxu0 0.0
  %8808 = vmatpush1.msra.mxu0 0.0
  %8809 = vmatprep.subr.mxu0 0.0
  %8810 = vmatpush1.msra.mxu0 0.0
  %8811 = vmatprep.subr.mxu0 0.0
  %8812 = vmatpush1.msra.mxu0 0.0
  %8813 = vmatprep.subr.mxu0 0.0
  %8814 = vmatpush1.msra.mxu0 0.0
  %8815 = vmatprep.subr.mxu0 0.0
  %8816 = vmatpush1.msra.mxu0 0.0
  %8817 = vmatprep.subr.mxu0 0.0
  %8818 = vmatpush1.msra.mxu0 0.0
  %8819 = vmatprep.subr.mxu0 0.0
  %8820 = vmatpush1.msra.mxu0 0.0
  %8821 = vmatprep.subr.mxu0 0.0
  %8822 = vmatpush1.msra.mxu0 0.0
  %8823 = vmatprep.subr.mxu0 0.0
  %8824 = vmatpush1.msra.mxu0 0.0
  %8825 = vmatprep.subr.mxu0 0.0
  %8826 = vmatpush1.msra.mxu0 0.0
  %8827 = vmatprep.subr.mxu0 0.0
  %8828 = vmatpush1.msra.mxu0 0.0
  %8829 = vmatprep.subr.mxu0 0.0
  %8830 = vmatpush1.msra.mxu0 0.0
  %8831 = vmatprep.subr.mxu0 0.0
  %8832 = vmatpush1.msra.mxu0 0.0
  %8833 = vmatprep.subr.mxu0 0.0
  %8834 = vmatpush1.msra.mxu0 0.0
  %8835 = vmatprep.subr.mxu0 0.0
  %8836 = vmatpush1.msra.mxu0 0.0
  %8837 = vmatprep.subr.mxu0 0.0
  %8838 = vmatpush1.msra.mxu0 0.0
  %8839 = vmatprep.subr.mxu0 0.0
  %8840 = vmatpush1.msra.mxu0 0.0
  %8841 = vmatprep.subr.mxu0 0.0
  %8842 = vmatpush1.msra.mxu0 0.0
  %8843 = vmatprep.subr.mxu0 0.0
  %8844 = vmatpush1.msra.mxu0 0.0
  %8845 = vmatprep.subr.mxu0 0.0
  %8846 = vmatpush1.msra.mxu0 0.0
  %8847 = vmatprep.subr.mxu0 0.0
  %8848 = vmatpush1.msra.mxu0 0.0
  %8849 = vmatprep.subr.mxu0 0.0
  %8850 = vmatpush1.msra.mxu0 0.0
  %8851 = vmatprep.subr.mxu0 0.0
  %8852 = vmatpush1.msra.mxu0 0.0
  %8853 = vmatprep.subr.mxu0 0.0
  %8854 = vmatpush1.msra.mxu0 0.0
  %8855 = vmatprep.subr.mxu0 0.0
  %8856 = vmatpush1.msra.mxu0 0.0
  %8857 = vmatprep.mubr.f32.mxu0 0.0
  %8858 = vmatmul.mubr.f32.gmra.mrb[0].mxu0 %v8791
  %v8859 = vpop.f32.mrb[0].mxu0
  %v8860 = vadd.f32 0.0, %v8859
  %v8861 = vpop.f32.mrb[0].mxu0
  %8862 = vdwg.mxu0
  %8863 = vrot.lane.b32.xlu0 %v7942, 48
  %v8864 = vpop.permute.xlu0 %8863
  %v8867 = vsel %vm168, %v8786, 0
  %8869 = vmatprep.subr.mxu0 0.0
  %8870 = vmatpush1.msra.mxu0 %v8864
  %8871 = vmatprep.subr.mxu0 0.0
  %8872 = vmatpush1.msra.mxu0 0.0
  %8873 = vmatprep.subr.mxu0 0.0
  %8874 = vmatpush1.msra.mxu0 0.0
  %8875 = vmatprep.subr.mxu0 0.0
  %8876 = vmatpush1.msra.mxu0 0.0
  %8877 = vmatprep.subr.mxu0 0.0
  %8878 = vmatpush1.msra.mxu0 0.0
  %8879 = vmatprep.subr.mxu0 0.0
  %8880 = vmatpush1.msra.mxu0 0.0
  %8881 = vmatprep.subr.mxu0 0.0
  %8882 = vmatpush1.msra.mxu0 0.0
  %8883 = vmatprep.subr.mxu0 0.0
  %8884 = vmatpush1.msra.mxu0 0.0
  %8885 = vmatprep.subr.mxu0 0.0
  %8886 = vmatpush1.msra.mxu0 0.0
  %8887 = vmatprep.subr.mxu0 0.0
  %8888 = vmatpush1.msra.mxu0 0.0
  %8889 = vmatprep.subr.mxu0 0.0
  %8890 = vmatpush1.msra.mxu0 0.0
  %8891 = vmatprep.subr.mxu0 0.0
  %8892 = vmatpush1.msra.mxu0 0.0
  %8893 = vmatprep.subr.mxu0 0.0
  %8894 = vmatpush1.msra.mxu0 0.0
  %8895 = vmatprep.subr.mxu0 0.0
  %8896 = vmatpush1.msra.mxu0 0.0
  %8897 = vmatprep.subr.mxu0 0.0
  %8898 = vmatpush1.msra.mxu0 0.0
  %8899 = vmatprep.subr.mxu0 0.0
  %8900 = vmatpush1.msra.mxu0 0.0
  %8901 = vmatprep.subr.mxu0 0.0
  %8902 = vmatpush1.msra.mxu0 0.0
  %8903 = vmatprep.subr.mxu0 0.0
  %8904 = vmatpush1.msra.mxu0 0.0
  %8905 = vmatprep.subr.mxu0 0.0
  %8906 = vmatpush1.msra.mxu0 0.0
  %8907 = vmatprep.subr.mxu0 0.0
  %8908 = vmatpush1.msra.mxu0 0.0
  %8909 = vmatprep.subr.mxu0 0.0
  %8910 = vmatpush1.msra.mxu0 0.0
  %8911 = vmatprep.subr.mxu0 0.0
  %8912 = vmatpush1.msra.mxu0 0.0
  %8913 = vmatprep.subr.mxu0 0.0
  %8914 = vmatpush1.msra.mxu0 0.0
  %8915 = vmatprep.subr.mxu0 0.0
  %8916 = vmatpush1.msra.mxu0 0.0
  %8917 = vmatprep.subr.mxu0 0.0
  %8918 = vmatpush1.msra.mxu0 0.0
  %8919 = vmatprep.subr.mxu0 0.0
  %8920 = vmatpush1.msra.mxu0 0.0
  %8921 = vmatprep.subr.mxu0 0.0
  %8922 = vmatpush1.msra.mxu0 0.0
  %8923 = vmatprep.subr.mxu0 0.0
  %8924 = vmatpush1.msra.mxu0 0.0
  %8925 = vmatprep.subr.mxu0 0.0
  %8926 = vmatpush1.msra.mxu0 0.0
  %8927 = vmatprep.subr.mxu0 0.0
  %8928 = vmatpush1.msra.mxu0 0.0
  %8929 = vmatprep.subr.mxu0 0.0
  %8930 = vmatpush1.msra.mxu0 0.0
  %8931 = vmatprep.subr.mxu0 0.0
  %8932 = vmatpush1.msra.mxu0 0.0
  %8933 = vmatprep.mubr.f32.mxu0 0.0
  %8934 = vmatmul.mubr.f32.gmra.mrb[0].mxu0 %v8867
  %v8935 = vpop.f32.mrb[0].mxu0
  %v8936 = vadd.f32 0.0, %v8935
  %v8937 = vpop.f32.mrb[0].mxu0
  %8938 = vdwg.mxu0
  %8939 = vrot.lane.b32.xlu0 %v7939, 104
  %v8940 = vpop.permute.xlu0 %8939
  %8941 = vrot.lane.b32.xlu0 %v7939, 72
  %v8942 = vpop.permute.xlu0 %8941
  %v8943 = vsel %vm168, %v8940, 0
  %v8945 = vsel %vm168, %v8942, 0
  %8947 = vmatprep.subr.mxu0 0.0
  %8948 = vmatpush1.xpose.msra.mxu0 %v8945
  %8949 = vmatprep.subr.mxu0 0.0
  %8950 = vmatpush1.xpose.msra.mxu0 0.0
  %8951 = vmatprep.subr.mxu0 0.0
  %8952 = vmatpush1.xpose.msra.mxu0 0.0
  %8953 = vmatprep.subr.mxu0 0.0
  %8954 = vmatpush1.xpose.msra.mxu0 0.0
  %8955 = vmatprep.subr.mxu0 0.0
  %8956 = vmatpush1.xpose.msra.mxu0 0.0
  %8957 = vmatprep.subr.mxu0 0.0
  %8958 = vmatpush1.xpose.msra.mxu0 0.0
  %8959 = vmatprep.subr.mxu0 0.0
  %8960 = vmatpush1.xpose.msra.mxu0 0.0
  %8961 = vmatprep.subr.mxu0 0.0
  %8962 = vmatpush1.xpose.msra.mxu0 0.0
  %8963 = vmatprep.subr.mxu0 0.0
  %8964 = vmatpush1.xpose.msra.mxu0 0.0
  %8965 = vmatprep.subr.mxu0 0.0
  %8966 = vmatpush1.xpose.msra.mxu0 0.0
  %8967 = vmatprep.subr.mxu0 0.0
  %8968 = vmatpush1.xpose.msra.mxu0 0.0
  %8969 = vmatprep.subr.mxu0 0.0
  %8970 = vmatpush1.xpose.msra.mxu0 0.0
  %8971 = vmatprep.subr.mxu0 0.0
  %8972 = vmatpush1.xpose.msra.mxu0 0.0
  %8973 = vmatprep.subr.mxu0 0.0
  %8974 = vmatpush1.xpose.msra.mxu0 0.0
  %8975 = vmatprep.subr.mxu0 0.0
  %8976 = vmatpush1.xpose.msra.mxu0 0.0
  %8977 = vmatprep.subr.mxu0 0.0
  %8978 = vmatpush1.xpose.msra.mxu0 0.0
  %8979 = vmatprep.subr.mxu0 0.0
  %8980 = vmatpush1.xpose.msra.mxu0 0.0
  %8981 = vmatprep.subr.mxu0 0.0
  %8982 = vmatpush1.xpose.msra.mxu0 0.0
  %8983 = vmatprep.subr.mxu0 0.0
  %8984 = vmatpush1.xpose.msra.mxu0 0.0
  %8985 = vmatprep.subr.mxu0 0.0
  %8986 = vmatpush1.xpose.msra.mxu0 0.0
  %8987 = vmatprep.subr.mxu0 0.0
  %8988 = vmatpush1.xpose.msra.mxu0 0.0
  %8989 = vmatprep.subr.mxu0 0.0
  %8990 = vmatpush1.xpose.msra.mxu0 0.0
  %8991 = vmatprep.subr.mxu0 0.0
  %8992 = vmatpush1.xpose.msra.mxu0 0.0
  %8993 = vmatprep.subr.mxu0 0.0
  %8994 = vmatpush1.xpose.msra.mxu0 0.0
  %8995 = vmatprep.subr.mxu0 0.0
  %8996 = vmatpush1.xpose.msra.mxu0 0.0
  %8997 = vmatprep.subr.mxu0 0.0
  %8998 = vmatpush1.xpose.msra.mxu0 0.0
  %8999 = vmatprep.subr.mxu0 0.0
  %9000 = vmatpush1.xpose.msra.mxu0 0.0
  %9001 = vmatprep.subr.mxu0 0.0
  %9002 = vmatpush1.xpose.msra.mxu0 0.0
  %9003 = vmatprep.subr.mxu0 0.0
  %9004 = vmatpush1.xpose.msra.mxu0 0.0
  %9005 = vmatprep.subr.mxu0 0.0
  %9006 = vmatpush1.xpose.msra.mxu0 0.0
  %9007 = vmatprep.subr.mxu0 0.0
  %9008 = vmatpush1.xpose.msra.mxu0 0.0
  %9009 = vmatprep.subr.mxu0 0.0
  %9010 = vmatpush1.xpose.msra.mxu0 0.0
  %9011 = vmatprep.mubr.f32.mxu0 0.0
  %9012 = vmatmul.mubr.f32.gmra.mrb[0].mxu0 %v8943
  %v9013 = vpop.f32.mrb[0].mxu0
  %v9014 = vadd.f32 0.0, %v9013
  %v9015 = vpop.f32.mrb[0].mxu0
  %9016 = vdwg.mxu0
  %9017 = vrot.lane.b32.xlu0 %v7942, 104
  %v9018 = vpop.permute.xlu0 %9017
  %9019 = vrot.lane.b32.xlu0 %v7942, 72
  %v9020 = vpop.permute.xlu0 %9019
  %v9021 = vsel %vm168, %v9018, 0
  %v9023 = vsel %vm168, %v9020, 0
  %9025 = vmatprep.subr.mxu0 0.0
  %9026 = vmatpush1.xpose.msra.mxu0 %v9023
  %9027 = vmatprep.subr.mxu0 0.0
  %9028 = vmatpush1.xpose.msra.mxu0 0.0
  %9029 = vmatprep.subr.mxu0 0.0
  %9030 = vmatpush1.xpose.msra.mxu0 0.0
  %9031 = vmatprep.subr.mxu0 0.0
  %9032 = vmatpush1.xpose.msra.mxu0 0.0
  %9033 = vmatprep.subr.mxu0 0.0
  %9034 = vmatpush1.xpose.msra.mxu0 0.0
  %9035 = vmatprep.subr.mxu0 0.0
  %9036 = vmatpush1.xpose.msra.mxu0 0.0
  %9037 = vmatprep.subr.mxu0 0.0
  %9038 = vmatpush1.xpose.msra.mxu0 0.0
  %9039 = vmatprep.subr.mxu0 0.0
  %9040 = vmatpush1.xpose.msra.mxu0 0.0
  %9041 = vmatprep.subr.mxu0 0.0
  %9042 = vmatpush1.xpose.msra.mxu0 0.0
  %9043 = vmatprep.subr.mxu0 0.0
  %9044 = vmatpush1.xpose.msra.mxu0 0.0
  %9045 = vmatprep.subr.mxu0 0.0
  %9046 = vmatpush1.xpose.msra.mxu0 0.0
  %9047 = vmatprep.subr.mxu0 0.0
  %9048 = vmatpush1.xpose.msra.mxu0 0.0
  %9049 = vmatprep.subr.mxu0 0.0
  %9050 = vmatpush1.xpose.msra.mxu0 0.0
  %9051 = vmatprep.subr.mxu0 0.0
  %9052 = vmatpush1.xpose.msra.mxu0 0.0
  %9053 = vmatprep.subr.mxu0 0.0
  %9054 = vmatpush1.xpose.msra.mxu0 0.0
  %9055 = vmatprep.subr.mxu0 0.0
  %9056 = vmatpush1.xpose.msra.mxu0 0.0
  %9057 = vmatprep.subr.mxu0 0.0
  %9058 = vmatpush1.xpose.msra.mxu0 0.0
  %9059 = vmatprep.subr.mxu0 0.0
  %9060 = vmatpush1.xpose.msra.mxu0 0.0
  %9061 = vmatprep.subr.mxu0 0.0
  %9062 = vmatpush1.xpose.msra.mxu0 0.0
  %9063 = vmatprep.subr.mxu0 0.0
  %9064 = vmatpush1.xpose.msra.mxu0 0.0
  %9065 = vmatprep.subr.mxu0 0.0
  %9066 = vmatpush1.xpose.msra.mxu0 0.0
  %9067 = vmatprep.subr.mxu0 0.0
  %9068 = vmatpush1.xpose.msra.mxu0 0.0
  %9069 = vmatprep.subr.mxu0 0.0
  %9070 = vmatpush1.xpose.msra.mxu0 0.0
  %9071 = vmatprep.subr.mxu0 0.0
  %9072 = vmatpush1.xpose.msra.mxu0 0.0
  %9073 = vmatprep.subr.mxu0 0.0
  %9074 = vmatpush1.xpose.msra.mxu0 0.0
  %9075 = vmatprep.subr.mxu0 0.0
  %9076 = vmatpush1.xpose.msra.mxu0 0.0
  %9077 = vmatprep.subr.mxu0 0.0
  %9078 = vmatpush1.xpose.msra.mxu0 0.0
  %9079 = vmatprep.subr.mxu0 0.0
  %9080 = vmatpush1.xpose.msra.mxu0 0.0
  %9081 = vmatprep.subr.mxu0 0.0
  %9082 = vmatpush1.xpose.msra.mxu0 0.0
  %9083 = vmatprep.subr.mxu0 0.0
  %9084 = vmatpush1.xpose.msra.mxu0 0.0
  %9085 = vmatprep.subr.mxu0 0.0
  %9086 = vmatpush1.xpose.msra.mxu0 0.0
  %9087 = vmatprep.subr.mxu0 0.0
  %9088 = vmatpush1.xpose.msra.mxu0 0.0
  %9089 = vmatprep.mubr.f32.mxu0 0.0
  %9090 = vmatmul.mubr.f32.gmra.mrb[0].mxu0 %v9021
  %v9091 = vpop.f32.mrb[0].mxu0
  %v9092 = vadd.f32 0.0, %v9091
  %v9093 = vpop.f32.mrb[0].mxu0
  %9094 = vdwg.mxu0
  %v9095 = vmul.f32 %v9014, 0.35355338
  %v9096 = vmul.f32 %v9092, 0.35355338
  %v9097 = vsel %vm168, %v9095, -inf
  %9098 = vmax.xlane.f32.xlu0 %v9097
  %v9099 = vpop.xlane.xlu0 %9098
  %v9100 = vsel %vm168, %v9096, -inf
  %9101 = vmax.xlane.f32.xlu0 %v9100
  %v9102 = vpop.xlane.xlu0 %9101
  %v9103 = vsub.f32 %v9095, %v9099
  %v9104 = vsub.f32 %v9096, %v9102
  %v9105 = vmul.f32 %v9103, 1.442695
  %v9106 = vpow.pop %v9105
  %v9107 = vmul.f32 %v9104, 1.442695
  %v9108 = vpow.pop %v9107
  %v9109 = vsel %vm168, %v9106, 0.0
  %9110 = vadd.xlane.f32.xlu0 %v9109
  %v9111 = vpop.xlane.xlu0 %9110
  %v9112 = vsel %vm168, %v9108, 0.0
  %9113 = vadd.xlane.f32.xlu0 %v9112
  %v9114 = vpop.xlane.xlu0 %9113
  %v9115 = vrcp.pop %v9111
  %v9116 = vrcp.pop %v9114
  %v9117 = vmul.f32 %v9106, %v9115
  %v9118 = vmul.f32 %v9108, %v9116
  %9119 = vrot.lane.b32.xlu0 %v7939, 40
  %v9120 = vpop.permute.xlu0 %9119
  %v9123 = vsel %vm168, %v9117, 0
  %9125 = vmatprep.subr.mxu0 0.0
  %9126 = vmatpush1.msra.mxu0 %v9120
  %9127 = vmatprep.subr.mxu0 0.0
  %9128 = vmatpush1.msra.mxu0 0.0
  %9129 = vmatprep.subr.mxu0 0.0
  %9130 = vmatpush1.msra.mxu0 0.0
  %9131 = vmatprep.subr.mxu0 0.0
  %9132 = vmatpush1.msra.mxu0 0.0
  %9133 = vmatprep.subr.mxu0 0.0
  %9134 = vmatpush1.msra.mxu0 0.0
  %9135 = vmatprep.subr.mxu0 0.0
  %9136 = vmatpush1.msra.mxu0 0.0
  %9137 = vmatprep.subr.mxu0 0.0
  %9138 = vmatpush1.msra.mxu0 0.0
  %9139 = vmatprep.subr.mxu0 0.0
  %9140 = vmatpush1.msra.mxu0 0.0
  %9141 = vmatprep.subr.mxu0 0.0
  %9142 = vmatpush1.msra.mxu0 0.0
  %9143 = vmatprep.subr.mxu0 0.0
  %9144 = vmatpush1.msra.mxu0 0.0
  %9145 = vmatprep.subr.mxu0 0.0
  %9146 = vmatpush1.msra.mxu0 0.0
  %9147 = vmatprep.subr.mxu0 0.0
  %9148 = vmatpush1.msra.mxu0 0.0
  %9149 = vmatprep.subr.mxu0 0.0
  %9150 = vmatpush1.msra.mxu0 0.0
  %9151 = vmatprep.subr.mxu0 0.0
  %9152 = vmatpush1.msra.mxu0 0.0
  %9153 = vmatprep.subr.mxu0 0.0
  %9154 = vmatpush1.msra.mxu0 0.0
  %9155 = vmatprep.subr.mxu0 0.0
  %9156 = vmatpush1.msra.mxu0 0.0
  %9157 = vmatprep.subr.mxu0 0.0
  %9158 = vmatpush1.msra.mxu0 0.0
  %9159 = vmatprep.subr.mxu0 0.0
  %9160 = vmatpush1.msra.mxu0 0.0
  %9161 = vmatprep.subr.mxu0 0.0
  %9162 = vmatpush1.msra.mxu0 0.0
  %9163 = vmatprep.subr.mxu0 0.0
  %9164 = vmatpush1.msra.mxu0 0.0
  %9165 = vmatprep.subr.mxu0 0.0
  %9166 = vmatpush1.msra.mxu0 0.0
  %9167 = vmatprep.subr.mxu0 0.0
  %9168 = vmatpush1.msra.mxu0 0.0
  %9169 = vmatprep.subr.mxu0 0.0
  %9170 = vmatpush1.msra.mxu0 0.0
  %9171 = vmatprep.subr.mxu0 0.0
  %9172 = vmatpush1.msra.mxu0 0.0
  %9173 = vmatprep.subr.mxu0 0.0
  %9174 = vmatpush1.msra.mxu0 0.0
  %9175 = vmatprep.subr.mxu0 0.0
  %9176 = vmatpush1.msra.mxu0 0.0
  %9177 = vmatprep.subr.mxu0 0.0
  %9178 = vmatpush1.msra.mxu0 0.0
  %9179 = vmatprep.subr.mxu0 0.0
  %9180 = vmatpush1.msra.mxu0 0.0
  %9181 = vmatprep.subr.mxu0 0.0
  %9182 = vmatpush1.msra.mxu0 0.0
  %9183 = vmatprep.subr.mxu0 0.0
  %9184 = vmatpush1.msra.mxu0 0.0
  %9185 = vmatprep.subr.mxu0 0.0
  %9186 = vmatpush1.msra.mxu0 0.0
  %9187 = vmatprep.subr.mxu0 0.0
  %9188 = vmatpush1.msra.mxu0 0.0
  %9189 = vmatprep.mubr.f32.mxu0 0.0
  %9190 = vmatmul.mubr.f32.gmra.mrb[0].mxu0 %v9123
  %v9191 = vpop.f32.mrb[0].mxu0
  %v9192 = vadd.f32 0.0, %v9191
  %v9193 = vpop.f32.mrb[0].mxu0
  %9194 = vdwg.mxu0
  %9195 = vrot.lane.b32.xlu0 %v7942, 40
  %v9196 = vpop.permute.xlu0 %9195
  %v9199 = vsel %vm168, %v9118, 0
  %9201 = vmatprep.subr.mxu0 0.0
  %9202 = vmatpush1.msra.mxu0 %v9196
  %9203 = vmatprep.subr.mxu0 0.0
  %9204 = vmatpush1.msra.mxu0 0.0
  %9205 = vmatprep.subr.mxu0 0.0
  %9206 = vmatpush1.msra.mxu0 0.0
  %9207 = vmatprep.subr.mxu0 0.0
  %9208 = vmatpush1.msra.mxu0 0.0
  %9209 = vmatprep.subr.mxu0 0.0
  %9210 = vmatpush1.msra.mxu0 0.0
  %9211 = vmatprep.subr.mxu0 0.0
  %9212 = vmatpush1.msra.mxu0 0.0
  %9213 = vmatprep.subr.mxu0 0.0
  %9214 = vmatpush1.msra.mxu0 0.0
  %9215 = vmatprep.subr.mxu0 0.0
  %9216 = vmatpush1.msra.mxu0 0.0
  %9217 = vmatprep.subr.mxu0 0.0
  %9218 = vmatpush1.msra.mxu0 0.0
  %9219 = vmatprep.subr.mxu0 0.0
  %9220 = vmatpush1.msra.mxu0 0.0
  %9221 = vmatprep.subr.mxu0 0.0
  %9222 = vmatpush1.msra.mxu0 0.0
  %9223 = vmatprep.subr.mxu0 0.0
  %9224 = vmatpush1.msra.mxu0 0.0
  %9225 = vmatprep.subr.mxu0 0.0
  %9226 = vmatpush1.msra.mxu0 0.0
  %9227 = vmatprep.subr.mxu0 0.0
  %9228 = vmatpush1.msra.mxu0 0.0
  %9229 = vmatprep.subr.mxu0 0.0
  %9230 = vmatpush1.msra.mxu0 0.0
  %9231 = vmatprep.subr.mxu0 0.0
  %9232 = vmatpush1.msra.mxu0 0.0
  %9233 = vmatprep.subr.mxu0 0.0
  %9234 = vmatpush1.msra.mxu0 0.0
  %9235 = vmatprep.subr.mxu0 0.0
  %9236 = vmatpush1.msra.mxu0 0.0
  %9237 = vmatprep.subr.mxu0 0.0
  %9238 = vmatpush1.msra.mxu0 0.0
  %9239 = vmatprep.subr.mxu0 0.0
  %9240 = vmatpush1.msra.mxu0 0.0
  %9241 = vmatprep.subr.mxu0 0.0
  %9242 = vmatpush1.msra.mxu0 0.0
  %9243 = vmatprep.subr.mxu0 0.0
  %9244 = vmatpush1.msra.mxu0 0.0
  %9245 = vmatprep.subr.mxu0 0.0
  %9246 = vmatpush1.msra.mxu0 0.0
  %9247 = vmatprep.subr.mxu0 0.0
  %9248 = vmatpush1.msra.mxu0 0.0
  %9249 = vmatprep.subr.mxu0 0.0
  %9250 = vmatpush1.msra.mxu0 0.0
  %9251 = vmatprep.subr.mxu0 0.0
  %9252 = vmatpush1.msra.mxu0 0.0
  %9253 = vmatprep.subr.mxu0 0.0
  %9254 = vmatpush1.msra.mxu0 0.0
  %9255 = vmatprep.subr.mxu0 0.0
  %9256 = vmatpush1.msra.mxu0 0.0
  %9257 = vmatprep.subr.mxu0 0.0
  %9258 = vmatpush1.msra.mxu0 0.0
  %9259 = vmatprep.subr.mxu0 0.0
  %9260 = vmatpush1.msra.mxu0 0.0
  %9261 = vmatprep.subr.mxu0 0.0
  %9262 = vmatpush1.msra.mxu0 0.0
  %9263 = vmatprep.subr.mxu0 0.0
  %9264 = vmatpush1.msra.mxu0 0.0
  %9265 = vmatprep.mubr.f32.mxu0 0.0
  %9266 = vmatmul.mubr.f32.gmra.mrb[0].mxu0 %v9199
  %v9267 = vpop.f32.mrb[0].mxu0
  %v9268 = vadd.f32 0.0, %v9267
  %v9269 = vpop.f32.mrb[0].mxu0
  %9270 = vdwg.mxu0
  %9273 = vrot.lane.b32.xlu0 %v8528, 8
  %v9274 = vpop.permute.xlu0 %9273
  %9275 = vrot.lane.b32.xlu0 %v8604, 8
  %v9276 = vpop.permute.xlu0 %9275
  %9281 = vrot.lane.b32.xlu0 %v8860, 16
  %v9282 = vpop.permute.xlu0 %9281
  %9283 = vrot.lane.b32.xlu0 %v8936, 16
  %v9284 = vpop.permute.xlu0 %9283
  %9289 = vrot.lane.b32.xlu0 %v9192, 24
  %v9290 = vpop.permute.xlu0 %9289
  %9291 = vrot.lane.b32.xlu0 %v9268, 24
  %v9292 = vpop.permute.xlu0 %9291
  %v9295 = vsel %vm168, %v8196, %v9274
  %v9296 = vsel %vm168, %v8272, %v9276
  %v9297 = vsel %vm4926, %v9295, %v9282
  %v9298 = vsel %vm4926, %v9296, %v9284
  %v9299 = vsel %vm4934, %v9297, %v9290
  %v9300 = vsel %vm4934, %v9298, %v9292
  %v9301 = vpack.c.bf16 %v9300, %v9299
  %v9302 = vld [vmem:[%s8] sm:$0xf]
  %v9303 = vld [vmem:[%s8 + $0x4] sm:$0xf]
  %v9304 = vld [vmem:[%s8 + $0x8] sm:$0xf]
  %v9305 = vld [vmem:[%s8 + $0xc] sm:$0xf]
  %v9306 = vld [vmem:[%s11 + $0x1] sm:$0x1]
  %v9308 = vlaneseq
  %v9309 = vshrl.u32 %v9308, 7
  %v9310 = vsub.s32 0, %v9309
  %v9311 = vrot.slane %v9306, %v9310
  %v9317 = vunpack.c.l.b16 %v9302
  %v9318 = vunpack.c.l.b16 %v9303
  %v9319 = vunpack.c.l.b16 %v9304
  %v9320 = vunpack.c.l.b16 %v9305
  %v9321 = vpack.c.b16 %v9318, %v9317
  %v9322 = vpack.c.b16 %v9320, %v9319
  %v9326 = vsel %vm88, %v9301, 0
  %9328 = vmatprep.subr.bf16.mxu0 0
  %9329 = vmatpush1.bf16.msra.mxu0 %v9321
  %9330 = vmatprep.subr.bf16.mxu0 0
  %9331 = vmatpush1.bf16.msra.mxu0 %v9322
  %9332 = vmatprep.subr.bf16.mxu0 0
  %9333 = vmatpush1.bf16.msra.mxu0 0
  %9334 = vmatprep.subr.bf16.mxu0 0
  %9335 = vmatpush1.bf16.msra.mxu0 0
  %9336 = vmatprep.subr.bf16.mxu0 0
  %9337 = vmatpush1.bf16.msra.mxu0 0
  %9338 = vmatprep.subr.bf16.mxu0 0
  %9339 = vmatpush1.bf16.msra.mxu0 0
  %9340 = vmatprep.subr.bf16.mxu0 0
  %9341 = vmatpush1.bf16.msra.mxu0 0
  %9342 = vmatprep.subr.bf16.mxu0 0
  %9343 = vmatpush1.bf16.msra.mxu0 0
  %9344 = vmatprep.subr.bf16.mxu0 0
  %9345 = vmatpush1.bf16.msra.mxu0 0
  %9346 = vmatprep.subr.bf16.mxu0 0
  %9347 = vmatpush1.bf16.msra.mxu0 0
  %9348 = vmatprep.subr.bf16.mxu0 0
  %9349 = vmatpush1.bf16.msra.mxu0 0
  %9350 = vmatprep.subr.bf16.mxu0 0
  %9351 = vmatpush1.bf16.msra.mxu0 0
  %9352 = vmatprep.subr.bf16.mxu0 0
  %9353 = vmatpush1.bf16.msra.mxu0 0
  %9354 = vmatprep.subr.bf16.mxu0 0
  %9355 = vmatpush1.bf16.msra.mxu0 0
  %9356 = vmatprep.subr.bf16.mxu0 0
  %9357 = vmatpush1.bf16.msra.mxu0 0
  %9358 = vmatprep.subr.bf16.mxu0 0
  %9359 = vmatpush1.bf16.msra.mxu0 0
  %9360 = vmatprep.mubr.bf16.mxu0 0
  %9361 = vmatmul.mubr.bf16.gmra.mrb[0].mxu0 %v9326
  %v9362 = vpop.f32.mrb[0].mxu0
  %v9363 = vadd.f32 %v9311, %v9362
  %v9364 = vpop.f32.mrb[0].mxu0
  %v9365 = vpop.f32.mrb[0].mxu0
  %v9366 = vadd.f32 %v9311, %v9365
  %v9367 = vpop.f32.mrb[0].mxu0
  %9368 = vdwg.mxu0
  %v9369 = vadd.f32 %v7870, %v9363
  %v9370 = vadd.f32 %v7871, %v9366
  %v9371 = vld [vmem:[%s11 + $0x13] sm:$0x1]
  %v9372 = vld [vmem:[%s11 + $0x14] sm:$0x1]
  %v9373 = vsel %vm88, %v9369, 0.0
  %9374 = vadd.xlane.f32.xlu0 %v9373
  %v9375 = vpop.xlane.xlu0 %9374
  %v9376 = vsel %vm88, %v9370, 0.0
  %9377 = vadd.xlane.f32.xlu0 %v9376
  %v9378 = vpop.xlane.xlu0 %9377
  %v9379 = vmul.f32 %v9375, %v5075
  %v9380 = vmul.f32 %v9378, %v5075
  %v9381 = vsub.f32 %v9369, %v9379
  %v9382 = vsub.f32 %v9370, %v9380
  %v9383 = vmul.f32 %v9381, %v9381
  %v9384 = vmul.f32 %v9382, %v9382
  %v9385 = vsel %vm88, %v9383, 0.0
  %9386 = vadd.xlane.f32.xlu0 %v9385
  %v9387 = vpop.xlane.xlu0 %9386
  %v9388 = vsel %vm88, %v9384, 0.0
  %9389 = vadd.xlane.f32.xlu0 %v9388
  %v9390 = vpop.xlane.xlu0 %9389
  %v9391 = vmul.f32 %v9387, %v5075
  %v9392 = vmul.f32 %v9390, %v5075
  %v9393 = vadd.f32 %v9391, 1e-05
  %v9394 = vadd.f32 %v9392, 1e-05
  %v9395 = vrsqrt.pop %v9393
  %v9396 = vrsqrt.pop %v9394
  %v9397 = vmul.f32 %v9381, %v9395
  %v9398 = vmul.f32 %v9382, %v9396
  %v9400 = vlaneseq
  %v9401 = vshrl.u32 %v9400, 7
  %v9402 = vsub.s32 0, %v9401
  %v9403 = vrot.slane %v9371, %v9402
  %v9405 = vmul.f32 %v9397, %v9403
  %v9406 = vmul.f32 %v9398, %v9403
  %v9408 = vlaneseq
  %v9409 = vshrl.u32 %v9408, 7
  %v9410 = vsub.s32 0, %v9409
  %v9411 = vrot.slane %v9372, %v9410
  %v9413 = vadd.f32 %v9405, %v9411
  %v9414 = vadd.f32 %v9406, %v9411
  %v9415 = vpack.c.bf16 %v9414, %v9413
  %v9416 = vld [vmem:[%s9] sm:$0xff]
  %v9417 = vld [vmem:[%s9 + $0x8] sm:$0xff]
  %v9418 = vld [vmem:[%s9 + $0x10] sm:$0xff]
  %v9419 = vld [vmem:[%s9 + $0x18] sm:$0xff]
  %v9420 = vld [vmem:[%s9 + $0x20] sm:$0xff]
  %v9421 = vld [vmem:[%s9 + $0x28] sm:$0xff]
  %v9422 = vld [vmem:[%s9 + $0x30] sm:$0xff]
  %v9423 = vld [vmem:[%s9 + $0x38] sm:$0xff]
  %v9424 = vld [vmem:[%s9 + $0x40] sm:$0xff]
  %v9425 = vld [vmem:[%s9 + $0x48] sm:$0xff]
  %v9426 = vld [vmem:[%s9 + $0x50] sm:$0xff]
  %v9427 = vld [vmem:[%s9 + $0x58] sm:$0xff]
  %v9428 = vld [vmem:[%s9 + $0x60] sm:$0xff]
  %v9429 = vld [vmem:[%s9 + $0x68] sm:$0xff]
  %v9430 = vld [vmem:[%s9 + $0x70] sm:$0xff]
  %v9431 = vld [vmem:[%s9 + $0x78] sm:$0xff]
  %v9432 = vld [vmem:[%s9 + $0x80] sm:$0xff]
  %v9433 = vld [vmem:[%s9 + $0x88] sm:$0xff]
  %v9434 = vld [vmem:[%s9 + $0x90] sm:$0xff]
  %v9435 = vld [vmem:[%s9 + $0x98] sm:$0xff]
  %v9436 = vld [vmem:[%s9 + $0xa0] sm:$0xff]
  %v9437 = vld [vmem:[%s9 + $0xa8] sm:$0xff]
  %v9438 = vld [vmem:[%s9 + $0xb0] sm:$0xff]
  %v9439 = vld [vmem:[%s9 + $0xb8] sm:$0xff]
  %v9440 = vld [vmem:[%s9 + $0xc0] sm:$0xff]
  %v9441 = vld [vmem:[%s9 + $0xc8] sm:$0xff]
  %v9442 = vld [vmem:[%s9 + $0xd0] sm:$0xff]
  %v9443 = vld [vmem:[%s9 + $0xd8] sm:$0xff]
  %v9444 = vld [vmem:[%s9 + $0xe0] sm:$0xff]
  %v9445 = vld [vmem:[%s9 + $0xe8] sm:$0xff]
  %v9446 = vld [vmem:[%s9 + $0xf0] sm:$0xff]
  %v9447 = vld [vmem:[%s9 + $0xf8] sm:$0xff]
  %v9448 = vld [vmem:[%s11 + $0x2] sm:$0xff]
  %v9449 = vld [vmem:[%s11 + $0xa] sm:$0xff]
  %v9452 = vlaneseq
  %v9453 = vshrl.u32 %v9452, 7
  %v9454 = vsub.s32 0, %v9453
  %v9455 = vrot.slane %v9448, %v9454
  %v9456 = vlaneseq
  %v9457 = vshrl.u32 %v9456, 7
  %v9458 = vsub.s32 1, %v9457
  %v9459 = vrot.slane %v9448, %v9458
  %v9460 = vlaneseq
  %v9461 = vshrl.u32 %v9460, 7
  %v9462 = vsub.s32 2, %v9461
  %v9463 = vrot.slane %v9448, %v9462
  %v9464 = vlaneseq
  %v9465 = vshrl.u32 %v9464, 7
  %v9466 = vsub.s32 3, %v9465
  %v9467 = vrot.slane %v9448, %v9466
  %v9468 = vlaneseq
  %v9469 = vshrl.u32 %v9468, 7
  %v9470 = vsub.s32 4, %v9469
  %v9471 = vrot.slane %v9448, %v9470
  %v9472 = vlaneseq
  %v9473 = vshrl.u32 %v9472, 7
  %v9474 = vsub.s32 5, %v9473
  %v9475 = vrot.slane %v9448, %v9474
  %v9476 = vlaneseq
  %v9477 = vshrl.u32 %v9476, 7
  %v9478 = vsub.s32 6, %v9477
  %v9479 = vrot.slane %v9448, %v9478
  %v9480 = vlaneseq
  %v9481 = vshrl.u32 %v9480, 7
  %v9482 = vsub.s32 7, %v9481
  %v9483 = vrot.slane %v9448, %v9482
  %v9484 = vlaneseq
  %v9485 = vshrl.u32 %v9484, 7
  %v9486 = vsub.s32 0, %v9485
  %v9487 = vrot.slane %v9449, %v9486
  %v9488 = vlaneseq
  %v9489 = vshrl.u32 %v9488, 7
  %v9490 = vsub.s32 1, %v9489
  %v9491 = vrot.slane %v9449, %v9490
  %v9492 = vlaneseq
  %v9493 = vshrl.u32 %v9492, 7
  %v9494 = vsub.s32 2, %v9493
  %v9495 = vrot.slane %v9449, %v9494
  %v9496 = vlaneseq
  %v9497 = vshrl.u32 %v9496, 7
  %v9498 = vsub.s32 3, %v9497
  %v9499 = vrot.slane %v9449, %v9498
  %v9500 = vlaneseq
  %v9501 = vshrl.u32 %v9500, 7
  %v9502 = vsub.s32 4, %v9501
  %v9503 = vrot.slane %v9449, %v9502
  %v9504 = vlaneseq
  %v9505 = vshrl.u32 %v9504, 7
  %v9506 = vsub.s32 5, %v9505
  %v9507 = vrot.slane %v9449, %v9506
  %v9508 = vlaneseq
  %v9509 = vshrl.u32 %v9508, 7
  %v9510 = vsub.s32 6, %v9509
  %v9511 = vrot.slane %v9449, %v9510
  %v9512 = vlaneseq
  %v9513 = vshrl.u32 %v9512, 7
  %v9514 = vsub.s32 7, %v9513
  %v9515 = vrot.slane %v9449, %v9514
  %v9564 = vunpack.c.l.b16 %v9416
  %v9565 = vunpack.c.h.b16 %v9416
  %v9566 = vunpack.c.l.b16 %v9417
  %v9567 = vunpack.c.h.b16 %v9417
  %v9568 = vunpack.c.l.b16 %v9418
  %v9569 = vunpack.c.h.b16 %v9418
  %v9570 = vunpack.c.l.b16 %v9419
  %v9571 = vunpack.c.h.b16 %v9419
  %v9572 = vunpack.c.l.b16 %v9420
  %v9573 = vunpack.c.h.b16 %v9420
  %v9574 = vunpack.c.l.b16 %v9421
  %v9575 = vunpack.c.h.b16 %v9421
  %v9576 = vunpack.c.l.b16 %v9422
  %v9577 = vunpack.c.h.b16 %v9422
  %v9578 = vunpack.c.l.b16 %v9423
  %v9579 = vunpack.c.h.b16 %v9423
  %v9580 = vunpack.c.l.b16 %v9424
  %v9581 = vunpack.c.h.b16 %v9424
  %v9582 = vunpack.c.l.b16 %v9425
  %v9583 = vunpack.c.h.b16 %v9425
  %v9584 = vunpack.c.l.b16 %v9426
  %v9585 = vunpack.c.h.b16 %v9426
  %v9586 = vunpack.c.l.b16 %v9427
  %v9587 = vunpack.c.h.b16 %v9427
  %v9588 = vunpack.c.l.b16 %v9428
  %v9589 = vunpack.c.h.b16 %v9428
  %v9590 = vunpack.c.l.b16 %v9429
  %v9591 = vunpack.c.h.b16 %v9429
  %v9592 = vunpack.c.l.b16 %v9430
  %v9593 = vunpack.c.h.b16 %v9430
  %v9594 = vunpack.c.l.b16 %v9431
  %v9595 = vunpack.c.h.b16 %v9431
  %v9596 = vunpack.c.l.b16 %v9432
  %v9597 = vunpack.c.h.b16 %v9432
  %v9598 = vunpack.c.l.b16 %v9433
  %v9599 = vunpack.c.h.b16 %v9433
  %v9600 = vunpack.c.l.b16 %v9434
  %v9601 = vunpack.c.h.b16 %v9434
  %v9602 = vunpack.c.l.b16 %v9435
  %v9603 = vunpack.c.h.b16 %v9435
  %v9604 = vunpack.c.l.b16 %v9436
  %v9605 = vunpack.c.h.b16 %v9436
  %v9606 = vunpack.c.l.b16 %v9437
  %v9607 = vunpack.c.h.b16 %v9437
  %v9608 = vunpack.c.l.b16 %v9438
  %v9609 = vunpack.c.h.b16 %v9438
  %v9610 = vunpack.c.l.b16 %v9439
  %v9611 = vunpack.c.h.b16 %v9439
  %v9612 = vunpack.c.l.b16 %v9440
  %v9613 = vunpack.c.h.b16 %v9440
  %v9614 = vunpack.c.l.b16 %v9441
  %v9615 = vunpack.c.h.b16 %v9441
  %v9616 = vunpack.c.l.b16 %v9442
  %v9617 = vunpack.c.h.b16 %v9442
  %v9618 = vunpack.c.l.b16 %v9443
  %v9619 = vunpack.c.h.b16 %v9443
  %v9620 = vunpack.c.l.b16 %v9444
  %v9621 = vunpack.c.h.b16 %v9444
  %v9622 = vunpack.c.l.b16 %v9445
  %v9623 = vunpack.c.h.b16 %v9445
  %v9624 = vunpack.c.l.b16 %v9446
  %v9625 = vunpack.c.h.b16 %v9446
  %v9626 = vunpack.c.l.b16 %v9447
  %v9627 = vunpack.c.h.b16 %v9447
  %v9628 = vpack.c.b16 %v9580, %v9564
  %v9629 = vpack.c.b16 %v9581, %v9565
  %v9630 = vpack.c.b16 %v9582, %v9566
  %v9631 = vpack.c.b16 %v9583, %v9567
  %v9632 = vpack.c.b16 %v9584, %v9568
  %v9633 = vpack.c.b16 %v9585, %v9569
  %v9634 = vpack.c.b16 %v9586, %v9570
  %v9635 = vpack.c.b16 %v9587, %v9571
  %v9636 = vpack.c.b16 %v9588, %v9572
  %v9637 = vpack.c.b16 %v9589, %v9573
  %v9638 = vpack.c.b16 %v9590, %v9574
  %v9639 = vpack.c.b16 %v9591, %v9575
  %v9640 = vpack.c.b16 %v9592, %v9576
  %v9641 = vpack.c.b16 %v9593, %v9577
  %v9642 = vpack.c.b16 %v9594, %v9578
  %v9643 = vpack.c.b16 %v9595, %v9579
  %v9644 = vpack.c.b16 %v9612, %v9596
  %v9645 = vpack.c.b16 %v9613, %v9597
  %v9646 = vpack.c.b16 %v9614, %v9598
  %v9647 = vpack.c.b16 %v9615, %v9599
  %v9648 = vpack.c.b16 %v9616, %v9600
  %v9649 = vpack.c.b16 %v9617, %v9601
  %v9650 = vpack.c.b16 %v9618, %v9602
  %v9651 = vpack.c.b16 %v9619, %v9603
  %v9652 = vpack.c.b16 %v9620, %v9604
  %v9653 = vpack.c.b16 %v9621, %v9605
  %v9654 = vpack.c.b16 %v9622, %v9606
  %v9655 = vpack.c.b16 %v9623, %v9607
  %v9656 = vpack.c.b16 %v9624, %v9608
  %v9657 = vpack.c.b16 %v9625, %v9609
  %v9658 = vpack.c.b16 %v9626, %v9610
  %v9659 = vpack.c.b16 %v9627, %v9611
  %v9693 = vsel %vm88, %v9415, 0
  %9695 = vmatprep.subr.bf16.mxu0 %v9629
  %9696 = vmatpush1.bf16.msra.mxu0 %v9628
  %9697 = vmatprep.subr.bf16.mxu0 %v9645
  %9698 = vmatpush1.bf16.msra.mxu0 %v9644
  %9699 = vmatprep.subr.bf16.mxu0 0
  %9700 = vmatpush1.bf16.msra.mxu0 0
  %9701 = vmatprep.subr.bf16.mxu0 0
  %9702 = vmatpush1.bf16.msra.mxu0 0
  %9703 = vmatprep.subr.bf16.mxu0 0
  %9704 = vmatpush1.bf16.msra.mxu0 0
  %9705 = vmatprep.subr.bf16.mxu0 0
  %9706 = vmatpush1.bf16.msra.mxu0 0
  %9707 = vmatprep.subr.bf16.mxu0 0
  %9708 = vmatpush1.bf16.msra.mxu0 0
  %9709 = vmatprep.subr.bf16.mxu0 0
  %9710 = vmatpush1.bf16.msra.mxu0 0
  %9711 = vmatprep.subr.bf16.mxu0 0
  %9712 = vmatpush1.bf16.msra.mxu0 0
  %9713 = vmatprep.subr.bf16.mxu0 0
  %9714 = vmatpush1.bf16.msra.mxu0 0
  %9715 = vmatprep.subr.bf16.mxu0 0
  %9716 = vmatpush1.bf16.msra.mxu0 0
  %9717 = vmatprep.subr.bf16.mxu0 0
  %9718 = vmatpush1.bf16.msra.mxu0 0
  %9719 = vmatprep.subr.bf16.mxu0 0
  %9720 = vmatpush1.bf16.msra.mxu0 0
  %9721 = vmatprep.subr.bf16.mxu0 0
  %9722 = vmatpush1.bf16.msra.mxu0 0
  %9723 = vmatprep.subr.bf16.mxu0 0
  %9724 = vmatpush1.bf16.msra.mxu0 0
  %9725 = vmatprep.subr.bf16.mxu0 0
  %9726 = vmatpush1.bf16.msra.mxu0 0
  %9727 = vmatprep.mubr.bf16.mxu0 0
  %9728 = vmatmul.mubr.bf16.gmra.mrb[0].mxu0 %v9693
  %v9729 = vpop.f32.mrb[0].mxu0
  %v9730 = vadd.f32 %v9455, %v9729
  %v9731 = vpop.f32.mrb[0].mxu0
  %v9732 = vadd.f32 %v9459, %v9731
  %v9733 = vpop.f32.mrb[0].mxu0
  %v9734 = vadd.f32 %v9455, %v9733
  %v9735 = vpop.f32.mrb[0].mxu0
  %v9736 = vadd.f32 %v9459, %v9735
  %9737 = vdwg.mxu0
  %9738 = vmatprep.subr.bf16.mxu0 %v9631
  %9739 = vmatpush1.bf16.msra.mxu0 %v9630
  %9740 = vmatprep.subr.bf16.mxu0 %v9647
  %9741 = vmatpush1.bf16.msra.mxu0 %v9646
  %9742 = vmatprep.subr.bf16.mxu0 0
  %9743 = vmatpush1.bf16.msra.mxu0 0
  %9744 = vmatprep.subr.bf16.mxu0 0
  %9745 = vmatpush1.bf16.msra.mxu0 0
  %9746 = vmatprep.subr.bf16.mxu0 0
  %9747 = vmatpush1.bf16.msra.mxu0 0
  %9748 = vmatprep.subr.bf16.mxu0 0
  %9749 = vmatpush1.bf16.msra.mxu0 0
  %9750 = vmatprep.subr.bf16.mxu0 0
  %9751 = vmatpush1.bf16.msra.mxu0 0
  %9752 = vmatprep.subr.bf16.mxu0 0
  %9753 = vmatpush1.bf16.msra.mxu0 0
  %9754 = vmatprep.subr.bf16.mxu0 0
  %9755 = vmatpush1.bf16.msra.mxu0 0
  %9756 = vmatprep.subr.bf16.mxu0 0
  %9757 = vmatpush1.bf16.msra.mxu0 0
  %9758 = vmatprep.subr.bf16.mxu0 0
  %9759 = vmatpush1.bf16.msra.mxu0 0
  %9760 = vmatprep.subr.bf16.mxu0 0
  %9761 = vmatpush1.bf16.msra.mxu0 0
  %9762 = vmatprep.subr.bf16.mxu0 0
  %9763 = vmatpush1.bf16.msra.mxu0 0
  %9764 = vmatprep.subr.bf16.mxu0 0
  %9765 = vmatpush1.bf16.msra.mxu0 0
  %9766 = vmatprep.subr.bf16.mxu0 0
  %9767 = vmatpush1.bf16.msra.mxu0 0
  %9768 = vmatprep.subr.bf16.mxu0 0
  %9769 = vmatpush1.bf16.msra.mxu0 0
  %9770 = vmatprep.mubr.bf16.mxu0 0
  %9771 = vmatmul.mubr.bf16.gmra.mrb[0].mxu0 %v9693
  %v9772 = vpop.f32.mrb[0].mxu0
  %v9773 = vadd.f32 %v9463, %v9772
  %v9774 = vpop.f32.mrb[0].mxu0
  %v9775 = vadd.f32 %v9467, %v9774
  %v9776 = vpop.f32.mrb[0].mxu0
  %v9777 = vadd.f32 %v9463, %v9776
  %v9778 = vpop.f32.mrb[0].mxu0
  %v9779 = vadd.f32 %v9467, %v9778
  %9780 = vdwg.mxu0
  %9781 = vmatprep.subr.bf16.mxu0 %v9633
  %9782 = vmatpush1.bf16.msra.mxu0 %v9632
  %9783 = vmatprep.subr.bf16.mxu0 %v9649
  %9784 = vmatpush1.bf16.msra.mxu0 %v9648
  %9785 = vmatprep.subr.bf16.mxu0 0
  %9786 = vmatpush1.bf16.msra.mxu0 0
  %9787 = vmatprep.subr.bf16.mxu0 0
  %9788 = vmatpush1.bf16.msra.mxu0 0
  %9789 = vmatprep.subr.bf16.mxu0 0
  %9790 = vmatpush1.bf16.msra.mxu0 0
  %9791 = vmatprep.subr.bf16.mxu0 0
  %9792 = vmatpush1.bf16.msra.mxu0 0
  %9793 = vmatprep.subr.bf16.mxu0 0
  %9794 = vmatpush1.bf16.msra.mxu0 0
  %9795 = vmatprep.subr.bf16.mxu0 0
  %9796 = vmatpush1.bf16.msra.mxu0 0
  %9797 = vmatprep.subr.bf16.mxu0 0
  %9798 = vmatpush1.bf16.msra.mxu0 0
  %9799 = vmatprep.subr.bf16.mxu0 0
  %9800 = vmatpush1.bf16.msra.mxu0 0
  %9801 = vmatprep.subr.bf16.mxu0 0
  %9802 = vmatpush1.bf16.msra.mxu0 0
  %9803 = vmatprep.subr.bf16.mxu0 0
  %9804 = vmatpush1.bf16.msra.mxu0 0
  %9805 = vmatprep.subr.bf16.mxu0 0
  %9806 = vmatpush1.bf16.msra.mxu0 0
  %9807 = vmatprep.subr.bf16.mxu0 0
  %9808 = vmatpush1.bf16.msra.mxu0 0
  %9809 = vmatprep.subr.bf16.mxu0 0
  %9810 = vmatpush1.bf16.msra.mxu0 0
  %9811 = vmatprep.subr.bf16.mxu0 0
  %9812 = vmatpush1.bf16.msra.mxu0 0
  %9813 = vmatprep.mubr.bf16.mxu0 0
  %9814 = vmatmul.mubr.bf16.gmra.mrb[0].mxu0 %v9693
  %v9815 = vpop.f32.mrb[0].mxu0
  %v9816 = vadd.f32 %v9471, %v9815
  %v9817 = vpop.f32.mrb[0].mxu0
  %v9818 = vadd.f32 %v9475, %v9817
  %v9819 = vpop.f32.mrb[0].mxu0
  %v9820 = vadd.f32 %v9471, %v9819
  %v9821 = vpop.f32.mrb[0].mxu0
  %v9822 = vadd.f32 %v9475, %v9821
  %9823 = vdwg.mxu0
  %9824 = vmatprep.subr.bf16.mxu0 %v9635
  %9825 = vmatpush1.bf16.msra.mxu0 %v9634
  %9826 = vmatprep.subr.bf16.mxu0 %v9651
  %9827 = vmatpush1.bf16.msra.mxu0 %v9650
  %9828 = vmatprep.subr.bf16.mxu0 0
  %9829 = vmatpush1.bf16.msra.mxu0 0
  %9830 = vmatprep.subr.bf16.mxu0 0
  %9831 = vmatpush1.bf16.msra.mxu0 0
  %9832 = vmatprep.subr.bf16.mxu0 0
  %9833 = vmatpush1.bf16.msra.mxu0 0
  %9834 = vmatprep.subr.bf16.mxu0 0
  %9835 = vmatpush1.bf16.msra.mxu0 0
  %9836 = vmatprep.subr.bf16.mxu0 0
  %9837 = vmatpush1.bf16.msra.mxu0 0
  %9838 = vmatprep.subr.bf16.mxu0 0
  %9839 = vmatpush1.bf16.msra.mxu0 0
  %9840 = vmatprep.subr.bf16.mxu0 0
  %9841 = vmatpush1.bf16.msra.mxu0 0
  %9842 = vmatprep.subr.bf16.mxu0 0
  %9843 = vmatpush1.bf16.msra.mxu0 0
  %9844 = vmatprep.subr.bf16.mxu0 0
  %9845 = vmatpush1.bf16.msra.mxu0 0
  %9846 = vmatprep.subr.bf16.mxu0 0
  %9847 = vmatpush1.bf16.msra.mxu0 0
  %9848 = vmatprep.subr.bf16.mxu0 0
  %9849 = vmatpush1.bf16.msra.mxu0 0
  %9850 = vmatprep.subr.bf16.mxu0 0
  %9851 = vmatpush1.bf16.msra.mxu0 0
  %9852 = vmatprep.subr.bf16.mxu0 0
  %9853 = vmatpush1.bf16.msra.mxu0 0
  %9854 = vmatprep.subr.bf16.mxu0 0
  %9855 = vmatpush1.bf16.msra.mxu0 0
  %9856 = vmatprep.mubr.bf16.mxu0 0
  %9857 = vmatmul.mubr.bf16.gmra.mrb[0].mxu0 %v9693
  %v9858 = vpop.f32.mrb[0].mxu0
  %v9859 = vadd.f32 %v9479, %v9858
  %v9860 = vpop.f32.mrb[0].mxu0
  %v9861 = vadd.f32 %v9483, %v9860
  %v9862 = vpop.f32.mrb[0].mxu0
  %v9863 = vadd.f32 %v9479, %v9862
  %v9864 = vpop.f32.mrb[0].mxu0
  %v9865 = vadd.f32 %v9483, %v9864
  %9866 = vdwg.mxu0
  %9867 = vmatprep.subr.bf16.mxu0 %v9637
  %9868 = vmatpush1.bf16.msra.mxu0 %v9636
  %9869 = vmatprep.subr.bf16.mxu0 %v9653
  %9870 = vmatpush1.bf16.msra.mxu0 %v9652
  %9871 = vmatprep.subr.bf16.mxu0 0
  %9872 = vmatpush1.bf16.msra.mxu0 0
  %9873 = vmatprep.subr.bf16.mxu0 0
  %9874 = vmatpush1.bf16.msra.mxu0 0
  %9875 = vmatprep.subr.bf16.mxu0 0
  %9876 = vmatpush1.bf16.msra.mxu0 0
  %9877 = vmatprep.subr.bf16.mxu0 0
  %9878 = vmatpush1.bf16.msra.mxu0 0
  %9879 = vmatprep.subr.bf16.mxu0 0
  %9880 = vmatpush1.bf16.msra.mxu0 0
  %9881 = vmatprep.subr.bf16.mxu0 0
  %9882 = vmatpush1.bf16.msra.mxu0 0
  %9883 = vmatprep.subr.bf16.mxu0 0
  %9884 = vmatpush1.bf16.msra.mxu0 0
  %9885 = vmatprep.subr.bf16.mxu0 0
  %9886 = vmatpush1.bf16.msra.mxu0 0
  %9887 = vmatprep.subr.bf16.mxu0 0
  %9888 = vmatpush1.bf16.msra.mxu0 0
  %9889 = vmatprep.subr.bf16.mxu0 0
  %9890 = vmatpush1.bf16.msra.mxu0 0
  %9891 = vmatprep.subr.bf16.mxu0 0
  %9892 = vmatpush1.bf16.msra.mxu0 0
  %9893 = vmatprep.subr.bf16.mxu0 0
  %9894 = vmatpush1.bf16.msra.mxu0 0
  %9895 = vmatprep.subr.bf16.mxu0 0
  %9896 = vmatpush1.bf16.msra.mxu0 0
  %9897 = vmatprep.subr.bf16.mxu0 0
  %9898 = vmatpush1.bf16.msra.mxu0 0
  %9899 = vmatprep.mubr.bf16.mxu0 0
  %9900 = vmatmul.mubr.bf16.gmra.mrb[0].mxu0 %v9693
  %v9901 = vpop.f32.mrb[0].mxu0
  %v9902 = vadd.f32 %v9487, %v9901
  %v9903 = vpop.f32.mrb[0].mxu0
  %v9904 = vadd.f32 %v9491, %v9903
  %v9905 = vpop.f32.mrb[0].mxu0
  %v9906 = vadd.f32 %v9487, %v9905
  %v9907 = vpop.f32.mrb[0].mxu0
  %v9908 = vadd.f32 %v9491, %v9907
  %9909 = vdwg.mxu0
  %9910 = vmatprep.subr.bf16.mxu0 %v9639
  %9911 = vmatpush1.bf16.msra.mxu0 %v9638
  %9912 = vmatprep.subr.bf16.mxu0 %v9655
  %9913 = vmatpush1.bf16.msra.mxu0 %v9654
  %9914 = vmatprep.subr.bf16.mxu0 0
  %9915 = vmatpush1.bf16.msra.mxu0 0
  %9916 = vmatprep.subr.bf16.mxu0 0
  %9917 = vmatpush1.bf16.msra.mxu0 0
  %9918 = vmatprep.subr.bf16.mxu0 0
  %9919 = vmatpush1.bf16.msra.mxu0 0
  %9920 = vmatprep.subr.bf16.mxu0 0
  %9921 = vmatpush1.bf16.msra.mxu0 0
  %9922 = vmatprep.subr.bf16.mxu0 0
  %9923 = vmatpush1.bf16.msra.mxu0 0
  %9924 = vmatprep.subr.bf16.mxu0 0
  %9925 = vmatpush1.bf16.msra.mxu0 0
  %9926 = vmatprep.subr.bf16.mxu0 0
  %9927 = vmatpush1.bf16.msra.mxu0 0
  %9928 = vmatprep.subr.bf16.mxu0 0
  %9929 = vmatpush1.bf16.msra.mxu0 0
  %9930 = vmatprep.subr.bf16.mxu0 0
  %9931 = vmatpush1.bf16.msra.mxu0 0
  %9932 = vmatprep.subr.bf16.mxu0 0
  %9933 = vmatpush1.bf16.msra.mxu0 0
  %9934 = vmatprep.subr.bf16.mxu0 0
  %9935 = vmatpush1.bf16.msra.mxu0 0
  %9936 = vmatprep.subr.bf16.mxu0 0
  %9937 = vmatpush1.bf16.msra.mxu0 0
  %9938 = vmatprep.subr.bf16.mxu0 0
  %9939 = vmatpush1.bf16.msra.mxu0 0
  %9940 = vmatprep.subr.bf16.mxu0 0
  %9941 = vmatpush1.bf16.msra.mxu0 0
  %9942 = vmatprep.mubr.bf16.mxu0 0
  %9943 = vmatmul.mubr.bf16.gmra.mrb[0].mxu0 %v9693
  %v9944 = vpop.f32.mrb[0].mxu0
  %v9945 = vadd.f32 %v9495, %v9944
  %v9946 = vpop.f32.mrb[0].mxu0
  %v9947 = vadd.f32 %v9499, %v9946
  %v9948 = vpop.f32.mrb[0].mxu0
  %v9949 = vadd.f32 %v9495, %v9948
  %v9950 = vpop.f32.mrb[0].mxu0
  %v9951 = vadd.f32 %v9499, %v9950
  %9952 = vdwg.mxu0
  %9953 = vmatprep.subr.bf16.mxu0 %v9641
  %9954 = vmatpush1.bf16.msra.mxu0 %v9640
  %9955 = vmatprep.subr.bf16.mxu0 %v9657
  %9956 = vmatpush1.bf16.msra.mxu0 %v9656
  %9957 = vmatprep.subr.bf16.mxu0 0
  %9958 = vmatpush1.bf16.msra.mxu0 0
  %9959 = vmatprep.subr.bf16.mxu0 0
  %9960 = vmatpush1.bf16.msra.mxu0 0
  %9961 = vmatprep.subr.bf16.mxu0 0
  %9962 = vmatpush1.bf16.msra.mxu0 0
  %9963 = vmatprep.subr.bf16.mxu0 0
  %9964 = vmatpush1.bf16.msra.mxu0 0
  %9965 = vmatprep.subr.bf16.mxu0 0
  %9966 = vmatpush1.bf16.msra.mxu0 0
  %9967 = vmatprep.subr.bf16.mxu0 0
  %9968 = vmatpush1.bf16.msra.mxu0 0
  %9969 = vmatprep.subr.bf16.mxu0 0
  %9970 = vmatpush1.bf16.msra.mxu0 0
  %9971 = vmatprep.subr.bf16.mxu0 0
  %9972 = vmatpush1.bf16.msra.mxu0 0
  %9973 = vmatprep.subr.bf16.mxu0 0
  %9974 = vmatpush1.bf16.msra.mxu0 0
  %9975 = vmatprep.subr.bf16.mxu0 0
  %9976 = vmatpush1.bf16.msra.mxu0 0
  %9977 = vmatprep.subr.bf16.mxu0 0
  %9978 = vmatpush1.bf16.msra.mxu0 0
  %9979 = vmatprep.subr.bf16.mxu0 0
  %9980 = vmatpush1.bf16.msra.mxu0 0
  %9981 = vmatprep.subr.bf16.mxu0 0
  %9982 = vmatpush1.bf16.msra.mxu0 0
  %9983 = vmatprep.subr.bf16.mxu0 0
  %9984 = vmatpush1.bf16.msra.mxu0 0
  %9985 = vmatprep.mubr.bf16.mxu0 0
  %9986 = vmatmul.mubr.bf16.gmra.mrb[0].mxu0 %v9693
  %v9987 = vpop.f32.mrb[0].mxu0
  %v9988 = vadd.f32 %v9503, %v9987
  %v9989 = vpop.f32.mrb[0].mxu0
  %v9990 = vadd.f32 %v9507, %v9989
  %v9991 = vpop.f32.mrb[0].mxu0
  %v9992 = vadd.f32 %v9503, %v9991
  %v9993 = vpop.f32.mrb[0].mxu0
  %v9994 = vadd.f32 %v9507, %v9993
  %9995 = vdwg.mxu0
  %9996 = vmatprep.subr.bf16.mxu0 %v9643
  %9997 = vmatpush1.bf16.msra.mxu0 %v9642
  %9998 = vmatprep.subr.bf16.mxu0 %v9659
  %9999 = vmatpush1.bf16.msra.mxu0 %v9658
  %10000 = vmatprep.subr.bf16.mxu0 0
  %10001 = vmatpush1.bf16.msra.mxu0 0
  %10002 = vmatprep.subr.bf16.mxu0 0
  %10003 = vmatpush1.bf16.msra.mxu0 0
  %10004 = vmatprep.subr.bf16.mxu0 0
  %10005 = vmatpush1.bf16.msra.mxu0 0
  %10006 = vmatprep.subr.bf16.mxu0 0
  %10007 = vmatpush1.bf16.msra.mxu0 0
  %10008 = vmatprep.subr.bf16.mxu0 0
  %10009 = vmatpush1.bf16.msra.mxu0 0
  %10010 = vmatprep.subr.bf16.mxu0 0
  %10011 = vmatpush1.bf16.msra.mxu0 0
  %10012 = vmatprep.subr.bf16.mxu0 0
  %10013 = vmatpush1.bf16.msra.mxu0 0
  %10014 = vmatprep.subr.bf16.mxu0 0
  %10015 = vmatpush1.bf16.msra.mxu0 0
  %10016 = vmatprep.subr.bf16.mxu0 0
  %10017 = vmatpush1.bf16.msra.mxu0 0
  %10018 = vmatprep.subr.bf16.mxu0 0
  %10019 = vmatpush1.bf16.msra.mxu0 0
  %10020 = vmatprep.subr.bf16.mxu0 0
  %10021 = vmatpush1.bf16.msra.mxu0 0
  %10022 = vmatprep.subr.bf16.mxu0 0
  %10023 = vmatpush1.bf16.msra.mxu0 0
  %10024 = vmatprep.subr.bf16.mxu0 0
  %10025 = vmatpush1.bf16.msra.mxu0 0
  %10026 = vmatprep.subr.bf16.mxu0 0
  %10027 = vmatpush1.bf16.msra.mxu0 0
  %10028 = vmatprep.mubr.bf16.mxu0 0
  %10029 = vmatmul.mubr.bf16.gmra.mrb[0].mxu0 %v9693
  %v10030 = vpop.f32.mrb[0].mxu0
  %v10031 = vadd.f32 %v9511, %v10030
  %v10032 = vpop.f32.mrb[0].mxu0
  %v10033 = vadd.f32 %v9515, %v10032
  %v10034 = vpop.f32.mrb[0].mxu0
  %v10035 = vadd.f32 %v9511, %v10034
  %v10036 = vpop.f32.mrb[0].mxu0
  %v10037 = vadd.f32 %v9515, %v10036
  %10038 = vdwg.mxu0
  %v10039 = vmax.f32 %v9730, 0.0
  %v10040 = vmax.f32 %v9732, 0.0
  %v10041 = vmax.f32 %v9773, 0.0
  %v10042 = vmax.f32 %v9775, 0.0
  %v10043 = vmax.f32 %v9816, 0.0
  %v10044 = vmax.f32 %v9818, 0.0
  %v10045 = vmax.f32 %v9859, 0.0
  %v10046 = vmax.f32 %v9861, 0.0
  %v10047 = vmax.f32 %v9902, 0.0
  %v10048 = vmax.f32 %v9904, 0.0
  %v10049 = vmax.f32 %v9945, 0.0
  %v10050 = vmax.f32 %v9947, 0.0
  %v10051 = vmax.f32 %v9988, 0.0
  %v10052 = vmax.f32 %v9990, 0.0
  %v10053 = vmax.f32 %v10031, 0.0
  %v10054 = vmax.f32 %v10033, 0.0
  %v10055 = vmax.f32 %v9734, 0.0
  %v10056 = vmax.f32 %v9736, 0.0
  %v10057 = vmax.f32 %v9777, 0.0
  %v10058 = vmax.f32 %v9779, 0.0
  %v10059 = vmax.f32 %v9820, 0.0
  %v10060 = vmax.f32 %v9822, 0.0
  %v10061 = vmax.f32 %v9863, 0.0
  %v10062 = vmax.f32 %v9865, 0.0
  %v10063 = vmax.f32 %v9906, 0.0
  %v10064 = vmax.f32 %v9908, 0.0
  %v10065 = vmax.f32 %v9949, 0.0
  %v10066 = vmax.f32 %v9951, 0.0
  %v10067 = vmax.f32 %v9992, 0.0
  %v10068 = vmax.f32 %v9994, 0.0
  %v10069 = vmax.f32 %v10035, 0.0
  %v10070 = vmax.f32 %v10037, 0.0
  %v10071 = vpack.c.bf16 %v10055, %v10039
  %v10072 = vpack.c.bf16 %v10056, %v10040
  %v10073 = vpack.c.bf16 %v10057, %v10041
  %v10074 = vpack.c.bf16 %v10058, %v10042
  %v10075 = vpack.c.bf16 %v10059, %v10043
  %v10076 = vpack.c.bf16 %v10060, %v10044
  %v10077 = vpack.c.bf16 %v10061, %v10045
  %v10078 = vpack.c.bf16 %v10062, %v10046
  %v10079 = vpack.c.bf16 %v10063, %v10047
  %v10080 = vpack.c.bf16 %v10064, %v10048
  %v10081 = vpack.c.bf16 %v10065, %v10049
  %v10082 = vpack.c.bf16 %v10066, %v10050
  %v10083 = vpack.c.bf16 %v10067, %v10051
  %v10084 = vpack.c.bf16 %v10068, %v10052
  %v10085 = vpack.c.bf16 %v10069, %v10053
  %v10086 = vpack.c.bf16 %v10070, %v10054
  %v10087 = vld [vmem:[%s10] sm:$0xf]
  %v10088 = vld [vmem:[%s10 + $0x4] sm:$0xf]
  %v10089 = vld [vmem:[%s10 + $0x8] sm:$0xf]
  %v10090 = vld [vmem:[%s10 + $0xc] sm:$0xf]
  %v10091 = vld [vmem:[%s10 + $0x10] sm:$0xf]
  %v10092 = vld [vmem:[%s10 + $0x14] sm:$0xf]
  %v10093 = vld [vmem:[%s10 + $0x18] sm:$0xf]
  %v10094 = vld [vmem:[%s10 + $0x1c] sm:$0xf]
  %v10095 = vld [vmem:[%s10 + $0x20] sm:$0xf]
  %v10096 = vld [vmem:[%s10 + $0x24] sm:$0xf]
  %v10097 = vld [vmem:[%s10 + $0x28] sm:$0xf]
  %v10098 = vld [vmem:[%s10 + $0x2c] sm:$0xf]
  %v10099 = vld [vmem:[%s10 + $0x30] sm:$0xf]
  %v10100 = vld [vmem:[%s10 + $0x34] sm:$0xf]
  %v10101 = vld [vmem:[%s10 + $0x38] sm:$0xf]
  %v10102 = vld [vmem:[%s10 + $0x3c] sm:$0xf]
  %v10103 = vld [vmem:[%s10 + $0x40] sm:$0xf]
  %v10104 = vld [vmem:[%s10 + $0x44] sm:$0xf]
  %v10105 = vld [vmem:[%s10 + $0x48] sm:$0xf]
  %v10106 = vld [vmem:[%s10 + $0x4c] sm:$0xf]
  %v10107 = vld [vmem:[%s10 + $0x50] sm:$0xf]
  %v10108 = vld [vmem:[%s10 + $0x54] sm:$0xf]
  %v10109 = vld [vmem:[%s10 + $0x58] sm:$0xf]
  %v10110 = vld [vmem:[%s10 + $0x5c] sm:$0xf]
  %v10111 = vld [vmem:[%s10 + $0x60] sm:$0xf]
  %v10112 = vld [vmem:[%s10 + $0x64] sm:$0xf]
  %v10113 = vld [vmem:[%s10 + $0x68] sm:$0xf]
  %v10114 = vld [vmem:[%s10 + $0x6c] sm:$0xf]
  %v10115 = vld [vmem:[%s10 + $0x70] sm:$0xf]
  %v10116 = vld [vmem:[%s10 + $0x74] sm:$0xf]
  %v10117 = vld [vmem:[%s10 + $0x78] sm:$0xf]
  %v10118 = vld [vmem:[%s10 + $0x7c] sm:$0xf]
  %v10119 = vld [vmem:[%s10 + $0x80] sm:$0xf]
  %v10120 = vld [vmem:[%s10 + $0x84] sm:$0xf]
  %v10121 = vld [vmem:[%s10 + $0x88] sm:$0xf]
  %v10122 = vld [vmem:[%s10 + $0x8c] sm:$0xf]
  %v10123 = vld [vmem:[%s10 + $0x90] sm:$0xf]
  %v10124 = vld [vmem:[%s10 + $0x94] sm:$0xf]
  %v10125 = vld [vmem:[%s10 + $0x98] sm:$0xf]
  %v10126 = vld [vmem:[%s10 + $0x9c] sm:$0xf]
  %v10127 = vld [vmem:[%s10 + $0xa0] sm:$0xf]
  %v10128 = vld [vmem:[%s10 + $0xa4] sm:$0xf]
  %v10129 = vld [vmem:[%s10 + $0xa8] sm:$0xf]
  %v10130 = vld [vmem:[%s10 + $0xac] sm:$0xf]
  %v10131 = vld [vmem:[%s10 + $0xb0] sm:$0xf]
  %v10132 = vld [vmem:[%s10 + $0xb4] sm:$0xf]
  %v10133 = vld [vmem:[%s10 + $0xb8] sm:$0xf]
  %v10134 = vld [vmem:[%s10 + $0xbc] sm:$0xf]
  %v10135 = vld [vmem:[%s10 + $0xc0] sm:$0xf]
  %v10136 = vld [vmem:[%s10 + $0xc4] sm:$0xf]
  %v10137 = vld [vmem:[%s10 + $0xc8] sm:$0xf]
  %v10138 = vld [vmem:[%s10 + $0xcc] sm:$0xf]
  %v10139 = vld [vmem:[%s10 + $0xd0] sm:$0xf]
  %v10140 = vld [vmem:[%s10 + $0xd4] sm:$0xf]
  %v10141 = vld [vmem:[%s10 + $0xd8] sm:$0xf]
  %v10142 = vld [vmem:[%s10 + $0xdc] sm:$0xf]
  %v10143 = vld [vmem:[%s10 + $0xe0] sm:$0xf]
  %v10144 = vld [vmem:[%s10 + $0xe4] sm:$0xf]
  %v10145 = vld [vmem:[%s10 + $0xe8] sm:$0xf]
  %v10146 = vld [vmem:[%s10 + $0xec] sm:$0xf]
  %v10147 = vld [vmem:[%s10 + $0xf0] sm:$0xf]
  %v10148 = vld [vmem:[%s10 + $0xf4] sm:$0xf]
  %v10149 = vld [vmem:[%s10 + $0xf8] sm:$0xf]
  %v10150 = vld [vmem:[%s10 + $0xfc] sm:$0xf]
  %v10151 = vld [vmem:[%s10 + $0x100] sm:$0xf]
  %v10152 = vld [vmem:[%s10 + $0x104] sm:$0xf]
  %v10153 = vld [vmem:[%s10 + $0x108] sm:$0xf]
  %v10154 = vld [vmem:[%s10 + $0x10c] sm:$0xf]
  %v10155 = vld [vmem:[%s10 + $0x110] sm:$0xf]
  %v10156 = vld [vmem:[%s10 + $0x114] sm:$0xf]
  %v10157 = vld [vmem:[%s10 + $0x118] sm:$0xf]
  %v10158 = vld [vmem:[%s10 + $0x11c] sm:$0xf]
  %v10159 = vld [vmem:[%s10 + $0x120] sm:$0xf]
  %v10160 = vld [vmem:[%s10 + $0x124] sm:$0xf]
  %v10161 = vld [vmem:[%s10 + $0x128] sm:$0xf]
  %v10162 = vld [vmem:[%s10 + $0x12c] sm:$0xf]
  %v10163 = vld [vmem:[%s10 + $0x130] sm:$0xf]
  %v10164 = vld [vmem:[%s10 + $0x134] sm:$0xf]
  %v10165 = vld [vmem:[%s10 + $0x138] sm:$0xf]
  %v10166 = vld [vmem:[%s10 + $0x13c] sm:$0xf]
  %v10167 = vld [vmem:[%s10 + $0x140] sm:$0xf]
  %v10168 = vld [vmem:[%s10 + $0x144] sm:$0xf]
  %v10169 = vld [vmem:[%s10 + $0x148] sm:$0xf]
  %v10170 = vld [vmem:[%s10 + $0x14c] sm:$0xf]
  %v10171 = vld [vmem:[%s10 + $0x150] sm:$0xf]
  %v10172 = vld [vmem:[%s10 + $0x154] sm:$0xf]
  %v10173 = vld [vmem:[%s10 + $0x158] sm:$0xf]
  %v10174 = vld [vmem:[%s10 + $0x15c] sm:$0xf]
  %v10175 = vld [vmem:[%s10 + $0x160] sm:$0xf]
  %v10176 = vld [vmem:[%s10 + $0x164] sm:$0xf]
  %v10177 = vld [vmem:[%s10 + $0x168] sm:$0xf]
  %v10178 = vld [vmem:[%s10 + $0x16c] sm:$0xf]
  %v10179 = vld [vmem:[%s10 + $0x170] sm:$0xf]
  %v10180 = vld [vmem:[%s10 + $0x174] sm:$0xf]
  %v10181 = vld [vmem:[%s10 + $0x178] sm:$0xf]
  %v10182 = vld [vmem:[%s10 + $0x17c] sm:$0xf]
  %v10183 = vld [vmem:[%s10 + $0x180] sm:$0xf]
  %v10184 = vld [vmem:[%s10 + $0x184] sm:$0xf]
  %v10185 = vld [vmem:[%s10 + $0x188] sm:$0xf]
  %v10186 = vld [vmem:[%s10 + $0x18c] sm:$0xf]
  %v10187 = vld [vmem:[%s10 + $0x190] sm:$0xf]
  %v10188 = vld [vmem:[%s10 + $0x194] sm:$0xf]
  %v10189 = vld [vmem:[%s10 + $0x198] sm:$0xf]
  %v10190 = vld [vmem:[%s10 + $0x19c] sm:$0xf]
  %v10191 = vld [vmem:[%s10 + $0x1a0] sm:$0xf]
  %v10192 = vld [vmem:[%s10 + $0x1a4] sm:$0xf]
  %v10193 = vld [vmem:[%s10 + $0x1a8] sm:$0xf]
  %v10194 = vld [vmem:[%s10 + $0x1ac] sm:$0xf]
  %v10195 = vld [vmem:[%s10 + $0x1b0] sm:$0xf]
  %v10196 = vld [vmem:[%s10 + $0x1b4] sm:$0xf]
  %v10197 = vld [vmem:[%s10 + $0x1b8] sm:$0xf]
  %v10198 = vld [vmem:[%s10 + $0x1bc] sm:$0xf]
  %v10199 = vld [vmem:[%s10 + $0x1c0] sm:$0xf]
  %v10200 = vld [vmem:[%s10 + $0x1c4] sm:$0xf]
  %v10201 = vld [vmem:[%s10 + $0x1c8] sm:$0xf]
  %v10202 = vld [vmem:[%s10 + $0x1cc] sm:$0xf]
  %v10203 = vld [vmem:[%s10 + $0x1d0] sm:$0xf]
  %v10204 = vld [vmem:[%s10 + $0x1d4] sm:$0xf]
  %v10205 = vld [vmem:[%s10 + $0x1d8] sm:$0xf]
  %v10206 = vld [vmem:[%s10 + $0x1dc] sm:$0xf]
  %v10207 = vld [vmem:[%s10 + $0x1e0] sm:$0xf]
  %v10208 = vld [vmem:[%s10 + $0x1e4] sm:$0xf]
  %v10209 = vld [vmem:[%s10 + $0x1e8] sm:$0xf]
  %v10210 = vld [vmem:[%s10 + $0x1ec] sm:$0xf]
  %v10211 = vld [vmem:[%s10 + $0x1f0] sm:$0xf]
  %v10212 = vld [vmem:[%s10 + $0x1f4] sm:$0xf]
  %v10213 = vld [vmem:[%s10 + $0x1f8] sm:$0xf]
  %v10214 = vld [vmem:[%s10 + $0x1fc] sm:$0xf]
  %v10215 = vld [vmem:[%s10 + $0x200] sm:$0xf]
  %v10216 = vld [vmem:[%s10 + $0x204] sm:$0xf]
  %v10217 = vld [vmem:[%s10 + $0x208] sm:$0xf]
  %v10218 = vld [vmem:[%s10 + $0x20c] sm:$0xf]
  %v10219 = vld [vmem:[%s10 + $0x210] sm:$0xf]
  %v10220 = vld [vmem:[%s10 + $0x214] sm:$0xf]
  %v10221 = vld [vmem:[%s10 + $0x218] sm:$0xf]
  %v10222 = vld [vmem:[%s10 + $0x21c] sm:$0xf]
  %v10223 = vld [vmem:[%s10 + $0x220] sm:$0xf]
  %v10224 = vld [vmem:[%s10 + $0x224] sm:$0xf]
  %v10225 = vld [vmem:[%s10 + $0x228] sm:$0xf]
  %v10226 = vld [vmem:[%s10 + $0x22c] sm:$0xf]
  %v10227 = vld [vmem:[%s10 + $0x230] sm:$0xf]
  %v10228 = vld [vmem:[%s10 + $0x234] sm:$0xf]
  %v10229 = vld [vmem:[%s10 + $0x238] sm:$0xf]
  %v10230 = vld [vmem:[%s10 + $0x23c] sm:$0xf]
  %v10231 = vld [vmem:[%s10 + $0x240] sm:$0xf]
  %v10232 = vld [vmem:[%s10 + $0x244] sm:$0xf]
  %v10233 = vld [vmem:[%s10 + $0x248] sm:$0xf]
  %v10234 = vld [vmem:[%s10 + $0x24c] sm:$0xf]
  %v10235 = vld [vmem:[%s10 + $0x250] sm:$0xf]
  %v10236 = vld [vmem:[%s10 + $0x254] sm:$0xf]
  %v10237 = vld [vmem:[%s10 + $0x258] sm:$0xf]
  %v10238 = vld [vmem:[%s10 + $0x25c] sm:$0xf]
  %v10239 = vld [vmem:[%s10 + $0x260] sm:$0xf]
  %v10240 = vld [vmem:[%s10 + $0x264] sm:$0xf]
  %v10241 = vld [vmem:[%s10 + $0x268] sm:$0xf]
  %v10242 = vld [vmem:[%s10 + $0x26c] sm:$0xf]
  %v10243 = vld [vmem:[%s10 + $0x270] sm:$0xf]
  %v10244 = vld [vmem:[%s10 + $0x274] sm:$0xf]
  %v10245 = vld [vmem:[%s10 + $0x278] sm:$0xf]
  %v10246 = vld [vmem:[%s10 + $0x27c] sm:$0xf]
  %v10247 = vld [vmem:[%s10 + $0x280] sm:$0xf]
  %v10248 = vld [vmem:[%s10 + $0x284] sm:$0xf]
  %v10249 = vld [vmem:[%s10 + $0x288] sm:$0xf]
  %v10250 = vld [vmem:[%s10 + $0x28c] sm:$0xf]
  %v10251 = vld [vmem:[%s10 + $0x290] sm:$0xf]
  %v10252 = vld [vmem:[%s10 + $0x294] sm:$0xf]
  %v10253 = vld [vmem:[%s10 + $0x298] sm:$0xf]
  %v10254 = vld [vmem:[%s10 + $0x29c] sm:$0xf]
  %v10255 = vld [vmem:[%s10 + $0x2a0] sm:$0xf]
  %v10256 = vld [vmem:[%s10 + $0x2a4] sm:$0xf]
  %v10257 = vld [vmem:[%s10 + $0x2a8] sm:$0xf]
  %v10258 = vld [vmem:[%s10 + $0x2ac] sm:$0xf]
  %v10259 = vld [vmem:[%s10 + $0x2b0] sm:$0xf]
  %v10260 = vld [vmem:[%s10 + $0x2b4] sm:$0xf]
  %v10261 = vld [vmem:[%s10 + $0x2b8] sm:$0xf]
  %v10262 = vld [vmem:[%s10 + $0x2bc] sm:$0xf]
  %v10263 = vld [vmem:[%s10 + $0x2c0] sm:$0xf]
  %v10264 = vld [vmem:[%s10 + $0x2c4] sm:$0xf]
  %v10265 = vld [vmem:[%s10 + $0x2c8] sm:$0xf]
  %v10266 = vld [vmem:[%s10 + $0x2cc] sm:$0xf]
  %v10267 = vld [vmem:[%s10 + $0x2d0] sm:$0xf]
  %v10268 = vld [vmem:[%s10 + $0x2d4] sm:$0xf]
  %v10269 = vld [vmem:[%s10 + $0x2d8] sm:$0xf]
  %v10270 = vld [vmem:[%s10 + $0x2dc] sm:$0xf]
  %v10271 = vld [vmem:[%s10 + $0x2e0] sm:$0xf]
  %v10272 = vld [vmem:[%s10 + $0x2e4] sm:$0xf]
  %v10273 = vld [vmem:[%s10 + $0x2e8] sm:$0xf]
  %v10274 = vld [vmem:[%s10 + $0x2ec] sm:$0xf]
  %v10275 = vld [vmem:[%s10 + $0x2f0] sm:$0xf]
  %v10276 = vld [vmem:[%s10 + $0x2f4] sm:$0xf]
  %v10277 = vld [vmem:[%s10 + $0x2f8] sm:$0xf]
  %v10278 = vld [vmem:[%s10 + $0x2fc] sm:$0xf]
  %v10279 = vld [vmem:[%s10 + $0x300] sm:$0xf]
  %v10280 = vld [vmem:[%s10 + $0x304] sm:$0xf]
  %v10281 = vld [vmem:[%s10 + $0x308] sm:$0xf]
  %v10282 = vld [vmem:[%s10 + $0x30c] sm:$0xf]
  %v10283 = vld [vmem:[%s10 + $0x310] sm:$0xf]
  %v10284 = vld [vmem:[%s10 + $0x314] sm:$0xf]
  %v10285 = vld [vmem:[%s10 + $0x318] sm:$0xf]
  %v10286 = vld [vmem:[%s10 + $0x31c] sm:$0xf]
  %v10287 = vld [vmem:[%s10 + $0x320] sm:$0xf]
  %v10288 = vld [vmem:[%s10 + $0x324] sm:$0xf]
  %v10289 = vld [vmem:[%s10 + $0x328] sm:$0xf]
  %v10290 = vld [vmem:[%s10 + $0x32c] sm:$0xf]
  %v10291 = vld [vmem:[%s10 + $0x330] sm:$0xf]
  %v10292 = vld [vmem:[%s10 + $0x334] sm:$0xf]
  %v10293 = vld [vmem:[%s10 + $0x338] sm:$0xf]
  %v10294 = vld [vmem:[%s10 + $0x33c] sm:$0xf]
  %v10295 = vld [vmem:[%s10 + $0x340] sm:$0xf]
  %v10296 = vld [vmem:[%s10 + $0x344] sm:$0xf]
  %v10297 = vld [vmem:[%s10 + $0x348] sm:$0xf]
  %v10298 = vld [vmem:[%s10 + $0x34c] sm:$0xf]
  %v10299 = vld [vmem:[%s10 + $0x350] sm:$0xf]
  %v10300 = vld [vmem:[%s10 + $0x354] sm:$0xf]
  %v10301 = vld [vmem:[%s10 + $0x358] sm:$0xf]
  %v10302 = vld [vmem:[%s10 + $0x35c] sm:$0xf]
  %v10303 = vld [vmem:[%s10 + $0x360] sm:$0xf]
  %v10304 = vld [vmem:[%s10 + $0x364] sm:$0xf]
  %v10305 = vld [vmem:[%s10 + $0x368] sm:$0xf]
  %v10306 = vld [vmem:[%s10 + $0x36c] sm:$0xf]
  %v10307 = vld [vmem:[%s10 + $0x370] sm:$0xf]
  %v10308 = vld [vmem:[%s10 + $0x374] sm:$0xf]
  %v10309 = vld [vmem:[%s10 + $0x378] sm:$0xf]
  %v10310 = vld [vmem:[%s10 + $0x37c] sm:$0xf]
  %v10311 = vld [vmem:[%s10 + $0x380] sm:$0xf]
  %v10312 = vld [vmem:[%s10 + $0x384] sm:$0xf]
  %v10313 = vld [vmem:[%s10 + $0x388] sm:$0xf]
  %v10314 = vld [vmem:[%s10 + $0x38c] sm:$0xf]
  %v10315 = vld [vmem:[%s10 + $0x390] sm:$0xf]
  %v10316 = vld [vmem:[%s10 + $0x394] sm:$0xf]
  %v10317 = vld [vmem:[%s10 + $0x398] sm:$0xf]
  %v10318 = vld [vmem:[%s10 + $0x39c] sm:$0xf]
  %v10319 = vld [vmem:[%s10 + $0x3a0] sm:$0xf]
  %v10320 = vld [vmem:[%s10 + $0x3a4] sm:$0xf]
  %v10321 = vld [vmem:[%s10 + $0x3a8] sm:$0xf]
  %v10322 = vld [vmem:[%s10 + $0x3ac] sm:$0xf]
  %v10323 = vld [vmem:[%s10 + $0x3b0] sm:$0xf]
  %v10324 = vld [vmem:[%s10 + $0x3b4] sm:$0xf]
  %v10325 = vld [vmem:[%s10 + $0x3b8] sm:$0xf]
  %v10326 = vld [vmem:[%s10 + $0x3bc] sm:$0xf]
  %v10327 = vld [vmem:[%s10 + $0x3c0] sm:$0xf]
  %v10328 = vld [vmem:[%s10 + $0x3c4] sm:$0xf]
  %v10329 = vld [vmem:[%s10 + $0x3c8] sm:$0xf]
  %v10330 = vld [vmem:[%s10 + $0x3cc] sm:$0xf]
  %v10331 = vld [vmem:[%s10 + $0x3d0] sm:$0xf]
  %v10332 = vld [vmem:[%s10 + $0x3d4] sm:$0xf]
  %v10333 = vld [vmem:[%s10 + $0x3d8] sm:$0xf]
  %v10334 = vld [vmem:[%s10 + $0x3dc] sm:$0xf]
  %v10335 = vld [vmem:[%s10 + $0x3e0] sm:$0xf]
  %v10336 = vld [vmem:[%s10 + $0x3e4] sm:$0xf]
  %v10337 = vld [vmem:[%s10 + $0x3e8] sm:$0xf]
  %v10338 = vld [vmem:[%s10 + $0x3ec] sm:$0xf]
  %v10339 = vld [vmem:[%s10 + $0x3f0] sm:$0xf]
  %v10340 = vld [vmem:[%s10 + $0x3f4] sm:$0xf]
  %v10341 = vld [vmem:[%s10 + $0x3f8] sm:$0xf]
  %v10342 = vld [vmem:[%s10 + $0x3fc] sm:$0xf]
  %v10343 = vld [vmem:[%s11 + $0x12] sm:$0x1]
  %v10345 = vlaneseq
  %v10346 = vshrl.u32 %v10345, 7
  %v10347 = vsub.s32 0, %v10346
  %v10348 = vrot.slane %v10343, %v10347
  %v10606 = vunpack.c.l.b16 %v10087
  %v10607 = vunpack.c.l.b16 %v10088
  %v10608 = vunpack.c.l.b16 %v10089
  %v10609 = vunpack.c.l.b16 %v10090
  %v10610 = vunpack.c.l.b16 %v10091
  %v10611 = vunpack.c.l.b16 %v10092
  %v10612 = vunpack.c.l.b16 %v10093
  %v10613 = vunpack.c.l.b16 %v10094
  %v10614 = vunpack.c.l.b16 %v10095
  %v10615 = vunpack.c.l.b16 %v10096
  %v10616 = vunpack.c.l.b16 %v10097
  %v10617 = vunpack.c.l.b16 %v10098
  %v10618 = vunpack.c.l.b16 %v10099
  %v10619 = vunpack.c.l.b16 %v10100
  %v10620 = vunpack.c.l.b16 %v10101
  %v10621 = vunpack.c.l.b16 %v10102
  %v10622 = vunpack.c.l.b16 %v10103
  %v10623 = vunpack.c.l.b16 %v10104
  %v10624 = vunpack.c.l.b16 %v10105
  %v10625 = vunpack.c.l.b16 %v10106
  %v10626 = vunpack.c.l.b16 %v10107
  %v10627 = vunpack.c.l.b16 %v10108
  %v10628 = vunpack.c.l.b16 %v10109
  %v10629 = vunpack.c.l.b16 %v10110
  %v10630 = vunpack.c.l.b16 %v10111
  %v10631 = vunpack.c.l.b16 %v10112
  %v10632 = vunpack.c.l.b16 %v10113
  %v10633 = vunpack.c.l.b16 %v10114
  %v10634 = vunpack.c.l.b16 %v10115
  %v10635 = vunpack.c.l.b16 %v10116
  %v10636 = vunpack.c.l.b16 %v10117
  %v10637 = vunpack.c.l.b16 %v10118
  %v10638 = vunpack.c.l.b16 %v10119
  %v10639 = vunpack.c.l.b16 %v10120
  %v10640 = vunpack.c.l.b16 %v10121
  %v10641 = vunpack.c.l.b16 %v10122
  %v10642 = vunpack.c.l.b16 %v10123
  %v10643 = vunpack.c.l.b16 %v10124
  %v10644 = vunpack.c.l.b16 %v10125
  %v10645 = vunpack.c.l.b16 %v10126
  %v10646 = vunpack.c.l.b16 %v10127
  %v10647 = vunpack.c.l.b16 %v10128
  %v10648 = vunpack.c.l.b16 %v10129
  %v10649 = vunpack.c.l.b16 %v10130
  %v10650 = vunpack.c.l.b16 %v10131
  %v10651 = vunpack.c.l.b16 %v10132
  %v10652 = vunpack.c.l.b16 %v10133
  %v10653 = vunpack.c.l.b16 %v10134
  %v10654 = vunpack.c.l.b16 %v10135
  %v10655 = vunpack.c.l.b16 %v10136
  %v10656 = vunpack.c.l.b16 %v10137
  %v10657 = vunpack.c.l.b16 %v10138
  %v10658 = vunpack.c.l.b16 %v10139
  %v10659 = vunpack.c.l.b16 %v10140
  %v10660 = vunpack.c.l.b16 %v10141
  %v10661 = vunpack.c.l.b16 %v10142
  %v10662 = vunpack.c.l.b16 %v10143
  %v10663 = vunpack.c.l.b16 %v10144
  %v10664 = vunpack.c.l.b16 %v10145
  %v10665 = vunpack.c.l.b16 %v10146
  %v10666 = vunpack.c.l.b16 %v10147
  %v10667 = vunpack.c.l.b16 %v10148
  %v10668 = vunpack.c.l.b16 %v10149
  %v10669 = vunpack.c.l.b16 %v10150
  %v10670 = vunpack.c.l.b16 %v10151
  %v10671 = vunpack.c.l.b16 %v10152
  %v10672 = vunpack.c.l.b16 %v10153
  %v10673 = vunpack.c.l.b16 %v10154
  %v10674 = vunpack.c.l.b16 %v10155
  %v10675 = vunpack.c.l.b16 %v10156
  %v10676 = vunpack.c.l.b16 %v10157
  %v10677 = vunpack.c.l.b16 %v10158
  %v10678 = vunpack.c.l.b16 %v10159
  %v10679 = vunpack.c.l.b16 %v10160
  %v10680 = vunpack.c.l.b16 %v10161
  %v10681 = vunpack.c.l.b16 %v10162
  %v10682 = vunpack.c.l.b16 %v10163
  %v10683 = vunpack.c.l.b16 %v10164
  %v10684 = vunpack.c.l.b16 %v10165
  %v10685 = vunpack.c.l.b16 %v10166
  %v10686 = vunpack.c.l.b16 %v10167
  %v10687 = vunpack.c.l.b16 %v10168
  %v10688 = vunpack.c.l.b16 %v10169
  %v10689 = vunpack.c.l.b16 %v10170
  %v10690 = vunpack.c.l.b16 %v10171
  %v10691 = vunpack.c.l.b16 %v10172
  %v10692 = vunpack.c.l.b16 %v10173
  %v10693 = vunpack.c.l.b16 %v10174
  %v10694 = vunpack.c.l.b16 %v10175
  %v10695 = vunpack.c.l.b16 %v10176
  %v10696 = vunpack.c.l.b16 %v10177
  %v10697 = vunpack.c.l.b16 %v10178
  %v10698 = vunpack.c.l.b16 %v10179
  %v10699 = vunpack.c.l.b16 %v10180
  %v10700 = vunpack.c.l.b16 %v10181
  %v10701 = vunpack.c.l.b16 %v10182
  %v10702 = vunpack.c.l.b16 %v10183
  %v10703 = vunpack.c.l.b16 %v10184
  %v10704 = vunpack.c.l.b16 %v10185
  %v10705 = vunpack.c.l.b16 %v10186
  %v10706 = vunpack.c.l.b16 %v10187
  %v10707 = vunpack.c.l.b16 %v10188
  %v10708 = vunpack.c.l.b16 %v10189
  %v10709 = vunpack.c.l.b16 %v10190
  %v10710 = vunpack.c.l.b16 %v10191
  %v10711 = vunpack.c.l.b16 %v10192
  %v10712 = vunpack.c.l.b16 %v10193
  %v10713 = vunpack.c.l.b16 %v10194
  %v10714 = vunpack.c.l.b16 %v10195
  %v10715 = vunpack.c.l.b16 %v10196
  %v10716 = vunpack.c.l.b16 %v10197
  %v10717 = vunpack.c.l.b16 %v10198
  %v10718 = vunpack.c.l.b16 %v10199
  %v10719 = vunpack.c.l.b16 %v10200
  %v10720 = vunpack.c.l.b16 %v10201
  %v10721 = vunpack.c.l.b16 %v10202
  %v10722 = vunpack.c.l.b16 %v10203
  %v10723 = vunpack.c.l.b16 %v10204
  %v10724 = vunpack.c.l.b16 %v10205
  %v10725 = vunpack.c.l.b16 %v10206
  %v10726 = vunpack.c.l.b16 %v10207
  %v10727 = vunpack.c.l.b16 %v10208
  %v10728 = vunpack.c.l.b16 %v10209
  %v10729 = vunpack.c.l.b16 %v10210
  %v10730 = vunpack.c.l.b16 %v10211
  %v10731 = vunpack.c.l.b16 %v10212
  %v10732 = vunpack.c.l.b16 %v10213
  %v10733 = vunpack.c.l.b16 %v10214
  %v10734 = vunpack.c.l.b16 %v10215
  %v10735 = vunpack.c.l.b16 %v10216
  %v10736 = vunpack.c.l.b16 %v10217
  %v10737 = vunpack.c.l.b16 %v10218
  %v10738 = vunpack.c.l.b16 %v10219
  %v10739 = vunpack.c.l.b16 %v10220
  %v10740 = vunpack.c.l.b16 %v10221
  %v10741 = vunpack.c.l.b16 %v10222
  %v10742 = vunpack.c.l.b16 %v10223
  %v10743 = vunpack.c.l.b16 %v10224
  %v10744 = vunpack.c.l.b16 %v10225
  %v10745 = vunpack.c.l.b16 %v10226
  %v10746 = vunpack.c.l.b16 %v10227
  %v10747 = vunpack.c.l.b16 %v10228
  %v10748 = vunpack.c.l.b16 %v10229
  %v10749 = vunpack.c.l.b16 %v10230
  %v10750 = vunpack.c.l.b16 %v10231
  %v10751 = vunpack.c.l.b16 %v10232
  %v10752 = vunpack.c.l.b16 %v10233
  %v10753 = vunpack.c.l.b16 %v10234
  %v10754 = vunpack.c.l.b16 %v10235
  %v10755 = vunpack.c.l.b16 %v10236
  %v10756 = vunpack.c.l.b16 %v10237
  %v10757 = vunpack.c.l.b16 %v10238
  %v10758 = vunpack.c.l.b16 %v10239
  %v10759 = vunpack.c.l.b16 %v10240
  %v10760 = vunpack.c.l.b16 %v10241
  %v10761 = vunpack.c.l.b16 %v10242
  %v10762 = vunpack.c.l.b16 %v10243
  %v10763 = vunpack.c.l.b16 %v10244
  %v10764 = vunpack.c.l.b16 %v10245
  %v10765 = vunpack.c.l.b16 %v10246
  %v10766 = vunpack.c.l.b16 %v10247
  %v10767 = vunpack.c.l.b16 %v10248
  %v10768 = vunpack.c.l.b16 %v10249
  %v10769 = vunpack.c.l.b16 %v10250
  %v10770 = vunpack.c.l.b16 %v10251
  %v10771 = vunpack.c.l.b16 %v10252
  %v10772 = vunpack.c.l.b16 %v10253
  %v10773 = vunpack.c.l.b16 %v10254
  %v10774 = vunpack.c.l.b16 %v10255
  %v10775 = vunpack.c.l.b16 %v10256
  %v10776 = vunpack.c.l.b16 %v10257
  %v10777 = vunpack.c.l.b16 %v10258
  %v10778 = vunpack.c.l.b16 %v10259
  %v10779 = vunpack.c.l.b16 %v10260
  %v10780 = vunpack.c.l.b16 %v10261
  %v10781 = vunpack.c.l.b16 %v10262
  %v10782 = vunpack.c.l.b16 %v10263
  %v10783 = vunpack.c.l.b16 %v10264
  %v10784 = vunpack.c.l.b16 %v10265
  %v10785 = vunpack.c.l.b16 %v10266
  %v10786 = vunpack.c.l.b16 %v10267
  %v10787 = vunpack.c.l.b16 %v10268
  %v10788 = vunpack.c.l.b16 %v10269
  %v10789 = vunpack.c.l.b16 %v10270
  %v10790 = vunpack.c.l.b16 %v10271
  %v10791 = vunpack.c.l.b16 %v10272
  %v10792 = vunpack.c.l.b16 %v10273
  %v10793 = vunpack.c.l.b16 %v10274
  %v10794 = vunpack.c.l.b16 %v10275
  %v10795 = vunpack.c.l.b16 %v10276
  %v10796 = vunpack.c.l.b16 %v10277
  %v10797 = vunpack.c.l.b16 %v10278
  %v10798 = vunpack.c.l.b16 %v10279
  %v10799 = vunpack.c.l.b16 %v10280
  %v10800 = vunpack.c.l.b16 %v10281
  %v10801 = vunpack.c.l.b16 %v10282
  %v10802 = vunpack.c.l.b16 %v10283
  %v10803 = vunpack.c.l.b16 %v10284
  %v10804 = vunpack.c.l.b16 %v10285
  %v10805 = vunpack.c.l.b16 %v10286
  %v10806 = vunpack.c.l.b16 %v10287
  %v10807 = vunpack.c.l.b16 %v10288
  %v10808 = vunpack.c.l.b16 %v10289
  %v10809 = vunpack.c.l.b16 %v10290
  %v10810 = vunpack.c.l.b16 %v10291
  %v10811 = vunpack.c.l.b16 %v10292
  %v10812 = vunpack.c.l.b16 %v10293
  %v10813 = vunpack.c.l.b16 %v10294
  %v10814 = vunpack.c.l.b16 %v10295
  %v10815 = vunpack.c.l.b16 %v10296
  %v10816 = vunpack.c.l.b16 %v10297
  %v10817 = vunpack.c.l.b16 %v10298
  %v10818 = vunpack.c.l.b16 %v10299
  %v10819 = vunpack.c.l.b16 %v10300
  %v10820 = vunpack.c.l.b16 %v10301
  %v10821 = vunpack.c.l.b16 %v10302
  %v10822 = vunpack.c.l.b16 %v10303
  %v10823 = vunpack.c.l.b16 %v10304
  %v10824 = vunpack.c.l.b16 %v10305
  %v10825 = vunpack.c.l.b16 %v10306
  %v10826 = vunpack.c.l.b16 %v10307
  %v10827 = vunpack.c.l.b16 %v10308
  %v10828 = vunpack.c.l.b16 %v10309
  %v10829 = vunpack.c.l.b16 %v10310
  %v10830 = vunpack.c.l.b16 %v10311
  %v10831 = vunpack.c.l.b16 %v10312
  %v10832 = vunpack.c.l.b16 %v10313
  %v10833 = vunpack.c.l.b16 %v10314
  %v10834 = vunpack.c.l.b16 %v10315
  %v10835 = vunpack.c.l.b16 %v10316
  %v10836 = vunpack.c.l.b16 %v10317
  %v10837 = vunpack.c.l.b16 %v10318
  %v10838 = vunpack.c.l.b16 %v10319
  %v10839 = vunpack.c.l.b16 %v10320
  %v10840 = vunpack.c.l.b16 %v10321
  %v10841 = vunpack.c.l.b16 %v10322
  %v10842 = vunpack.c.l.b16 %v10323
  %v10843 = vunpack.c.l.b16 %v10324
  %v10844 = vunpack.c.l.b16 %v10325
  %v10845 = vunpack.c.l.b16 %v10326
  %v10846 = vunpack.c.l.b16 %v10327
  %v10847 = vunpack.c.l.b16 %v10328
  %v10848 = vunpack.c.l.b16 %v10329
  %v10849 = vunpack.c.l.b16 %v10330
  %v10850 = vunpack.c.l.b16 %v10331
  %v10851 = vunpack.c.l.b16 %v10332
  %v10852 = vunpack.c.l.b16 %v10333
  %v10853 = vunpack.c.l.b16 %v10334
  %v10854 = vunpack.c.l.b16 %v10335
  %v10855 = vunpack.c.l.b16 %v10336
  %v10856 = vunpack.c.l.b16 %v10337
  %v10857 = vunpack.c.l.b16 %v10338
  %v10858 = vunpack.c.l.b16 %v10339
  %v10859 = vunpack.c.l.b16 %v10340
  %v10860 = vunpack.c.l.b16 %v10341
  %v10861 = vunpack.c.l.b16 %v10342
  %v10862 = vpack.c.b16 %v10607, %v10606
  %v10863 = vpack.c.b16 %v10609, %v10608
  %v10864 = vpack.c.b16 %v10611, %v10610
  %v10865 = vpack.c.b16 %v10613, %v10612
  %v10866 = vpack.c.b16 %v10615, %v10614
  %v10867 = vpack.c.b16 %v10617, %v10616
  %v10868 = vpack.c.b16 %v10619, %v10618
  %v10869 = vpack.c.b16 %v10621, %v10620
  %v10870 = vpack.c.b16 %v10623, %v10622
  %v10871 = vpack.c.b16 %v10625, %v10624
  %v10872 = vpack.c.b16 %v10627, %v10626
  %v10873 = vpack.c.b16 %v10629, %v10628
  %v10874 = vpack.c.b16 %v10631, %v10630
  %v10875 = vpack.c.b16 %v10633, %v10632
  %v10876 = vpack.c.b16 %v10635, %v10634
  %v10877 = vpack.c.b16 %v10637, %v10636
  %v10878 = vpack.c.b16 %v10639, %v10638
  %v10879 = vpack.c.b16 %v10641, %v10640
  %v10880 = vpack.c.b16 %v10643, %v10642
  %v10881 = vpack.c.b16 %v10645, %v10644
  %v10882 = vpack.c.b16 %v10647, %v10646
  %v10883 = vpack.c.b16 %v10649, %v10648
  %v10884 = vpack.c.b16 %v10651, %v10650
  %v10885 = vpack.c.b16 %v10653, %v10652
  %v10886 = vpack.c.b16 %v10655, %v10654
  %v10887 = vpack.c.b16 %v10657, %v10656
  %v10888 = vpack.c.b16 %v10659, %v10658
  %v10889 = vpack.c.b16 %v10661, %v10660
  %v10890 = vpack.c.b16 %v10663, %v10662
  %v10891 = vpack.c.b16 %v10665, %v10664
  %v10892 = vpack.c.b16 %v10667, %v10666
  %v10893 = vpack.c.b16 %v10669, %v10668
  %v10894 = vpack.c.b16 %v10671, %v10670
  %v10895 = vpack.c.b16 %v10673, %v10672
  %v10896 = vpack.c.b16 %v10675, %v10674
  %v10897 = vpack.c.b16 %v10677, %v10676
  %v10898 = vpack.c.b16 %v10679, %v10678
  %v10899 = vpack.c.b16 %v10681, %v10680
  %v10900 = vpack.c.b16 %v10683, %v10682
  %v10901 = vpack.c.b16 %v10685, %v10684
  %v10902 = vpack.c.b16 %v10687, %v10686
  %v10903 = vpack.c.b16 %v10689, %v10688
  %v10904 = vpack.c.b16 %v10691, %v10690
  %v10905 = vpack.c.b16 %v10693, %v10692
  %v10906 = vpack.c.b16 %v10695, %v10694
  %v10907 = vpack.c.b16 %v10697, %v10696
  %v10908 = vpack.c.b16 %v10699, %v10698
  %v10909 = vpack.c.b16 %v10701, %v10700
  %v10910 = vpack.c.b16 %v10703, %v10702
  %v10911 = vpack.c.b16 %v10705, %v10704
  %v10912 = vpack.c.b16 %v10707, %v10706
  %v10913 = vpack.c.b16 %v10709, %v10708
  %v10914 = vpack.c.b16 %v10711, %v10710
  %v10915 = vpack.c.b16 %v10713, %v10712
  %v10916 = vpack.c.b16 %v10715, %v10714
  %v10917 = vpack.c.b16 %v10717, %v10716
  %v10918 = vpack.c.b16 %v10719, %v10718
  %v10919 = vpack.c.b16 %v10721, %v10720
  %v10920 = vpack.c.b16 %v10723, %v10722
  %v10921 = vpack.c.b16 %v10725, %v10724
  %v10922 = vpack.c.b16 %v10727, %v10726
  %v10923 = vpack.c.b16 %v10729, %v10728
  %v10924 = vpack.c.b16 %v10731, %v10730
  %v10925 = vpack.c.b16 %v10733, %v10732
  %v10926 = vpack.c.b16 %v10735, %v10734
  %v10927 = vpack.c.b16 %v10737, %v10736
  %v10928 = vpack.c.b16 %v10739, %v10738
  %v10929 = vpack.c.b16 %v10741, %v10740
  %v10930 = vpack.c.b16 %v10743, %v10742
  %v10931 = vpack.c.b16 %v10745, %v10744
  %v10932 = vpack.c.b16 %v10747, %v10746
  %v10933 = vpack.c.b16 %v10749, %v10748
  %v10934 = vpack.c.b16 %v10751, %v10750
  %v10935 = vpack.c.b16 %v10753, %v10752
  %v10936 = vpack.c.b16 %v10755, %v10754
  %v10937 = vpack.c.b16 %v10757, %v10756
  %v10938 = vpack.c.b16 %v10759, %v10758
  %v10939 = vpack.c.b16 %v10761, %v10760
  %v10940 = vpack.c.b16 %v10763, %v10762
  %v10941 = vpack.c.b16 %v10765, %v10764
  %v10942 = vpack.c.b16 %v10767, %v10766
  %v10943 = vpack.c.b16 %v10769, %v10768
  %v10944 = vpack.c.b16 %v10771, %v10770
  %v10945 = vpack.c.b16 %v10773, %v10772
  %v10946 = vpack.c.b16 %v10775, %v10774
  %v10947 = vpack.c.b16 %v10777, %v10776
  %v10948 = vpack.c.b16 %v10779, %v10778
  %v10949 = vpack.c.b16 %v10781, %v10780
  %v10950 = vpack.c.b16 %v10783, %v10782
  %v10951 = vpack.c.b16 %v10785, %v10784
  %v10952 = vpack.c.b16 %v10787, %v10786
  %v10953 = vpack.c.b16 %v10789, %v10788
  %v10954 = vpack.c.b16 %v10791, %v10790
  %v10955 = vpack.c.b16 %v10793, %v10792
  %v10956 = vpack.c.b16 %v10795, %v10794
  %v10957 = vpack.c.b16 %v10797, %v10796
  %v10958 = vpack.c.b16 %v10799, %v10798
  %v10959 = vpack.c.b16 %v10801, %v10800
  %v10960 = vpack.c.b16 %v10803, %v10802
  %v10961 = vpack.c.b16 %v10805, %v10804
  %v10962 = vpack.c.b16 %v10807, %v10806
  %v10963 = vpack.c.b16 %v10809, %v10808
  %v10964 = vpack.c.b16 %v10811, %v10810
  %v10965 = vpack.c.b16 %v10813, %v10812
  %v10966 = vpack.c.b16 %v10815, %v10814
  %v10967 = vpack.c.b16 %v10817, %v10816
  %v10968 = vpack.c.b16 %v10819, %v10818
  %v10969 = vpack.c.b16 %v10821, %v10820
  %v10970 = vpack.c.b16 %v10823, %v10822
  %v10971 = vpack.c.b16 %v10825, %v10824
  %v10972 = vpack.c.b16 %v10827, %v10826
  %v10973 = vpack.c.b16 %v10829, %v10828
  %v10974 = vpack.c.b16 %v10831, %v10830
  %v10975 = vpack.c.b16 %v10833, %v10832
  %v10976 = vpack.c.b16 %v10835, %v10834
  %v10977 = vpack.c.b16 %v10837, %v10836
  %v10978 = vpack.c.b16 %v10839, %v10838
  %v10979 = vpack.c.b16 %v10841, %v10840
  %v10980 = vpack.c.b16 %v10843, %v10842
  %v10981 = vpack.c.b16 %v10845, %v10844
  %v10982 = vpack.c.b16 %v10847, %v10846
  %v10983 = vpack.c.b16 %v10849, %v10848
  %v10984 = vpack.c.b16 %v10851, %v10850
  %v10985 = vpack.c.b16 %v10853, %v10852
  %v10986 = vpack.c.b16 %v10855, %v10854
  %v10987 = vpack.c.b16 %v10857, %v10856
  %v10988 = vpack.c.b16 %v10859, %v10858
  %v10989 = vpack.c.b16 %v10861, %v10860
  %11118 = vmatprep.subr.bf16.mxu0 0
  %11119 = vmatpush1.bf16.msra.mxu0 %v10862
  %11120 = vmatprep.subr.bf16.mxu0 0
  %11121 = vmatpush1.bf16.msra.mxu0 %v10863
  %11122 = vmatprep.subr.bf16.mxu0 0
  %11123 = vmatpush1.bf16.msra.mxu0 %v10864
  %11124 = vmatprep.subr.bf16.mxu0 0
  %11125 = vmatpush1.bf16.msra.mxu0 %v10865
  %11126 = vmatprep.subr.bf16.mxu0 0
  %11127 = vmatpush1.bf16.msra.mxu0 %v10866
  %11128 = vmatprep.subr.bf16.mxu0 0
  %11129 = vmatpush1.bf16.msra.mxu0 %v10867
  %11130 = vmatprep.subr.bf16.mxu0 0
  %11131 = vmatpush1.bf16.msra.mxu0 %v10868
  %11132 = vmatprep.subr.bf16.mxu0 0
  %11133 = vmatpush1.bf16.msra.mxu0 %v10869
  %11134 = vmatprep.subr.bf16.mxu0 0
  %11135 = vmatpush1.bf16.msra.mxu0 %v10870
  %11136 = vmatprep.subr.bf16.mxu0 0
  %11137 = vmatpush1.bf16.msra.mxu0 %v10871
  %11138 = vmatprep.subr.bf16.mxu0 0
  %11139 = vmatpush1.bf16.msra.mxu0 %v10872
  %11140 = vmatprep.subr.bf16.mxu0 0
  %11141 = vmatpush1.bf16.msra.mxu0 %v10873
  %11142 = vmatprep.subr.bf16.mxu0 0
  %11143 = vmatpush1.bf16.msra.mxu0 %v10874
  %11144 = vmatprep.subr.bf16.mxu0 0
  %11145 = vmatpush1.bf16.msra.mxu0 %v10875
  %11146 = vmatprep.subr.bf16.mxu0 0
  %11147 = vmatpush1.bf16.msra.mxu0 %v10876
  %11148 = vmatprep.subr.bf16.mxu0 0
  %11149 = vmatpush1.bf16.msra.mxu0 %v10877
  %11150 = vmatprep.mubr.bf16.mxu0 %v10072
  %11151 = vmatmul.mubr.bf16.gmra.mrb[0].mxu0 %v10071
  %v11152 = vpop.f32.mrb[0].mxu0
  %v11153 = vadd.f32 %v10348, %v11152
  %v11154 = vpop.f32.mrb[0].mxu0
  %v11155 = vpop.f32.mrb[0].mxu0
  %v11156 = vadd.f32 %v10348, %v11155
  %v11157 = vpop.f32.mrb[0].mxu0
  %11158 = vdwg.mxu0
  %11159 = vmatprep.subr.bf16.mxu0 0
  %11160 = vmatpush1.bf16.msra.mxu0 %v10878
  %11161 = vmatprep.subr.bf16.mxu0 0
  %11162 = vmatpush1.bf16.msra.mxu0 %v10879
  %11163 = vmatprep.subr.bf16.mxu0 0
  %11164 = vmatpush1.bf16.msra.mxu0 %v10880
  %11165 = vmatprep.subr.bf16.mxu0 0
  %11166 = vmatpush1.bf16.msra.mxu0 %v10881
  %11167 = vmatprep.subr.bf16.mxu0 0
  %11168 = vmatpush1.bf16.msra.mxu0 %v10882
  %11169 = vmatprep.subr.bf16.mxu0 0
  %11170 = vmatpush1.bf16.msra.mxu0 %v10883
  %11171 = vmatprep.subr.bf16.mxu0 0
  %11172 = vmatpush1.bf16.msra.mxu0 %v10884
  %11173 = vmatprep.subr.bf16.mxu0 0
  %11174 = vmatpush1.bf16.msra.mxu0 %v10885
  %11175 = vmatprep.subr.bf16.mxu0 0
  %11176 = vmatpush1.bf16.msra.mxu0 %v10886
  %11177 = vmatprep.subr.bf16.mxu0 0
  %11178 = vmatpush1.bf16.msra.mxu0 %v10887
  %11179 = vmatprep.subr.bf16.mxu0 0
  %11180 = vmatpush1.bf16.msra.mxu0 %v10888
  %11181 = vmatprep.subr.bf16.mxu0 0
  %11182 = vmatpush1.bf16.msra.mxu0 %v10889
  %11183 = vmatprep.subr.bf16.mxu0 0
  %11184 = vmatpush1.bf16.msra.mxu0 %v10890
  %11185 = vmatprep.subr.bf16.mxu0 0
  %11186 = vmatpush1.bf16.msra.mxu0 %v10891
  %11187 = vmatprep.subr.bf16.mxu0 0
  %11188 = vmatpush1.bf16.msra.mxu0 %v10892
  %11189 = vmatprep.subr.bf16.mxu0 0
  %11190 = vmatpush1.bf16.msra.mxu0 %v10893
  %11191 = vmatprep.mubr.bf16.mxu0 %v10074
  %11192 = vmatmul.mubr.bf16.gmra.mrb[0].mxu0 %v10073
  %v11193 = vpop.f32.mrb[0].mxu0
  %v11194 = vadd.f32 %v11153, %v11193
  %v11195 = vpop.f32.mrb[0].mxu0
  %v11196 = vpop.f32.mrb[0].mxu0
  %v11197 = vadd.f32 %v11156, %v11196
  %v11198 = vpop.f32.mrb[0].mxu0
  %11199 = vdwg.mxu0
  %11200 = vmatprep.subr.bf16.mxu0 0
  %11201 = vmatpush1.bf16.msra.mxu0 %v10894
  %11202 = vmatprep.subr.bf16.mxu0 0
  %11203 = vmatpush1.bf16.msra.mxu0 %v10895
  %11204 = vmatprep.subr.bf16.mxu0 0
  %11205 = vmatpush1.bf16.msra.mxu0 %v10896
  %11206 = vmatprep.subr.bf16.mxu0 0
  %11207 = vmatpush1.bf16.msra.mxu0 %v10897
  %11208 = vmatprep.subr.bf16.mxu0 0
  %11209 = vmatpush1.bf16.msra.mxu0 %v10898
  %11210 = vmatprep.subr.bf16.mxu0 0
  %11211 = vmatpush1.bf16.msra.mxu0 %v10899
  %11212 = vmatprep.subr.bf16.mxu0 0
  %11213 = vmatpush1.bf16.msra.mxu0 %v10900
  %11214 = vmatprep.subr.bf16.mxu0 0
  %11215 = vmatpush1.bf16.msra.mxu0 %v10901
  %11216 = vmatprep.subr.bf16.mxu0 0
  %11217 = vmatpush1.bf16.msra.mxu0 %v10902
  %11218 = vmatprep.subr.bf16.mxu0 0
  %11219 = vmatpush1.bf16.msra.mxu0 %v10903
  %11220 = vmatprep.subr.bf16.mxu0 0
  %11221 = vmatpush1.bf16.msra.mxu0 %v10904
  %11222 = vmatprep.subr.bf16.mxu0 0
  %11223 = vmatpush1.bf16.msra.mxu0 %v10905
  %11224 = vmatprep.subr.bf16.mxu0 0
  %11225 = vmatpush1.bf16.msra.mxu0 %v10906
  %11226 = vmatprep.subr.bf16.mxu0 0
  %11227 = vmatpush1.bf16.msra.mxu0 %v10907
  %11228 = vmatprep.subr.bf16.mxu0 0
  %11229 = vmatpush1.bf16.msra.mxu0 %v10908
  %11230 = vmatprep.subr.bf16.mxu0 0
  %11231 = vmatpush1.bf16.msra.mxu0 %v10909
  %11232 = vmatprep.mubr.bf16.mxu0 %v10076
  %11233 = vmatmul.mubr.bf16.gmra.mrb[0].mxu0 %v10075
  %v11234 = vpop.f32.mrb[0].mxu0
  %v11235 = vadd.f32 %v11194, %v11234
  %v11236 = vpop.f32.mrb[0].mxu0
  %v11237 = vpop.f32.mrb[0].mxu0
  %v11238 = vadd.f32 %v11197, %v11237
  %v11239 = vpop.f32.mrb[0].mxu0
  %11240 = vdwg.mxu0
  %11241 = vmatprep.subr.bf16.mxu0 0
  %11242 = vmatpush1.bf16.msra.mxu0 %v10910
  %11243 = vmatprep.subr.bf16.mxu0 0
  %11244 = vmatpush1.bf16.msra.mxu0 %v10911
  %11245 = vmatprep.subr.bf16.mxu0 0
  %11246 = vmatpush1.bf16.msra.mxu0 %v10912
  %11247 = vmatprep.subr.bf16.mxu0 0
  %11248 = vmatpush1.bf16.msra.mxu0 %v10913
  %11249 = vmatprep.subr.bf16.mxu0 0
  %11250 = vmatpush1.bf16.msra.mxu0 %v10914
  %11251 = vmatprep.subr.bf16.mxu0 0
  %11252 = vmatpush1.bf16.msra.mxu0 %v10915
  %11253 = vmatprep.subr.bf16.mxu0 0
  %11254 = vmatpush1.bf16.msra.mxu0 %v10916
  %11255 = vmatprep.subr.bf16.mxu0 0
  %11256 = vmatpush1.bf16.msra.mxu0 %v10917
  %11257 = vmatprep.subr.bf16.mxu0 0
  %11258 = vmatpush1.bf16.msra.mxu0 %v10918
  %11259 = vmatprep.subr.bf16.mxu0 0
  %11260 = vmatpush1.bf16.msra.mxu0 %v10919
  %11261 = vmatprep.subr.bf16.mxu0 0
  %11262 = vmatpush1.bf16.msra.mxu0 %v10920
  %11263 = vmatprep.subr.bf16.mxu0 0
  %11264 = vmatpush1.bf16.msra.mxu0 %v10921
  %11265 = vmatprep.subr.bf16.mxu0 0
  %11266 = vmatpush1.bf16.msra.mxu0 %v10922
  %11267 = vmatprep.subr.bf16.mxu0 0
  %11268 = vmatpush1.bf16.msra.mxu0 %v10923
  %11269 = vmatprep.subr.bf16.mxu0 0
  %11270 = vmatpush1.bf16.msra.mxu0 %v10924
  %11271 = vmatprep.subr.bf16.mxu0 0
  %11272 = vmatpush1.bf16.msra.mxu0 %v10925
  %11273 = vmatprep.mubr.bf16.mxu0 %v10078
  %11274 = vmatmul.mubr.bf16.gmra.mrb[0].mxu0 %v10077
  %v11275 = vpop.f32.mrb[0].mxu0
  %v11276 = vadd.f32 %v11235, %v11275
  %v11277 = vpop.f32.mrb[0].mxu0
  %v11278 = vpop.f32.mrb[0].mxu0
  %v11279 = vadd.f32 %v11238, %v11278
  %v11280 = vpop.f32.mrb[0].mxu0
  %11281 = vdwg.mxu0
  %11282 = vmatprep.subr.bf16.mxu0 0
  %11283 = vmatpush1.bf16.msra.mxu0 %v10926
  %11284 = vmatprep.subr.bf16.mxu0 0
  %11285 = vmatpush1.bf16.msra.mxu0 %v10927
  %11286 = vmatprep.subr.bf16.mxu0 0
  %11287 = vmatpush1.bf16.msra.mxu0 %v10928
  %11288 = vmatprep.subr.bf16.mxu0 0
  %11289 = vmatpush1.bf16.msra.mxu0 %v10929
  %11290 = vmatprep.subr.bf16.mxu0 0
  %11291 = vmatpush1.bf16.msra.mxu0 %v10930
  %11292 = vmatprep.subr.bf16.mxu0 0
  %11293 = vmatpush1.bf16.msra.mxu0 %v10931
  %11294 = vmatprep.subr.bf16.mxu0 0
  %11295 = vmatpush1.bf16.msra.mxu0 %v10932
  %11296 = vmatprep.subr.bf16.mxu0 0
  %11297 = vmatpush1.bf16.msra.mxu0 %v10933
  %11298 = vmatprep.subr.bf16.mxu0 0
  %11299 = vmatpush1.bf16.msra.mxu0 %v10934
  %11300 = vmatprep.subr.bf16.mxu0 0
  %11301 = vmatpush1.bf16.msra.mxu0 %v10935
  %11302 = vmatprep.subr.bf16.mxu0 0
  %11303 = vmatpush1.bf16.msra.mxu0 %v10936
  %11304 = vmatprep.subr.bf16.mxu0 0
  %11305 = vmatpush1.bf16.msra.mxu0 %v10937
  %11306 = vmatprep.subr.bf16.mxu0 0
  %11307 = vmatpush1.bf16.msra.mxu0 %v10938
  %11308 = vmatprep.subr.bf16.mxu0 0
  %11309 = vmatpush1.bf16.msra.mxu0 %v10939
  %11310 = vmatprep.subr.bf16.mxu0 0
  %11311 = vmatpush1.bf16.msra.mxu0 %v10940
  %11312 = vmatprep.subr.bf16.mxu0 0
  %11313 = vmatpush1.bf16.msra.mxu0 %v10941
  %11314 = vmatprep.mubr.bf16.mxu0 %v10080
  %11315 = vmatmul.mubr.bf16.gmra.mrb[0].mxu0 %v10079
  %v11316 = vpop.f32.mrb[0].mxu0
  %v11317 = vadd.f32 %v11276, %v11316
  %v11318 = vpop.f32.mrb[0].mxu0
  %v11319 = vpop.f32.mrb[0].mxu0
  %v11320 = vadd.f32 %v11279, %v11319
  %v11321 = vpop.f32.mrb[0].mxu0
  %11322 = vdwg.mxu0
  %11323 = vmatprep.subr.bf16.mxu0 0
  %11324 = vmatpush1.bf16.msra.mxu0 %v10942
  %11325 = vmatprep.subr.bf16.mxu0 0
  %11326 = vmatpush1.bf16.msra.mxu0 %v10943
  %11327 = vmatprep.subr.bf16.mxu0 0
  %11328 = vmatpush1.bf16.msra.mxu0 %v10944
  %11329 = vmatprep.subr.bf16.mxu0 0
  %11330 = vmatpush1.bf16.msra.mxu0 %v10945
  %11331 = vmatprep.subr.bf16.mxu0 0
  %11332 = vmatpush1.bf16.msra.mxu0 %v10946
  %11333 = vmatprep.subr.bf16.mxu0 0
  %11334 = vmatpush1.bf16.msra.mxu0 %v10947
  %11335 = vmatprep.subr.bf16.mxu0 0
  %11336 = vmatpush1.bf16.msra.mxu0 %v10948
  %11337 = vmatprep.subr.bf16.mxu0 0
  %11338 = vmatpush1.bf16.msra.mxu0 %v10949
  %11339 = vmatprep.subr.bf16.mxu0 0
  %11340 = vmatpush1.bf16.msra.mxu0 %v10950
  %11341 = vmatprep.subr.bf16.mxu0 0
  %11342 = vmatpush1.bf16.msra.mxu0 %v10951
  %11343 = vmatprep.subr.bf16.mxu0 0
  %11344 = vmatpush1.bf16.msra.mxu0 %v10952
  %11345 = vmatprep.subr.bf16.mxu0 0
  %11346 = vmatpush1.bf16.msra.mxu0 %v10953
  %11347 = vmatprep.subr.bf16.mxu0 0
  %11348 = vmatpush1.bf16.msra.mxu0 %v10954
  %11349 = vmatprep.subr.bf16.mxu0 0
  %11350 = vmatpush1.bf16.msra.mxu0 %v10955
  %11351 = vmatprep.subr.bf16.mxu0 0
  %11352 = vmatpush1.bf16.msra.mxu0 %v10956
  %11353 = vmatprep.subr.bf16.mxu0 0
  %11354 = vmatpush1.bf16.msra.mxu0 %v10957
  %11355 = vmatprep.mubr.bf16.mxu0 %v10082
  %11356 = vmatmul.mubr.bf16.gmra.mrb[0].mxu0 %v10081
  %v11357 = vpop.f32.mrb[0].mxu0
  %v11358 = vadd.f32 %v11317, %v11357
  %v11359 = vpop.f32.mrb[0].mxu0
  %v11360 = vpop.f32.mrb[0].mxu0
  %v11361 = vadd.f32 %v11320, %v11360
  %v11362 = vpop.f32.mrb[0].mxu0
  %11363 = vdwg.mxu0
  %11364 = vmatprep.subr.bf16.mxu0 0
  %11365 = vmatpush1.bf16.msra.mxu0 %v10958
  %11366 = vmatprep.subr.bf16.mxu0 0
  %11367 = vmatpush1.bf16.msra.mxu0 %v10959
  %11368 = vmatprep.subr.bf16.mxu0 0
  %11369 = vmatpush1.bf16.msra.mxu0 %v10960
  %11370 = vmatprep.subr.bf16.mxu0 0
  %11371 = vmatpush1.bf16.msra.mxu0 %v10961
  %11372 = vmatprep.subr.bf16.mxu0 0
  %11373 = vmatpush1.bf16.msra.mxu0 %v10962
  %11374 = vmatprep.subr.bf16.mxu0 0
  %11375 = vmatpush1.bf16.msra.mxu0 %v10963
  %11376 = vmatprep.subr.bf16.mxu0 0
  %11377 = vmatpush1.bf16.msra.mxu0 %v10964
  %11378 = vmatprep.subr.bf16.mxu0 0
  %11379 = vmatpush1.bf16.msra.mxu0 %v10965
  %11380 = vmatprep.subr.bf16.mxu0 0
  %11381 = vmatpush1.bf16.msra.mxu0 %v10966
  %11382 = vmatprep.subr.bf16.mxu0 0
  %11383 = vmatpush1.bf16.msra.mxu0 %v10967
  %11384 = vmatprep.subr.bf16.mxu0 0
  %11385 = vmatpush1.bf16.msra.mxu0 %v10968
  %11386 = vmatprep.subr.bf16.mxu0 0
  %11387 = vmatpush1.bf16.msra.mxu0 %v10969
  %11388 = vmatprep.subr.bf16.mxu0 0
  %11389 = vmatpush1.bf16.msra.mxu0 %v10970
  %11390 = vmatprep.subr.bf16.mxu0 0
  %11391 = vmatpush1.bf16.msra.mxu0 %v10971
  %11392 = vmatprep.subr.bf16.mxu0 0
  %11393 = vmatpush1.bf16.msra.mxu0 %v10972
  %11394 = vmatprep.subr.bf16.mxu0 0
  %11395 = vmatpush1.bf16.msra.mxu0 %v10973
  %11396 = vmatprep.mubr.bf16.mxu0 %v10084
  %11397 = vmatmul.mubr.bf16.gmra.mrb[0].mxu0 %v10083
  %v11398 = vpop.f32.mrb[0].mxu0
  %v11399 = vadd.f32 %v11358, %v11398
  %v11400 = vpop.f32.mrb[0].mxu0
  %v11401 = vpop.f32.mrb[0].mxu0
  %v11402 = vadd.f32 %v11361, %v11401
  %v11403 = vpop.f32.mrb[0].mxu0
  %11404 = vdwg.mxu0
  %11405 = vmatprep.subr.bf16.mxu0 0
  %11406 = vmatpush1.bf16.msra.mxu0 %v10974
  %11407 = vmatprep.subr.bf16.mxu0 0
  %11408 = vmatpush1.bf16.msra.mxu0 %v10975
  %11409 = vmatprep.subr.bf16.mxu0 0
  %11410 = vmatpush1.bf16.msra.mxu0 %v10976
  %11411 = vmatprep.subr.bf16.mxu0 0
  %11412 = vmatpush1.bf16.msra.mxu0 %v10977
  %11413 = vmatprep.subr.bf16.mxu0 0
  %11414 = vmatpush1.bf16.msra.mxu0 %v10978
  %11415 = vmatprep.subr.bf16.mxu0 0
  %11416 = vmatpush1.bf16.msra.mxu0 %v10979
  %11417 = vmatprep.subr.bf16.mxu0 0
  %11418 = vmatpush1.bf16.msra.mxu0 %v10980
  %11419 = vmatprep.subr.bf16.mxu0 0
  %11420 = vmatpush1.bf16.msra.mxu0 %v10981
  %11421 = vmatprep.subr.bf16.mxu0 0
  %11422 = vmatpush1.bf16.msra.mxu0 %v10982
  %11423 = vmatprep.subr.bf16.mxu0 0
  %11424 = vmatpush1.bf16.msra.mxu0 %v10983
  %11425 = vmatprep.subr.bf16.mxu0 0
  %11426 = vmatpush1.bf16.msra.mxu0 %v10984
  %11427 = vmatprep.subr.bf16.mxu0 0
  %11428 = vmatpush1.bf16.msra.mxu0 %v10985
  %11429 = vmatprep.subr.bf16.mxu0 0
  %11430 = vmatpush1.bf16.msra.mxu0 %v10986
  %11431 = vmatprep.subr.bf16.mxu0 0
  %11432 = vmatpush1.bf16.msra.mxu0 %v10987
  %11433 = vmatprep.subr.bf16.mxu0 0
  %11434 = vmatpush1.bf16.msra.mxu0 %v10988
  %11435 = vmatprep.subr.bf16.mxu0 0
  %11436 = vmatpush1.bf16.msra.mxu0 %v10989
  %11437 = vmatprep.mubr.bf16.mxu0 %v10086
  %11438 = vmatmul.mubr.bf16.gmra.mrb[0].mxu0 %v10085
  %v11439 = vpop.f32.mrb[0].mxu0
  %v11440 = vadd.f32 %v11399, %v11439
  %v11441 = vpop.f32.mrb[0].mxu0
  %v11442 = vpop.f32.mrb[0].mxu0
  %v11443 = vadd.f32 %v11402, %v11442
  %v11444 = vpop.f32.mrb[0].mxu0
  %11445 = vdwg.mxu0
  %v11446 = vadd.f32 %v9413, %v11440
  %v11447 = vadd.f32 %v9414, %v11443
  %v11448 = vld [vmem:[%s11 + $0x15] sm:$0x1]
  %v11449 = vld [vmem:[%s11 + $0x16] sm:$0x1]
  %v11450 = vsel %vm88, %v11446, 0.0
  %11451 = vadd.xlane.f32.xlu0 %v11450
  %v11452 = vpop.xlane.xlu0 %11451
  %v11453 = vsel %vm88, %v11447, 0.0
  %11454 = vadd.xlane.f32.xlu0 %v11453
  %v11455 = vpop.xlane.xlu0 %11454
  %v11456 = vmul.f32 %v11452, %v5075
  %v11457 = vmul.f32 %v11455, %v5075
  %v11458 = vsub.f32 %v11446, %v11456
  %v11459 = vsub.f32 %v11447, %v11457
  %v11460 = vmul.f32 %v11458, %v11458
  %v11461 = vmul.f32 %v11459, %v11459
  %v11462 = vsel %vm88, %v11460, 0.0
  %11463 = vadd.xlane.f32.xlu0 %v11462
  %v11464 = vpop.xlane.xlu0 %11463
  %v11465 = vsel %vm88, %v11461, 0.0
  %11466 = vadd.xlane.f32.xlu0 %v11465
  %v11467 = vpop.xlane.xlu0 %11466
  %v11468 = vmul.f32 %v11464, %v5075
  %v11469 = vmul.f32 %v11467, %v5075
  %v11470 = vadd.f32 %v11468, 1e-05
  %v11471 = vadd.f32 %v11469, 1e-05
  %v11472 = vrsqrt.pop %v11470
  %v11473 = vrsqrt.pop %v11471
  %v11474 = vmul.f32 %v11458, %v11472
  %v11475 = vmul.f32 %v11459, %v11473
  %v11477 = vlaneseq
  %v11478 = vshrl.u32 %v11477, 7
  %v11479 = vsub.s32 0, %v11478
  %v11480 = vrot.slane %v11448, %v11479
  %v11482 = vmul.f32 %v11474, %v11480
  %v11483 = vmul.f32 %v11475, %v11480
  %v11485 = vlaneseq
  %v11486 = vshrl.u32 %v11485, 7
  %v11487 = vsub.s32 0, %v11486
  %v11488 = vrot.slane %v11449, %v11487
  %v11490 = vadd.f32 %v11482, %v11488
  %v11491 = vadd.f32 %v11483, %v11488
  %v11492 = vlaneseq
  %v11493 = vshrl.u32 %v11492, 7
  %v11494 = vlaneseq
  %v11495 = vand.u32 %v11494, 127
  %v11496 = vmul.u32 %v11493, 8
  %v11497 = vadd.s32 %v11496, 7
  %vm11498 = vcmp.eq.s32.totalorder %v11495, %v11497
  %v11499 = vsel %vm11498, 1, 0
  %v11500 = vcvt.s32.f32 %v11499
  %v11502 = vsel %vm4926, %v11500, 0
  %11504 = vmatprep.subr.mxu0 0.0
  %11505 = vmatpush1.msra.mxu0 %v11490
  %11506 = vmatprep.subr.mxu0 0.0
  %11507 = vmatpush1.msra.mxu0 %v11491
  %11508 = vmatprep.subr.mxu0 0.0
  %11509 = vmatpush1.msra.mxu0 0.0
  %11510 = vmatprep.subr.mxu0 0.0
  %11511 = vmatpush1.msra.mxu0 0.0
  %11512 = vmatprep.subr.mxu0 0.0
  %11513 = vmatpush1.msra.mxu0 0.0
  %11514 = vmatprep.subr.mxu0 0.0
  %11515 = vmatpush1.msra.mxu0 0.0
  %11516 = vmatprep.subr.mxu0 0.0
  %11517 = vmatpush1.msra.mxu0 0.0
  %11518 = vmatprep.subr.mxu0 0.0
  %11519 = vmatpush1.msra.mxu0 0.0
  %11520 = vmatprep.subr.mxu0 0.0
  %11521 = vmatpush1.msra.mxu0 0.0
  %11522 = vmatprep.subr.mxu0 0.0
  %11523 = vmatpush1.msra.mxu0 0.0
  %11524 = vmatprep.subr.mxu0 0.0
  %11525 = vmatpush1.msra.mxu0 0.0
  %11526 = vmatprep.subr.mxu0 0.0
  %11527 = vmatpush1.msra.mxu0 0.0
  %11528 = vmatprep.subr.mxu0 0.0
  %11529 = vmatpush1.msra.mxu0 0.0
  %11530 = vmatprep.subr.mxu0 0.0
  %11531 = vmatpush1.msra.mxu0 0.0
  %11532 = vmatprep.subr.mxu0 0.0
  %11533 = vmatpush1.msra.mxu0 0.0
  %11534 = vmatprep.subr.mxu0 0.0
  %11535 = vmatpush1.msra.mxu0 0.0
  %11536 = vmatprep.subr.mxu0 0.0
  %11537 = vmatpush1.msra.mxu0 0.0
  %11538 = vmatprep.subr.mxu0 0.0
  %11539 = vmatpush1.msra.mxu0 0.0
  %11540 = vmatprep.subr.mxu0 0.0
  %11541 = vmatpush1.msra.mxu0 0.0
  %11542 = vmatprep.subr.mxu0 0.0
  %11543 = vmatpush1.msra.mxu0 0.0
  %11544 = vmatprep.subr.mxu0 0.0
  %11545 = vmatpush1.msra.mxu0 0.0
  %11546 = vmatprep.subr.mxu0 0.0
  %11547 = vmatpush1.msra.mxu0 0.0
  %11548 = vmatprep.subr.mxu0 0.0
  %11549 = vmatpush1.msra.mxu0 0.0
  %11550 = vmatprep.subr.mxu0 0.0
  %11551 = vmatpush1.msra.mxu0 0.0
  %11552 = vmatprep.subr.mxu0 0.0
  %11553 = vmatpush1.msra.mxu0 0.0
  %11554 = vmatprep.subr.mxu0 0.0
  %11555 = vmatpush1.msra.mxu0 0.0
  %11556 = vmatprep.subr.mxu0 0.0
  %11557 = vmatpush1.msra.mxu0 0.0
  %11558 = vmatprep.subr.mxu0 0.0
  %11559 = vmatpush1.msra.mxu0 0.0
  %11560 = vmatprep.subr.mxu0 0.0
  %11561 = vmatpush1.msra.mxu0 0.0
  %11562 = vmatprep.subr.mxu0 0.0
  %11563 = vmatpush1.msra.mxu0 0.0
  %11564 = vmatprep.subr.mxu0 0.0
  %11565 = vmatpush1.msra.mxu0 0.0
  %11566 = vmatprep.subr.mxu0 0.0
  %11567 = vmatpush1.msra.mxu0 0.0
  %11568 = vmatprep.mubr.f32.mxu0 0.0
  %11569 = vmatmul.mubr.f32.gmra.mrb[0].mxu0 %v11502
  %v11570 = vpop.f32.mrb[0].mxu0
  %v11571 = vadd.f32 0.0, %v11570
  %v11572 = vpop.f32.mrb[0].mxu0
  %11573 = vdwg.mxu0
  %v11574 = vadd.s32 %v11496, 5
  %vm11575 = vcmp.eq.s32.totalorder %v11495, %v11574
  %v11576 = vsel %vm11575, 1, 0
  %v11577 = vcvt.s32.f32 %v11576
  %vm11578 = vcmask 326656
  %v11580 = vsel %vm11578, %v11577, 0
  %11582 = vmatprep.subr.mxu0 0.0
  %11583 = vmatpush1.msra.mxu0 %v7872
  %11584 = vmatprep.subr.mxu0 0.0
  %11585 = vmatpush1.msra.mxu0 %v7873
  %11586 = vmatprep.subr.mxu0 0.0
  %11587 = vmatpush1.msra.mxu0 %v7874
  %11588 = vmatprep.subr.mxu0 0.0
  %11589 = vmatpush1.msra.mxu0 %v7875
  %11590 = vmatprep.subr.mxu0 0.0
  %11591 = vmatpush1.msra.mxu0 %v7876
  %11592 = vmatprep.subr.mxu0 0.0
  %11593 = vmatpush1.msra.mxu0 0.0
  %11594 = vmatprep.subr.mxu0 0.0
  %11595 = vmatpush1.msra.mxu0 0.0
  %11596 = vmatprep.subr.mxu0 0.0
  %11597 = vmatpush1.msra.mxu0 0.0
  %11598 = vmatprep.subr.mxu0 0.0
  %11599 = vmatpush1.msra.mxu0 0.0
  %11600 = vmatprep.subr.mxu0 0.0
  %11601 = vmatpush1.msra.mxu0 0.0
  %11602 = vmatprep.subr.mxu0 0.0
  %11603 = vmatpush1.msra.mxu0 0.0
  %11604 = vmatprep.subr.mxu0 0.0
  %11605 = vmatpush1.msra.mxu0 0.0
  %11606 = vmatprep.subr.mxu0 0.0
  %11607 = vmatpush1.msra.mxu0 0.0
  %11608 = vmatprep.subr.mxu0 0.0
  %11609 = vmatpush1.msra.mxu0 0.0
  %11610 = vmatprep.subr.mxu0 0.0
  %11611 = vmatpush1.msra.mxu0 0.0
  %11612 = vmatprep.subr.mxu0 0.0
  %11613 = vmatpush1.msra.mxu0 0.0
  %11614 = vmatprep.subr.mxu0 0.0
  %11615 = vmatpush1.msra.mxu0 0.0
  %11616 = vmatprep.subr.mxu0 0.0
  %11617 = vmatpush1.msra.mxu0 0.0
  %11618 = vmatprep.subr.mxu0 0.0
  %11619 = vmatpush1.msra.mxu0 0.0
  %11620 = vmatprep.subr.mxu0 0.0
  %11621 = vmatpush1.msra.mxu0 0.0
  %11622 = vmatprep.subr.mxu0 0.0
  %11623 = vmatpush1.msra.mxu0 0.0
  %11624 = vmatprep.subr.mxu0 0.0
  %11625 = vmatpush1.msra.mxu0 0.0
  %11626 = vmatprep.subr.mxu0 0.0
  %11627 = vmatpush1.msra.mxu0 0.0
  %11628 = vmatprep.subr.mxu0 0.0
  %11629 = vmatpush1.msra.mxu0 0.0
  %11630 = vmatprep.subr.mxu0 0.0
  %11631 = vmatpush1.msra.mxu0 0.0
  %11632 = vmatprep.subr.mxu0 0.0
  %11633 = vmatpush1.msra.mxu0 0.0
  %11634 = vmatprep.subr.mxu0 0.0
  %11635 = vmatpush1.msra.mxu0 0.0
  %11636 = vmatprep.subr.mxu0 0.0
  %11637 = vmatpush1.msra.mxu0 0.0
  %11638 = vmatprep.subr.mxu0 0.0
  %11639 = vmatpush1.msra.mxu0 0.0
  %11640 = vmatprep.subr.mxu0 0.0
  %11641 = vmatpush1.msra.mxu0 0.0
  %11642 = vmatprep.subr.mxu0 0.0
  %11643 = vmatpush1.msra.mxu0 0.0
  %11644 = vmatprep.subr.mxu0 0.0
  %11645 = vmatpush1.msra.mxu0 0.0
  %11646 = vmatprep.mubr.f32.mxu0 0.0
  %11647 = vmatmul.mubr.f32.gmra.mrb[0].mxu0 %v11580
  %v11648 = vpop.f32.mrb[0].mxu0
  %v11649 = vadd.f32 0.0, %v11648
  %v11650 = vpop.f32.mrb[0].mxu0
  %11651 = vdwg.mxu0
  %v11652 = vld [vmem:[%s12 + $0x2] sm:$0x1]
  %v11654 = vlaneseq
  %v11655 = vshrl.u32 %v11654, 7
  %v11656 = vsub.s32 0, %v11655
  %v11657 = vrot.slane %v11652, %v11656
  %v11659 = vmul.f32 %v11571, %v11657
  %vm11660 = vcmask 254976
  %v11661 = vsel %vm11660, %v11659, 0.0
  %11662 = vadd.xlane.f32.xlu0 %v11661
  %v11663 = vpop.xlane.xlu0 %11662
  %v11664 = vld [vmem:[%s12 + $0x4] sm:$0x1]
  %v11666 = vlaneseq
  %v11667 = vshrl.u32 %v11666, 7
  %v11668 = vsub.s32 0, %v11667
  %v11669 = vrot.slane %v11664, %v11668
  %v11671 = vadd.f32 %v11663, %v11669
  %vm11672 = vcmask 1024
  %11673 = vst.msk [vmem:[%s14] sm:$0x3] %vm11672, %v11671
  %v11674 = vld [vmem:[%s12] sm:$0x1]
  %v11676 = vlaneseq
  %v11677 = vshrl.u32 %v11676, 7
  %v11678 = vsub.s32 0, %v11677
  %v11679 = vrot.slane %v11674, %v11678
  %v11681 = vmul.f32 %v11571, %v11679
  %v11682 = vsel %vm11660, %v11681, 0.0
  %11683 = vadd.xlane.f32.xlu0 %v11682
  %v11684 = vpop.xlane.xlu0 %11683
  %v11685 = vld [vmem:[%s12 + $0x1] sm:$0x1]
  %v11687 = vsel %vm88, %v11685, 0
  %v11690 = vsel %vm88, %v11649, 0
  %11692 = vmatprep.subr.mxu0 0.0
  %11693 = vmatpush1.xpose.msra.mxu0 %v11690
  %11694 = vmatprep.subr.mxu0 0.0
  %11695 = vmatpush1.xpose.msra.mxu0 0.0
  %11696 = vmatprep.subr.mxu0 0.0
  %11697 = vmatpush1.xpose.msra.mxu0 0.0
  %11698 = vmatprep.subr.mxu0 0.0
  %11699 = vmatpush1.xpose.msra.mxu0 0.0
  %11700 = vmatprep.subr.mxu0 0.0
  %11701 = vmatpush1.xpose.msra.mxu0 0.0
  %11702 = vmatprep.subr.mxu0 0.0
  %11703 = vmatpush1.xpose.msra.mxu0 0.0
  %11704 = vmatprep.subr.mxu0 0.0
  %11705 = vmatpush1.xpose.msra.mxu0 0.0
  %11706 = vmatprep.subr.mxu0 0.0
  %11707 = vmatpush1.xpose.msra.mxu0 0.0
  %11708 = vmatprep.subr.mxu0 0.0
  %11709 = vmatpush1.xpose.msra.mxu0 0.0
  %11710 = vmatprep.subr.mxu0 0.0
  %11711 = vmatpush1.xpose.msra.mxu0 0.0
  %11712 = vmatprep.subr.mxu0 0.0
  %11713 = vmatpush1.xpose.msra.mxu0 0.0
  %11714 = vmatprep.subr.mxu0 0.0
  %11715 = vmatpush1.xpose.msra.mxu0 0.0
  %11716 = vmatprep.subr.mxu0 0.0
  %11717 = vmatpush1.xpose.msra.mxu0 0.0
  %11718 = vmatprep.subr.mxu0 0.0
  %11719 = vmatpush1.xpose.msra.mxu0 0.0
  %11720 = vmatprep.subr.mxu0 0.0
  %11721 = vmatpush1.xpose.msra.mxu0 0.0
  %11722 = vmatprep.subr.mxu0 0.0
  %11723 = vmatpush1.xpose.msra.mxu0 0.0
  %11724 = vmatprep.subr.mxu0 0.0
  %11725 = vmatpush1.xpose.msra.mxu0 0.0
  %11726 = vmatprep.subr.mxu0 0.0
  %11727 = vmatpush1.xpose.msra.mxu0 0.0
  %11728 = vmatprep.subr.mxu0 0.0
  %11729 = vmatpush1.xpose.msra.mxu0 0.0
  %11730 = vmatprep.subr.mxu0 0.0
  %11731 = vmatpush1.xpose.msra.mxu0 0.0
  %11732 = vmatprep.subr.mxu0 0.0
  %11733 = vmatpush1.xpose.msra.mxu0 0.0
  %11734 = vmatprep.subr.mxu0 0.0
  %11735 = vmatpush1.xpose.msra.mxu0 0.0
  %11736 = vmatprep.subr.mxu0 0.0
  %11737 = vmatpush1.xpose.msra.mxu0 0.0
  %11738 = vmatprep.subr.mxu0 0.0
  %11739 = vmatpush1.xpose.msra.mxu0 0.0
  %11740 = vmatprep.subr.mxu0 0.0
  %11741 = vmatpush1.xpose.msra.mxu0 0.0
  %11742 = vmatprep.subr.mxu0 0.0
  %11743 = vmatpush1.xpose.msra.mxu0 0.0
  %11744 = vmatprep.subr.mxu0 0.0
  %11745 = vmatpush1.xpose.msra.mxu0 0.0
  %11746 = vmatprep.subr.mxu0 0.0
  %11747 = vmatpush1.xpose.msra.mxu0 0.0
  %11748 = vmatprep.subr.mxu0 0.0
  %11749 = vmatpush1.xpose.msra.mxu0 0.0
  %11750 = vmatprep.subr.mxu0 0.0
  %11751 = vmatpush1.xpose.msra.mxu0 0.0
  %11752 = vmatprep.subr.mxu0 0.0
  %11753 = vmatpush1.xpose.msra.mxu0 0.0
  %11754 = vmatprep.subr.mxu0 0.0
  %11755 = vmatpush1.xpose.msra.mxu0 0.0
  %11756 = vmatprep.mubr.f32.mxu0 0.0
  %11757 = vmatmul.mubr.f32.gmra.mrb[0].mxu0 %v11687
  %v11758 = vpop.f32.mrb[0].mxu0
  %v11759 = vadd.f32 0.0, %v11758
  %v11760 = vpop.f32.mrb[0].mxu0
  %11761 = vdwg.mxu0
  %v11762 = vlaneseq
  %v11763 = vshrl.u32 %v11762, 7
  %v11764 = vsub.s32 0, %v11763
  %v11765 = vrot.slane %v11759, %v11764
  %v11766 = vadd.f32 %v11684, %v11765
  %v11767 = vld [vmem:[%s12 + $0x3] sm:$0x1]
  %v11769 = vlaneseq
  %v11770 = vshrl.u32 %v11769, 7
  %v11771 = vsub.s32 0, %v11770
  %v11772 = vrot.slane %v11767, %v11771
  %11773 = vset.pattern.permute.xlu0 0
  %11774 = vperm.xlu0 %11773, %v11772
  %v11775 = vpop.permute.xlu0 %11774
  %v11777 = vadd.f32 %v11766, %v11775
  %v11778 = vmax.f32 %v11777, 0.0
  %vm11779 = vcmask 33792
  %11780 = vst.msk [vmem:[%s13] sm:$0x3] %vm11779, %v11778
  // Predicated region
  $region54: #{transformer_scorer_forward.1} parent=0 // pred_check
    _
  $region55: #{transformer_scorer_forward.1} parent=0 // pred_check_branch
    %11782 = sbr.rel (0) target = $region57
  $region56: #{transformer_scorer_forward.1} parent=0 // pred_region
    _
  $region57: #{transformer_scorer_forward.1} parent=0 // pred_fallthru
    _
  // Predicated region
  $region58: #{transformer_scorer_forward.1} parent=0 // pred_check
    _
  $region59: #{transformer_scorer_forward.1} parent=0 // pred_check_branch
    %11784 = sbr.rel (0) target = $region61
  $region60: #{transformer_scorer_forward.1} parent=0 // pred_region
    _
  $region61: #{transformer_scorer_forward.1} parent=0 // pred_fallthru
    _
  // Predicated region
  $region62: #{transformer_scorer_forward.1} parent=0 // pred_check
    _
  $region63: #{transformer_scorer_forward.1} parent=0 // pred_check_branch
    %11786 = sbr.rel (0) target = $region65
  $region64: #{transformer_scorer_forward.1} parent=0 // pred_region
    _
  $region65: #{transformer_scorer_forward.1} parent=0 // pred_fallthru
    _
  // Predicated region
  $region66: #{transformer_scorer_forward.1} parent=0 // pred_check
    _
  $region67: #{transformer_scorer_forward.1} parent=0 // pred_check_branch
    %11788 = sbr.rel (0) target = $region69
  $region68: #{transformer_scorer_forward.1} parent=0 // pred_region
    _
  $region69: #{transformer_scorer_forward.1} parent=0 // pred_fallthru
    _

</llo_original>
